<compile_context>
chip_gen: v7x
topology: tpu7x:2x2x1
jax: 0.10.0
libtpu: 0.0.40
codegen_flags: <defaults>
</compile_context>

<pallas_src>
import jax
import jax.numpy as jnp
from jax import lax
from jax.experimental import pallas as pl
from jax.experimental.pallas import tpu as pltpu

BN_EPS = 1e-5
RATIO = 4   # Involution channel reduction for kernel generation (C -> C/RATIO -> K*K)


# ----------------------------- fused Pallas kernel -----------------------------

def _make_fused_kernel(kernels, H, W, C, KKP, col_offs, HB):
    NK = len(kernels)
    P = max(k // 2 for k in kernels)
    Hp = H + 2 * P
    NC = H // HB

    def kernel(xpad_ref, w1_ref, b1_ref, w2_ref, b2_ref, bns_ref, bnb_ref,
               fcw_ref, fcb_ref, fcsw_ref, fcsb_ref,
               out_ref, xsh_ref, feats_ref, ssum_ref):
        # ---- stage 0: build dx-shifted slabs of the max-halo padded input, once per image.
        # xsh[dx][r, w, :] == xpad[r, dx + w, :]  -> only 2P+1 misaligned slices (not 84).
        for dx in range(2 * P + 1):
            for r0 in range(0, Hp, 8):                 # row-chunked copy bounds vreg pressure
                rr = min(8, Hp - r0)
                xsh_ref[dx, r0:r0 + rr, :, :] = xpad_ref[0, r0:r0 + rr, dx:dx + W, :]

        ssum_ref[...] = jnp.zeros_like(ssum_ref)
        bn_s = bns_ref[...]                            # (NK, C)
        bn_b = bnb_ref[...]

        # ---- stage 1: batched kernel generation + involution + BN/ReLU, H-chunked.
        def chunk_body(ci, carry):
            h0 = ci * HB
            # centre slab rows == the unpadded input rows of this chunk.
            xc = xsh_ref[P, pl.ds(P + h0, HB), :, :]                    # (HB, W, C)
            xf = xc.reshape(HB * W, C)
            # all branches' kernel-generation 1x1 convs in two lane-dense MXU matmuls.
            h1 = jnp.dot(xf, w1_ref[...], preferred_element_type=jnp.float32) + b1_ref[...]
            h1 = jnp.maximum(h1, 0.0)
            kerc = jnp.dot(h1, w2_ref[...], preferred_element_type=jnp.float32) + b2_ref[...]
            kerc = kerc.reshape(HB, W, KKP)

            for bi, K in enumerate(kernels):
                o = P - K // 2
                base = col_offs[bi]
                acc = jnp.zeros((HB, W, C), jnp.float32)
                for dy in range(K):
                    for dx in range(K):
                        c0 = base + dy * K + dx
                        kw = kerc[:, :, c0:c0 + 1]                      # (HB, W, 1)
                        xs = xsh_ref[o + dx, pl.ds(o + dy + h0, HB), :, :]
                        acc = acc + kw * xs
                feat = jnp.maximum(acc * bn_s[bi:bi + 1] + bn_b[bi:bi + 1], 0.0)
                feats_ref[bi, pl.ds(h0, HB), :, :] = feat               # stays in VMEM
                ssum_ref[...] += jnp.sum(feat.reshape(HB * W, C), axis=0, keepdims=True)
            return carry

        lax.fori_loop(0, NC, chunk_body, 0)

        # ---- stage 2: SK squeeze/excite glue (tiny matmuls) + softmax over the branch axis.
        S = ssum_ref[...] * (1.0 / float(H * W))                        # (1, C)
        Z = jnp.dot(S, fcw_ref[...], preferred_element_type=jnp.float32) + fcb_ref[...]
        logits = [jnp.dot(Z, fcsw_ref[i], preferred_element_type=jnp.float32)
                  + fcsb_ref[i:i + 1, :] for i in range(NK)]            # NK x (1, C)
        m = logits[0]
        for i in range(1, NK):
            m = jnp.maximum(m, logits[i])
        exps = [jnp.exp(l - m) for l in logits]
        den = exps[0]
        for i in range(1, NK):
            den = den + exps[i]
        att = [e / den for e in exps]                                   # NK x (1, C)

        # ---- stage 3: fuse VMEM-resident branch features with the attention weights.
        def fuse_body(ci, carry):
            h0 = ci * HB
            v = att[0] * feats_ref[0, pl.ds(h0, HB), :, :]
            for bi in range(1, NK):
                v = v + att[bi] * feats_ref[bi, pl.ds(h0, HB), :, :]
            out_ref[0, pl.ds(h0, HB), :, :] = v
            return carry

        lax.fori_loop(0, NC, fuse_body, 0)

    return kernel


# ----------------------------- parameter packing -----------------------------

def _pack_params(params, kernels):
    NK = len(kernels)
    branches = params["branches"]
    Cr = branches[0]["w1"].shape[1]
    KKs = [k * k for k in kernels]
    col_offs, off = [], 0
    for kk in KKs:
        col_offs.append(off)
        off += kk
    KKP = ((off + 127) // 128) * 128                   # pad span-conv outputs to a lane tile

    w1 = jnp.concatenate([bp["w1"] for bp in branches], axis=1)        # (C, NK*Cr)
    b1 = jnp.concatenate([bp["b1"] for bp in branches], axis=1)        # (1, NK*Cr)
    w2 = jnp.zeros((NK * Cr, KKP), jnp.float32)                        # block-diagonal span conv
    b2 = jnp.zeros((1, KKP), jnp.float32)
    for i, bp in enumerate(branches):
        w2 = w2.at[i * Cr:(i + 1) * Cr, col_offs[i]:col_offs[i] + KKs[i]].set(bp["w2"])
        b2 = b2.at[:, col_offs[i]:col_offs[i] + KKs[i]].set(bp["b2"])
    bns = jnp.concatenate([bp["bn_s"] for bp in branches], axis=0)     # (NK, C)
    bnb = jnp.concatenate([bp["bn_b"] for bp in branches], axis=0)     # (NK, C)
    fcw = params["fc_w"]                                               # (C, d)
    fcb = params["fc_b"].reshape(1, -1)                                # (1, d)
    fcsw = jnp.stack([w for (w, _) in params["fcs"]], axis=0)          # (NK, d, C)
    fcsb = jnp.stack([b for (_, b) in params["fcs"]], axis=0)          # (NK, C)
    return (w1, b1, w2, b2, bns, bnb, fcw, fcb, fcsw, fcsb), col_offs, KKP


def _full_spec(*shape):
    n = len(shape)
    return pl.BlockSpec(shape, lambda b, _n=n: (0,) * _n)


# ----------------------------- forward (wrapper) -----------------------------

def inv_sk_attention_forward(x_nchw, params, kernels):
    B, C, H, W = x_nchw.shape
    NK = len(kernels)
    x = jnp.transpose(x_nchw, (0, 2, 3, 1)).astype(jnp.float32)        # NCHW -> NHWC
    P = max(k // 2 for k in kernels)
    Hp, Wp = H + 2 * P, W + 2 * P
    xpad = jnp.pad(x, ((0, 0), (P, P), (P, P), (0, 0)))                # single max-halo pad

    (w1, b1, w2, b2, bns, bnb, fcw, fcb, fcsw, fcsb), col_offs, KKP = _pack_params(params, kernels)
    Cr = params["branches"][0]["w1"].shape[1]
    d = fcw.shape[1]
    HB = 4 if H % 4 == 0 else 1                                         # H-chunk (vreg pressure)

    out = pl.pallas_call(
        _make_fused_kernel(tuple(kernels), H, W, C, KKP, tuple(col_offs), HB),
        out_shape=jax.ShapeDtypeStruct((B, H, W, C), jnp.float32),
        grid=(B,),
        in_specs=[
            pl.BlockSpec((1, Hp, Wp, C), lambda b: (b, 0, 0, 0)),
            _full_spec(C, NK * Cr), _full_spec(1, NK * Cr),
            _full_spec(NK * Cr, KKP), _full_spec(1, KKP),
            _full_spec(NK, C), _full_spec(NK, C),
            _full_spec(C, d), _full_spec(1, d),
            _full_spec(NK, d, C), _full_spec(NK, C),
        ],
        out_specs=pl.BlockSpec((1, H, W, C), lambda b: (b, 0, 0, 0)),
        scratch_shapes=[
            pltpu.VMEM((2 * P + 1, Hp, W, C), jnp.float32),    # dx-shifted input slabs
            pltpu.VMEM((NK, H, W, C), jnp.float32),            # VMEM-resident branch features
            pltpu.VMEM((1, C), jnp.float32),                   # running channel sum -> S
        ],
        compiler_params=pltpu.CompilerParams(dimension_semantics=("parallel",)),
    )(xpad, w1, b1, w2, b2, bns, bnb, fcw, fcb, fcsw, fcsb)

    return jnp.transpose(out, (0, 3, 1, 2))                             # back to NCHW


# ----------------------------- parameter init (deterministic) -----------------------------

def init_params(key, channel, kernels, reduction=16, L=32, ratio=RATIO):
    d = max(L, channel // reduction)
    Cr = channel // ratio
    n_keys = 4 * len(kernels) + 2 + 2 * len(kernels)
    keys = iter(jax.random.split(key, n_keys))
    rnd = lambda shape, s=0.1: s * jax.random.normal(next(keys), shape, dtype=jnp.float32)

    bn_scale = jnp.float32(1.0 / jnp.sqrt(1.0 + BN_EPS))        # default BN stats (eval mode)
    branches = []
    for k in kernels:
        KK = k * k
        w1 = rnd((channel, Cr)) * bn_scale                      # inner BN folded into conv1
        b1 = rnd((1, Cr)) * bn_scale
        w2 = rnd((Cr, KK))
        b2 = rnd((1, KK))
        bn_s = jnp.full((1, channel), bn_scale, jnp.float32)    # outer BatchNorm2d(channel)
        bn_b = jnp.zeros((1, channel), jnp.float32)
        branches.append(dict(w1=w1, b1=b1, w2=w2, b2=b2, bn_s=bn_s, bn_b=bn_b))

    fc_w = rnd((channel, d))
    fc_b = rnd((d,))
    fcs = [(rnd((d, channel)), rnd((channel,))) for _ in kernels]
    return dict(branches=branches, fc_w=fc_w, fc_b=fc_b, fcs=fcs, d=d)


# ----------------------------- pure-JAX reference (for verification) -----------------------------

def ref_forward(x_nchw, params, kernels):
    hp = jax.lax.Precision.HIGHEST
    x = jnp.transpose(x_nchw, (0, 2, 3, 1)).astype(jnp.float32)
    B, H, W, C = x.shape
    feats = []
    for k, bp in zip(kernels, params["branches"]):
        h1 = jnp.maximum(jnp.einsum("bhwc,cr->bhwr", x, bp["w1"], precision=hp) + bp["b1"][0], 0.0)
        ker = jnp.einsum("bhwr,rk->bhwk", h1, bp["w2"], precision=hp) + bp["b2"][0]
        p = k // 2
        xpad = jnp.pad(x, ((0, 0), (p, p), (p, p), (0, 0)))
        acc = jnp.zeros_like(x)
        for kk in range(k * k):
            dy, dx = kk // k, kk % k
            acc = acc + ker[..., kk:kk + 1] * xpad[:, dy:dy + H, dx:dx + W, :]
        feats.append(jnp.maximum(acc * bp["bn_s"][0] + bp["bn_b"][0], 0.0))
    U = sum(feats)
    S = U.mean(axis=(1, 2))
    Z = jnp.dot(S, params["fc_w"], precision=hp) + params["fc_b"]
    logits = jnp.stack([jnp.dot(Z, w, precision=hp) + b for (w, b) in params["fcs"]], axis=0)
    att = jax.nn.softmax(logits, axis=0)
    V = sum(att[i][:, None, None, :] * feats[i] for i in range(len(kernels)))
    return jnp.transpose(V, (0, 3, 1, 2))


# ----------------------------- main -----------------------------

if __name__ == "__main__":
    B, C, H, W = 2, 128, 16, 16
    kernels = [1, 3, 5, 7]
    reduction, L = 16, 32

    key = jax.random.PRNGKey(0)
    kx, kp = jax.random.split(key)
    x = jax.random.normal(kx, (B, C, H, W), dtype=jnp.float32)
    params = init_params(kp, C, kernels, reduction=reduction, L=L)

    out = jax.block_until_ready(inv_sk_attention_forward(x, params, kernels))
    ref = jax.block_until_ready(ref_forward(x, params, kernels))

    assert out.shape == (B, C, H, W), out.shape
    max_err = float(jnp.max(jnp.abs(out - ref)))
    assert jnp.allclose(out, ref, rtol=2e-3, atol=2e-3), max_err
    print("KERNEL_OK")
</pallas_src>

<mosaic_0001>
module attributes {stable_mosaic.version = 11 : i64} {
  func.func @kernel(%arg0: i32, %arg1: memref<1x22x22x128xf32, #tpu.memory_space<vmem>>, %arg2: memref<128x128xf32, #tpu.memory_space<vmem>>, %arg3: memref<1x128xf32, #tpu.memory_space<vmem>>, %arg4: memref<128x128xf32, #tpu.memory_space<vmem>>, %arg5: memref<1x128xf32, #tpu.memory_space<vmem>>, %arg6: memref<4x128xf32, #tpu.memory_space<vmem>>, %arg7: memref<4x128xf32, #tpu.memory_space<vmem>>, %arg8: memref<128x32xf32, #tpu.memory_space<vmem>>, %arg9: memref<1x32xf32, #tpu.memory_space<vmem>>, %arg10: memref<4x32x128xf32, #tpu.memory_space<vmem>>, %arg11: memref<4x128xf32, #tpu.memory_space<vmem>>, %arg12: memref<1x16x16x128xf32, #tpu.memory_space<vmem>>, %arg13: memref<7x22x16x128xf32, #tpu.memory_space<vmem>>, %arg14: memref<4x16x16x128xf32, #tpu.memory_space<vmem>>, %arg15: memref<1x128xf32, #tpu.memory_space<vmem>>) attributes {dimension_semantics = [#tpu.dimension_semantics<parallel>], iteration_bounds = array<i64: 2>, scalar_prefetch = 0 : i64, scratch_operands = 3 : i64, tpu.core_type = #tpu.core_type<tc>, window_params = [{transform_indices = @transform_0, window_bounds = array<i64: 1, 22, 22, 128>}, {pipeline_mode = #tpu.pipeline_mode<synchronous>, transform_indices = @transform_1, window_bounds = array<i64: 128, 128>}, {pipeline_mode = #tpu.pipeline_mode<synchronous>, transform_indices = @transform_2, window_bounds = array<i64: 1, 128>}, {pipeline_mode = #tpu.pipeline_mode<synchronous>, transform_indices = @transform_3, window_bounds = array<i64: 128, 128>}, {pipeline_mode = #tpu.pipeline_mode<synchronous>, transform_indices = @transform_4, window_bounds = array<i64: 1, 128>}, {pipeline_mode = #tpu.pipeline_mode<synchronous>, transform_indices = @transform_5, window_bounds = array<i64: 4, 128>}, {pipeline_mode = #tpu.pipeline_mode<synchronous>, transform_indices = @transform_6, window_bounds = array<i64: 4, 128>}, {pipeline_mode = #tpu.pipeline_mode<synchronous>, transform_indices = @transform_7, window_bounds = array<i64: 128, 32>}, {pipeline_mode = #tpu.pipeline_mode<synchronous>, transform_indices = @transform_8, window_bounds = array<i64: 1, 32>}, {pipeline_mode = #tpu.pipeline_mode<synchronous>, transform_indices = @transform_9, window_bounds = array<i64: 4, 32, 128>}, {pipeline_mode = #tpu.pipeline_mode<synchronous>, transform_indices = @transform_10, window_bounds = array<i64: 4, 128>}, {transform_indices = @transform_11, window_bounds = array<i64: 1, 16, 16, 128>}]} {
    %c0 = arith.constant 0 : index
    %c0_0 = arith.constant 0 : index
    %c0_1 = arith.constant 0 : index
    %c0_2 = arith.constant 0 : index
    %0 = vector.load %arg1[%c0, %c0_0, %c0_1, %c0_2] : memref<1x22x22x128xf32, #tpu.memory_space<vmem>>, vector<1x8x16x128xf32>
    %1 = vector.shape_cast %0 : vector<1x8x16x128xf32> to vector<8x16x128xf32>
    %c0_3 = arith.constant 0 : index
    %c0_4 = arith.constant 0 : index
    %c0_5 = arith.constant 0 : index
    %c0_6 = arith.constant 0 : index
    %2 = vector.load %arg13[%c0_3, %c0_4, %c0_5, %c0_6] : memref<7x22x16x128xf32, #tpu.memory_space<vmem>>, vector<1x8x16x128xf32>
    %3 = vector.shape_cast %2 : vector<1x8x16x128xf32> to vector<8x16x128xf32>
    %4 = vector.shape_cast %1 : vector<8x16x128xf32> to vector<1x8x16x128xf32>
    tpu.vector_store %arg13[%c0_3, %c0_4, %c0_5, %c0_6], %4 {strides = array<i32>} : memref<7x22x16x128xf32, #tpu.memory_space<vmem>>, vector<1x8x16x128xf32>,
    %c0_7 = arith.constant 0 : index
    %c8 = arith.constant 8 : index
    %c0_8 = arith.constant 0 : index
    %c0_9 = arith.constant 0 : index
    %5 = vector.load %arg1[%c0_7, %c8, %c0_8, %c0_9] : memref<1x22x22x128xf32, #tpu.memory_space<vmem>>, vector<1x8x16x128xf32>
    %6 = vector.shape_cast %5 : vector<1x8x16x128xf32> to vector<8x16x128xf32>
    %c0_10 = arith.constant 0 : index
    %c8_11 = arith.constant 8 : index
    %c0_12 = arith.constant 0 : index
    %c0_13 = arith.constant 0 : index
    %7 = vector.load %arg13[%c0_10, %c8_11, %c0_12, %c0_13] : memref<7x22x16x128xf32, #tpu.memory_space<vmem>>, vector<1x8x16x128xf32>
    %8 = vector.shape_cast %7 : vector<1x8x16x128xf32> to vector<8x16x128xf32>
    %9 = vector.shape_cast %6 : vector<8x16x128xf32> to vector<1x8x16x128xf32>
    tpu.vector_store %arg13[%c0_10, %c8_11, %c0_12, %c0_13], %9 {strides = array<i32>} : memref<7x22x16x128xf32, #tpu.memory_space<vmem>>, vector<1x8x16x128xf32>,
    %c0_14 = arith.constant 0 : index
    %c16 = arith.constant 16 : index
    %c0_15 = arith.constant 0 : index
    %c0_16 = arith.constant 0 : index
    %10 = vector.load %arg1[%c0_14, %c16, %c0_15, %c0_16] : memref<1x22x22x128xf32, #tpu.memory_space<vmem>>, vector<1x6x16x128xf32>
    %11 = vector.shape_cast %10 : vector<1x6x16x128xf32> to vector<6x16x128xf32>
    %c0_17 = arith.constant 0 : index
    %c16_18 = arith.constant 16 : index
    %c0_19 = arith.constant 0 : index
    %c0_20 = arith.constant 0 : index
    %12 = vector.load %arg13[%c0_17, %c16_18, %c0_19, %c0_20] : memref<7x22x16x128xf32, #tpu.memory_space<vmem>>, vector<1x6x16x128xf32>
    %13 = vector.shape_cast %12 : vector<1x6x16x128xf32> to vector<6x16x128xf32>
    %14 = vector.shape_cast %11 : vector<6x16x128xf32> to vector<1x6x16x128xf32>
    tpu.vector_store %arg13[%c0_17, %c16_18, %c0_19, %c0_20], %14 {strides = array<i32>} : memref<7x22x16x128xf32, #tpu.memory_space<vmem>>, vector<1x6x16x128xf32>,
    %c0_21 = arith.constant 0 : index
    %c0_22 = arith.constant 0 : index
    %c1 = arith.constant 1 : index
    %c0_23 = arith.constant 0 : index
    %15 = vector.load %arg1[%c0_21, %c0_22, %c1, %c0_23] : memref<1x22x22x128xf32, #tpu.memory_space<vmem>>, vector<1x8x16x128xf32>
    %16 = vector.shape_cast %15 : vector<1x8x16x128xf32> to vector<8x16x128xf32>
    %c1_24 = arith.constant 1 : index
    %c0_25 = arith.constant 0 : index
    %c0_26 = arith.constant 0 : index
    %c0_27 = arith.constant 0 : index
    %17 = vector.load %arg13[%c1_24, %c0_25, %c0_26, %c0_27] : memref<7x22x16x128xf32, #tpu.memory_space<vmem>>, vector<1x8x16x128xf32>
    %18 = vector.shape_cast %17 : vector<1x8x16x128xf32> to vector<8x16x128xf32>
    %19 = vector.shape_cast %16 : vector<8x16x128xf32> to vector<1x8x16x128xf32>
    tpu.vector_store %arg13[%c1_24, %c0_25, %c0_26, %c0_27], %19 {strides = array<i32>} : memref<7x22x16x128xf32, #tpu.memory_space<vmem>>, vector<1x8x16x128xf32>,
    %c0_28 = arith.constant 0 : index
    %c8_29 = arith.constant 8 : index
    %c1_30 = arith.constant 1 : index
    %c0_31 = arith.constant 0 : index
    %20 = vector.load %arg1[%c0_28, %c8_29, %c1_30, %c0_31] : memref<1x22x22x128xf32, #tpu.memory_space<vmem>>, vector<1x8x16x128xf32>
    %21 = vector.shape_cast %20 : vector<1x8x16x128xf32> to vector<8x16x128xf32>
    %c1_32 = arith.constant 1 : index
    %c8_33 = arith.constant 8 : index
    %c0_34 = arith.constant 0 : index
    %c0_35 = arith.constant 0 : index
    %22 = vector.load %arg13[%c1_32, %c8_33, %c0_34, %c0_35] : memref<7x22x16x128xf32, #tpu.memory_space<vmem>>, vector<1x8x16x128xf32>
    %23 = vector.shape_cast %22 : vector<1x8x16x128xf32> to vector<8x16x128xf32>
    %24 = vector.shape_cast %21 : vector<8x16x128xf32> to vector<1x8x16x128xf32>
    tpu.vector_store %arg13[%c1_32, %c8_33, %c0_34, %c0_35], %24 {strides = array<i32>} : memref<7x22x16x128xf32, #tpu.memory_space<vmem>>, vector<1x8x16x128xf32>,
    %c0_36 = arith.constant 0 : index
    %c16_37 = arith.constant 16 : index
    %c1_38 = arith.constant 1 : index
    %c0_39 = arith.constant 0 : index
    %25 = vector.load %arg1[%c0_36, %c16_37, %c1_38, %c0_39] : memref<1x22x22x128xf32, #tpu.memory_space<vmem>>, vector<1x6x16x128xf32>
    %26 = vector.shape_cast %25 : vector<1x6x16x128xf32> to vector<6x16x128xf32>
    %c1_40 = arith.constant 1 : index
    %c16_41 = arith.constant 16 : index
    %c0_42 = arith.constant 0 : index
    %c0_43 = arith.constant 0 : index
    %27 = vector.load %arg13[%c1_40, %c16_41, %c0_42, %c0_43] : memref<7x22x16x128xf32, #tpu.memory_space<vmem>>, vector<1x6x16x128xf32>
    %28 = vector.shape_cast %27 : vector<1x6x16x128xf32> to vector<6x16x128xf32>
    %29 = vector.shape_cast %26 : vector<6x16x128xf32> to vector<1x6x16x128xf32>
    tpu.vector_store %arg13[%c1_40, %c16_41, %c0_42, %c0_43], %29 {strides = array<i32>} : memref<7x22x16x128xf32, #tpu.memory_space<vmem>>, vector<1x6x16x128xf32>,
    %c0_44 = arith.constant 0 : index
    %c0_45 = arith.constant 0 : index
    %c2 = arith.constant 2 : index
    %c0_46 = arith.constant 0 : index
    %30 = vector.load %arg1[%c0_44, %c0_45, %c2, %c0_46] : memref<1x22x22x128xf32, #tpu.memory_space<vmem>>, vector<1x8x16x128xf32>
    %31 = vector.shape_cast %30 : vector<1x8x16x128xf32> to vector<8x16x128xf32>
    %c2_47 = arith.constant 2 : index
    %c0_48 = arith.constant 0 : index
    %c0_49 = arith.constant 0 : index
    %c0_50 = arith.constant 0 : index
    %32 = vector.load %arg13[%c2_47, %c0_48, %c0_49, %c0_50] : memref<7x22x16x128xf32, #tpu.memory_space<vmem>>, vector<1x8x16x128xf32>
    %33 = vector.shape_cast %32 : vector<1x8x16x128xf32> to vector<8x16x128xf32>
    %34 = vector.shape_cast %31 : vector<8x16x128xf32> to vector<1x8x16x128xf32>
    tpu.vector_store %arg13[%c2_47, %c0_48, %c0_49, %c0_50], %34 {strides = array<i32>} : memref<7x22x16x128xf32, #tpu.memory_space<vmem>>, vector<1x8x16x128xf32>,
    %c0_51 = arith.constant 0 : index
    %c8_52 = arith.constant 8 : index
    %c2_53 = arith.constant 2 : index
    %c0_54 = arith.constant 0 : index
    %35 = vector.load %arg1[%c0_51, %c8_52, %c2_53, %c0_54] : memref<1x22x22x128xf32, #tpu.memory_space<vmem>>, vector<1x8x16x128xf32>
    %36 = vector.shape_cast %35 : vector<1x8x16x128xf32> to vector<8x16x128xf32>
    %c2_55 = arith.constant 2 : index
    %c8_56 = arith.constant 8 : index
    %c0_57 = arith.constant 0 : index
    %c0_58 = arith.constant 0 : index
    %37 = vector.load %arg13[%c2_55, %c8_56, %c0_57, %c0_58] : memref<7x22x16x128xf32, #tpu.memory_space<vmem>>, vector<1x8x16x128xf32>
    %38 = vector.shape_cast %37 : vector<1x8x16x128xf32> to vector<8x16x128xf32>
    %39 = vector.shape_cast %36 : vector<8x16x128xf32> to vector<1x8x16x128xf32>
    tpu.vector_store %arg13[%c2_55, %c8_56, %c0_57, %c0_58], %39 {strides = array<i32>} : memref<7x22x16x128xf32, #tpu.memory_space<vmem>>, vector<1x8x16x128xf32>,
    %c0_59 = arith.constant 0 : index
    %c16_60 = arith.constant 16 : index
    %c2_61 = arith.constant 2 : index
    %c0_62 = arith.constant 0 : index
    %40 = vector.load %arg1[%c0_59, %c16_60, %c2_61, %c0_62] : memref<1x22x22x128xf32, #tpu.memory_space<vmem>>, vector<1x6x16x128xf32>
    %41 = vector.shape_cast %40 : vector<1x6x16x128xf32> to vector<6x16x128xf32>
    %c2_63 = arith.constant 2 : index
    %c16_64 = arith.constant 16 : index
    %c0_65 = arith.constant 0 : index
    %c0_66 = arith.constant 0 : index
    %42 = vector.load %arg13[%c2_63, %c16_64, %c0_65, %c0_66] : memref<7x22x16x128xf32, #tpu.memory_space<vmem>>, vector<1x6x16x128xf32>
    %43 = vector.shape_cast %42 : vector<1x6x16x128xf32> to vector<6x16x128xf32>
    %44 = vector.shape_cast %41 : vector<6x16x128xf32> to vector<1x6x16x128xf32>
    tpu.vector_store %arg13[%c2_63, %c16_64, %c0_65, %c0_66], %44 {strides = array<i32>} : memref<7x22x16x128xf32, #tpu.memory_space<vmem>>, vector<1x6x16x128xf32>,
    %c0_67 = arith.constant 0 : index
    %c0_68 = arith.constant 0 : index
    %c3 = arith.constant 3 : index
    %c0_69 = arith.constant 0 : index
    %45 = vector.load %arg1[%c0_67, %c0_68, %c3, %c0_69] : memref<1x22x22x128xf32, #tpu.memory_space<vmem>>, vector<1x8x16x128xf32>
    %46 = vector.shape_cast %45 : vector<1x8x16x128xf32> to vector<8x16x128xf32>
    %c3_70 = arith.constant 3 : index
    %c0_71 = arith.constant 0 : index
    %c0_72 = arith.constant 0 : index
    %c0_73 = arith.constant 0 : index
    %47 = vector.load %arg13[%c3_70, %c0_71, %c0_72, %c0_73] : memref<7x22x16x128xf32, #tpu.memory_space<vmem>>, vector<1x8x16x128xf32>
    %48 = vector.shape_cast %47 : vector<1x8x16x128xf32> to vector<8x16x128xf32>
    %49 = vector.shape_cast %46 : vector<8x16x128xf32> to vector<1x8x16x128xf32>
    tpu.vector_store %arg13[%c3_70, %c0_71, %c0_72, %c0_73], %49 {strides = array<i32>} : memref<7x22x16x128xf32, #tpu.memory_space<vmem>>, vector<1x8x16x128xf32>,
    %c0_74 = arith.constant 0 : index
    %c8_75 = arith.constant 8 : index
    %c3_76 = arith.constant 3 : index
    %c0_77 = arith.constant 0 : index
    %50 = vector.load %arg1[%c0_74, %c8_75, %c3_76, %c0_77] : memref<1x22x22x128xf32, #tpu.memory_space<vmem>>, vector<1x8x16x128xf32>
    %51 = vector.shape_cast %50 : vector<1x8x16x128xf32> to vector<8x16x128xf32>
    %c3_78 = arith.constant 3 : index
    %c8_79 = arith.constant 8 : index
    %c0_80 = arith.constant 0 : index
    %c0_81 = arith.constant 0 : index
    %52 = vector.load %arg13[%c3_78, %c8_79, %c0_80, %c0_81] : memref<7x22x16x128xf32, #tpu.memory_space<vmem>>, vector<1x8x16x128xf32>
    %53 = vector.shape_cast %52 : vector<1x8x16x128xf32> to vector<8x16x128xf32>
    %54 = vector.shape_cast %51 : vector<8x16x128xf32> to vector<1x8x16x128xf32>
    tpu.vector_store %arg13[%c3_78, %c8_79, %c0_80, %c0_81], %54 {strides = array<i32>} : memref<7x22x16x128xf32, #tpu.memory_space<vmem>>, vector<1x8x16x128xf32>,
    %c0_82 = arith.constant 0 : index
    %c16_83 = arith.constant 16 : index
    %c3_84 = arith.constant 3 : index
    %c0_85 = arith.constant 0 : index
    %55 = vector.load %arg1[%c0_82, %c16_83, %c3_84, %c0_85] : memref<1x22x22x128xf32, #tpu.memory_space<vmem>>, vector<1x6x16x128xf32>
    %56 = vector.shape_cast %55 : vector<1x6x16x128xf32> to vector<6x16x128xf32>
    %c3_86 = arith.constant 3 : index
    %c16_87 = arith.constant 16 : index
    %c0_88 = arith.constant 0 : index
    %c0_89 = arith.constant 0 : index
    %57 = vector.load %arg13[%c3_86, %c16_87, %c0_88, %c0_89] : memref<7x22x16x128xf32, #tpu.memory_space<vmem>>, vector<1x6x16x128xf32>
    %58 = vector.shape_cast %57 : vector<1x6x16x128xf32> to vector<6x16x128xf32>
    %59 = vector.shape_cast %56 : vector<6x16x128xf32> to vector<1x6x16x128xf32>
    tpu.vector_store %arg13[%c3_86, %c16_87, %c0_88, %c0_89], %59 {strides = array<i32>} : memref<7x22x16x128xf32, #tpu.memory_space<vmem>>, vector<1x6x16x128xf32>,
    %c0_90 = arith.constant 0 : index
    %c0_91 = arith.constant 0 : index
    %c4 = arith.constant 4 : index
    %c0_92 = arith.constant 0 : index
    %60 = vector.load %arg1[%c0_90, %c0_91, %c4, %c0_92] : memref<1x22x22x128xf32, #tpu.memory_space<vmem>>, vector<1x8x16x128xf32>
    %61 = vector.shape_cast %60 : vector<1x8x16x128xf32> to vector<8x16x128xf32>
    %c4_93 = arith.constant 4 : index
    %c0_94 = arith.constant 0 : index
    %c0_95 = arith.constant 0 : index
    %c0_96 = arith.constant 0 : index
    %62 = vector.load %arg13[%c4_93, %c0_94, %c0_95, %c0_96] : memref<7x22x16x128xf32, #tpu.memory_space<vmem>>, vector<1x8x16x128xf32>
    %63 = vector.shape_cast %62 : vector<1x8x16x128xf32> to vector<8x16x128xf32>
    %64 = vector.shape_cast %61 : vector<8x16x128xf32> to vector<1x8x16x128xf32>
    tpu.vector_store %arg13[%c4_93, %c0_94, %c0_95, %c0_96], %64 {strides = array<i32>} : memref<7x22x16x128xf32, #tpu.memory_space<vmem>>, vector<1x8x16x128xf32>,
    %c0_97 = arith.constant 0 : index
    %c8_98 = arith.constant 8 : index
    %c4_99 = arith.constant 4 : index
    %c0_100 = arith.constant 0 : index
    %65 = vector.load %arg1[%c0_97, %c8_98, %c4_99, %c0_100] : memref<1x22x22x128xf32, #tpu.memory_space<vmem>>, vector<1x8x16x128xf32>
    %66 = vector.shape_cast %65 : vector<1x8x16x128xf32> to vector<8x16x128xf32>
    %c4_101 = arith.constant 4 : index
    %c8_102 = arith.constant 8 : index
    %c0_103 = arith.constant 0 : index
    %c0_104 = arith.constant 0 : index
    %67 = vector.load %arg13[%c4_101, %c8_102, %c0_103, %c0_104] : memref<7x22x16x128xf32, #tpu.memory_space<vmem>>, vector<1x8x16x128xf32>
    %68 = vector.shape_cast %67 : vector<1x8x16x128xf32> to vector<8x16x128xf32>
    %69 = vector.shape_cast %66 : vector<8x16x128xf32> to vector<1x8x16x128xf32>
    tpu.vector_store %arg13[%c4_101, %c8_102, %c0_103, %c0_104], %69 {strides = array<i32>} : memref<7x22x16x128xf32, #tpu.memory_space<vmem>>, vector<1x8x16x128xf32>,
    %c0_105 = arith.constant 0 : index
    %c16_106 = arith.constant 16 : index
    %c4_107 = arith.constant 4 : index
    %c0_108 = arith.constant 0 : index
    %70 = vector.load %arg1[%c0_105, %c16_106, %c4_107, %c0_108] : memref<1x22x22x128xf32, #tpu.memory_space<vmem>>, vector<1x6x16x128xf32>
    %71 = vector.shape_cast %70 : vector<1x6x16x128xf32> to vector<6x16x128xf32>
    %c4_109 = arith.constant 4 : index
    %c16_110 = arith.constant 16 : index
    %c0_111 = arith.constant 0 : index
    %c0_112 = arith.constant 0 : index
    %72 = vector.load %arg13[%c4_109, %c16_110, %c0_111, %c0_112] : memref<7x22x16x128xf32, #tpu.memory_space<vmem>>, vector<1x6x16x128xf32>
    %73 = vector.shape_cast %72 : vector<1x6x16x128xf32> to vector<6x16x128xf32>
    %74 = vector.shape_cast %71 : vector<6x16x128xf32> to vector<1x6x16x128xf32>
    tpu.vector_store %arg13[%c4_109, %c16_110, %c0_111, %c0_112], %74 {strides = array<i32>} : memref<7x22x16x128xf32, #tpu.memory_space<vmem>>, vector<1x6x16x128xf32>,
    %c0_113 = arith.constant 0 : index
    %c0_114 = arith.constant 0 : index
    %c5 = arith.constant 5 : index
    %c0_115 = arith.constant 0 : index
    %75 = vector.load %arg1[%c0_113, %c0_114, %c5, %c0_115] : memref<1x22x22x128xf32, #tpu.memory_space<vmem>>, vector<1x8x16x128xf32>
    %76 = vector.shape_cast %75 : vector<1x8x16x128xf32> to vector<8x16x128xf32>
    %c5_116 = arith.constant 5 : index
    %c0_117 = arith.constant 0 : index
    %c0_118 = arith.constant 0 : index
    %c0_119 = arith.constant 0 : index
    %77 = vector.load %arg13[%c5_116, %c0_117, %c0_118, %c0_119] : memref<7x22x16x128xf32, #tpu.memory_space<vmem>>, vector<1x8x16x128xf32>
    %78 = vector.shape_cast %77 : vector<1x8x16x128xf32> to vector<8x16x128xf32>
    %79 = vector.shape_cast %76 : vector<8x16x128xf32> to vector<1x8x16x128xf32>
    tpu.vector_store %arg13[%c5_116, %c0_117, %c0_118, %c0_119], %79 {strides = array<i32>} : memref<7x22x16x128xf32, #tpu.memory_space<vmem>>, vector<1x8x16x128xf32>,
    %c0_120 = arith.constant 0 : index
    %c8_121 = arith.constant 8 : index
    %c5_122 = arith.constant 5 : index
    %c0_123 = arith.constant 0 : index
    %80 = vector.load %arg1[%c0_120, %c8_121, %c5_122, %c0_123] : memref<1x22x22x128xf32, #tpu.memory_space<vmem>>, vector<1x8x16x128xf32>
    %81 = vector.shape_cast %80 : vector<1x8x16x128xf32> to vector<8x16x128xf32>
    %c5_124 = arith.constant 5 : index
    %c8_125 = arith.constant 8 : index
    %c0_126 = arith.constant 0 : index
    %c0_127 = arith.constant 0 : index
    %82 = vector.load %arg13[%c5_124, %c8_125, %c0_126, %c0_127] : memref<7x22x16x128xf32, #tpu.memory_space<vmem>>, vector<1x8x16x128xf32>
    %83 = vector.shape_cast %82 : vector<1x8x16x128xf32> to vector<8x16x128xf32>
    %84 = vector.shape_cast %81 : vector<8x16x128xf32> to vector<1x8x16x128xf32>
    tpu.vector_store %arg13[%c5_124, %c8_125, %c0_126, %c0_127], %84 {strides = array<i32>} : memref<7x22x16x128xf32, #tpu.memory_space<vmem>>, vector<1x8x16x128xf32>,
    %c0_128 = arith.constant 0 : index
    %c16_129 = arith.constant 16 : index
    %c5_130 = arith.constant 5 : index
    %c0_131 = arith.constant 0 : index
    %85 = vector.load %arg1[%c0_128, %c16_129, %c5_130, %c0_131] : memref<1x22x22x128xf32, #tpu.memory_space<vmem>>, vector<1x6x16x128xf32>
    %86 = vector.shape_cast %85 : vector<1x6x16x128xf32> to vector<6x16x128xf32>
    %c5_132 = arith.constant 5 : index
    %c16_133 = arith.constant 16 : index
    %c0_134 = arith.constant 0 : index
    %c0_135 = arith.constant 0 : index
    %87 = vector.load %arg13[%c5_132, %c16_133, %c0_134, %c0_135] : memref<7x22x16x128xf32, #tpu.memory_space<vmem>>, vector<1x6x16x128xf32>
    %88 = vector.shape_cast %87 : vector<1x6x16x128xf32> to vector<6x16x128xf32>
    %89 = vector.shape_cast %86 : vector<6x16x128xf32> to vector<1x6x16x128xf32>
    tpu.vector_store %arg13[%c5_132, %c16_133, %c0_134, %c0_135], %89 {strides = array<i32>} : memref<7x22x16x128xf32, #tpu.memory_space<vmem>>, vector<1x6x16x128xf32>,
    %c0_136 = arith.constant 0 : index
    %c0_137 = arith.constant 0 : index
    %c6 = arith.constant 6 : index
    %c0_138 = arith.constant 0 : index
    %90 = vector.load %arg1[%c0_136, %c0_137, %c6, %c0_138] : memref<1x22x22x128xf32, #tpu.memory_space<vmem>>, vector<1x8x16x128xf32>
    %91 = vector.shape_cast %90 : vector<1x8x16x128xf32> to vector<8x16x128xf32>
    %c6_139 = arith.constant 6 : index
    %c0_140 = arith.constant 0 : index
    %c0_141 = arith.constant 0 : index
    %c0_142 = arith.constant 0 : index
    %92 = vector.load %arg13[%c6_139, %c0_140, %c0_141, %c0_142] : memref<7x22x16x128xf32, #tpu.memory_space<vmem>>, vector<1x8x16x128xf32>
    %93 = vector.shape_cast %92 : vector<1x8x16x128xf32> to vector<8x16x128xf32>
    %94 = vector.shape_cast %91 : vector<8x16x128xf32> to vector<1x8x16x128xf32>
    tpu.vector_store %arg13[%c6_139, %c0_140, %c0_141, %c0_142], %94 {strides = array<i32>} : memref<7x22x16x128xf32, #tpu.memory_space<vmem>>, vector<1x8x16x128xf32>,
    %c0_143 = arith.constant 0 : index
    %c8_144 = arith.constant 8 : index
    %c6_145 = arith.constant 6 : index
    %c0_146 = arith.constant 0 : index
    %95 = vector.load %arg1[%c0_143, %c8_144, %c6_145, %c0_146] : memref<1x22x22x128xf32, #tpu.memory_space<vmem>>, vector<1x8x16x128xf32>
    %96 = vector.shape_cast %95 : vector<1x8x16x128xf32> to vector<8x16x128xf32>
    %c6_147 = arith.constant 6 : index
    %c8_148 = arith.constant 8 : index
    %c0_149 = arith.constant 0 : index
    %c0_150 = arith.constant 0 : index
    %97 = vector.load %arg13[%c6_147, %c8_148, %c0_149, %c0_150] : memref<7x22x16x128xf32, #tpu.memory_space<vmem>>, vector<1x8x16x128xf32>
    %98 = vector.shape_cast %97 : vector<1x8x16x128xf32> to vector<8x16x128xf32>
    %99 = vector.shape_cast %96 : vector<8x16x128xf32> to vector<1x8x16x128xf32>
    tpu.vector_store %arg13[%c6_147, %c8_148, %c0_149, %c0_150], %99 {strides = array<i32>} : memref<7x22x16x128xf32, #tpu.memory_space<vmem>>, vector<1x8x16x128xf32>,
    %c0_151 = arith.constant 0 : index
    %c16_152 = arith.constant 16 : index
    %c6_153 = arith.constant 6 : index
    %c0_154 = arith.constant 0 : index
    %100 = vector.load %arg1[%c0_151, %c16_152, %c6_153, %c0_154] : memref<1x22x22x128xf32, #tpu.memory_space<vmem>>, vector<1x6x16x128xf32>
    %101 = vector.shape_cast %100 : vector<1x6x16x128xf32> to vector<6x16x128xf32>
    %c6_155 = arith.constant 6 : index
    %c16_156 = arith.constant 16 : index
    %c0_157 = arith.constant 0 : index
    %c0_158 = arith.constant 0 : index
    %102 = vector.load %arg13[%c6_155, %c16_156, %c0_157, %c0_158] : memref<7x22x16x128xf32, #tpu.memory_space<vmem>>, vector<1x6x16x128xf32>
    %103 = vector.shape_cast %102 : vector<1x6x16x128xf32> to vector<6x16x128xf32>
    %104 = vector.shape_cast %101 : vector<6x16x128xf32> to vector<1x6x16x128xf32>
    tpu.vector_store %arg13[%c6_155, %c16_156, %c0_157, %c0_158], %104 {strides = array<i32>} : memref<7x22x16x128xf32, #tpu.memory_space<vmem>>, vector<1x6x16x128xf32>,
    %cst = arith.constant 0.000000e+00 : f32
    %105 = vector.broadcast %cst : f32 to vector<1x128xf32>
    %c0_159 = arith.constant 0 : index
    %c0_160 = arith.constant 0 : index
    %106 = vector.load %arg15[%c0_159, %c0_160] : memref<1x128xf32, #tpu.memory_space<vmem>>, vector<1x128xf32>
    tpu.vector_store %arg15[%c0_159, %c0_160], %105 {strides = array<i32>} : memref<1x128xf32, #tpu.memory_space<vmem>>, vector<1x128xf32>,
    %c0_161 = arith.constant 0 : index
    %c0_162 = arith.constant 0 : index
    %107 = vector.load %arg6[%c0_161, %c0_162] : memref<4x128xf32, #tpu.memory_space<vmem>>, vector<4x128xf32>
    %c0_163 = arith.constant 0 : index
    %c0_164 = arith.constant 0 : index
    %108 = vector.load %arg7[%c0_163, %c0_164] : memref<4x128xf32, #tpu.memory_space<vmem>>, vector<4x128xf32>
    %c0_i32 = arith.constant 0 : i32
    %c4_i32 = arith.constant 4 : i32
    %109 = arith.addi %c0_i32, %c4_i32 : i32
    %c1_i32 = arith.constant 1 : i32
    scf.for %arg16 = %c0_i32 to %109 step %c1_i32  : i32 {
      %c4_i32_202 = arith.constant 4 : i32
      %156 = arith.muli %arg16, %c4_i32_202 : i32
      %c3_i32 = arith.constant 3 : i32
      %157 = arith.addi %c3_i32, %156 : i32
      %c3_203 = arith.constant 3 : index
      %158 = arith.index_cast %157 : i32 to index
      %c0_204 = arith.constant 0 : index
      %c0_205 = arith.constant 0 : index
      %159 = vector.load %arg13[%c3_203, %158, %c0_204, %c0_205] : memref<7x22x16x128xf32, #tpu.memory_space<vmem>>, vector<1x4x16x128xf32>
      %160 = vector.shape_cast %159 : vector<1x4x16x128xf32> to vector<4x16x128xf32>
      %161 = vector.shape_cast %160 : vector<4x16x128xf32> to vector<64x128xf32>
      %c0_206 = arith.constant 0 : index
      %c0_207 = arith.constant 0 : index
      %162 = vector.load %arg2[%c0_206, %c0_207] : memref<128x128xf32, #tpu.memory_space<vmem>>, vector<128x128xf32>
      %cst_208 = arith.constant dense<0.000000e+00> : vector<64x128xf32>
      %163 = tpu.matmul %161, %162, %cst_208 {dimension_numbers = #tpu.dot_dimension_numbers<[1], [0], [0], [1], [0, 0, 1, 1], [], []>} : vector<64x128xf32>, vector<128x128xf32>, vector<64x128xf32> -> vector<64x128xf32>
      %c0_209 = arith.constant 0 : index
      %c0_210 = arith.constant 0 : index
      %164 = vector.load %arg3[%c0_209, %c0_210] : memref<1x128xf32, #tpu.memory_space<vmem>>, vector<1x128xf32>
      %165 = vector.broadcast %164 : vector<1x128xf32> to vector<64x128xf32>
      %166 = arith.addf %163, %165 : vector<64x128xf32>
      %cst_211 = arith.constant 0.000000e+00 : f32
      %167 = vector.broadcast %cst_211 : f32 to vector<64x128xf32>
      %168 = arith.maximumf %166, %167 : vector<64x128xf32>
      %c0_212 = arith.constant 0 : index
      %c0_213 = arith.constant 0 : index
      %169 = vector.load %arg4[%c0_212, %c0_213] : memref<128x128xf32, #tpu.memory_space<vmem>>, vector<128x128xf32>
      %cst_214 = arith.constant dense<0.000000e+00> : vector<64x128xf32>
      %170 = tpu.matmul %168, %169, %cst_214 {dimension_numbers = #tpu.dot_dimension_numbers<[1], [0], [0], [1], [0, 0, 1, 1], [], []>} : vector<64x128xf32>, vector<128x128xf32>, vector<64x128xf32> -> vector<64x128xf32>
      %c0_215 = arith.constant 0 : index
      %c0_216 = arith.constant 0 : index
      %171 = vector.load %arg5[%c0_215, %c0_216] : memref<1x128xf32, #tpu.memory_space<vmem>>, vector<1x128xf32>
      %172 = vector.broadcast %171 : vector<1x128xf32> to vector<64x128xf32>
      %173 = arith.addf %170, %172 : vector<64x128xf32>
      %174 = vector.shape_cast %173 : vector<64x128xf32> to vector<4x16x128xf32>
      %cst_217 = arith.constant 0.000000e+00 : f32
      %175 = vector.broadcast %cst_217 : f32 to vector<4x16x128xf32>
      %176 = vector.extract_strided_slice %174 {offsets = [0, 0, 0], sizes = [4, 16, 1], strides = [1, 1, 1]} : vector<4x16x128xf32> to vector<4x16x1xf32>
      %c3_i32_218 = arith.constant 3 : i32
      %177 = arith.addi %c3_i32_218, %156 : i32
      %c3_219 = arith.constant 3 : index
      %178 = arith.index_cast %177 : i32 to index
      %c0_220 = arith.constant 0 : index
      %c0_221 = arith.constant 0 : index
      %179 = vector.load %arg13[%c3_219, %178, %c0_220, %c0_221] : memref<7x22x16x128xf32, #tpu.memory_space<vmem>>, vector<1x4x16x128xf32>
      %180 = vector.shape_cast %179 : vector<1x4x16x128xf32> to vector<4x16x128xf32>
      %181 = vector.broadcast %176 : vector<4x16x1xf32> to vector<4x16x128xf32>
      %182 = arith.mulf %181, %180 : vector<4x16x128xf32>
      %183 = arith.addf %175, %182 : vector<4x16x128xf32>
      %184 = vector.extract_strided_slice %107 {offsets = [0, 0], sizes = [1, 128], strides = [1, 1]} : vector<4x128xf32> to vector<1x128xf32>
      %185 = vector.shape_cast %184 : vector<1x128xf32> to vector<1x1x128xf32>
      %186 = vector.broadcast %185 : vector<1x1x128xf32> to vector<4x16x128xf32>
      %187 = arith.mulf %183, %186 : vector<4x16x128xf32>
      %188 = vector.extract_strided_slice %108 {offsets = [0, 0], sizes = [1, 128], strides = [1, 1]} : vector<4x128xf32> to vector<1x128xf32>
      %189 = vector.shape_cast %188 : vector<1x128xf32> to vector<1x1x128xf32>
      %190 = vector.broadcast %189 : vector<1x1x128xf32> to vector<4x16x128xf32>
      %191 = arith.addf %187, %190 : vector<4x16x128xf32>
      %cst_222 = arith.constant 0.000000e+00 : f32
      %192 = vector.broadcast %cst_222 : f32 to vector<4x16x128xf32>
      %193 = arith.maximumf %191, %192 : vector<4x16x128xf32>
      %c0_223 = arith.constant 0 : index
      %194 = arith.index_cast %156 : i32 to index
      %c0_224 = arith.constant 0 : index
      %c0_225 = arith.constant 0 : index
      %195 = vector.load %arg14[%c0_223, %194, %c0_224, %c0_225] : memref<4x16x16x128xf32, #tpu.memory_space<vmem>>, vector<1x4x16x128xf32>
      %196 = vector.shape_cast %195 : vector<1x4x16x128xf32> to vector<4x16x128xf32>
      %197 = vector.shape_cast %193 : vector<4x16x128xf32> to vector<1x4x16x128xf32>
      tpu.vector_store %arg14[%c0_223, %194, %c0_224, %c0_225], %197 {strides = array<i32>} : memref<4x16x16x128xf32, #tpu.memory_space<vmem>>, vector<1x4x16x128xf32>,
      %c0_226 = arith.constant 0 : index
      %c0_227 = arith.constant 0 : index
      %198 = vector.load %arg15[%c0_226, %c0_227] : memref<1x128xf32, #tpu.memory_space<vmem>>, vector<1x128xf32>
      %199 = vector.shape_cast %193 : vector<4x16x128xf32> to vector<64x128xf32>
      %cst_228 = arith.constant dense<0.000000e+00> : vector<128xf32>
      %200 = vector.multi_reduction <add>, %199, %cst_228 [0] : vector<64x128xf32> to vector<128xf32>
      %201 = vector.shape_cast %200 : vector<128xf32> to vector<1x128xf32>
      %202 = arith.addf %198, %201 : vector<1x128xf32>
      %c0_229 = arith.constant 0 : index
      %c0_230 = arith.constant 0 : index
      %203 = vector.load %arg15[%c0_229, %c0_230] : memref<1x128xf32, #tpu.memory_space<vmem>>, vector<1x128xf32>
      tpu.vector_store %arg15[%c0_229, %c0_230], %202 {strides = array<i32>} : memref<1x128xf32, #tpu.memory_space<vmem>>, vector<1x128xf32>,
      %cst_231 = arith.constant 0.000000e+00 : f32
      %204 = vector.broadcast %cst_231 : f32 to vector<4x16x128xf32>
      %205 = vector.extract_strided_slice %174 {offsets = [0, 0, 1], sizes = [4, 16, 1], strides = [1, 1, 1]} : vector<4x16x128xf32> to vector<4x16x1xf32>
      %c2_i32 = arith.constant 2 : i32
      %206 = arith.addi %c2_i32, %156 : i32
      %c2_232 = arith.constant 2 : index
      %207 = arith.index_cast %206 : i32 to index
      %c0_233 = arith.constant 0 : index
      %c0_234 = arith.constant 0 : index
      %208 = vector.load %arg13[%c2_232, %207, %c0_233, %c0_234] : memref<7x22x16x128xf32, #tpu.memory_space<vmem>>, vector<1x4x16x128xf32>
      %209 = vector.shape_cast %208 : vector<1x4x16x128xf32> to vector<4x16x128xf32>
      %210 = vector.broadcast %205 : vector<4x16x1xf32> to vector<4x16x128xf32>
      %211 = arith.mulf %210, %209 : vector<4x16x128xf32>
      %212 = arith.addf %204, %211 : vector<4x16x128xf32>
      %213 = vector.extract_strided_slice %174 {offsets = [0, 0, 2], sizes = [4, 16, 1], strides = [1, 1, 1]} : vector<4x16x128xf32> to vector<4x16x1xf32>
      %c2_i32_235 = arith.constant 2 : i32
      %214 = arith.addi %c2_i32_235, %156 : i32
      %c3_236 = arith.constant 3 : index
      %215 = arith.index_cast %214 : i32 to index
      %c0_237 = arith.constant 0 : index
      %c0_238 = arith.constant 0 : index
      %216 = vector.load %arg13[%c3_236, %215, %c0_237, %c0_238] : memref<7x22x16x128xf32, #tpu.memory_space<vmem>>, vector<1x4x16x128xf32>
      %217 = vector.shape_cast %216 : vector<1x4x16x128xf32> to vector<4x16x128xf32>
      %218 = vector.broadcast %213 : vector<4x16x1xf32> to vector<4x16x128xf32>
      %219 = arith.mulf %218, %217 : vector<4x16x128xf32>
      %220 = arith.addf %212, %219 : vector<4x16x128xf32>
      %221 = vector.extract_strided_slice %174 {offsets = [0, 0, 3], sizes = [4, 16, 1], strides = [1, 1, 1]} : vector<4x16x128xf32> to vector<4x16x1xf32>
      %c2_i32_239 = arith.constant 2 : i32
      %222 = arith.addi %c2_i32_239, %156 : i32
      %c4_240 = arith.constant 4 : index
      %223 = arith.index_cast %222 : i32 to index
      %c0_241 = arith.constant 0 : index
      %c0_242 = arith.constant 0 : index
      %224 = vector.load %arg13[%c4_240, %223, %c0_241, %c0_242] : memref<7x22x16x128xf32, #tpu.memory_space<vmem>>, vector<1x4x16x128xf32>
      %225 = vector.shape_cast %224 : vector<1x4x16x128xf32> to vector<4x16x128xf32>
      %226 = vector.broadcast %221 : vector<4x16x1xf32> to vector<4x16x128xf32>
      %227 = arith.mulf %226, %225 : vector<4x16x128xf32>
      %228 = arith.addf %220, %227 : vector<4x16x128xf32>
      %229 = vector.extract_strided_slice %174 {offsets = [0, 0, 4], sizes = [4, 16, 1], strides = [1, 1, 1]} : vector<4x16x128xf32> to vector<4x16x1xf32>
      %c3_i32_243 = arith.constant 3 : i32
      %230 = arith.addi %c3_i32_243, %156 : i32
      %c2_244 = arith.constant 2 : index
      %231 = arith.index_cast %230 : i32 to index
      %c0_245 = arith.constant 0 : index
      %c0_246 = arith.constant 0 : index
      %232 = vector.load %arg13[%c2_244, %231, %c0_245, %c0_246] : memref<7x22x16x128xf32, #tpu.memory_space<vmem>>, vector<1x4x16x128xf32>
      %233 = vector.shape_cast %232 : vector<1x4x16x128xf32> to vector<4x16x128xf32>
      %234 = vector.broadcast %229 : vector<4x16x1xf32> to vector<4x16x128xf32>
      %235 = arith.mulf %234, %233 : vector<4x16x128xf32>
      %236 = arith.addf %228, %235 : vector<4x16x128xf32>
      %237 = vector.extract_strided_slice %174 {offsets = [0, 0, 5], sizes = [4, 16, 1], strides = [1, 1, 1]} : vector<4x16x128xf32> to vector<4x16x1xf32>
      %c3_i32_247 = arith.constant 3 : i32
      %238 = arith.addi %c3_i32_247, %156 : i32
      %c3_248 = arith.constant 3 : index
      %239 = arith.index_cast %238 : i32 to index
      %c0_249 = arith.constant 0 : index
      %c0_250 = arith.constant 0 : index
      %240 = vector.load %arg13[%c3_248, %239, %c0_249, %c0_250] : memref<7x22x16x128xf32, #tpu.memory_space<vmem>>, vector<1x4x16x128xf32>
      %241 = vector.shape_cast %240 : vector<1x4x16x128xf32> to vector<4x16x128xf32>
      %242 = vector.broadcast %237 : vector<4x16x1xf32> to vector<4x16x128xf32>
      %243 = arith.mulf %242, %241 : vector<4x16x128xf32>
      %244 = arith.addf %236, %243 : vector<4x16x128xf32>
      %245 = vector.extract_strided_slice %174 {offsets = [0, 0, 6], sizes = [4, 16, 1], strides = [1, 1, 1]} : vector<4x16x128xf32> to vector<4x16x1xf32>
      %c3_i32_251 = arith.constant 3 : i32
      %246 = arith.addi %c3_i32_251, %156 : i32
      %c4_252 = arith.constant 4 : index
      %247 = arith.index_cast %246 : i32 to index
      %c0_253 = arith.constant 0 : index
      %c0_254 = arith.constant 0 : index
      %248 = vector.load %arg13[%c4_252, %247, %c0_253, %c0_254] : memref<7x22x16x128xf32, #tpu.memory_space<vmem>>, vector<1x4x16x128xf32>
      %249 = vector.shape_cast %248 : vector<1x4x16x128xf32> to vector<4x16x128xf32>
      %250 = vector.broadcast %245 : vector<4x16x1xf32> to vector<4x16x128xf32>
      %251 = arith.mulf %250, %249 : vector<4x16x128xf32>
      %252 = arith.addf %244, %251 : vector<4x16x128xf32>
      %253 = vector.extract_strided_slice %174 {offsets = [0, 0, 7], sizes = [4, 16, 1], strides = [1, 1, 1]} : vector<4x16x128xf32> to vector<4x16x1xf32>
      %c4_i32_255 = arith.constant 4 : i32
      %254 = arith.addi %c4_i32_255, %156 : i32
      %c2_256 = arith.constant 2 : index
      %255 = arith.index_cast %254 : i32 to index
      %c0_257 = arith.constant 0 : index
      %c0_258 = arith.constant 0 : index
      %256 = vector.load %arg13[%c2_256, %255, %c0_257, %c0_258] : memref<7x22x16x128xf32, #tpu.memory_space<vmem>>, vector<1x4x16x128xf32>
      %257 = vector.shape_cast %256 : vector<1x4x16x128xf32> to vector<4x16x128xf32>
      %258 = vector.broadcast %253 : vector<4x16x1xf32> to vector<4x16x128xf32>
      %259 = arith.mulf %258, %257 : vector<4x16x128xf32>
      %260 = arith.addf %252, %259 : vector<4x16x128xf32>
      %261 = vector.extract_strided_slice %174 {offsets = [0, 0, 8], sizes = [4, 16, 1], strides = [1, 1, 1]} : vector<4x16x128xf32> to vector<4x16x1xf32>
      %c4_i32_259 = arith.constant 4 : i32
      %262 = arith.addi %c4_i32_259, %156 : i32
      %c3_260 = arith.constant 3 : index
      %263 = arith.index_cast %262 : i32 to index
      %c0_261 = arith.constant 0 : index
      %c0_262 = arith.constant 0 : index
      %264 = vector.load %arg13[%c3_260, %263, %c0_261, %c0_262] : memref<7x22x16x128xf32, #tpu.memory_space<vmem>>, vector<1x4x16x128xf32>
      %265 = vector.shape_cast %264 : vector<1x4x16x128xf32> to vector<4x16x128xf32>
      %266 = vector.broadcast %261 : vector<4x16x1xf32> to vector<4x16x128xf32>
      %267 = arith.mulf %266, %265 : vector<4x16x128xf32>
      %268 = arith.addf %260, %267 : vector<4x16x128xf32>
      %269 = vector.extract_strided_slice %174 {offsets = [0, 0, 9], sizes = [4, 16, 1], strides = [1, 1, 1]} : vector<4x16x128xf32> to vector<4x16x1xf32>
      %c4_i32_263 = arith.constant 4 : i32
      %270 = arith.addi %c4_i32_263, %156 : i32
      %c4_264 = arith.constant 4 : index
      %271 = arith.index_cast %270 : i32 to index
      %c0_265 = arith.constant 0 : index
      %c0_266 = arith.constant 0 : index
      %272 = vector.load %arg13[%c4_264, %271, %c0_265, %c0_266] : memref<7x22x16x128xf32, #tpu.memory_space<vmem>>, vector<1x4x16x128xf32>
      %273 = vector.shape_cast %272 : vector<1x4x16x128xf32> to vector<4x16x128xf32>
      %274 = vector.broadcast %269 : vector<4x16x1xf32> to vector<4x16x128xf32>
      %275 = arith.mulf %274, %273 : vector<4x16x128xf32>
      %276 = arith.addf %268, %275 : vector<4x16x128xf32>
      %277 = vector.extract_strided_slice %107 {offsets = [1, 0], sizes = [1, 128], strides = [1, 1]} : vector<4x128xf32> to vector<1x128xf32>
      %278 = vector.shape_cast %277 : vector<1x128xf32> to vector<1x1x128xf32>
      %279 = vector.broadcast %278 : vector<1x1x128xf32> to vector<4x16x128xf32>
      %280 = arith.mulf %276, %279 : vector<4x16x128xf32>
      %281 = vector.extract_strided_slice %108 {offsets = [1, 0], sizes = [1, 128], strides = [1, 1]} : vector<4x128xf32> to vector<1x128xf32>
      %282 = vector.shape_cast %281 : vector<1x128xf32> to vector<1x1x128xf32>
      %283 = vector.broadcast %282 : vector<1x1x128xf32> to vector<4x16x128xf32>
      %284 = arith.addf %280, %283 : vector<4x16x128xf32>
      %cst_267 = arith.constant 0.000000e+00 : f32
      %285 = vector.broadcast %cst_267 : f32 to vector<4x16x128xf32>
      %286 = arith.maximumf %284, %285 : vector<4x16x128xf32>
      %c1_268 = arith.constant 1 : index
      %287 = arith.index_cast %156 : i32 to index
      %c0_269 = arith.constant 0 : index
      %c0_270 = arith.constant 0 : index
      %288 = vector.load %arg14[%c1_268, %287, %c0_269, %c0_270] : memref<4x16x16x128xf32, #tpu.memory_space<vmem>>, vector<1x4x16x128xf32>
      %289 = vector.shape_cast %288 : vector<1x4x16x128xf32> to vector<4x16x128xf32>
      %290 = vector.shape_cast %286 : vector<4x16x128xf32> to vector<1x4x16x128xf32>
      tpu.vector_store %arg14[%c1_268, %287, %c0_269, %c0_270], %290 {strides = array<i32>} : memref<4x16x16x128xf32, #tpu.memory_space<vmem>>, vector<1x4x16x128xf32>,
      %c0_271 = arith.constant 0 : index
      %c0_272 = arith.constant 0 : index
      %291 = vector.load %arg15[%c0_271, %c0_272] : memref<1x128xf32, #tpu.memory_space<vmem>>, vector<1x128xf32>
      %292 = vector.shape_cast %286 : vector<4x16x128xf32> to vector<64x128xf32>
      %cst_273 = arith.constant dense<0.000000e+00> : vector<128xf32>
      %293 = vector.multi_reduction <add>, %292, %cst_273 [0] : vector<64x128xf32> to vector<128xf32>
      %294 = vector.shape_cast %293 : vector<128xf32> to vector<1x128xf32>
      %295 = arith.addf %291, %294 : vector<1x128xf32>
      %c0_274 = arith.constant 0 : index
      %c0_275 = arith.constant 0 : index
      %296 = vector.load %arg15[%c0_274, %c0_275] : memref<1x128xf32, #tpu.memory_space<vmem>>, vector<1x128xf32>
      tpu.vector_store %arg15[%c0_274, %c0_275], %295 {strides = array<i32>} : memref<1x128xf32, #tpu.memory_space<vmem>>, vector<1x128xf32>,
      %cst_276 = arith.constant 0.000000e+00 : f32
      %297 = vector.broadcast %cst_276 : f32 to vector<4x16x128xf32>
      %298 = vector.extract_strided_slice %174 {offsets = [0, 0, 10], sizes = [4, 16, 1], strides = [1, 1, 1]} : vector<4x16x128xf32> to vector<4x16x1xf32>
      %c1_i32_277 = arith.constant 1 : i32
      %299 = arith.addi %c1_i32_277, %156 : i32
      %c1_278 = arith.constant 1 : index
      %300 = arith.index_cast %299 : i32 to index
      %c0_279 = arith.constant 0 : index
      %c0_280 = arith.constant 0 : index
      %301 = vector.load %arg13[%c1_278, %300, %c0_279, %c0_280] : memref<7x22x16x128xf32, #tpu.memory_space<vmem>>, vector<1x4x16x128xf32>
      %302 = vector.shape_cast %301 : vector<1x4x16x128xf32> to vector<4x16x128xf32>
      %303 = vector.broadcast %298 : vector<4x16x1xf32> to vector<4x16x128xf32>
      %304 = arith.mulf %303, %302 : vector<4x16x128xf32>
      %305 = arith.addf %297, %304 : vector<4x16x128xf32>
      %306 = vector.extract_strided_slice %174 {offsets = [0, 0, 11], sizes = [4, 16, 1], strides = [1, 1, 1]} : vector<4x16x128xf32> to vector<4x16x1xf32>
      %c1_i32_281 = arith.constant 1 : i32
      %307 = arith.addi %c1_i32_281, %156 : i32
      %c2_282 = arith.constant 2 : index
      %308 = arith.index_cast %307 : i32 to index
      %c0_283 = arith.constant 0 : index
      %c0_284 = arith.constant 0 : index
      %309 = vector.load %arg13[%c2_282, %308, %c0_283, %c0_284] : memref<7x22x16x128xf32, #tpu.memory_space<vmem>>, vector<1x4x16x128xf32>
      %310 = vector.shape_cast %309 : vector<1x4x16x128xf32> to vector<4x16x128xf32>
      %311 = vector.broadcast %306 : vector<4x16x1xf32> to vector<4x16x128xf32>
      %312 = arith.mulf %311, %310 : vector<4x16x128xf32>
      %313 = arith.addf %305, %312 : vector<4x16x128xf32>
      %314 = vector.extract_strided_slice %174 {offsets = [0, 0, 12], sizes = [4, 16, 1], strides = [1, 1, 1]} : vector<4x16x128xf32> to vector<4x16x1xf32>
      %c1_i32_285 = arith.constant 1 : i32
      %315 = arith.addi %c1_i32_285, %156 : i32
      %c3_286 = arith.constant 3 : index
      %316 = arith.index_cast %315 : i32 to index
      %c0_287 = arith.constant 0 : index
      %c0_288 = arith.constant 0 : index
      %317 = vector.load %arg13[%c3_286, %316, %c0_287, %c0_288] : memref<7x22x16x128xf32, #tpu.memory_space<vmem>>, vector<1x4x16x128xf32>
      %318 = vector.shape_cast %317 : vector<1x4x16x128xf32> to vector<4x16x128xf32>
      %319 = vector.broadcast %314 : vector<4x16x1xf32> to vector<4x16x128xf32>
      %320 = arith.mulf %319, %318 : vector<4x16x128xf32>
      %321 = arith.addf %313, %320 : vector<4x16x128xf32>
      %322 = vector.extract_strided_slice %174 {offsets = [0, 0, 13], sizes = [4, 16, 1], strides = [1, 1, 1]} : vector<4x16x128xf32> to vector<4x16x1xf32>
      %c1_i32_289 = arith.constant 1 : i32
      %323 = arith.addi %c1_i32_289, %156 : i32
      %c4_290 = arith.constant 4 : index
      %324 = arith.index_cast %323 : i32 to index
      %c0_291 = arith.constant 0 : index
      %c0_292 = arith.constant 0 : index
      %325 = vector.load %arg13[%c4_290, %324, %c0_291, %c0_292] : memref<7x22x16x128xf32, #tpu.memory_space<vmem>>, vector<1x4x16x128xf32>
      %326 = vector.shape_cast %325 : vector<1x4x16x128xf32> to vector<4x16x128xf32>
      %327 = vector.broadcast %322 : vector<4x16x1xf32> to vector<4x16x128xf32>
      %328 = arith.mulf %327, %326 : vector<4x16x128xf32>
      %329 = arith.addf %321, %328 : vector<4x16x128xf32>
      %330 = vector.extract_strided_slice %174 {offsets = [0, 0, 14], sizes = [4, 16, 1], strides = [1, 1, 1]} : vector<4x16x128xf32> to vector<4x16x1xf32>
      %c1_i32_293 = arith.constant 1 : i32
      %331 = arith.addi %c1_i32_293, %156 : i32
      %c5_294 = arith.constant 5 : index
      %332 = arith.index_cast %331 : i32 to index
      %c0_295 = arith.constant 0 : index
      %c0_296 = arith.constant 0 : index
      %333 = vector.load %arg13[%c5_294, %332, %c0_295, %c0_296] : memref<7x22x16x128xf32, #tpu.memory_space<vmem>>, vector<1x4x16x128xf32>
      %334 = vector.shape_cast %333 : vector<1x4x16x128xf32> to vector<4x16x128xf32>
      %335 = vector.broadcast %330 : vector<4x16x1xf32> to vector<4x16x128xf32>
      %336 = arith.mulf %335, %334 : vector<4x16x128xf32>
      %337 = arith.addf %329, %336 : vector<4x16x128xf32>
      %338 = vector.extract_strided_slice %174 {offsets = [0, 0, 15], sizes = [4, 16, 1], strides = [1, 1, 1]} : vector<4x16x128xf32> to vector<4x16x1xf32>
      %c2_i32_297 = arith.constant 2 : i32
      %339 = arith.addi %c2_i32_297, %156 : i32
      %c1_298 = arith.constant 1 : index
      %340 = arith.index_cast %339 : i32 to index
      %c0_299 = arith.constant 0 : index
      %c0_300 = arith.constant 0 : index
      %341 = vector.load %arg13[%c1_298, %340, %c0_299, %c0_300] : memref<7x22x16x128xf32, #tpu.memory_space<vmem>>, vector<1x4x16x128xf32>
      %342 = vector.shape_cast %341 : vector<1x4x16x128xf32> to vector<4x16x128xf32>
      %343 = vector.broadcast %338 : vector<4x16x1xf32> to vector<4x16x128xf32>
      %344 = arith.mulf %343, %342 : vector<4x16x128xf32>
      %345 = arith.addf %337, %344 : vector<4x16x128xf32>
      %346 = vector.extract_strided_slice %174 {offsets = [0, 0, 16], sizes = [4, 16, 1], strides = [1, 1, 1]} : vector<4x16x128xf32> to vector<4x16x1xf32>
      %c2_i32_301 = arith.constant 2 : i32
      %347 = arith.addi %c2_i32_301, %156 : i32
      %c2_302 = arith.constant 2 : index
      %348 = arith.index_cast %347 : i32 to index
      %c0_303 = arith.constant 0 : index
      %c0_304 = arith.constant 0 : index
      %349 = vector.load %arg13[%c2_302, %348, %c0_303, %c0_304] : memref<7x22x16x128xf32, #tpu.memory_space<vmem>>, vector<1x4x16x128xf32>
      %350 = vector.shape_cast %349 : vector<1x4x16x128xf32> to vector<4x16x128xf32>
      %351 = vector.broadcast %346 : vector<4x16x1xf32> to vector<4x16x128xf32>
      %352 = arith.mulf %351, %350 : vector<4x16x128xf32>
      %353 = arith.addf %345, %352 : vector<4x16x128xf32>
      %354 = vector.extract_strided_slice %174 {offsets = [0, 0, 17], sizes = [4, 16, 1], strides = [1, 1, 1]} : vector<4x16x128xf32> to vector<4x16x1xf32>
      %c2_i32_305 = arith.constant 2 : i32
      %355 = arith.addi %c2_i32_305, %156 : i32
      %c3_306 = arith.constant 3 : index
      %356 = arith.index_cast %355 : i32 to index
      %c0_307 = arith.constant 0 : index
      %c0_308 = arith.constant 0 : index
      %357 = vector.load %arg13[%c3_306, %356, %c0_307, %c0_308] : memref<7x22x16x128xf32, #tpu.memory_space<vmem>>, vector<1x4x16x128xf32>
      %358 = vector.shape_cast %357 : vector<1x4x16x128xf32> to vector<4x16x128xf32>
      %359 = vector.broadcast %354 : vector<4x16x1xf32> to vector<4x16x128xf32>
      %360 = arith.mulf %359, %358 : vector<4x16x128xf32>
      %361 = arith.addf %353, %360 : vector<4x16x128xf32>
      %362 = vector.extract_strided_slice %174 {offsets = [0, 0, 18], sizes = [4, 16, 1], strides = [1, 1, 1]} : vector<4x16x128xf32> to vector<4x16x1xf32>
      %c2_i32_309 = arith.constant 2 : i32
      %363 = arith.addi %c2_i32_309, %156 : i32
      %c4_310 = arith.constant 4 : index
      %364 = arith.index_cast %363 : i32 to index
      %c0_311 = arith.constant 0 : index
      %c0_312 = arith.constant 0 : index
      %365 = vector.load %arg13[%c4_310, %364, %c0_311, %c0_312] : memref<7x22x16x128xf32, #tpu.memory_space<vmem>>, vector<1x4x16x128xf32>
      %366 = vector.shape_cast %365 : vector<1x4x16x128xf32> to vector<4x16x128xf32>
      %367 = vector.broadcast %362 : vector<4x16x1xf32> to vector<4x16x128xf32>
      %368 = arith.mulf %367, %366 : vector<4x16x128xf32>
      %369 = arith.addf %361, %368 : vector<4x16x128xf32>
      %370 = vector.extract_strided_slice %174 {offsets = [0, 0, 19], sizes = [4, 16, 1], strides = [1, 1, 1]} : vector<4x16x128xf32> to vector<4x16x1xf32>
      %c2_i32_313 = arith.constant 2 : i32
      %371 = arith.addi %c2_i32_313, %156 : i32
      %c5_314 = arith.constant 5 : index
      %372 = arith.index_cast %371 : i32 to index
      %c0_315 = arith.constant 0 : index
      %c0_316 = arith.constant 0 : index
      %373 = vector.load %arg13[%c5_314, %372, %c0_315, %c0_316] : memref<7x22x16x128xf32, #tpu.memory_space<vmem>>, vector<1x4x16x128xf32>
      %374 = vector.shape_cast %373 : vector<1x4x16x128xf32> to vector<4x16x128xf32>
      %375 = vector.broadcast %370 : vector<4x16x1xf32> to vector<4x16x128xf32>
      %376 = arith.mulf %375, %374 : vector<4x16x128xf32>
      %377 = arith.addf %369, %376 : vector<4x16x128xf32>
      %378 = vector.extract_strided_slice %174 {offsets = [0, 0, 20], sizes = [4, 16, 1], strides = [1, 1, 1]} : vector<4x16x128xf32> to vector<4x16x1xf32>
      %c3_i32_317 = arith.constant 3 : i32
      %379 = arith.addi %c3_i32_317, %156 : i32
      %c1_318 = arith.constant 1 : index
      %380 = arith.index_cast %379 : i32 to index
      %c0_319 = arith.constant 0 : index
      %c0_320 = arith.constant 0 : index
      %381 = vector.load %arg13[%c1_318, %380, %c0_319, %c0_320] : memref<7x22x16x128xf32, #tpu.memory_space<vmem>>, vector<1x4x16x128xf32>
      %382 = vector.shape_cast %381 : vector<1x4x16x128xf32> to vector<4x16x128xf32>
      %383 = vector.broadcast %378 : vector<4x16x1xf32> to vector<4x16x128xf32>
      %384 = arith.mulf %383, %382 : vector<4x16x128xf32>
      %385 = arith.addf %377, %384 : vector<4x16x128xf32>
      %386 = vector.extract_strided_slice %174 {offsets = [0, 0, 21], sizes = [4, 16, 1], strides = [1, 1, 1]} : vector<4x16x128xf32> to vector<4x16x1xf32>
      %c3_i32_321 = arith.constant 3 : i32
      %387 = arith.addi %c3_i32_321, %156 : i32
      %c2_322 = arith.constant 2 : index
      %388 = arith.index_cast %387 : i32 to index
      %c0_323 = arith.constant 0 : index
      %c0_324 = arith.constant 0 : index
      %389 = vector.load %arg13[%c2_322, %388, %c0_323, %c0_324] : memref<7x22x16x128xf32, #tpu.memory_space<vmem>>, vector<1x4x16x128xf32>
      %390 = vector.shape_cast %389 : vector<1x4x16x128xf32> to vector<4x16x128xf32>
      %391 = vector.broadcast %386 : vector<4x16x1xf32> to vector<4x16x128xf32>
      %392 = arith.mulf %391, %390 : vector<4x16x128xf32>
      %393 = arith.addf %385, %392 : vector<4x16x128xf32>
      %394 = vector.extract_strided_slice %174 {offsets = [0, 0, 22], sizes = [4, 16, 1], strides = [1, 1, 1]} : vector<4x16x128xf32> to vector<4x16x1xf32>
      %c3_i32_325 = arith.constant 3 : i32
      %395 = arith.addi %c3_i32_325, %156 : i32
      %c3_326 = arith.constant 3 : index
      %396 = arith.index_cast %395 : i32 to index
      %c0_327 = arith.constant 0 : index
      %c0_328 = arith.constant 0 : index
      %397 = vector.load %arg13[%c3_326, %396, %c0_327, %c0_328] : memref<7x22x16x128xf32, #tpu.memory_space<vmem>>, vector<1x4x16x128xf32>
      %398 = vector.shape_cast %397 : vector<1x4x16x128xf32> to vector<4x16x128xf32>
      %399 = vector.broadcast %394 : vector<4x16x1xf32> to vector<4x16x128xf32>
      %400 = arith.mulf %399, %398 : vector<4x16x128xf32>
      %401 = arith.addf %393, %400 : vector<4x16x128xf32>
      %402 = vector.extract_strided_slice %174 {offsets = [0, 0, 23], sizes = [4, 16, 1], strides = [1, 1, 1]} : vector<4x16x128xf32> to vector<4x16x1xf32>
      %c3_i32_329 = arith.constant 3 : i32
      %403 = arith.addi %c3_i32_329, %156 : i32
      %c4_330 = arith.constant 4 : index
      %404 = arith.index_cast %403 : i32 to index
      %c0_331 = arith.constant 0 : index
      %c0_332 = arith.constant 0 : index
      %405 = vector.load %arg13[%c4_330, %404, %c0_331, %c0_332] : memref<7x22x16x128xf32, #tpu.memory_space<vmem>>, vector<1x4x16x128xf32>
      %406 = vector.shape_cast %405 : vector<1x4x16x128xf32> to vector<4x16x128xf32>
      %407 = vector.broadcast %402 : vector<4x16x1xf32> to vector<4x16x128xf32>
      %408 = arith.mulf %407, %406 : vector<4x16x128xf32>
      %409 = arith.addf %401, %408 : vector<4x16x128xf32>
      %410 = vector.extract_strided_slice %174 {offsets = [0, 0, 24], sizes = [4, 16, 1], strides = [1, 1, 1]} : vector<4x16x128xf32> to vector<4x16x1xf32>
      %c3_i32_333 = arith.constant 3 : i32
      %411 = arith.addi %c3_i32_333, %156 : i32
      %c5_334 = arith.constant 5 : index
      %412 = arith.index_cast %411 : i32 to index
      %c0_335 = arith.constant 0 : index
      %c0_336 = arith.constant 0 : index
      %413 = vector.load %arg13[%c5_334, %412, %c0_335, %c0_336] : memref<7x22x16x128xf32, #tpu.memory_space<vmem>>, vector<1x4x16x128xf32>
      %414 = vector.shape_cast %413 : vector<1x4x16x128xf32> to vector<4x16x128xf32>
      %415 = vector.broadcast %410 : vector<4x16x1xf32> to vector<4x16x128xf32>
      %416 = arith.mulf %415, %414 : vector<4x16x128xf32>
      %417 = arith.addf %409, %416 : vector<4x16x128xf32>
      %418 = vector.extract_strided_slice %174 {offsets = [0, 0, 25], sizes = [4, 16, 1], strides = [1, 1, 1]} : vector<4x16x128xf32> to vector<4x16x1xf32>
      %c4_i32_337 = arith.constant 4 : i32
      %419 = arith.addi %c4_i32_337, %156 : i32
      %c1_338 = arith.constant 1 : index
      %420 = arith.index_cast %419 : i32 to index
      %c0_339 = arith.constant 0 : index
      %c0_340 = arith.constant 0 : index
      %421 = vector.load %arg13[%c1_338, %420, %c0_339, %c0_340] : memref<7x22x16x128xf32, #tpu.memory_space<vmem>>, vector<1x4x16x128xf32>
      %422 = vector.shape_cast %421 : vector<1x4x16x128xf32> to vector<4x16x128xf32>
      %423 = vector.broadcast %418 : vector<4x16x1xf32> to vector<4x16x128xf32>
      %424 = arith.mulf %423, %422 : vector<4x16x128xf32>
      %425 = arith.addf %417, %424 : vector<4x16x128xf32>
      %426 = vector.extract_strided_slice %174 {offsets = [0, 0, 26], sizes = [4, 16, 1], strides = [1, 1, 1]} : vector<4x16x128xf32> to vector<4x16x1xf32>
      %c4_i32_341 = arith.constant 4 : i32
      %427 = arith.addi %c4_i32_341, %156 : i32
      %c2_342 = arith.constant 2 : index
      %428 = arith.index_cast %427 : i32 to index
      %c0_343 = arith.constant 0 : index
      %c0_344 = arith.constant 0 : index
      %429 = vector.load %arg13[%c2_342, %428, %c0_343, %c0_344] : memref<7x22x16x128xf32, #tpu.memory_space<vmem>>, vector<1x4x16x128xf32>
      %430 = vector.shape_cast %429 : vector<1x4x16x128xf32> to vector<4x16x128xf32>
      %431 = vector.broadcast %426 : vector<4x16x1xf32> to vector<4x16x128xf32>
      %432 = arith.mulf %431, %430 : vector<4x16x128xf32>
      %433 = arith.addf %425, %432 : vector<4x16x128xf32>
      %434 = vector.extract_strided_slice %174 {offsets = [0, 0, 27], sizes = [4, 16, 1], strides = [1, 1, 1]} : vector<4x16x128xf32> to vector<4x16x1xf32>
      %c4_i32_345 = arith.constant 4 : i32
      %435 = arith.addi %c4_i32_345, %156 : i32
      %c3_346 = arith.constant 3 : index
      %436 = arith.index_cast %435 : i32 to index
      %c0_347 = arith.constant 0 : index
      %c0_348 = arith.constant 0 : index
      %437 = vector.load %arg13[%c3_346, %436, %c0_347, %c0_348] : memref<7x22x16x128xf32, #tpu.memory_space<vmem>>, vector<1x4x16x128xf32>
      %438 = vector.shape_cast %437 : vector<1x4x16x128xf32> to vector<4x16x128xf32>
      %439 = vector.broadcast %434 : vector<4x16x1xf32> to vector<4x16x128xf32>
      %440 = arith.mulf %439, %438 : vector<4x16x128xf32>
      %441 = arith.addf %433, %440 : vector<4x16x128xf32>
      %442 = vector.extract_strided_slice %174 {offsets = [0, 0, 28], sizes = [4, 16, 1], strides = [1, 1, 1]} : vector<4x16x128xf32> to vector<4x16x1xf32>
      %c4_i32_349 = arith.constant 4 : i32
      %443 = arith.addi %c4_i32_349, %156 : i32
      %c4_350 = arith.constant 4 : index
      %444 = arith.index_cast %443 : i32 to index
      %c0_351 = arith.constant 0 : index
      %c0_352 = arith.constant 0 : index
      %445 = vector.load %arg13[%c4_350, %444, %c0_351, %c0_352] : memref<7x22x16x128xf32, #tpu.memory_space<vmem>>, vector<1x4x16x128xf32>
      %446 = vector.shape_cast %445 : vector<1x4x16x128xf32> to vector<4x16x128xf32>
      %447 = vector.broadcast %442 : vector<4x16x1xf32> to vector<4x16x128xf32>
      %448 = arith.mulf %447, %446 : vector<4x16x128xf32>
      %449 = arith.addf %441, %448 : vector<4x16x128xf32>
      %450 = vector.extract_strided_slice %174 {offsets = [0, 0, 29], sizes = [4, 16, 1], strides = [1, 1, 1]} : vector<4x16x128xf32> to vector<4x16x1xf32>
      %c4_i32_353 = arith.constant 4 : i32
      %451 = arith.addi %c4_i32_353, %156 : i32
      %c5_354 = arith.constant 5 : index
      %452 = arith.index_cast %451 : i32 to index
      %c0_355 = arith.constant 0 : index
      %c0_356 = arith.constant 0 : index
      %453 = vector.load %arg13[%c5_354, %452, %c0_355, %c0_356] : memref<7x22x16x128xf32, #tpu.memory_space<vmem>>, vector<1x4x16x128xf32>
      %454 = vector.shape_cast %453 : vector<1x4x16x128xf32> to vector<4x16x128xf32>
      %455 = vector.broadcast %450 : vector<4x16x1xf32> to vector<4x16x128xf32>
      %456 = arith.mulf %455, %454 : vector<4x16x128xf32>
      %457 = arith.addf %449, %456 : vector<4x16x128xf32>
      %458 = vector.extract_strided_slice %174 {offsets = [0, 0, 30], sizes = [4, 16, 1], strides = [1, 1, 1]} : vector<4x16x128xf32> to vector<4x16x1xf32>
      %c5_i32 = arith.constant 5 : i32
      %459 = arith.addi %c5_i32, %156 : i32
      %c1_357 = arith.constant 1 : index
      %460 = arith.index_cast %459 : i32 to index
      %c0_358 = arith.constant 0 : index
      %c0_359 = arith.constant 0 : index
      %461 = vector.load %arg13[%c1_357, %460, %c0_358, %c0_359] : memref<7x22x16x128xf32, #tpu.memory_space<vmem>>, vector<1x4x16x128xf32>
      %462 = vector.shape_cast %461 : vector<1x4x16x128xf32> to vector<4x16x128xf32>
      %463 = vector.broadcast %458 : vector<4x16x1xf32> to vector<4x16x128xf32>
      %464 = arith.mulf %463, %462 : vector<4x16x128xf32>
      %465 = arith.addf %457, %464 : vector<4x16x128xf32>
      %466 = vector.extract_strided_slice %174 {offsets = [0, 0, 31], sizes = [4, 16, 1], strides = [1, 1, 1]} : vector<4x16x128xf32> to vector<4x16x1xf32>
      %c5_i32_360 = arith.constant 5 : i32
      %467 = arith.addi %c5_i32_360, %156 : i32
      %c2_361 = arith.constant 2 : index
      %468 = arith.index_cast %467 : i32 to index
      %c0_362 = arith.constant 0 : index
      %c0_363 = arith.constant 0 : index
      %469 = vector.load %arg13[%c2_361, %468, %c0_362, %c0_363] : memref<7x22x16x128xf32, #tpu.memory_space<vmem>>, vector<1x4x16x128xf32>
      %470 = vector.shape_cast %469 : vector<1x4x16x128xf32> to vector<4x16x128xf32>
      %471 = vector.broadcast %466 : vector<4x16x1xf32> to vector<4x16x128xf32>
      %472 = arith.mulf %471, %470 : vector<4x16x128xf32>
      %473 = arith.addf %465, %472 : vector<4x16x128xf32>
      %474 = vector.extract_strided_slice %174 {offsets = [0, 0, 32], sizes = [4, 16, 1], strides = [1, 1, 1]} : vector<4x16x128xf32> to vector<4x16x1xf32>
      %c5_i32_364 = arith.constant 5 : i32
      %475 = arith.addi %c5_i32_364, %156 : i32
      %c3_365 = arith.constant 3 : index
      %476 = arith.index_cast %475 : i32 to index
      %c0_366 = arith.constant 0 : index
      %c0_367 = arith.constant 0 : index
      %477 = vector.load %arg13[%c3_365, %476, %c0_366, %c0_367] : memref<7x22x16x128xf32, #tpu.memory_space<vmem>>, vector<1x4x16x128xf32>
      %478 = vector.shape_cast %477 : vector<1x4x16x128xf32> to vector<4x16x128xf32>
      %479 = vector.broadcast %474 : vector<4x16x1xf32> to vector<4x16x128xf32>
      %480 = arith.mulf %479, %478 : vector<4x16x128xf32>
      %481 = arith.addf %473, %480 : vector<4x16x128xf32>
      %482 = vector.extract_strided_slice %174 {offsets = [0, 0, 33], sizes = [4, 16, 1], strides = [1, 1, 1]} : vector<4x16x128xf32> to vector<4x16x1xf32>
      %c5_i32_368 = arith.constant 5 : i32
      %483 = arith.addi %c5_i32_368, %156 : i32
      %c4_369 = arith.constant 4 : index
      %484 = arith.index_cast %483 : i32 to index
      %c0_370 = arith.constant 0 : index
      %c0_371 = arith.constant 0 : index
      %485 = vector.load %arg13[%c4_369, %484, %c0_370, %c0_371] : memref<7x22x16x128xf32, #tpu.memory_space<vmem>>, vector<1x4x16x128xf32>
      %486 = vector.shape_cast %485 : vector<1x4x16x128xf32> to vector<4x16x128xf32>
      %487 = vector.broadcast %482 : vector<4x16x1xf32> to vector<4x16x128xf32>
      %488 = arith.mulf %487, %486 : vector<4x16x128xf32>
      %489 = arith.addf %481, %488 : vector<4x16x128xf32>
      %490 = vector.extract_strided_slice %174 {offsets = [0, 0, 34], sizes = [4, 16, 1], strides = [1, 1, 1]} : vector<4x16x128xf32> to vector<4x16x1xf32>
      %c5_i32_372 = arith.constant 5 : i32
      %491 = arith.addi %c5_i32_372, %156 : i32
      %c5_373 = arith.constant 5 : index
      %492 = arith.index_cast %491 : i32 to index
      %c0_374 = arith.constant 0 : index
      %c0_375 = arith.constant 0 : index
      %493 = vector.load %arg13[%c5_373, %492, %c0_374, %c0_375] : memref<7x22x16x128xf32, #tpu.memory_space<vmem>>, vector<1x4x16x128xf32>
      %494 = vector.shape_cast %493 : vector<1x4x16x128xf32> to vector<4x16x128xf32>
      %495 = vector.broadcast %490 : vector<4x16x1xf32> to vector<4x16x128xf32>
      %496 = arith.mulf %495, %494 : vector<4x16x128xf32>
      %497 = arith.addf %489, %496 : vector<4x16x128xf32>
      %498 = vector.extract_strided_slice %107 {offsets = [2, 0], sizes = [1, 128], strides = [1, 1]} : vector<4x128xf32> to vector<1x128xf32>
      %499 = vector.shape_cast %498 : vector<1x128xf32> to vector<1x1x128xf32>
      %500 = vector.broadcast %499 : vector<1x1x128xf32> to vector<4x16x128xf32>
      %501 = arith.mulf %497, %500 : vector<4x16x128xf32>
      %502 = vector.extract_strided_slice %108 {offsets = [2, 0], sizes = [1, 128], strides = [1, 1]} : vector<4x128xf32> to vector<1x128xf32>
      %503 = vector.shape_cast %502 : vector<1x128xf32> to vector<1x1x128xf32>
      %504 = vector.broadcast %503 : vector<1x1x128xf32> to vector<4x16x128xf32>
      %505 = arith.addf %501, %504 : vector<4x16x128xf32>
      %cst_376 = arith.constant 0.000000e+00 : f32
      %506 = vector.broadcast %cst_376 : f32 to vector<4x16x128xf32>
      %507 = arith.maximumf %505, %506 : vector<4x16x128xf32>
      %c2_377 = arith.constant 2 : index
      %508 = arith.index_cast %156 : i32 to index
      %c0_378 = arith.constant 0 : index
      %c0_379 = arith.constant 0 : index
      %509 = vector.load %arg14[%c2_377, %508, %c0_378, %c0_379] : memref<4x16x16x128xf32, #tpu.memory_space<vmem>>, vector<1x4x16x128xf32>
      %510 = vector.shape_cast %509 : vector<1x4x16x128xf32> to vector<4x16x128xf32>
      %511 = vector.shape_cast %507 : vector<4x16x128xf32> to vector<1x4x16x128xf32>
      tpu.vector_store %arg14[%c2_377, %508, %c0_378, %c0_379], %511 {strides = array<i32>} : memref<4x16x16x128xf32, #tpu.memory_space<vmem>>, vector<1x4x16x128xf32>,
      %c0_380 = arith.constant 0 : index
      %c0_381 = arith.constant 0 : index
      %512 = vector.load %arg15[%c0_380, %c0_381] : memref<1x128xf32, #tpu.memory_space<vmem>>, vector<1x128xf32>
      %513 = vector.shape_cast %507 : vector<4x16x128xf32> to vector<64x128xf32>
      %cst_382 = arith.constant dense<0.000000e+00> : vector<128xf32>
      %514 = vector.multi_reduction <add>, %513, %cst_382 [0] : vector<64x128xf32> to vector<128xf32>
      %515 = vector.shape_cast %514 : vector<128xf32> to vector<1x128xf32>
      %516 = arith.addf %512, %515 : vector<1x128xf32>
      %c0_383 = arith.constant 0 : index
      %c0_384 = arith.constant 0 : index
      %517 = vector.load %arg15[%c0_383, %c0_384] : memref<1x128xf32, #tpu.memory_space<vmem>>, vector<1x128xf32>
      tpu.vector_store %arg15[%c0_383, %c0_384], %516 {strides = array<i32>} : memref<1x128xf32, #tpu.memory_space<vmem>>, vector<1x128xf32>,
      %cst_385 = arith.constant 0.000000e+00 : f32
      %518 = vector.broadcast %cst_385 : f32 to vector<4x16x128xf32>
      %519 = vector.extract_strided_slice %174 {offsets = [0, 0, 35], sizes = [4, 16, 1], strides = [1, 1, 1]} : vector<4x16x128xf32> to vector<4x16x1xf32>
      %c0_i32_386 = arith.constant 0 : i32
      %520 = arith.addi %c0_i32_386, %156 : i32
      %c0_387 = arith.constant 0 : index
      %521 = arith.index_cast %520 : i32 to index
      %c0_388 = arith.constant 0 : index
      %c0_389 = arith.constant 0 : index
      %522 = vector.load %arg13[%c0_387, %521, %c0_388, %c0_389] : memref<7x22x16x128xf32, #tpu.memory_space<vmem>>, vector<1x4x16x128xf32>
      %523 = vector.shape_cast %522 : vector<1x4x16x128xf32> to vector<4x16x128xf32>
      %524 = vector.broadcast %519 : vector<4x16x1xf32> to vector<4x16x128xf32>
      %525 = arith.mulf %524, %523 : vector<4x16x128xf32>
      %526 = arith.addf %518, %525 : vector<4x16x128xf32>
      %527 = vector.extract_strided_slice %174 {offsets = [0, 0, 36], sizes = [4, 16, 1], strides = [1, 1, 1]} : vector<4x16x128xf32> to vector<4x16x1xf32>
      %c0_i32_390 = arith.constant 0 : i32
      %528 = arith.addi %c0_i32_390, %156 : i32
      %c1_391 = arith.constant 1 : index
      %529 = arith.index_cast %528 : i32 to index
      %c0_392 = arith.constant 0 : index
      %c0_393 = arith.constant 0 : index
      %530 = vector.load %arg13[%c1_391, %529, %c0_392, %c0_393] : memref<7x22x16x128xf32, #tpu.memory_space<vmem>>, vector<1x4x16x128xf32>
      %531 = vector.shape_cast %530 : vector<1x4x16x128xf32> to vector<4x16x128xf32>
      %532 = vector.broadcast %527 : vector<4x16x1xf32> to vector<4x16x128xf32>
      %533 = arith.mulf %532, %531 : vector<4x16x128xf32>
      %534 = arith.addf %526, %533 : vector<4x16x128xf32>
      %535 = vector.extract_strided_slice %174 {offsets = [0, 0, 37], sizes = [4, 16, 1], strides = [1, 1, 1]} : vector<4x16x128xf32> to vector<4x16x1xf32>
      %c0_i32_394 = arith.constant 0 : i32
      %536 = arith.addi %c0_i32_394, %156 : i32
      %c2_395 = arith.constant 2 : index
      %537 = arith.index_cast %536 : i32 to index
      %c0_396 = arith.constant 0 : index
      %c0_397 = arith.constant 0 : index
      %538 = vector.load %arg13[%c2_395, %537, %c0_396, %c0_397] : memref<7x22x16x128xf32, #tpu.memory_space<vmem>>, vector<1x4x16x128xf32>
      %539 = vector.shape_cast %538 : vector<1x4x16x128xf32> to vector<4x16x128xf32>
      %540 = vector.broadcast %535 : vector<4x16x1xf32> to vector<4x16x128xf32>
      %541 = arith.mulf %540, %539 : vector<4x16x128xf32>
      %542 = arith.addf %534, %541 : vector<4x16x128xf32>
      %543 = vector.extract_strided_slice %174 {offsets = [0, 0, 38], sizes = [4, 16, 1], strides = [1, 1, 1]} : vector<4x16x128xf32> to vector<4x16x1xf32>
      %c0_i32_398 = arith.constant 0 : i32
      %544 = arith.addi %c0_i32_398, %156 : i32
      %c3_399 = arith.constant 3 : index
      %545 = arith.index_cast %544 : i32 to index
      %c0_400 = arith.constant 0 : index
      %c0_401 = arith.constant 0 : index
      %546 = vector.load %arg13[%c3_399, %545, %c0_400, %c0_401] : memref<7x22x16x128xf32, #tpu.memory_space<vmem>>, vector<1x4x16x128xf32>
      %547 = vector.shape_cast %546 : vector<1x4x16x128xf32> to vector<4x16x128xf32>
      %548 = vector.broadcast %543 : vector<4x16x1xf32> to vector<4x16x128xf32>
      %549 = arith.mulf %548, %547 : vector<4x16x128xf32>
      %550 = arith.addf %542, %549 : vector<4x16x128xf32>
      %551 = vector.extract_strided_slice %174 {offsets = [0, 0, 39], sizes = [4, 16, 1], strides = [1, 1, 1]} : vector<4x16x128xf32> to vector<4x16x1xf32>
      %c0_i32_402 = arith.constant 0 : i32
      %552 = arith.addi %c0_i32_402, %156 : i32
      %c4_403 = arith.constant 4 : index
      %553 = arith.index_cast %552 : i32 to index
      %c0_404 = arith.constant 0 : index
      %c0_405 = arith.constant 0 : index
      %554 = vector.load %arg13[%c4_403, %553, %c0_404, %c0_405] : memref<7x22x16x128xf32, #tpu.memory_space<vmem>>, vector<1x4x16x128xf32>
      %555 = vector.shape_cast %554 : vector<1x4x16x128xf32> to vector<4x16x128xf32>
      %556 = vector.broadcast %551 : vector<4x16x1xf32> to vector<4x16x128xf32>
      %557 = arith.mulf %556, %555 : vector<4x16x128xf32>
      %558 = arith.addf %550, %557 : vector<4x16x128xf32>
      %559 = vector.extract_strided_slice %174 {offsets = [0, 0, 40], sizes = [4, 16, 1], strides = [1, 1, 1]} : vector<4x16x128xf32> to vector<4x16x1xf32>
      %c0_i32_406 = arith.constant 0 : i32
      %560 = arith.addi %c0_i32_406, %156 : i32
      %c5_407 = arith.constant 5 : index
      %561 = arith.index_cast %560 : i32 to index
      %c0_408 = arith.constant 0 : index
      %c0_409 = arith.constant 0 : index
      %562 = vector.load %arg13[%c5_407, %561, %c0_408, %c0_409] : memref<7x22x16x128xf32, #tpu.memory_space<vmem>>, vector<1x4x16x128xf32>
      %563 = vector.shape_cast %562 : vector<1x4x16x128xf32> to vector<4x16x128xf32>
      %564 = vector.broadcast %559 : vector<4x16x1xf32> to vector<4x16x128xf32>
      %565 = arith.mulf %564, %563 : vector<4x16x128xf32>
      %566 = arith.addf %558, %565 : vector<4x16x128xf32>
      %567 = vector.extract_strided_slice %174 {offsets = [0, 0, 41], sizes = [4, 16, 1], strides = [1, 1, 1]} : vector<4x16x128xf32> to vector<4x16x1xf32>
      %c0_i32_410 = arith.constant 0 : i32
      %568 = arith.addi %c0_i32_410, %156 : i32
      %c6_411 = arith.constant 6 : index
      %569 = arith.index_cast %568 : i32 to index
      %c0_412 = arith.constant 0 : index
      %c0_413 = arith.constant 0 : index
      %570 = vector.load %arg13[%c6_411, %569, %c0_412, %c0_413] : memref<7x22x16x128xf32, #tpu.memory_space<vmem>>, vector<1x4x16x128xf32>
      %571 = vector.shape_cast %570 : vector<1x4x16x128xf32> to vector<4x16x128xf32>
      %572 = vector.broadcast %567 : vector<4x16x1xf32> to vector<4x16x128xf32>
      %573 = arith.mulf %572, %571 : vector<4x16x128xf32>
      %574 = arith.addf %566, %573 : vector<4x16x128xf32>
      %575 = vector.extract_strided_slice %174 {offsets = [0, 0, 42], sizes = [4, 16, 1], strides = [1, 1, 1]} : vector<4x16x128xf32> to vector<4x16x1xf32>
      %c1_i32_414 = arith.constant 1 : i32
      %576 = arith.addi %c1_i32_414, %156 : i32
      %c0_415 = arith.constant 0 : index
      %577 = arith.index_cast %576 : i32 to index
      %c0_416 = arith.constant 0 : index
      %c0_417 = arith.constant 0 : index
      %578 = vector.load %arg13[%c0_415, %577, %c0_416, %c0_417] : memref<7x22x16x128xf32, #tpu.memory_space<vmem>>, vector<1x4x16x128xf32>
      %579 = vector.shape_cast %578 : vector<1x4x16x128xf32> to vector<4x16x128xf32>
      %580 = vector.broadcast %575 : vector<4x16x1xf32> to vector<4x16x128xf32>
      %581 = arith.mulf %580, %579 : vector<4x16x128xf32>
      %582 = arith.addf %574, %581 : vector<4x16x128xf32>
      %583 = vector.extract_strided_slice %174 {offsets = [0, 0, 43], sizes = [4, 16, 1], strides = [1, 1, 1]} : vector<4x16x128xf32> to vector<4x16x1xf32>
      %c1_i32_418 = arith.constant 1 : i32
      %584 = arith.addi %c1_i32_418, %156 : i32
      %c1_419 = arith.constant 1 : index
      %585 = arith.index_cast %584 : i32 to index
      %c0_420 = arith.constant 0 : index
      %c0_421 = arith.constant 0 : index
      %586 = vector.load %arg13[%c1_419, %585, %c0_420, %c0_421] : memref<7x22x16x128xf32, #tpu.memory_space<vmem>>, vector<1x4x16x128xf32>
      %587 = vector.shape_cast %586 : vector<1x4x16x128xf32> to vector<4x16x128xf32>
      %588 = vector.broadcast %583 : vector<4x16x1xf32> to vector<4x16x128xf32>
      %589 = arith.mulf %588, %587 : vector<4x16x128xf32>
      %590 = arith.addf %582, %589 : vector<4x16x128xf32>
      %591 = vector.extract_strided_slice %174 {offsets = [0, 0, 44], sizes = [4, 16, 1], strides = [1, 1, 1]} : vector<4x16x128xf32> to vector<4x16x1xf32>
      %c1_i32_422 = arith.constant 1 : i32
      %592 = arith.addi %c1_i32_422, %156 : i32
      %c2_423 = arith.constant 2 : index
      %593 = arith.index_cast %592 : i32 to index
      %c0_424 = arith.constant 0 : index
      %c0_425 = arith.constant 0 : index
      %594 = vector.load %arg13[%c2_423, %593, %c0_424, %c0_425] : memref<7x22x16x128xf32, #tpu.memory_space<vmem>>, vector<1x4x16x128xf32>
      %595 = vector.shape_cast %594 : vector<1x4x16x128xf32> to vector<4x16x128xf32>
      %596 = vector.broadcast %591 : vector<4x16x1xf32> to vector<4x16x128xf32>
      %597 = arith.mulf %596, %595 : vector<4x16x128xf32>
      %598 = arith.addf %590, %597 : vector<4x16x128xf32>
      %599 = vector.extract_strided_slice %174 {offsets = [0, 0, 45], sizes = [4, 16, 1], strides = [1, 1, 1]} : vector<4x16x128xf32> to vector<4x16x1xf32>
      %c1_i32_426 = arith.constant 1 : i32
      %600 = arith.addi %c1_i32_426, %156 : i32
      %c3_427 = arith.constant 3 : index
      %601 = arith.index_cast %600 : i32 to index
      %c0_428 = arith.constant 0 : index
      %c0_429 = arith.constant 0 : index
      %602 = vector.load %arg13[%c3_427, %601, %c0_428, %c0_429] : memref<7x22x16x128xf32, #tpu.memory_space<vmem>>, vector<1x4x16x128xf32>
      %603 = vector.shape_cast %602 : vector<1x4x16x128xf32> to vector<4x16x128xf32>
      %604 = vector.broadcast %599 : vector<4x16x1xf32> to vector<4x16x128xf32>
      %605 = arith.mulf %604, %603 : vector<4x16x128xf32>
      %606 = arith.addf %598, %605 : vector<4x16x128xf32>
      %607 = vector.extract_strided_slice %174 {offsets = [0, 0, 46], sizes = [4, 16, 1], strides = [1, 1, 1]} : vector<4x16x128xf32> to vector<4x16x1xf32>
      %c1_i32_430 = arith.constant 1 : i32
      %608 = arith.addi %c1_i32_430, %156 : i32
      %c4_431 = arith.constant 4 : index
      %609 = arith.index_cast %608 : i32 to index
      %c0_432 = arith.constant 0 : index
      %c0_433 = arith.constant 0 : index
      %610 = vector.load %arg13[%c4_431, %609, %c0_432, %c0_433] : memref<7x22x16x128xf32, #tpu.memory_space<vmem>>, vector<1x4x16x128xf32>
      %611 = vector.shape_cast %610 : vector<1x4x16x128xf32> to vector<4x16x128xf32>
      %612 = vector.broadcast %607 : vector<4x16x1xf32> to vector<4x16x128xf32>
      %613 = arith.mulf %612, %611 : vector<4x16x128xf32>
      %614 = arith.addf %606, %613 : vector<4x16x128xf32>
      %615 = vector.extract_strided_slice %174 {offsets = [0, 0, 47], sizes = [4, 16, 1], strides = [1, 1, 1]} : vector<4x16x128xf32> to vector<4x16x1xf32>
      %c1_i32_434 = arith.constant 1 : i32
      %616 = arith.addi %c1_i32_434, %156 : i32
      %c5_435 = arith.constant 5 : index
      %617 = arith.index_cast %616 : i32 to index
      %c0_436 = arith.constant 0 : index
      %c0_437 = arith.constant 0 : index
      %618 = vector.load %arg13[%c5_435, %617, %c0_436, %c0_437] : memref<7x22x16x128xf32, #tpu.memory_space<vmem>>, vector<1x4x16x128xf32>
      %619 = vector.shape_cast %618 : vector<1x4x16x128xf32> to vector<4x16x128xf32>
      %620 = vector.broadcast %615 : vector<4x16x1xf32> to vector<4x16x128xf32>
      %621 = arith.mulf %620, %619 : vector<4x16x128xf32>
      %622 = arith.addf %614, %621 : vector<4x16x128xf32>
      %623 = vector.extract_strided_slice %174 {offsets = [0, 0, 48], sizes = [4, 16, 1], strides = [1, 1, 1]} : vector<4x16x128xf32> to vector<4x16x1xf32>
      %c1_i32_438 = arith.constant 1 : i32
      %624 = arith.addi %c1_i32_438, %156 : i32
      %c6_439 = arith.constant 6 : index
      %625 = arith.index_cast %624 : i32 to index
      %c0_440 = arith.constant 0 : index
      %c0_441 = arith.constant 0 : index
      %626 = vector.load %arg13[%c6_439, %625, %c0_440, %c0_441] : memref<7x22x16x128xf32, #tpu.memory_space<vmem>>, vector<1x4x16x128xf32>
      %627 = vector.shape_cast %626 : vector<1x4x16x128xf32> to vector<4x16x128xf32>
      %628 = vector.broadcast %623 : vector<4x16x1xf32> to vector<4x16x128xf32>
      %629 = arith.mulf %628, %627 : vector<4x16x128xf32>
      %630 = arith.addf %622, %629 : vector<4x16x128xf32>
      %631 = vector.extract_strided_slice %174 {offsets = [0, 0, 49], sizes = [4, 16, 1], strides = [1, 1, 1]} : vector<4x16x128xf32> to vector<4x16x1xf32>
      %c2_i32_442 = arith.constant 2 : i32
      %632 = arith.addi %c2_i32_442, %156 : i32
      %c0_443 = arith.constant 0 : index
      %633 = arith.index_cast %632 : i32 to index
      %c0_444 = arith.constant 0 : index
      %c0_445 = arith.constant 0 : index
      %634 = vector.load %arg13[%c0_443, %633, %c0_444, %c0_445] : memref<7x22x16x128xf32, #tpu.memory_space<vmem>>, vector<1x4x16x128xf32>
      %635 = vector.shape_cast %634 : vector<1x4x16x128xf32> to vector<4x16x128xf32>
      %636 = vector.broadcast %631 : vector<4x16x1xf32> to vector<4x16x128xf32>
      %637 = arith.mulf %636, %635 : vector<4x16x128xf32>
      %638 = arith.addf %630, %637 : vector<4x16x128xf32>
      %639 = vector.extract_strided_slice %174 {offsets = [0, 0, 50], sizes = [4, 16, 1], strides = [1, 1, 1]} : vector<4x16x128xf32> to vector<4x16x1xf32>
      %c2_i32_446 = arith.constant 2 : i32
      %640 = arith.addi %c2_i32_446, %156 : i32
      %c1_447 = arith.constant 1 : index
      %641 = arith.index_cast %640 : i32 to index
      %c0_448 = arith.constant 0 : index
      %c0_449 = arith.constant 0 : index
      %642 = vector.load %arg13[%c1_447, %641, %c0_448, %c0_449] : memref<7x22x16x128xf32, #tpu.memory_space<vmem>>, vector<1x4x16x128xf32>
      %643 = vector.shape_cast %642 : vector<1x4x16x128xf32> to vector<4x16x128xf32>
      %644 = vector.broadcast %639 : vector<4x16x1xf32> to vector<4x16x128xf32>
      %645 = arith.mulf %644, %643 : vector<4x16x128xf32>
      %646 = arith.addf %638, %645 : vector<4x16x128xf32>
      %647 = vector.extract_strided_slice %174 {offsets = [0, 0, 51], sizes = [4, 16, 1], strides = [1, 1, 1]} : vector<4x16x128xf32> to vector<4x16x1xf32>
      %c2_i32_450 = arith.constant 2 : i32
      %648 = arith.addi %c2_i32_450, %156 : i32
      %c2_451 = arith.constant 2 : index
      %649 = arith.index_cast %648 : i32 to index
      %c0_452 = arith.constant 0 : index
      %c0_453 = arith.constant 0 : index
      %650 = vector.load %arg13[%c2_451, %649, %c0_452, %c0_453] : memref<7x22x16x128xf32, #tpu.memory_space<vmem>>, vector<1x4x16x128xf32>
      %651 = vector.shape_cast %650 : vector<1x4x16x128xf32> to vector<4x16x128xf32>
      %652 = vector.broadcast %647 : vector<4x16x1xf32> to vector<4x16x128xf32>
      %653 = arith.mulf %652, %651 : vector<4x16x128xf32>
      %654 = arith.addf %646, %653 : vector<4x16x128xf32>
      %655 = vector.extract_strided_slice %174 {offsets = [0, 0, 52], sizes = [4, 16, 1], strides = [1, 1, 1]} : vector<4x16x128xf32> to vector<4x16x1xf32>
      %c2_i32_454 = arith.constant 2 : i32
      %656 = arith.addi %c2_i32_454, %156 : i32
      %c3_455 = arith.constant 3 : index
      %657 = arith.index_cast %656 : i32 to index
      %c0_456 = arith.constant 0 : index
      %c0_457 = arith.constant 0 : index
      %658 = vector.load %arg13[%c3_455, %657, %c0_456, %c0_457] : memref<7x22x16x128xf32, #tpu.memory_space<vmem>>, vector<1x4x16x128xf32>
      %659 = vector.shape_cast %658 : vector<1x4x16x128xf32> to vector<4x16x128xf32>
      %660 = vector.broadcast %655 : vector<4x16x1xf32> to vector<4x16x128xf32>
      %661 = arith.mulf %660, %659 : vector<4x16x128xf32>
      %662 = arith.addf %654, %661 : vector<4x16x128xf32>
      %663 = vector.extract_strided_slice %174 {offsets = [0, 0, 53], sizes = [4, 16, 1], strides = [1, 1, 1]} : vector<4x16x128xf32> to vector<4x16x1xf32>
      %c2_i32_458 = arith.constant 2 : i32
      %664 = arith.addi %c2_i32_458, %156 : i32
      %c4_459 = arith.constant 4 : index
      %665 = arith.index_cast %664 : i32 to index
      %c0_460 = arith.constant 0 : index
      %c0_461 = arith.constant 0 : index
      %666 = vector.load %arg13[%c4_459, %665, %c0_460, %c0_461] : memref<7x22x16x128xf32, #tpu.memory_space<vmem>>, vector<1x4x16x128xf32>
      %667 = vector.shape_cast %666 : vector<1x4x16x128xf32> to vector<4x16x128xf32>
      %668 = vector.broadcast %663 : vector<4x16x1xf32> to vector<4x16x128xf32>
      %669 = arith.mulf %668, %667 : vector<4x16x128xf32>
      %670 = arith.addf %662, %669 : vector<4x16x128xf32>
      %671 = vector.extract_strided_slice %174 {offsets = [0, 0, 54], sizes = [4, 16, 1], strides = [1, 1, 1]} : vector<4x16x128xf32> to vector<4x16x1xf32>
      %c2_i32_462 = arith.constant 2 : i32
      %672 = arith.addi %c2_i32_462, %156 : i32
      %c5_463 = arith.constant 5 : index
      %673 = arith.index_cast %672 : i32 to index
      %c0_464 = arith.constant 0 : index
      %c0_465 = arith.constant 0 : index
      %674 = vector.load %arg13[%c5_463, %673, %c0_464, %c0_465] : memref<7x22x16x128xf32, #tpu.memory_space<vmem>>, vector<1x4x16x128xf32>
      %675 = vector.shape_cast %674 : vector<1x4x16x128xf32> to vector<4x16x128xf32>
      %676 = vector.broadcast %671 : vector<4x16x1xf32> to vector<4x16x128xf32>
      %677 = arith.mulf %676, %675 : vector<4x16x128xf32>
      %678 = arith.addf %670, %677 : vector<4x16x128xf32>
      %679 = vector.extract_strided_slice %174 {offsets = [0, 0, 55], sizes = [4, 16, 1], strides = [1, 1, 1]} : vector<4x16x128xf32> to vector<4x16x1xf32>
      %c2_i32_466 = arith.constant 2 : i32
      %680 = arith.addi %c2_i32_466, %156 : i32
      %c6_467 = arith.constant 6 : index
      %681 = arith.index_cast %680 : i32 to index
      %c0_468 = arith.constant 0 : index
      %c0_469 = arith.constant 0 : index
      %682 = vector.load %arg13[%c6_467, %681, %c0_468, %c0_469] : memref<7x22x16x128xf32, #tpu.memory_space<vmem>>, vector<1x4x16x128xf32>
      %683 = vector.shape_cast %682 : vector<1x4x16x128xf32> to vector<4x16x128xf32>
      %684 = vector.broadcast %679 : vector<4x16x1xf32> to vector<4x16x128xf32>
      %685 = arith.mulf %684, %683 : vector<4x16x128xf32>
      %686 = arith.addf %678, %685 : vector<4x16x128xf32>
      %687 = vector.extract_strided_slice %174 {offsets = [0, 0, 56], sizes = [4, 16, 1], strides = [1, 1, 1]} : vector<4x16x128xf32> to vector<4x16x1xf32>
      %c3_i32_470 = arith.constant 3 : i32
      %688 = arith.addi %c3_i32_470, %156 : i32
      %c0_471 = arith.constant 0 : index
      %689 = arith.index_cast %688 : i32 to index
      %c0_472 = arith.constant 0 : index
      %c0_473 = arith.constant 0 : index
      %690 = vector.load %arg13[%c0_471, %689, %c0_472, %c0_473] : memref<7x22x16x128xf32, #tpu.memory_space<vmem>>, vector<1x4x16x128xf32>
      %691 = vector.shape_cast %690 : vector<1x4x16x128xf32> to vector<4x16x128xf32>
      %692 = vector.broadcast %687 : vector<4x16x1xf32> to vector<4x16x128xf32>
      %693 = arith.mulf %692, %691 : vector<4x16x128xf32>
      %694 = arith.addf %686, %693 : vector<4x16x128xf32>
      %695 = vector.extract_strided_slice %174 {offsets = [0, 0, 57], sizes = [4, 16, 1], strides = [1, 1, 1]} : vector<4x16x128xf32> to vector<4x16x1xf32>
      %c3_i32_474 = arith.constant 3 : i32
      %696 = arith.addi %c3_i32_474, %156 : i32
      %c1_475 = arith.constant 1 : index
      %697 = arith.index_cast %696 : i32 to index
      %c0_476 = arith.constant 0 : index
      %c0_477 = arith.constant 0 : index
      %698 = vector.load %arg13[%c1_475, %697, %c0_476, %c0_477] : memref<7x22x16x128xf32, #tpu.memory_space<vmem>>, vector<1x4x16x128xf32>
      %699 = vector.shape_cast %698 : vector<1x4x16x128xf32> to vector<4x16x128xf32>
      %700 = vector.broadcast %695 : vector<4x16x1xf32> to vector<4x16x128xf32>
      %701 = arith.mulf %700, %699 : vector<4x16x128xf32>
      %702 = arith.addf %694, %701 : vector<4x16x128xf32>
      %703 = vector.extract_strided_slice %174 {offsets = [0, 0, 58], sizes = [4, 16, 1], strides = [1, 1, 1]} : vector<4x16x128xf32> to vector<4x16x1xf32>
      %c3_i32_478 = arith.constant 3 : i32
      %704 = arith.addi %c3_i32_478, %156 : i32
      %c2_479 = arith.constant 2 : index
      %705 = arith.index_cast %704 : i32 to index
      %c0_480 = arith.constant 0 : index
      %c0_481 = arith.constant 0 : index
      %706 = vector.load %arg13[%c2_479, %705, %c0_480, %c0_481] : memref<7x22x16x128xf32, #tpu.memory_space<vmem>>, vector<1x4x16x128xf32>
      %707 = vector.shape_cast %706 : vector<1x4x16x128xf32> to vector<4x16x128xf32>
      %708 = vector.broadcast %703 : vector<4x16x1xf32> to vector<4x16x128xf32>
      %709 = arith.mulf %708, %707 : vector<4x16x128xf32>
      %710 = arith.addf %702, %709 : vector<4x16x128xf32>
      %711 = vector.extract_strided_slice %174 {offsets = [0, 0, 59], sizes = [4, 16, 1], strides = [1, 1, 1]} : vector<4x16x128xf32> to vector<4x16x1xf32>
      %c3_i32_482 = arith.constant 3 : i32
      %712 = arith.addi %c3_i32_482, %156 : i32
      %c3_483 = arith.constant 3 : index
      %713 = arith.index_cast %712 : i32 to index
      %c0_484 = arith.constant 0 : index
      %c0_485 = arith.constant 0 : index
      %714 = vector.load %arg13[%c3_483, %713, %c0_484, %c0_485] : memref<7x22x16x128xf32, #tpu.memory_space<vmem>>, vector<1x4x16x128xf32>
      %715 = vector.shape_cast %714 : vector<1x4x16x128xf32> to vector<4x16x128xf32>
      %716 = vector.broadcast %711 : vector<4x16x1xf32> to vector<4x16x128xf32>
      %717 = arith.mulf %716, %715 : vector<4x16x128xf32>
      %718 = arith.addf %710, %717 : vector<4x16x128xf32>
      %719 = vector.extract_strided_slice %174 {offsets = [0, 0, 60], sizes = [4, 16, 1], strides = [1, 1, 1]} : vector<4x16x128xf32> to vector<4x16x1xf32>
      %c3_i32_486 = arith.constant 3 : i32
      %720 = arith.addi %c3_i32_486, %156 : i32
      %c4_487 = arith.constant 4 : index
      %721 = arith.index_cast %720 : i32 to index
      %c0_488 = arith.constant 0 : index
      %c0_489 = arith.constant 0 : index
      %722 = vector.load %arg13[%c4_487, %721, %c0_488, %c0_489] : memref<7x22x16x128xf32, #tpu.memory_space<vmem>>, vector<1x4x16x128xf32>
      %723 = vector.shape_cast %722 : vector<1x4x16x128xf32> to vector<4x16x128xf32>
      %724 = vector.broadcast %719 : vector<4x16x1xf32> to vector<4x16x128xf32>
      %725 = arith.mulf %724, %723 : vector<4x16x128xf32>
      %726 = arith.addf %718, %725 : vector<4x16x128xf32>
      %727 = vector.extract_strided_slice %174 {offsets = [0, 0, 61], sizes = [4, 16, 1], strides = [1, 1, 1]} : vector<4x16x128xf32> to vector<4x16x1xf32>
      %c3_i32_490 = arith.constant 3 : i32
      %728 = arith.addi %c3_i32_490, %156 : i32
      %c5_491 = arith.constant 5 : index
      %729 = arith.index_cast %728 : i32 to index
      %c0_492 = arith.constant 0 : index
      %c0_493 = arith.constant 0 : index
      %730 = vector.load %arg13[%c5_491, %729, %c0_492, %c0_493] : memref<7x22x16x128xf32, #tpu.memory_space<vmem>>, vector<1x4x16x128xf32>
      %731 = vector.shape_cast %730 : vector<1x4x16x128xf32> to vector<4x16x128xf32>
      %732 = vector.broadcast %727 : vector<4x16x1xf32> to vector<4x16x128xf32>
      %733 = arith.mulf %732, %731 : vector<4x16x128xf32>
      %734 = arith.addf %726, %733 : vector<4x16x128xf32>
      %735 = vector.extract_strided_slice %174 {offsets = [0, 0, 62], sizes = [4, 16, 1], strides = [1, 1, 1]} : vector<4x16x128xf32> to vector<4x16x1xf32>
      %c3_i32_494 = arith.constant 3 : i32
      %736 = arith.addi %c3_i32_494, %156 : i32
      %c6_495 = arith.constant 6 : index
      %737 = arith.index_cast %736 : i32 to index
      %c0_496 = arith.constant 0 : index
      %c0_497 = arith.constant 0 : index
      %738 = vector.load %arg13[%c6_495, %737, %c0_496, %c0_497] : memref<7x22x16x128xf32, #tpu.memory_space<vmem>>, vector<1x4x16x128xf32>
      %739 = vector.shape_cast %738 : vector<1x4x16x128xf32> to vector<4x16x128xf32>
      %740 = vector.broadcast %735 : vector<4x16x1xf32> to vector<4x16x128xf32>
      %741 = arith.mulf %740, %739 : vector<4x16x128xf32>
      %742 = arith.addf %734, %741 : vector<4x16x128xf32>
      %743 = vector.extract_strided_slice %174 {offsets = [0, 0, 63], sizes = [4, 16, 1], strides = [1, 1, 1]} : vector<4x16x128xf32> to vector<4x16x1xf32>
      %c4_i32_498 = arith.constant 4 : i32
      %744 = arith.addi %c4_i32_498, %156 : i32
      %c0_499 = arith.constant 0 : index
      %745 = arith.index_cast %744 : i32 to index
      %c0_500 = arith.constant 0 : index
      %c0_501 = arith.constant 0 : index
      %746 = vector.load %arg13[%c0_499, %745, %c0_500, %c0_501] : memref<7x22x16x128xf32, #tpu.memory_space<vmem>>, vector<1x4x16x128xf32>
      %747 = vector.shape_cast %746 : vector<1x4x16x128xf32> to vector<4x16x128xf32>
      %748 = vector.broadcast %743 : vector<4x16x1xf32> to vector<4x16x128xf32>
      %749 = arith.mulf %748, %747 : vector<4x16x128xf32>
      %750 = arith.addf %742, %749 : vector<4x16x128xf32>
      %751 = vector.extract_strided_slice %174 {offsets = [0, 0, 64], sizes = [4, 16, 1], strides = [1, 1, 1]} : vector<4x16x128xf32> to vector<4x16x1xf32>
      %c4_i32_502 = arith.constant 4 : i32
      %752 = arith.addi %c4_i32_502, %156 : i32
      %c1_503 = arith.constant 1 : index
      %753 = arith.index_cast %752 : i32 to index
      %c0_504 = arith.constant 0 : index
      %c0_505 = arith.constant 0 : index
      %754 = vector.load %arg13[%c1_503, %753, %c0_504, %c0_505] : memref<7x22x16x128xf32, #tpu.memory_space<vmem>>, vector<1x4x16x128xf32>
      %755 = vector.shape_cast %754 : vector<1x4x16x128xf32> to vector<4x16x128xf32>
      %756 = vector.broadcast %751 : vector<4x16x1xf32> to vector<4x16x128xf32>
      %757 = arith.mulf %756, %755 : vector<4x16x128xf32>
      %758 = arith.addf %750, %757 : vector<4x16x128xf32>
      %759 = vector.extract_strided_slice %174 {offsets = [0, 0, 65], sizes = [4, 16, 1], strides = [1, 1, 1]} : vector<4x16x128xf32> to vector<4x16x1xf32>
      %c4_i32_506 = arith.constant 4 : i32
      %760 = arith.addi %c4_i32_506, %156 : i32
      %c2_507 = arith.constant 2 : index
      %761 = arith.index_cast %760 : i32 to index
      %c0_508 = arith.constant 0 : index
      %c0_509 = arith.constant 0 : index
      %762 = vector.load %arg13[%c2_507, %761, %c0_508, %c0_509] : memref<7x22x16x128xf32, #tpu.memory_space<vmem>>, vector<1x4x16x128xf32>
      %763 = vector.shape_cast %762 : vector<1x4x16x128xf32> to vector<4x16x128xf32>
      %764 = vector.broadcast %759 : vector<4x16x1xf32> to vector<4x16x128xf32>
      %765 = arith.mulf %764, %763 : vector<4x16x128xf32>
      %766 = arith.addf %758, %765 : vector<4x16x128xf32>
      %767 = vector.extract_strided_slice %174 {offsets = [0, 0, 66], sizes = [4, 16, 1], strides = [1, 1, 1]} : vector<4x16x128xf32> to vector<4x16x1xf32>
      %c4_i32_510 = arith.constant 4 : i32
      %768 = arith.addi %c4_i32_510, %156 : i32
      %c3_511 = arith.constant 3 : index
      %769 = arith.index_cast %768 : i32 to index
      %c0_512 = arith.constant 0 : index
      %c0_513 = arith.constant 0 : index
      %770 = vector.load %arg13[%c3_511, %769, %c0_512, %c0_513] : memref<7x22x16x128xf32, #tpu.memory_space<vmem>>, vector<1x4x16x128xf32>
      %771 = vector.shape_cast %770 : vector<1x4x16x128xf32> to vector<4x16x128xf32>
      %772 = vector.broadcast %767 : vector<4x16x1xf32> to vector<4x16x128xf32>
      %773 = arith.mulf %772, %771 : vector<4x16x128xf32>
      %774 = arith.addf %766, %773 : vector<4x16x128xf32>
      %775 = vector.extract_strided_slice %174 {offsets = [0, 0, 67], sizes = [4, 16, 1], strides = [1, 1, 1]} : vector<4x16x128xf32> to vector<4x16x1xf32>
      %c4_i32_514 = arith.constant 4 : i32
      %776 = arith.addi %c4_i32_514, %156 : i32
      %c4_515 = arith.constant 4 : index
      %777 = arith.index_cast %776 : i32 to index
      %c0_516 = arith.constant 0 : index
      %c0_517 = arith.constant 0 : index
      %778 = vector.load %arg13[%c4_515, %777, %c0_516, %c0_517] : memref<7x22x16x128xf32, #tpu.memory_space<vmem>>, vector<1x4x16x128xf32>
      %779 = vector.shape_cast %778 : vector<1x4x16x128xf32> to vector<4x16x128xf32>
      %780 = vector.broadcast %775 : vector<4x16x1xf32> to vector<4x16x128xf32>
      %781 = arith.mulf %780, %779 : vector<4x16x128xf32>
      %782 = arith.addf %774, %781 : vector<4x16x128xf32>
      %783 = vector.extract_strided_slice %174 {offsets = [0, 0, 68], sizes = [4, 16, 1], strides = [1, 1, 1]} : vector<4x16x128xf32> to vector<4x16x1xf32>
      %c4_i32_518 = arith.constant 4 : i32
      %784 = arith.addi %c4_i32_518, %156 : i32
      %c5_519 = arith.constant 5 : index
      %785 = arith.index_cast %784 : i32 to index
      %c0_520 = arith.constant 0 : index
      %c0_521 = arith.constant 0 : index
      %786 = vector.load %arg13[%c5_519, %785, %c0_520, %c0_521] : memref<7x22x16x128xf32, #tpu.memory_space<vmem>>, vector<1x4x16x128xf32>
      %787 = vector.shape_cast %786 : vector<1x4x16x128xf32> to vector<4x16x128xf32>
      %788 = vector.broadcast %783 : vector<4x16x1xf32> to vector<4x16x128xf32>
      %789 = arith.mulf %788, %787 : vector<4x16x128xf32>
      %790 = arith.addf %782, %789 : vector<4x16x128xf32>
      %791 = vector.extract_strided_slice %174 {offsets = [0, 0, 69], sizes = [4, 16, 1], strides = [1, 1, 1]} : vector<4x16x128xf32> to vector<4x16x1xf32>
      %c4_i32_522 = arith.constant 4 : i32
      %792 = arith.addi %c4_i32_522, %156 : i32
      %c6_523 = arith.constant 6 : index
      %793 = arith.index_cast %792 : i32 to index
      %c0_524 = arith.constant 0 : index
      %c0_525 = arith.constant 0 : index
      %794 = vector.load %arg13[%c6_523, %793, %c0_524, %c0_525] : memref<7x22x16x128xf32, #tpu.memory_space<vmem>>, vector<1x4x16x128xf32>
      %795 = vector.shape_cast %794 : vector<1x4x16x128xf32> to vector<4x16x128xf32>
      %796 = vector.broadcast %791 : vector<4x16x1xf32> to vector<4x16x128xf32>
      %797 = arith.mulf %796, %795 : vector<4x16x128xf32>
      %798 = arith.addf %790, %797 : vector<4x16x128xf32>
      %799 = vector.extract_strided_slice %174 {offsets = [0, 0, 70], sizes = [4, 16, 1], strides = [1, 1, 1]} : vector<4x16x128xf32> to vector<4x16x1xf32>
      %c5_i32_526 = arith.constant 5 : i32
      %800 = arith.addi %c5_i32_526, %156 : i32
      %c0_527 = arith.constant 0 : index
      %801 = arith.index_cast %800 : i32 to index
      %c0_528 = arith.constant 0 : index
      %c0_529 = arith.constant 0 : index
      %802 = vector.load %arg13[%c0_527, %801, %c0_528, %c0_529] : memref<7x22x16x128xf32, #tpu.memory_space<vmem>>, vector<1x4x16x128xf32>
      %803 = vector.shape_cast %802 : vector<1x4x16x128xf32> to vector<4x16x128xf32>
      %804 = vector.broadcast %799 : vector<4x16x1xf32> to vector<4x16x128xf32>
      %805 = arith.mulf %804, %803 : vector<4x16x128xf32>
      %806 = arith.addf %798, %805 : vector<4x16x128xf32>
      %807 = vector.extract_strided_slice %174 {offsets = [0, 0, 71], sizes = [4, 16, 1], strides = [1, 1, 1]} : vector<4x16x128xf32> to vector<4x16x1xf32>
      %c5_i32_530 = arith.constant 5 : i32
      %808 = arith.addi %c5_i32_530, %156 : i32
      %c1_531 = arith.constant 1 : index
      %809 = arith.index_cast %808 : i32 to index
      %c0_532 = arith.constant 0 : index
      %c0_533 = arith.constant 0 : index
      %810 = vector.load %arg13[%c1_531, %809, %c0_532, %c0_533] : memref<7x22x16x128xf32, #tpu.memory_space<vmem>>, vector<1x4x16x128xf32>
      %811 = vector.shape_cast %810 : vector<1x4x16x128xf32> to vector<4x16x128xf32>
      %812 = vector.broadcast %807 : vector<4x16x1xf32> to vector<4x16x128xf32>
      %813 = arith.mulf %812, %811 : vector<4x16x128xf32>
      %814 = arith.addf %806, %813 : vector<4x16x128xf32>
      %815 = vector.extract_strided_slice %174 {offsets = [0, 0, 72], sizes = [4, 16, 1], strides = [1, 1, 1]} : vector<4x16x128xf32> to vector<4x16x1xf32>
      %c5_i32_534 = arith.constant 5 : i32
      %816 = arith.addi %c5_i32_534, %156 : i32
      %c2_535 = arith.constant 2 : index
      %817 = arith.index_cast %816 : i32 to index
      %c0_536 = arith.constant 0 : index
      %c0_537 = arith.constant 0 : index
      %818 = vector.load %arg13[%c2_535, %817, %c0_536, %c0_537] : memref<7x22x16x128xf32, #tpu.memory_space<vmem>>, vector<1x4x16x128xf32>
      %819 = vector.shape_cast %818 : vector<1x4x16x128xf32> to vector<4x16x128xf32>
      %820 = vector.broadcast %815 : vector<4x16x1xf32> to vector<4x16x128xf32>
      %821 = arith.mulf %820, %819 : vector<4x16x128xf32>
      %822 = arith.addf %814, %821 : vector<4x16x128xf32>
      %823 = vector.extract_strided_slice %174 {offsets = [0, 0, 73], sizes = [4, 16, 1], strides = [1, 1, 1]} : vector<4x16x128xf32> to vector<4x16x1xf32>
      %c5_i32_538 = arith.constant 5 : i32
      %824 = arith.addi %c5_i32_538, %156 : i32
      %c3_539 = arith.constant 3 : index
      %825 = arith.index_cast %824 : i32 to index
      %c0_540 = arith.constant 0 : index
      %c0_541 = arith.constant 0 : index
      %826 = vector.load %arg13[%c3_539, %825, %c0_540, %c0_541] : memref<7x22x16x128xf32, #tpu.memory_space<vmem>>, vector<1x4x16x128xf32>
      %827 = vector.shape_cast %826 : vector<1x4x16x128xf32> to vector<4x16x128xf32>
      %828 = vector.broadcast %823 : vector<4x16x1xf32> to vector<4x16x128xf32>
      %829 = arith.mulf %828, %827 : vector<4x16x128xf32>
      %830 = arith.addf %822, %829 : vector<4x16x128xf32>
      %831 = vector.extract_strided_slice %174 {offsets = [0, 0, 74], sizes = [4, 16, 1], strides = [1, 1, 1]} : vector<4x16x128xf32> to vector<4x16x1xf32>
      %c5_i32_542 = arith.constant 5 : i32
      %832 = arith.addi %c5_i32_542, %156 : i32
      %c4_543 = arith.constant 4 : index
      %833 = arith.index_cast %832 : i32 to index
      %c0_544 = arith.constant 0 : index
      %c0_545 = arith.constant 0 : index
      %834 = vector.load %arg13[%c4_543, %833, %c0_544, %c0_545] : memref<7x22x16x128xf32, #tpu.memory_space<vmem>>, vector<1x4x16x128xf32>
      %835 = vector.shape_cast %834 : vector<1x4x16x128xf32> to vector<4x16x128xf32>
      %836 = vector.broadcast %831 : vector<4x16x1xf32> to vector<4x16x128xf32>
      %837 = arith.mulf %836, %835 : vector<4x16x128xf32>
      %838 = arith.addf %830, %837 : vector<4x16x128xf32>
      %839 = vector.extract_strided_slice %174 {offsets = [0, 0, 75], sizes = [4, 16, 1], strides = [1, 1, 1]} : vector<4x16x128xf32> to vector<4x16x1xf32>
      %c5_i32_546 = arith.constant 5 : i32
      %840 = arith.addi %c5_i32_546, %156 : i32
      %c5_547 = arith.constant 5 : index
      %841 = arith.index_cast %840 : i32 to index
      %c0_548 = arith.constant 0 : index
      %c0_549 = arith.constant 0 : index
      %842 = vector.load %arg13[%c5_547, %841, %c0_548, %c0_549] : memref<7x22x16x128xf32, #tpu.memory_space<vmem>>, vector<1x4x16x128xf32>
      %843 = vector.shape_cast %842 : vector<1x4x16x128xf32> to vector<4x16x128xf32>
      %844 = vector.broadcast %839 : vector<4x16x1xf32> to vector<4x16x128xf32>
      %845 = arith.mulf %844, %843 : vector<4x16x128xf32>
      %846 = arith.addf %838, %845 : vector<4x16x128xf32>
      %847 = vector.extract_strided_slice %174 {offsets = [0, 0, 76], sizes = [4, 16, 1], strides = [1, 1, 1]} : vector<4x16x128xf32> to vector<4x16x1xf32>
      %c5_i32_550 = arith.constant 5 : i32
      %848 = arith.addi %c5_i32_550, %156 : i32
      %c6_551 = arith.constant 6 : index
      %849 = arith.index_cast %848 : i32 to index
      %c0_552 = arith.constant 0 : index
      %c0_553 = arith.constant 0 : index
      %850 = vector.load %arg13[%c6_551, %849, %c0_552, %c0_553] : memref<7x22x16x128xf32, #tpu.memory_space<vmem>>, vector<1x4x16x128xf32>
      %851 = vector.shape_cast %850 : vector<1x4x16x128xf32> to vector<4x16x128xf32>
      %852 = vector.broadcast %847 : vector<4x16x1xf32> to vector<4x16x128xf32>
      %853 = arith.mulf %852, %851 : vector<4x16x128xf32>
      %854 = arith.addf %846, %853 : vector<4x16x128xf32>
      %855 = vector.extract_strided_slice %174 {offsets = [0, 0, 77], sizes = [4, 16, 1], strides = [1, 1, 1]} : vector<4x16x128xf32> to vector<4x16x1xf32>
      %c6_i32 = arith.constant 6 : i32
      %856 = arith.addi %c6_i32, %156 : i32
      %c0_554 = arith.constant 0 : index
      %857 = arith.index_cast %856 : i32 to index
      %c0_555 = arith.constant 0 : index
      %c0_556 = arith.constant 0 : index
      %858 = vector.load %arg13[%c0_554, %857, %c0_555, %c0_556] : memref<7x22x16x128xf32, #tpu.memory_space<vmem>>, vector<1x4x16x128xf32>
      %859 = vector.shape_cast %858 : vector<1x4x16x128xf32> to vector<4x16x128xf32>
      %860 = vector.broadcast %855 : vector<4x16x1xf32> to vector<4x16x128xf32>
      %861 = arith.mulf %860, %859 : vector<4x16x128xf32>
      %862 = arith.addf %854, %861 : vector<4x16x128xf32>
      %863 = vector.extract_strided_slice %174 {offsets = [0, 0, 78], sizes = [4, 16, 1], strides = [1, 1, 1]} : vector<4x16x128xf32> to vector<4x16x1xf32>
      %c6_i32_557 = arith.constant 6 : i32
      %864 = arith.addi %c6_i32_557, %156 : i32
      %c1_558 = arith.constant 1 : index
      %865 = arith.index_cast %864 : i32 to index
      %c0_559 = arith.constant 0 : index
      %c0_560 = arith.constant 0 : index
      %866 = vector.load %arg13[%c1_558, %865, %c0_559, %c0_560] : memref<7x22x16x128xf32, #tpu.memory_space<vmem>>, vector<1x4x16x128xf32>
      %867 = vector.shape_cast %866 : vector<1x4x16x128xf32> to vector<4x16x128xf32>
      %868 = vector.broadcast %863 : vector<4x16x1xf32> to vector<4x16x128xf32>
      %869 = arith.mulf %868, %867 : vector<4x16x128xf32>
      %870 = arith.addf %862, %869 : vector<4x16x128xf32>
      %871 = vector.extract_strided_slice %174 {offsets = [0, 0, 79], sizes = [4, 16, 1], strides = [1, 1, 1]} : vector<4x16x128xf32> to vector<4x16x1xf32>
      %c6_i32_561 = arith.constant 6 : i32
      %872 = arith.addi %c6_i32_561, %156 : i32
      %c2_562 = arith.constant 2 : index
      %873 = arith.index_cast %872 : i32 to index
      %c0_563 = arith.constant 0 : index
      %c0_564 = arith.constant 0 : index
      %874 = vector.load %arg13[%c2_562, %873, %c0_563, %c0_564] : memref<7x22x16x128xf32, #tpu.memory_space<vmem>>, vector<1x4x16x128xf32>
      %875 = vector.shape_cast %874 : vector<1x4x16x128xf32> to vector<4x16x128xf32>
      %876 = vector.broadcast %871 : vector<4x16x1xf32> to vector<4x16x128xf32>
      %877 = arith.mulf %876, %875 : vector<4x16x128xf32>
      %878 = arith.addf %870, %877 : vector<4x16x128xf32>
      %879 = vector.extract_strided_slice %174 {offsets = [0, 0, 80], sizes = [4, 16, 1], strides = [1, 1, 1]} : vector<4x16x128xf32> to vector<4x16x1xf32>
      %c6_i32_565 = arith.constant 6 : i32
      %880 = arith.addi %c6_i32_565, %156 : i32
      %c3_566 = arith.constant 3 : index
      %881 = arith.index_cast %880 : i32 to index
      %c0_567 = arith.constant 0 : index
      %c0_568 = arith.constant 0 : index
      %882 = vector.load %arg13[%c3_566, %881, %c0_567, %c0_568] : memref<7x22x16x128xf32, #tpu.memory_space<vmem>>, vector<1x4x16x128xf32>
      %883 = vector.shape_cast %882 : vector<1x4x16x128xf32> to vector<4x16x128xf32>
      %884 = vector.broadcast %879 : vector<4x16x1xf32> to vector<4x16x128xf32>
      %885 = arith.mulf %884, %883 : vector<4x16x128xf32>
      %886 = arith.addf %878, %885 : vector<4x16x128xf32>
      %887 = vector.extract_strided_slice %174 {offsets = [0, 0, 81], sizes = [4, 16, 1], strides = [1, 1, 1]} : vector<4x16x128xf32> to vector<4x16x1xf32>
      %c6_i32_569 = arith.constant 6 : i32
      %888 = arith.addi %c6_i32_569, %156 : i32
      %c4_570 = arith.constant 4 : index
      %889 = arith.index_cast %888 : i32 to index
      %c0_571 = arith.constant 0 : index
      %c0_572 = arith.constant 0 : index
      %890 = vector.load %arg13[%c4_570, %889, %c0_571, %c0_572] : memref<7x22x16x128xf32, #tpu.memory_space<vmem>>, vector<1x4x16x128xf32>
      %891 = vector.shape_cast %890 : vector<1x4x16x128xf32> to vector<4x16x128xf32>
      %892 = vector.broadcast %887 : vector<4x16x1xf32> to vector<4x16x128xf32>
      %893 = arith.mulf %892, %891 : vector<4x16x128xf32>
      %894 = arith.addf %886, %893 : vector<4x16x128xf32>
      %895 = vector.extract_strided_slice %174 {offsets = [0, 0, 82], sizes = [4, 16, 1], strides = [1, 1, 1]} : vector<4x16x128xf32> to vector<4x16x1xf32>
      %c6_i32_573 = arith.constant 6 : i32
      %896 = arith.addi %c6_i32_573, %156 : i32
      %c5_574 = arith.constant 5 : index
      %897 = arith.index_cast %896 : i32 to index
      %c0_575 = arith.constant 0 : index
      %c0_576 = arith.constant 0 : index
      %898 = vector.load %arg13[%c5_574, %897, %c0_575, %c0_576] : memref<7x22x16x128xf32, #tpu.memory_space<vmem>>, vector<1x4x16x128xf32>
      %899 = vector.shape_cast %898 : vector<1x4x16x128xf32> to vector<4x16x128xf32>
      %900 = vector.broadcast %895 : vector<4x16x1xf32> to vector<4x16x128xf32>
      %901 = arith.mulf %900, %899 : vector<4x16x128xf32>
      %902 = arith.addf %894, %901 : vector<4x16x128xf32>
      %903 = vector.extract_strided_slice %174 {offsets = [0, 0, 83], sizes = [4, 16, 1], strides = [1, 1, 1]} : vector<4x16x128xf32> to vector<4x16x1xf32>
      %c6_i32_577 = arith.constant 6 : i32
      %904 = arith.addi %c6_i32_577, %156 : i32
      %c6_578 = arith.constant 6 : index
      %905 = arith.index_cast %904 : i32 to index
      %c0_579 = arith.constant 0 : index
      %c0_580 = arith.constant 0 : index
      %906 = vector.load %arg13[%c6_578, %905, %c0_579, %c0_580] : memref<7x22x16x128xf32, #tpu.memory_space<vmem>>, vector<1x4x16x128xf32>
      %907 = vector.shape_cast %906 : vector<1x4x16x128xf32> to vector<4x16x128xf32>
      %908 = vector.broadcast %903 : vector<4x16x1xf32> to vector<4x16x128xf32>
      %909 = arith.mulf %908, %907 : vector<4x16x128xf32>
      %910 = arith.addf %902, %909 : vector<4x16x128xf32>
      %911 = vector.extract_strided_slice %107 {offsets = [3, 0], sizes = [1, 128], strides = [1, 1]} : vector<4x128xf32> to vector<1x128xf32>
      %912 = vector.shape_cast %911 : vector<1x128xf32> to vector<1x1x128xf32>
      %913 = vector.broadcast %912 : vector<1x1x128xf32> to vector<4x16x128xf32>
      %914 = arith.mulf %910, %913 : vector<4x16x128xf32>
      %915 = vector.extract_strided_slice %108 {offsets = [3, 0], sizes = [1, 128], strides = [1, 1]} : vector<4x128xf32> to vector<1x128xf32>
      %916 = vector.shape_cast %915 : vector<1x128xf32> to vector<1x1x128xf32>
      %917 = vector.broadcast %916 : vector<1x1x128xf32> to vector<4x16x128xf32>
      %918 = arith.addf %914, %917 : vector<4x16x128xf32>
      %cst_581 = arith.constant 0.000000e+00 : f32
      %919 = vector.broadcast %cst_581 : f32 to vector<4x16x128xf32>
      %920 = arith.maximumf %918, %919 : vector<4x16x128xf32>
      %c3_582 = arith.constant 3 : index
      %921 = arith.index_cast %156 : i32 to index
      %c0_583 = arith.constant 0 : index
      %c0_584 = arith.constant 0 : index
      %922 = vector.load %arg14[%c3_582, %921, %c0_583, %c0_584] : memref<4x16x16x128xf32, #tpu.memory_space<vmem>>, vector<1x4x16x128xf32>
      %923 = vector.shape_cast %922 : vector<1x4x16x128xf32> to vector<4x16x128xf32>
      %924 = vector.shape_cast %920 : vector<4x16x128xf32> to vector<1x4x16x128xf32>
      tpu.vector_store %arg14[%c3_582, %921, %c0_583, %c0_584], %924 {strides = array<i32>} : memref<4x16x16x128xf32, #tpu.memory_space<vmem>>, vector<1x4x16x128xf32>,
      %c0_585 = arith.constant 0 : index
      %c0_586 = arith.constant 0 : index
      %925 = vector.load %arg15[%c0_585, %c0_586] : memref<1x128xf32, #tpu.memory_space<vmem>>, vector<1x128xf32>
      %926 = vector.shape_cast %920 : vector<4x16x128xf32> to vector<64x128xf32>
      %cst_587 = arith.constant dense<0.000000e+00> : vector<128xf32>
      %927 = vector.multi_reduction <add>, %926, %cst_587 [0] : vector<64x128xf32> to vector<128xf32>
      %928 = vector.shape_cast %927 : vector<128xf32> to vector<1x128xf32>
      %929 = arith.addf %925, %928 : vector<1x128xf32>
      %c0_588 = arith.constant 0 : index
      %c0_589 = arith.constant 0 : index
      %930 = vector.load %arg15[%c0_588, %c0_589] : memref<1x128xf32, #tpu.memory_space<vmem>>, vector<1x128xf32>
      tpu.vector_store %arg15[%c0_588, %c0_589], %929 {strides = array<i32>} : memref<1x128xf32, #tpu.memory_space<vmem>>, vector<1x128xf32>,
    }
    %c4_i32_165 = arith.constant 4 : i32
    %c0_166 = arith.constant 0 : index
    %c0_167 = arith.constant 0 : index
    %110 = vector.load %arg15[%c0_166, %c0_167] : memref<1x128xf32, #tpu.memory_space<vmem>>, vector<1x128xf32>
    %cst_168 = arith.constant 3.906250e-03 : f32
    %111 = vector.broadcast %cst_168 : f32 to vector<1x128xf32>
    %112 = arith.mulf %110, %111 : vector<1x128xf32>
    %c0_169 = arith.constant 0 : index
    %c0_170 = arith.constant 0 : index
    %113 = vector.load %arg8[%c0_169, %c0_170] : memref<128x32xf32, #tpu.memory_space<vmem>>, vector<128x32xf32>
    %cst_171 = arith.constant dense<0.000000e+00> : vector<1x32xf32>
    %114 = tpu.matmul %112, %113, %cst_171 {dimension_numbers = #tpu.dot_dimension_numbers<[1], [0], [0], [1], [0, 0, 1, 1], [], []>} : vector<1x128xf32>, vector<128x32xf32>, vector<1x32xf32> -> vector<1x32xf32>
    %c0_172 = arith.constant 0 : index
    %c0_173 = arith.constant 0 : index
    %115 = vector.load %arg9[%c0_172, %c0_173] : memref<1x32xf32, #tpu.memory_space<vmem>>, vector<1x32xf32>
    %116 = arith.addf %114, %115 : vector<1x32xf32>
    %c0_174 = arith.constant 0 : index
    %c0_175 = arith.constant 0 : index
    %c0_176 = arith.constant 0 : index
    %117 = vector.load %arg10[%c0_174, %c0_175, %c0_176] : memref<4x32x128xf32, #tpu.memory_space<vmem>>, vector<1x32x128xf32>
    %118 = vector.shape_cast %117 : vector<1x32x128xf32> to vector<32x128xf32>
    %cst_177 = arith.constant dense<0.000000e+00> : vector<1x128xf32>
    %119 = tpu.matmul %116, %118, %cst_177 {dimension_numbers = #tpu.dot_dimension_numbers<[1], [0], [0], [1], [0, 0, 1, 1], [], []>} : vector<1x32xf32>, vector<32x128xf32>, vector<1x128xf32> -> vector<1x128xf32>
    %c0_178 = arith.constant 0 : index
    %c0_179 = arith.constant 0 : index
    %120 = vector.load %arg11[%c0_178, %c0_179] : memref<4x128xf32, #tpu.memory_space<vmem>>, vector<1x128xf32>
    %121 = arith.addf %119, %120 : vector<1x128xf32>
    %c1_180 = arith.constant 1 : index
    %c0_181 = arith.constant 0 : index
    %c0_182 = arith.constant 0 : index
    %122 = vector.load %arg10[%c1_180, %c0_181, %c0_182] : memref<4x32x128xf32, #tpu.memory_space<vmem>>, vector<1x32x128xf32>
    %123 = vector.shape_cast %122 : vector<1x32x128xf32> to vector<32x128xf32>
    %cst_183 = arith.constant dense<0.000000e+00> : vector<1x128xf32>
    %124 = tpu.matmul %116, %123, %cst_183 {dimension_numbers = #tpu.dot_dimension_numbers<[1], [0], [0], [1], [0, 0, 1, 1], [], []>} : vector<1x32xf32>, vector<32x128xf32>, vector<1x128xf32> -> vector<1x128xf32>
    %c1_184 = arith.constant 1 : index
    %c0_185 = arith.constant 0 : index
    %125 = vector.load %arg11[%c1_184, %c0_185] : memref<4x128xf32, #tpu.memory_space<vmem>>, vector<1x128xf32>
    %126 = arith.addf %124, %125 : vector<1x128xf32>
    %c2_186 = arith.constant 2 : index
    %c0_187 = arith.constant 0 : index
    %c0_188 = arith.constant 0 : index
    %127 = vector.load %arg10[%c2_186, %c0_187, %c0_188] : memref<4x32x128xf32, #tpu.memory_space<vmem>>, vector<1x32x128xf32>
    %128 = vector.shape_cast %127 : vector<1x32x128xf32> to vector<32x128xf32>
    %cst_189 = arith.constant dense<0.000000e+00> : vector<1x128xf32>
    %129 = tpu.matmul %116, %128, %cst_189 {dimension_numbers = #tpu.dot_dimension_numbers<[1], [0], [0], [1], [0, 0, 1, 1], [], []>} : vector<1x32xf32>, vector<32x128xf32>, vector<1x128xf32> -> vector<1x128xf32>
    %c2_190 = arith.constant 2 : index
    %c0_191 = arith.constant 0 : index
    %130 = vector.load %arg11[%c2_190, %c0_191] : memref<4x128xf32, #tpu.memory_space<vmem>>, vector<1x128xf32>
    %131 = arith.addf %129, %130 : vector<1x128xf32>
    %c3_192 = arith.constant 3 : index
    %c0_193 = arith.constant 0 : index
    %c0_194 = arith.constant 0 : index
    %132 = vector.load %arg10[%c3_192, %c0_193, %c0_194] : memref<4x32x128xf32, #tpu.memory_space<vmem>>, vector<1x32x128xf32>
    %133 = vector.shape_cast %132 : vector<1x32x128xf32> to vector<32x128xf32>
    %cst_195 = arith.constant dense<0.000000e+00> : vector<1x128xf32>
    %134 = tpu.matmul %116, %133, %cst_195 {dimension_numbers = #tpu.dot_dimension_numbers<[1], [0], [0], [1], [0, 0, 1, 1], [], []>} : vector<1x32xf32>, vector<32x128xf32>, vector<1x128xf32> -> vector<1x128xf32>
    %c3_196 = arith.constant 3 : index
    %c0_197 = arith.constant 0 : index
    %135 = vector.load %arg11[%c3_196, %c0_197] : memref<4x128xf32, #tpu.memory_space<vmem>>, vector<1x128xf32>
    %136 = arith.addf %134, %135 : vector<1x128xf32>
    %137 = arith.maximumf %121, %126 : vector<1x128xf32>
    %138 = arith.maximumf %137, %131 : vector<1x128xf32>
    %139 = arith.maximumf %138, %136 : vector<1x128xf32>
    %140 = arith.subf %121, %139 : vector<1x128xf32>
    %141 = math.exp %140 : vector<1x128xf32>
    %142 = arith.subf %126, %139 : vector<1x128xf32>
    %143 = math.exp %142 : vector<1x128xf32>
    %144 = arith.subf %131, %139 : vector<1x128xf32>
    %145 = math.exp %144 : vector<1x128xf32>
    %146 = arith.subf %136, %139 : vector<1x128xf32>
    %147 = math.exp %146 : vector<1x128xf32>
    %148 = arith.addf %141, %143 : vector<1x128xf32>
    %149 = arith.addf %148, %145 : vector<1x128xf32>
    %150 = arith.addf %149, %147 : vector<1x128xf32>
    %151 = arith.divf %141, %150 : vector<1x128xf32>
    %152 = arith.divf %143, %150 : vector<1x128xf32>
    %153 = arith.divf %145, %150 : vector<1x128xf32>
    %154 = arith.divf %147, %150 : vector<1x128xf32>
    %c0_i32_198 = arith.constant 0 : i32
    %c4_i32_199 = arith.constant 4 : i32
    %155 = arith.addi %c0_i32_198, %c4_i32_199 : i32
    %c1_i32_200 = arith.constant 1 : i32
    scf.for %arg16 = %c0_i32_198 to %155 step %c1_i32_200  : i32 {
      %c4_i32_202 = arith.constant 4 : i32
      %156 = arith.muli %arg16, %c4_i32_202 : i32
      %c0_203 = arith.constant 0 : index
      %157 = arith.index_cast %156 : i32 to index
      %c0_204 = arith.constant 0 : index
      %c0_205 = arith.constant 0 : index
      %158 = vector.load %arg14[%c0_203, %157, %c0_204, %c0_205] : memref<4x16x16x128xf32, #tpu.memory_space<vmem>>, vector<1x4x16x128xf32>
      %159 = vector.shape_cast %158 : vector<1x4x16x128xf32> to vector<4x16x128xf32>
      %160 = vector.shape_cast %151 : vector<1x128xf32> to vector<1x1x128xf32>
      %161 = vector.broadcast %160 : vector<1x1x128xf32> to vector<4x16x128xf32>
      %162 = arith.mulf %161, %159 : vector<4x16x128xf32>
      %c1_206 = arith.constant 1 : index
      %163 = arith.index_cast %156 : i32 to index
      %c0_207 = arith.constant 0 : index
      %c0_208 = arith.constant 0 : index
      %164 = vector.load %arg14[%c1_206, %163, %c0_207, %c0_208] : memref<4x16x16x128xf32, #tpu.memory_space<vmem>>, vector<1x4x16x128xf32>
      %165 = vector.shape_cast %164 : vector<1x4x16x128xf32> to vector<4x16x128xf32>
      %166 = vector.shape_cast %152 : vector<1x128xf32> to vector<1x1x128xf32>
      %167 = vector.broadcast %166 : vector<1x1x128xf32> to vector<4x16x128xf32>
      %168 = arith.mulf %167, %165 : vector<4x16x128xf32>
      %169 = arith.addf %162, %168 : vector<4x16x128xf32>
      %c2_209 = arith.constant 2 : index
      %170 = arith.index_cast %156 : i32 to index
      %c0_210 = arith.constant 0 : index
      %c0_211 = arith.constant 0 : index
      %171 = vector.load %arg14[%c2_209, %170, %c0_210, %c0_211] : memref<4x16x16x128xf32, #tpu.memory_space<vmem>>, vector<1x4x16x128xf32>
      %172 = vector.shape_cast %171 : vector<1x4x16x128xf32> to vector<4x16x128xf32>
      %173 = vector.shape_cast %153 : vector<1x128xf32> to vector<1x1x128xf32>
      %174 = vector.broadcast %173 : vector<1x1x128xf32> to vector<4x16x128xf32>
      %175 = arith.mulf %174, %172 : vector<4x16x128xf32>
      %176 = arith.addf %169, %175 : vector<4x16x128xf32>
      %c3_212 = arith.constant 3 : index
      %177 = arith.index_cast %156 : i32 to index
      %c0_213 = arith.constant 0 : index
      %c0_214 = arith.constant 0 : index
      %178 = vector.load %arg14[%c3_212, %177, %c0_213, %c0_214] : memref<4x16x16x128xf32, #tpu.memory_space<vmem>>, vector<1x4x16x128xf32>
      %179 = vector.shape_cast %178 : vector<1x4x16x128xf32> to vector<4x16x128xf32>
      %180 = vector.shape_cast %154 : vector<1x128xf32> to vector<1x1x128xf32>
      %181 = vector.broadcast %180 : vector<1x1x128xf32> to vector<4x16x128xf32>
      %182 = arith.mulf %181, %179 : vector<4x16x128xf32>
      %183 = arith.addf %176, %182 : vector<4x16x128xf32>
      %c0_215 = arith.constant 0 : index
      %184 = arith.index_cast %156 : i32 to index
      %c0_216 = arith.constant 0 : index
      %c0_217 = arith.constant 0 : index
      %185 = vector.load %arg12[%c0_215, %184, %c0_216, %c0_217] : memref<1x16x16x128xf32, #tpu.memory_space<vmem>>, vector<1x4x16x128xf32>
      %186 = vector.shape_cast %185 : vector<1x4x16x128xf32> to vector<4x16x128xf32>
      %187 = vector.shape_cast %183 : vector<4x16x128xf32> to vector<1x4x16x128xf32>
      tpu.vector_store %arg12[%c0_215, %184, %c0_216, %c0_217], %187 {strides = array<i32>} : memref<1x16x16x128xf32, #tpu.memory_space<vmem>>, vector<1x4x16x128xf32>,
    }
    %c4_i32_201 = arith.constant 4 : i32
    return
  }
  func.func @transform_0(%arg0: i32) -> (i32, i32, i32, i32) {
    %c0_i32 = arith.constant 0 : i32
    %c0_i32_0 = arith.constant 0 : i32
    %c0_i32_1 = arith.constant 0 : i32
    %c0_i32_2 = arith.constant 0 : i32
    return %arg0, %c0_i32, %c0_i32_0, %c0_i32_1 : i32, i32, i32, i32
  }
  func.func @transform_1(%arg0: i32) -> (i32, i32) {
    %c0_i32 = arith.constant 0 : i32
    %c0_i32_0 = arith.constant 0 : i32
    %c0_i32_1 = arith.constant 0 : i32
    return %c0_i32, %c0_i32_0 : i32, i32
  }
  func.func @transform_2(%arg0: i32) -> (i32, i32) {
    %c0_i32 = arith.constant 0 : i32
    %c0_i32_0 = arith.constant 0 : i32
    %c0_i32_1 = arith.constant 0 : i32
    return %c0_i32, %c0_i32_0 : i32, i32
  }
  func.func @transform_3(%arg0: i32) -> (i32, i32) {
    %c0_i32 = arith.constant 0 : i32
    %c0_i32_0 = arith.constant 0 : i32
    %c0_i32_1 = arith.constant 0 : i32
    return %c0_i32, %c0_i32_0 : i32, i32
  }
  func.func @transform_4(%arg0: i32) -> (i32, i32) {
    %c0_i32 = arith.constant 0 : i32
    %c0_i32_0 = arith.constant 0 : i32
    %c0_i32_1 = arith.constant 0 : i32
    return %c0_i32, %c0_i32_0 : i32, i32
  }
  func.func @transform_5(%arg0: i32) -> (i32, i32) {
    %c0_i32 = arith.constant 0 : i32
    %c0_i32_0 = arith.constant 0 : i32
    %c0_i32_1 = arith.constant 0 : i32
    return %c0_i32, %c0_i32_0 : i32, i32
  }
  func.func @transform_6(%arg0: i32) -> (i32, i32) {
    %c0_i32 = arith.constant 0 : i32
    %c0_i32_0 = arith.constant 0 : i32
    %c0_i32_1 = arith.constant 0 : i32
    return %c0_i32, %c0_i32_0 : i32, i32
  }
  func.func @transform_7(%arg0: i32) -> (i32, i32) {
    %c0_i32 = arith.constant 0 : i32
    %c0_i32_0 = arith.constant 0 : i32
    %c0_i32_1 = arith.constant 0 : i32
    return %c0_i32, %c0_i32_0 : i32, i32
  }
  func.func @transform_8(%arg0: i32) -> (i32, i32) {
    %c0_i32 = arith.constant 0 : i32
    %c0_i32_0 = arith.constant 0 : i32
    %c0_i32_1 = arith.constant 0 : i32
    return %c0_i32, %c0_i32_0 : i32, i32
  }
  func.func @transform_9(%arg0: i32) -> (i32, i32, i32) {
    %c0_i32 = arith.constant 0 : i32
    %c0_i32_0 = arith.constant 0 : i32
    %c0_i32_1 = arith.constant 0 : i32
    %c0_i32_2 = arith.constant 0 : i32
    return %c0_i32, %c0_i32_0, %c0_i32_1 : i32, i32, i32
  }
  func.func @transform_10(%arg0: i32) -> (i32, i32) {
    %c0_i32 = arith.constant 0 : i32
    %c0_i32_0 = arith.constant 0 : i32
    %c0_i32_1 = arith.constant 0 : i32
    return %c0_i32, %c0_i32_0 : i32, i32
  }
  func.func @transform_11(%arg0: i32) -> (i32, i32, i32, i32) {
    %c0_i32 = arith.constant 0 : i32
    %c0_i32_0 = arith.constant 0 : i32
    %c0_i32_1 = arith.constant 0 : i32
    %c0_i32_2 = arith.constant 0 : i32
    return %arg0, %c0_i32, %c0_i32_0, %c0_i32_1 : i32, i32, i32, i32
  }
}

</mosaic_0001>

<llo_original>
// kernel: tpu_custom_call.1
$region0: #{tpu_custom_call.1}
  #allocation0 [shape = 'u32[]', space=smem, size = 0x4, offset = 0x4, fixed_abs, tag = 'smem constant byte address 0x4 - core index']
  #allocation1 [shape = 'u32[144,128]{1,0:T(1,128)}', space=vmem, size = 0x12000, scoped, tag = 'internal scratch']
  #allocation2 [shape = 'f32[7,22,16,128]{3,2,1,0:T(8,128)}', space=vmem, size = 0x134000, scoped, tag = 'scratch operand']
  #allocation3 [shape = 'f32[4,16,16,128]{3,2,1,0:T(8,128)}', space=vmem, size = 0x80000, scoped, tag = 'scratch operand']
  #allocation4 [shape = 'f32[1,128]{1,0:T(1,128)}', space=vmem, size = 0x200, scoped, tag = 'scratch operand']
  %s0 = inlined_call_operand.vmem [shape: f32[2,22,22,128], index: 0, kind: input, shape index: {}]
  %s1 = inlined_call_operand.vmem [shape: f32[128,128], index: 1, kind: input, shape index: {}]
  %s2 = inlined_call_operand.vmem [shape: f32[1,128], index: 2, kind: input, shape index: {}]
  %s3 = inlined_call_operand.vmem [shape: f32[128,128], index: 3, kind: input, shape index: {}]
  %s4 = inlined_call_operand.vmem [shape: f32[1,128], index: 4, kind: input, shape index: {}]
  %s5 = inlined_call_operand.vmem [shape: f32[4,128], index: 5, kind: input, shape index: {}]
  %s6 = inlined_call_operand.vmem [shape: f32[4,128], index: 6, kind: input, shape index: {}]
  %s7 = inlined_call_operand.vmem [shape: f32[128,32], index: 7, kind: input, shape index: {}]
  %s8 = inlined_call_operand.vmem [shape: f32[1,32], index: 8, kind: input, shape index: {}]
  %s9 = inlined_call_operand.vmem [shape: f32[4,32,128], index: 9, kind: input, shape index: {}]
  %s10 = inlined_call_operand.vmem [shape: f32[4,128], index: 10, kind: input, shape index: {}]
  %s11 = inlined_call_operand.hbm [shape: f32[2,16,16,128], index: 11, kind: output, shape index: {}]
  %s12 = sld [smem:[#allocation0]]
  $region91: #{tpu_custom_call.1} parent=0
    _
  %s14 = ssub.s32 1, %s12
  %s15 = scalar_select 0, %s14, %s12
  $region1: #{tpu_custom_call.1} parent=0
    #allocation5 [shape = 'u8[262144]{0}', space=vmem, size = 0x40000, scoped, tag = 'output window, operand 0']
    #allocation6 [shape = 's32[2]{0}', space=sflag, size = 0x8, scoped, tag = 'scoped memory for tpu_custom_call.1']
    %16 = vsyncpa [#allocation6], 0
    %s17 = scalar_lea.sflag [#allocation6], 1
    %18 = vsyncpa %s17, 0
    loop: start=0, step=1, limit=4
    $region2: #{tpu_custom_call.1} parent=1 // loop_pre_header
      _
    $region3: #{tpu_custom_call.1} parent=1 // loop_header
      %s20 = sphi 0, %s24
      %p21 = scmp.ge.s32.totalorder %s20, 4
      %s30 = sphi 0, %s32
      %s33 = sphi 0, %s30
      %s34 = sphi 0, %s33
      %s50 = sphi 0, %s34
      %s54 = sphi 0, %s54
      %s56 = sphi 0, %s54
      %s57 = sphi 0, %s56
      %s71 = sphi 0, %s57
      %s75 = sphi 0, %s75
      %s77 = sphi 0, %s75
      %s78 = sphi 0, %s77
      %s92 = sphi 0, %s78
      %s96 = sphi 0, %s96
      %s98 = sphi 0, %s96
      %s99 = sphi 0, %s98
      %s113 = sphi 0, %s99
      %s117 = sphi 0, %s117
      %s119 = sphi 0, %s117
      %s120 = sphi 0, %s119
      %s134 = sphi 0, %s120
      %s138 = sphi 0, %s138
      %s140 = sphi 0, %s138
      %s141 = sphi 0, %s140
      %s155 = sphi 0, %s141
      %s159 = sphi 0, %s159
      %s161 = sphi 0, %s159
      %s162 = sphi 0, %s161
      %s176 = sphi 0, %s162
      %s180 = sphi 0, %s180
      %s182 = sphi 0, %s180
      %s183 = sphi 0, %s182
      %s197 = sphi 0, %s183
      %s201 = sphi 0, %s201
      %s203 = sphi 0, %s201
      %s204 = sphi 0, %s203
      %s218 = sphi 0, %s204
      %s222 = sphi 0, %s222
      %s224 = sphi 0, %s222
      %s225 = sphi 0, %s224
      %s239 = sphi 0, %s225
      %s243 = sphi 0, %s243
      %s245 = sphi 0, %s243
      %s246 = sphi 0, %s245
      %s260 = sphi 0, %s246
      %s266 = sphi 0, %s268
      %s269 = sphi 0, %s266
      %s270 = sphi 0, %s269
      %s286 = sphi 0, %s270
    $region4: #{tpu_custom_call.1} parent=1 // loop_header_branch
      %23 = sbr.rel (%p21) target = $region8
    $region5: #{tpu_custom_call.1} parent=1 // loop_body
      %s25 = ssub.s32 %s20, 1
      %s26 = ssub.s32 %s20, 2
      %s27 = sadd.s32 %s20, 1
      %s28 = ssub.s32 %s20, %s27
      %p29 = scmp.eq.s32.totalorder %s28, 0
      %s31 = sadd.s32 %s30, 1
      %s32 = scalar_select %p29, %s30, %s31
      %p35 = pneg %p29
      %p36 = scmp.eq.s32.totalorder %s20, 1
      %p37 = por %p35, %p36
      %p38 = scmp.ne.s32.totalorder %s30, %s33
      %p39 = scmp.eq.s32.totalorder %s20, 0
      %p40 = por %p38, %p39
      %p41 = scmp.ne.s32.totalorder %s30, %s33
      %p42 = scmp.eq.s32.totalorder %s25, 1
      %p43 = por %p41, %p42
      %p44 = scmp.ne.s32.totalorder %s33, %s34
      %p45 = scmp.eq.s32.totalorder %s25, 0
      %p46 = por %p44, %p45
      %p47 = scmp.ne.s32.totalorder %s33, %s34
      %p48 = scmp.eq.s32.totalorder %s26, 1
      %p49 = por %p47, %p48
      %p51 = scmp.ne.s32.totalorder %s34, %s50
      %p52 = scmp.eq.s32.totalorder %s26, 0
      %p53 = por %p51, %p52
      %s55 = sadd.s32 %s54, 1
      %p58 = scmp.eq.s32.totalorder %s20, 1
      %p59 = scmp.ne.s32.totalorder %s54, %s56
      %p60 = scmp.eq.s32.totalorder %s20, 0
      %p61 = por %p59, %p60
      %p62 = scmp.ne.s32.totalorder %s54, %s56
      %p63 = scmp.eq.s32.totalorder %s25, 1
      %p64 = por %p62, %p63
      %p65 = scmp.ne.s32.totalorder %s56, %s57
      %p66 = scmp.eq.s32.totalorder %s25, 0
      %p67 = por %p65, %p66
      %p68 = scmp.ne.s32.totalorder %s56, %s57
      %p69 = scmp.eq.s32.totalorder %s26, 1
      %p70 = por %p68, %p69
      %p72 = scmp.ne.s32.totalorder %s57, %s71
      %p73 = scmp.eq.s32.totalorder %s26, 0
      %p74 = por %p72, %p73
      %s76 = sadd.s32 %s75, 1
      %p79 = scmp.eq.s32.totalorder %s20, 1
      %p80 = scmp.ne.s32.totalorder %s75, %s77
      %p81 = scmp.eq.s32.totalorder %s20, 0
      %p82 = por %p80, %p81
      %p83 = scmp.ne.s32.totalorder %s75, %s77
      %p84 = scmp.eq.s32.totalorder %s25, 1
      %p85 = por %p83, %p84
      %p86 = scmp.ne.s32.totalorder %s77, %s78
      %p87 = scmp.eq.s32.totalorder %s25, 0
      %p88 = por %p86, %p87
      %p89 = scmp.ne.s32.totalorder %s77, %s78
      %p90 = scmp.eq.s32.totalorder %s26, 1
      %p91 = por %p89, %p90
      %p93 = scmp.ne.s32.totalorder %s78, %s92
      %p94 = scmp.eq.s32.totalorder %s26, 0
      %p95 = por %p93, %p94
      %s97 = sadd.s32 %s96, 1
      %p100 = scmp.eq.s32.totalorder %s20, 1
      %p101 = scmp.ne.s32.totalorder %s96, %s98
      %p102 = scmp.eq.s32.totalorder %s20, 0
      %p103 = por %p101, %p102
      %p104 = scmp.ne.s32.totalorder %s96, %s98
      %p105 = scmp.eq.s32.totalorder %s25, 1
      %p106 = por %p104, %p105
      %p107 = scmp.ne.s32.totalorder %s98, %s99
      %p108 = scmp.eq.s32.totalorder %s25, 0
      %p109 = por %p107, %p108
      %p110 = scmp.ne.s32.totalorder %s98, %s99
      %p111 = scmp.eq.s32.totalorder %s26, 1
      %p112 = por %p110, %p111
      %p114 = scmp.ne.s32.totalorder %s99, %s113
      %p115 = scmp.eq.s32.totalorder %s26, 0
      %p116 = por %p114, %p115
      %s118 = sadd.s32 %s117, 1
      %p121 = scmp.eq.s32.totalorder %s20, 1
      %p122 = scmp.ne.s32.totalorder %s117, %s119
      %p123 = scmp.eq.s32.totalorder %s20, 0
      %p124 = por %p122, %p123
      %p125 = scmp.ne.s32.totalorder %s117, %s119
      %p126 = scmp.eq.s32.totalorder %s25, 1
      %p127 = por %p125, %p126
      %p128 = scmp.ne.s32.totalorder %s119, %s120
      %p129 = scmp.eq.s32.totalorder %s25, 0
      %p130 = por %p128, %p129
      %p131 = scmp.ne.s32.totalorder %s119, %s120
      %p132 = scmp.eq.s32.totalorder %s26, 1
      %p133 = por %p131, %p132
      %p135 = scmp.ne.s32.totalorder %s120, %s134
      %p136 = scmp.eq.s32.totalorder %s26, 0
      %p137 = por %p135, %p136
      %s139 = sadd.s32 %s138, 1
      %p142 = scmp.eq.s32.totalorder %s20, 1
      %p143 = scmp.ne.s32.totalorder %s138, %s140
      %p144 = scmp.eq.s32.totalorder %s20, 0
      %p145 = por %p143, %p144
      %p146 = scmp.ne.s32.totalorder %s138, %s140
      %p147 = scmp.eq.s32.totalorder %s25, 1
      %p148 = por %p146, %p147
      %p149 = scmp.ne.s32.totalorder %s140, %s141
      %p150 = scmp.eq.s32.totalorder %s25, 0
      %p151 = por %p149, %p150
      %p152 = scmp.ne.s32.totalorder %s140, %s141
      %p153 = scmp.eq.s32.totalorder %s26, 1
      %p154 = por %p152, %p153
      %p156 = scmp.ne.s32.totalorder %s141, %s155
      %p157 = scmp.eq.s32.totalorder %s26, 0
      %p158 = por %p156, %p157
      %s160 = sadd.s32 %s159, 1
      %p163 = scmp.eq.s32.totalorder %s20, 1
      %p164 = scmp.ne.s32.totalorder %s159, %s161
      %p165 = scmp.eq.s32.totalorder %s20, 0
      %p166 = por %p164, %p165
      %p167 = scmp.ne.s32.totalorder %s159, %s161
      %p168 = scmp.eq.s32.totalorder %s25, 1
      %p169 = por %p167, %p168
      %p170 = scmp.ne.s32.totalorder %s161, %s162
      %p171 = scmp.eq.s32.totalorder %s25, 0
      %p172 = por %p170, %p171
      %p173 = scmp.ne.s32.totalorder %s161, %s162
      %p174 = scmp.eq.s32.totalorder %s26, 1
      %p175 = por %p173, %p174
      %p177 = scmp.ne.s32.totalorder %s162, %s176
      %p178 = scmp.eq.s32.totalorder %s26, 0
      %p179 = por %p177, %p178
      %s181 = sadd.s32 %s180, 1
      %p184 = scmp.eq.s32.totalorder %s20, 1
      %p185 = scmp.ne.s32.totalorder %s180, %s182
      %p186 = scmp.eq.s32.totalorder %s20, 0
      %p187 = por %p185, %p186
      %p188 = scmp.ne.s32.totalorder %s180, %s182
      %p189 = scmp.eq.s32.totalorder %s25, 1
      %p190 = por %p188, %p189
      %p191 = scmp.ne.s32.totalorder %s182, %s183
      %p192 = scmp.eq.s32.totalorder %s25, 0
      %p193 = por %p191, %p192
      %p194 = scmp.ne.s32.totalorder %s182, %s183
      %p195 = scmp.eq.s32.totalorder %s26, 1
      %p196 = por %p194, %p195
      %p198 = scmp.ne.s32.totalorder %s183, %s197
      %p199 = scmp.eq.s32.totalorder %s26, 0
      %p200 = por %p198, %p199
      %s202 = sadd.s32 %s201, 1
      %p205 = scmp.eq.s32.totalorder %s20, 1
      %p206 = scmp.ne.s32.totalorder %s201, %s203
      %p207 = scmp.eq.s32.totalorder %s20, 0
      %p208 = por %p206, %p207
      %p209 = scmp.ne.s32.totalorder %s201, %s203
      %p210 = scmp.eq.s32.totalorder %s25, 1
      %p211 = por %p209, %p210
      %p212 = scmp.ne.s32.totalorder %s203, %s204
      %p213 = scmp.eq.s32.totalorder %s25, 0
      %p214 = por %p212, %p213
      %p215 = scmp.ne.s32.totalorder %s203, %s204
      %p216 = scmp.eq.s32.totalorder %s26, 1
      %p217 = por %p215, %p216
      %p219 = scmp.ne.s32.totalorder %s204, %s218
      %p220 = scmp.eq.s32.totalorder %s26, 0
      %p221 = por %p219, %p220
      %s223 = sadd.s32 %s222, 1
      %p226 = scmp.eq.s32.totalorder %s20, 1
      %p227 = scmp.ne.s32.totalorder %s222, %s224
      %p228 = scmp.eq.s32.totalorder %s20, 0
      %p229 = por %p227, %p228
      %p230 = scmp.ne.s32.totalorder %s222, %s224
      %p231 = scmp.eq.s32.totalorder %s25, 1
      %p232 = por %p230, %p231
      %p233 = scmp.ne.s32.totalorder %s224, %s225
      %p234 = scmp.eq.s32.totalorder %s25, 0
      %p235 = por %p233, %p234
      %p236 = scmp.ne.s32.totalorder %s224, %s225
      %p237 = scmp.eq.s32.totalorder %s26, 1
      %p238 = por %p236, %p237
      %p240 = scmp.ne.s32.totalorder %s225, %s239
      %p241 = scmp.eq.s32.totalorder %s26, 0
      %p242 = por %p240, %p241
      %s244 = sadd.s32 %s243, 1
      %p247 = scmp.eq.s32.totalorder %s20, 1
      %p248 = scmp.ne.s32.totalorder %s243, %s245
      %p249 = scmp.eq.s32.totalorder %s20, 0
      %p250 = por %p248, %p249
      %p251 = scmp.ne.s32.totalorder %s243, %s245
      %p252 = scmp.eq.s32.totalorder %s25, 1
      %p253 = por %p251, %p252
      %p254 = scmp.ne.s32.totalorder %s245, %s246
      %p255 = scmp.eq.s32.totalorder %s25, 0
      %p256 = por %p254, %p255
      %p257 = scmp.ne.s32.totalorder %s245, %s246
      %p258 = scmp.eq.s32.totalorder %s26, 1
      %p259 = por %p257, %p258
      %p261 = scmp.ne.s32.totalorder %s246, %s260
      %p262 = scmp.eq.s32.totalorder %s26, 0
      %p263 = por %p261, %p262
      %s264 = ssub.s32 %s20, %s27
      %p265 = scmp.eq.s32.totalorder %s264, 0
      %s267 = sadd.s32 %s266, 1
      %s268 = scalar_select %p265, %s266, %s267
      %p271 = pneg %p265
      %p272 = scmp.eq.s32.totalorder %s20, 1
      %p273 = por %p271, %p272
      %p274 = scmp.ne.s32.totalorder %s266, %s269
      %p275 = scmp.eq.s32.totalorder %s20, 0
      %p276 = por %p274, %p275
      %p277 = scmp.ne.s32.totalorder %s266, %s269
      %p278 = scmp.eq.s32.totalorder %s25, 1
      %p279 = por %p277, %p278
      %p280 = scmp.ne.s32.totalorder %s269, %s270
      %p281 = scmp.eq.s32.totalorder %s25, 0
      %p282 = por %p280, %p281
      %p283 = scmp.ne.s32.totalorder %s269, %s270
      %p284 = scmp.eq.s32.totalorder %s26, 1
      %p285 = por %p283, %p284
      %p287 = scmp.ne.s32.totalorder %s270, %s286
      %p288 = scmp.eq.s32.totalorder %s26, 0
      %p289 = por %p287, %p288
      %p290 = scmp.le.s32.totalorder 1, %s20
      %p291 = scmp.lt.s32.totalorder %s20, 3
      %p292 = pnand %p290, %p291
      %p293 = pneg %p292
      // Predicated region
      $region9: #{tpu_custom_call.1} parent=5 // pred_check
        _
      $region10: #{tpu_custom_call.1} parent=5 // pred_check_branch
        %295 = sbr.rel (%p292) target = $region12
      $region11: #{tpu_custom_call.1} parent=5 // pred_region
        %s296 = ssub.s32 %s20, 1
        // Predicated region
        $region13: #{tpu_custom_call.1} parent=11 // pred_check
          %p297 = pneg %p67
        $region14: #{tpu_custom_call.1} parent=11 // pred_check_branch
          %299 = sbr.rel (%p297) target = $region16
        $region15: #{tpu_custom_call.1} parent=11 // pred_region
          _
        $region16: #{tpu_custom_call.1} parent=11 // pred_fallthru
          _
        // Predicated region
        $region17: #{tpu_custom_call.1} parent=11 // pred_check
          %p300 = pneg %p88
        $region18: #{tpu_custom_call.1} parent=11 // pred_check_branch
          %302 = sbr.rel (%p300) target = $region20
        $region19: #{tpu_custom_call.1} parent=11 // pred_region
          _
        $region20: #{tpu_custom_call.1} parent=11 // pred_fallthru
          _
        // Predicated region
        $region21: #{tpu_custom_call.1} parent=11 // pred_check
          %p303 = pneg %p109
        $region22: #{tpu_custom_call.1} parent=11 // pred_check_branch
          %305 = sbr.rel (%p303) target = $region24
        $region23: #{tpu_custom_call.1} parent=11 // pred_region
          _
        $region24: #{tpu_custom_call.1} parent=11 // pred_fallthru
          _
        // Predicated region
        $region25: #{tpu_custom_call.1} parent=11 // pred_check
          %p306 = pneg %p130
        $region26: #{tpu_custom_call.1} parent=11 // pred_check_branch
          %308 = sbr.rel (%p306) target = $region28
        $region27: #{tpu_custom_call.1} parent=11 // pred_region
          _
        $region28: #{tpu_custom_call.1} parent=11 // pred_fallthru
          _
        // Predicated region
        $region29: #{tpu_custom_call.1} parent=11 // pred_check
          %p309 = pneg %p151
        $region30: #{tpu_custom_call.1} parent=11 // pred_check_branch
          %311 = sbr.rel (%p309) target = $region32
        $region31: #{tpu_custom_call.1} parent=11 // pred_region
          _
        $region32: #{tpu_custom_call.1} parent=11 // pred_fallthru
          _
        // Predicated region
        $region33: #{tpu_custom_call.1} parent=11 // pred_check
          %p312 = pneg %p172
        $region34: #{tpu_custom_call.1} parent=11 // pred_check_branch
          %314 = sbr.rel (%p312) target = $region36
        $region35: #{tpu_custom_call.1} parent=11 // pred_region
          _
        $region36: #{tpu_custom_call.1} parent=11 // pred_fallthru
          _
        // Predicated region
        $region37: #{tpu_custom_call.1} parent=11 // pred_check
          %p315 = pneg %p193
        $region38: #{tpu_custom_call.1} parent=11 // pred_check_branch
          %317 = sbr.rel (%p315) target = $region40
        $region39: #{tpu_custom_call.1} parent=11 // pred_region
          _
        $region40: #{tpu_custom_call.1} parent=11 // pred_fallthru
          _
        // Predicated region
        $region41: #{tpu_custom_call.1} parent=11 // pred_check
          %p318 = pneg %p214
        $region42: #{tpu_custom_call.1} parent=11 // pred_check_branch
          %320 = sbr.rel (%p318) target = $region44
        $region43: #{tpu_custom_call.1} parent=11 // pred_region
          _
        $region44: #{tpu_custom_call.1} parent=11 // pred_fallthru
          _
        // Predicated region
        $region45: #{tpu_custom_call.1} parent=11 // pred_check
          %p321 = pneg %p235
        $region46: #{tpu_custom_call.1} parent=11 // pred_check_branch
          %323 = sbr.rel (%p321) target = $region48
        $region47: #{tpu_custom_call.1} parent=11 // pred_region
          _
        $region48: #{tpu_custom_call.1} parent=11 // pred_fallthru
          _
        // Predicated region
        $region49: #{tpu_custom_call.1} parent=11 // pred_check
          %p324 = pneg %p256
        $region50: #{tpu_custom_call.1} parent=11 // pred_check_branch
          %326 = sbr.rel (%p324) target = $region52
        $region51: #{tpu_custom_call.1} parent=11 // pred_region
          _
        $region52: #{tpu_custom_call.1} parent=11 // pred_fallthru
          _
      $region12: #{tpu_custom_call.1} parent=5 // pred_fallthru
        _
      %p327 = scmp.lt.s32.totalorder %s20, 2
      // Predicated region
      $region53: #{tpu_custom_call.1} parent=5 // pred_check
        %p328 = pneg %p327
      $region54: #{tpu_custom_call.1} parent=5 // pred_check_branch
        %330 = sbr.rel (%p328) target = $region56
      $region55: #{tpu_custom_call.1} parent=5 // pred_region
        // Predicated region
        $region57: #{tpu_custom_call.1} parent=55 // pred_check
          %p331 = pneg %p40
        $region58: #{tpu_custom_call.1} parent=55 // pred_check_branch
          %333 = sbr.rel (%p331) target = $region60
        $region59: #{tpu_custom_call.1} parent=55 // pred_region
          %p334 = scmp.lt.s32.totalorder %s20, 1
          %s335 = scalar_select %p334, %s20, 1
          %s336 = smul.addr %s335, 66
          %s337 = smul.addr %s336, 8
          %s338 = scalar_lea.vmem %s0, %s337
        $region60: #{tpu_custom_call.1} parent=55 // pred_fallthru
          _
      $region56: #{tpu_custom_call.1} parent=5 // pred_fallthru
        _
      %p339 = scmp.le.s32.totalorder 1, %s20
      %p340 = scmp.lt.s32.totalorder %s20, 3
      %p341 = pnand %p339, %p340
      %p342 = pneg %p341
      // Predicated region
      $region61: #{tpu_custom_call.1} parent=5 // pred_check
        _
      $region62: #{tpu_custom_call.1} parent=5 // pred_check_branch
        %344 = sbr.rel (%p341) target = $region64
      $region63: #{tpu_custom_call.1} parent=5 // pred_region
        %s345 = ssub.s32 %s20, 1
        %p346 = scmp.lt.s32.totalorder %s25, 1
        %s347 = scalar_select %p346, %s25, 1
        %s348 = smul.addr %s347, 66
        %s349 = smul.addr %s348, 8
        %s350 = scalar_lea.vmem %s0, %s349
        %p351 = pneg %p46
        %p352 = pneg %p43
        %p353 = pneg %p67
        %p354 = pneg %p64
        %p355 = pneg %p88
        %p356 = pneg %p85
        %p357 = pneg %p109
        %p358 = pneg %p106
        %p359 = pneg %p130
        %p360 = pneg %p127
        %p361 = pneg %p151
        %p362 = pneg %p148
        %p363 = pneg %p172
        %p364 = pneg %p169
        %p365 = pneg %p193
        %p366 = pneg %p190
        %p367 = pneg %p214
        %p368 = pneg %p211
        %p369 = pneg %p235
        %p370 = pneg %p232
        %p371 = pneg %p256
        %p372 = pneg %p253
        %p373 = pneg %p282
        %p374 = pneg %p279
        %s375 = sand.u32 %s269, 1
        %s376 = scalar_lea.sflag [#allocation6], %s375
        %s377 = sand.u32 %s269, 1
        %s378 = smul.addr %s377, 256
        %s379 = scalar_lea.vmem [#allocation5], %s378
        %p380 = scmp.lt.s32.totalorder %s25, 1
        %s381 = scalar_select %p380, %s25, 1
        %s382 = smul.addr %s381, 66
        %s383 = smul.addr %s382, 8
        %s384 = scalar_lea.vmem %s0, %s383
        %v385 = vld [vmem:[%s384] sm:$0xff]
        %v386 = vld [vmem:[%s384 + $0x8] sm:$0xff]
        %v387 = vld [vmem:[%s384 + $0x18] sm:$0xff]
        %v388 = vld [vmem:[%s384 + $0x20] sm:$0xff]
        %v389 = vld [vmem:[%s384 + $0x30] sm:$0xff]
        %v390 = vld [vmem:[%s384 + $0x38] sm:$0xff]
        %v391 = vld [vmem:[%s384 + $0x48] sm:$0xff]
        %v392 = vld [vmem:[%s384 + $0x50] sm:$0xff]
        %v393 = vld [vmem:[%s384 + $0x60] sm:$0xff]
        %v394 = vld [vmem:[%s384 + $0x68] sm:$0xff]
        %v395 = vld [vmem:[%s384 + $0x78] sm:$0xff]
        %v396 = vld [vmem:[%s384 + $0x80] sm:$0xff]
        %v397 = vld [vmem:[%s384 + $0x90] sm:$0xff]
        %v398 = vld [vmem:[%s384 + $0x98] sm:$0xff]
        %v399 = vld [vmem:[%s384 + $0xa8] sm:$0xff]
        %v400 = vld [vmem:[%s384 + $0xb0] sm:$0xff]
        %401 = vst [vmem:[#allocation2] sm:$0xff] %v385
        %402 = vst [vmem:[#allocation2 + $0x8] sm:$0xff] %v386
        %403 = vst [vmem:[#allocation2 + $0x10] sm:$0xff] %v387
        %404 = vst [vmem:[#allocation2 + $0x18] sm:$0xff] %v388
        %405 = vst [vmem:[#allocation2 + $0x20] sm:$0xff] %v389
        %406 = vst [vmem:[#allocation2 + $0x28] sm:$0xff] %v390
        %407 = vst [vmem:[#allocation2 + $0x30] sm:$0xff] %v391
        %408 = vst [vmem:[#allocation2 + $0x38] sm:$0xff] %v392
        %409 = vst [vmem:[#allocation2 + $0x40] sm:$0xff] %v393
        %410 = vst [vmem:[#allocation2 + $0x48] sm:$0xff] %v394
        %411 = vst [vmem:[#allocation2 + $0x50] sm:$0xff] %v395
        %412 = vst [vmem:[#allocation2 + $0x58] sm:$0xff] %v396
        %413 = vst [vmem:[#allocation2 + $0x60] sm:$0xff] %v397
        %414 = vst [vmem:[#allocation2 + $0x68] sm:$0xff] %v398
        %415 = vst [vmem:[#allocation2 + $0x70] sm:$0xff] %v399
        %416 = vst [vmem:[#allocation2 + $0x78] sm:$0xff] %v400
        %s417 = scalar_lea.vmem %s384, 192
        %v418 = vld [vmem:[%s417] sm:$0xff]
        %v419 = vld [vmem:[%s417 + $0x8] sm:$0xff]
        %v420 = vld [vmem:[%s417 + $0x18] sm:$0xff]
        %v421 = vld [vmem:[%s417 + $0x20] sm:$0xff]
        %v422 = vld [vmem:[%s417 + $0x30] sm:$0xff]
        %v423 = vld [vmem:[%s417 + $0x38] sm:$0xff]
        %v424 = vld [vmem:[%s417 + $0x48] sm:$0xff]
        %v425 = vld [vmem:[%s417 + $0x50] sm:$0xff]
        %v426 = vld [vmem:[%s417 + $0x60] sm:$0xff]
        %v427 = vld [vmem:[%s417 + $0x68] sm:$0xff]
        %v428 = vld [vmem:[%s417 + $0x78] sm:$0xff]
        %v429 = vld [vmem:[%s417 + $0x80] sm:$0xff]
        %v430 = vld [vmem:[%s417 + $0x90] sm:$0xff]
        %v431 = vld [vmem:[%s417 + $0x98] sm:$0xff]
        %v432 = vld [vmem:[%s417 + $0xa8] sm:$0xff]
        %v433 = vld [vmem:[%s417 + $0xb0] sm:$0xff]
        %s434 = scalar_lea.vmem [#allocation2], 128
        %435 = vst [vmem:[%s434] sm:$0xff] %v418
        %436 = vst [vmem:[%s434 + $0x8] sm:$0xff] %v419
        %437 = vst [vmem:[%s434 + $0x10] sm:$0xff] %v420
        %438 = vst [vmem:[%s434 + $0x18] sm:$0xff] %v421
        %439 = vst [vmem:[%s434 + $0x20] sm:$0xff] %v422
        %440 = vst [vmem:[%s434 + $0x28] sm:$0xff] %v423
        %441 = vst [vmem:[%s434 + $0x30] sm:$0xff] %v424
        %442 = vst [vmem:[%s434 + $0x38] sm:$0xff] %v425
        %443 = vst [vmem:[%s434 + $0x40] sm:$0xff] %v426
        %444 = vst [vmem:[%s434 + $0x48] sm:$0xff] %v427
        %445 = vst [vmem:[%s434 + $0x50] sm:$0xff] %v428
        %446 = vst [vmem:[%s434 + $0x58] sm:$0xff] %v429
        %447 = vst [vmem:[%s434 + $0x60] sm:$0xff] %v430
        %448 = vst [vmem:[%s434 + $0x68] sm:$0xff] %v431
        %449 = vst [vmem:[%s434 + $0x70] sm:$0xff] %v432
        %450 = vst [vmem:[%s434 + $0x78] sm:$0xff] %v433
        %s451 = scalar_lea.vmem %s384, 384
        %v452 = vld [vmem:[%s451] sm:$0xff]
        %v453 = vld [vmem:[%s451 + $0x8] sm:$0xff]
        %v454 = vld [vmem:[%s451 + $0x18] sm:$0xff]
        %v455 = vld [vmem:[%s451 + $0x20] sm:$0xff]
        %v456 = vld [vmem:[%s451 + $0x30] sm:$0xff]
        %v457 = vld [vmem:[%s451 + $0x38] sm:$0xff]
        %v458 = vld [vmem:[%s451 + $0x48] sm:$0xff]
        %v459 = vld [vmem:[%s451 + $0x50] sm:$0xff]
        %v460 = vld [vmem:[%s451 + $0x60] sm:$0xff]
        %v461 = vld [vmem:[%s451 + $0x68] sm:$0xff]
        %v462 = vld [vmem:[%s451 + $0x78] sm:$0xff]
        %v463 = vld [vmem:[%s451 + $0x80] sm:$0xff]
        %s464 = scalar_lea.vmem [#allocation2], 256
        %465 = vst [vmem:[%s464] sm:$0xff] %v452
        %466 = vst [vmem:[%s464 + $0x8] sm:$0xff] %v453
        %467 = vst [vmem:[%s464 + $0x10] sm:$0xff] %v454
        %468 = vst [vmem:[%s464 + $0x18] sm:$0xff] %v455
        %469 = vst [vmem:[%s464 + $0x20] sm:$0xff] %v456
        %470 = vst [vmem:[%s464 + $0x28] sm:$0xff] %v457
        %471 = vst [vmem:[%s464 + $0x30] sm:$0xff] %v458
        %472 = vst [vmem:[%s464 + $0x38] sm:$0xff] %v459
        %473 = vst [vmem:[%s464 + $0x40] sm:$0xff] %v460
        %474 = vst [vmem:[%s464 + $0x48] sm:$0xff] %v461
        %475 = vst [vmem:[%s464 + $0x50] sm:$0xff] %v462
        %476 = vst [vmem:[%s464 + $0x58] sm:$0xff] %v463
        %v477 = vld [vmem:[%s384 + $0x1] sm:$0xff]
        %v478 = vld [vmem:[%s384 + $0x9] sm:$0xff]
        %v479 = vld [vmem:[%s384 + $0x19] sm:$0xff]
        %v480 = vld [vmem:[%s384 + $0x21] sm:$0xff]
        %v481 = vld [vmem:[%s384 + $0x31] sm:$0xff]
        %v482 = vld [vmem:[%s384 + $0x39] sm:$0xff]
        %v483 = vld [vmem:[%s384 + $0x49] sm:$0xff]
        %v484 = vld [vmem:[%s384 + $0x51] sm:$0xff]
        %v485 = vld [vmem:[%s384 + $0x61] sm:$0xff]
        %v486 = vld [vmem:[%s384 + $0x69] sm:$0xff]
        %v487 = vld [vmem:[%s384 + $0x79] sm:$0xff]
        %v488 = vld [vmem:[%s384 + $0x81] sm:$0xff]
        %v489 = vld [vmem:[%s384 + $0x91] sm:$0xff]
        %v490 = vld [vmem:[%s384 + $0x99] sm:$0xff]
        %v491 = vld [vmem:[%s384 + $0xa9] sm:$0xff]
        %v492 = vld [vmem:[%s384 + $0xb1] sm:$0xff]
        %s493 = scalar_lea.vmem [#allocation2], 352
        %494 = vst [vmem:[%s493] sm:$0xff] %v477
        %495 = vst [vmem:[%s493 + $0x8] sm:$0xff] %v478
        %496 = vst [vmem:[%s493 + $0x10] sm:$0xff] %v479
        %497 = vst [vmem:[%s493 + $0x18] sm:$0xff] %v480
        %498 = vst [vmem:[%s493 + $0x20] sm:$0xff] %v481
        %499 = vst [vmem:[%s493 + $0x28] sm:$0xff] %v482
        %500 = vst [vmem:[%s493 + $0x30] sm:$0xff] %v483
        %501 = vst [vmem:[%s493 + $0x38] sm:$0xff] %v484
        %502 = vst [vmem:[%s493 + $0x40] sm:$0xff] %v485
        %503 = vst [vmem:[%s493 + $0x48] sm:$0xff] %v486
        %504 = vst [vmem:[%s493 + $0x50] sm:$0xff] %v487
        %505 = vst [vmem:[%s493 + $0x58] sm:$0xff] %v488
        %506 = vst [vmem:[%s493 + $0x60] sm:$0xff] %v489
        %507 = vst [vmem:[%s493 + $0x68] sm:$0xff] %v490
        %508 = vst [vmem:[%s493 + $0x70] sm:$0xff] %v491
        %509 = vst [vmem:[%s493 + $0x78] sm:$0xff] %v492
        %v510 = vld [vmem:[%s417 + $0x1] sm:$0xff]
        %v511 = vld [vmem:[%s417 + $0x9] sm:$0xff]
        %v512 = vld [vmem:[%s417 + $0x19] sm:$0xff]
        %v513 = vld [vmem:[%s417 + $0x21] sm:$0xff]
        %v514 = vld [vmem:[%s417 + $0x31] sm:$0xff]
        %v515 = vld [vmem:[%s417 + $0x39] sm:$0xff]
        %v516 = vld [vmem:[%s417 + $0x49] sm:$0xff]
        %v517 = vld [vmem:[%s417 + $0x51] sm:$0xff]
        %v518 = vld [vmem:[%s417 + $0x61] sm:$0xff]
        %v519 = vld [vmem:[%s417 + $0x69] sm:$0xff]
        %v520 = vld [vmem:[%s417 + $0x79] sm:$0xff]
        %v521 = vld [vmem:[%s417 + $0x81] sm:$0xff]
        %v522 = vld [vmem:[%s417 + $0x91] sm:$0xff]
        %v523 = vld [vmem:[%s417 + $0x99] sm:$0xff]
        %v524 = vld [vmem:[%s417 + $0xa9] sm:$0xff]
        %v525 = vld [vmem:[%s417 + $0xb1] sm:$0xff]
        %s526 = scalar_lea.vmem [#allocation2], 480
        %527 = vst [vmem:[%s526] sm:$0xff] %v510
        %528 = vst [vmem:[%s526 + $0x8] sm:$0xff] %v511
        %529 = vst [vmem:[%s526 + $0x10] sm:$0xff] %v512
        %530 = vst [vmem:[%s526 + $0x18] sm:$0xff] %v513
        %531 = vst [vmem:[%s526 + $0x20] sm:$0xff] %v514
        %532 = vst [vmem:[%s526 + $0x28] sm:$0xff] %v515
        %533 = vst [vmem:[%s526 + $0x30] sm:$0xff] %v516
        %534 = vst [vmem:[%s526 + $0x38] sm:$0xff] %v517
        %535 = vst [vmem:[%s526 + $0x40] sm:$0xff] %v518
        %536 = vst [vmem:[%s526 + $0x48] sm:$0xff] %v519
        %537 = vst [vmem:[%s526 + $0x50] sm:$0xff] %v520
        %538 = vst [vmem:[%s526 + $0x58] sm:$0xff] %v521
        %539 = vst [vmem:[%s526 + $0x60] sm:$0xff] %v522
        %540 = vst [vmem:[%s526 + $0x68] sm:$0xff] %v523
        %541 = vst [vmem:[%s526 + $0x70] sm:$0xff] %v524
        %542 = vst [vmem:[%s526 + $0x78] sm:$0xff] %v525
        %v543 = vld [vmem:[%s451 + $0x1] sm:$0xff]
        %v544 = vld [vmem:[%s451 + $0x9] sm:$0xff]
        %v545 = vld [vmem:[%s451 + $0x19] sm:$0xff]
        %v546 = vld [vmem:[%s451 + $0x21] sm:$0xff]
        %v547 = vld [vmem:[%s451 + $0x31] sm:$0xff]
        %v548 = vld [vmem:[%s451 + $0x39] sm:$0xff]
        %v549 = vld [vmem:[%s451 + $0x49] sm:$0xff]
        %v550 = vld [vmem:[%s451 + $0x51] sm:$0xff]
        %v551 = vld [vmem:[%s451 + $0x61] sm:$0xff]
        %v552 = vld [vmem:[%s451 + $0x69] sm:$0xff]
        %v553 = vld [vmem:[%s451 + $0x79] sm:$0xff]
        %v554 = vld [vmem:[%s451 + $0x81] sm:$0xff]
        %s555 = scalar_lea.vmem [#allocation2], 608
        %556 = vst [vmem:[%s555] sm:$0xff] %v543
        %557 = vst [vmem:[%s555 + $0x8] sm:$0xff] %v544
        %558 = vst [vmem:[%s555 + $0x10] sm:$0xff] %v545
        %559 = vst [vmem:[%s555 + $0x18] sm:$0xff] %v546
        %560 = vst [vmem:[%s555 + $0x20] sm:$0xff] %v547
        %561 = vst [vmem:[%s555 + $0x28] sm:$0xff] %v548
        %562 = vst [vmem:[%s555 + $0x30] sm:$0xff] %v549
        %563 = vst [vmem:[%s555 + $0x38] sm:$0xff] %v550
        %564 = vst [vmem:[%s555 + $0x40] sm:$0xff] %v551
        %565 = vst [vmem:[%s555 + $0x48] sm:$0xff] %v552
        %566 = vst [vmem:[%s555 + $0x50] sm:$0xff] %v553
        %567 = vst [vmem:[%s555 + $0x58] sm:$0xff] %v554
        %v568 = vld [vmem:[%s384 + $0x2] sm:$0xff]
        %v569 = vld [vmem:[%s384 + $0xa] sm:$0xff]
        %v570 = vld [vmem:[%s384 + $0x1a] sm:$0xff]
        %v571 = vld [vmem:[%s384 + $0x22] sm:$0xff]
        %v572 = vld [vmem:[%s384 + $0x32] sm:$0xff]
        %v573 = vld [vmem:[%s384 + $0x3a] sm:$0xff]
        %v574 = vld [vmem:[%s384 + $0x4a] sm:$0xff]
        %v575 = vld [vmem:[%s384 + $0x52] sm:$0xff]
        %v576 = vld [vmem:[%s384 + $0x62] sm:$0xff]
        %v577 = vld [vmem:[%s384 + $0x6a] sm:$0xff]
        %v578 = vld [vmem:[%s384 + $0x7a] sm:$0xff]
        %v579 = vld [vmem:[%s384 + $0x82] sm:$0xff]
        %v580 = vld [vmem:[%s384 + $0x92] sm:$0xff]
        %v581 = vld [vmem:[%s384 + $0x9a] sm:$0xff]
        %v582 = vld [vmem:[%s384 + $0xaa] sm:$0xff]
        %v583 = vld [vmem:[%s384 + $0xb2] sm:$0xff]
        %s584 = scalar_lea.vmem [#allocation2], 704
        %585 = vst [vmem:[%s584] sm:$0xff] %v568
        %586 = vst [vmem:[%s584 + $0x8] sm:$0xff] %v569
        %587 = vst [vmem:[%s584 + $0x10] sm:$0xff] %v570
        %588 = vst [vmem:[%s584 + $0x18] sm:$0xff] %v571
        %589 = vst [vmem:[%s584 + $0x20] sm:$0xff] %v572
        %590 = vst [vmem:[%s584 + $0x28] sm:$0xff] %v573
        %591 = vst [vmem:[%s584 + $0x30] sm:$0xff] %v574
        %592 = vst [vmem:[%s584 + $0x38] sm:$0xff] %v575
        %593 = vst [vmem:[%s584 + $0x40] sm:$0xff] %v576
        %594 = vst [vmem:[%s584 + $0x48] sm:$0xff] %v577
        %595 = vst [vmem:[%s584 + $0x50] sm:$0xff] %v578
        %596 = vst [vmem:[%s584 + $0x58] sm:$0xff] %v579
        %597 = vst [vmem:[%s584 + $0x60] sm:$0xff] %v580
        %598 = vst [vmem:[%s584 + $0x68] sm:$0xff] %v581
        %599 = vst [vmem:[%s584 + $0x70] sm:$0xff] %v582
        %600 = vst [vmem:[%s584 + $0x78] sm:$0xff] %v583
        %v601 = vld [vmem:[%s417 + $0x2] sm:$0xff]
        %v602 = vld [vmem:[%s417 + $0xa] sm:$0xff]
        %v603 = vld [vmem:[%s417 + $0x1a] sm:$0xff]
        %v604 = vld [vmem:[%s417 + $0x22] sm:$0xff]
        %v605 = vld [vmem:[%s417 + $0x32] sm:$0xff]
        %v606 = vld [vmem:[%s417 + $0x3a] sm:$0xff]
        %v607 = vld [vmem:[%s417 + $0x4a] sm:$0xff]
        %v608 = vld [vmem:[%s417 + $0x52] sm:$0xff]
        %v609 = vld [vmem:[%s417 + $0x62] sm:$0xff]
        %v610 = vld [vmem:[%s417 + $0x6a] sm:$0xff]
        %v611 = vld [vmem:[%s417 + $0x7a] sm:$0xff]
        %v612 = vld [vmem:[%s417 + $0x82] sm:$0xff]
        %v613 = vld [vmem:[%s417 + $0x92] sm:$0xff]
        %v614 = vld [vmem:[%s417 + $0x9a] sm:$0xff]
        %v615 = vld [vmem:[%s417 + $0xaa] sm:$0xff]
        %v616 = vld [vmem:[%s417 + $0xb2] sm:$0xff]
        %s617 = scalar_lea.vmem [#allocation2], 832
        %618 = vst [vmem:[%s617] sm:$0xff] %v601
        %619 = vst [vmem:[%s617 + $0x8] sm:$0xff] %v602
        %620 = vst [vmem:[%s617 + $0x10] sm:$0xff] %v603
        %621 = vst [vmem:[%s617 + $0x18] sm:$0xff] %v604
        %622 = vst [vmem:[%s617 + $0x20] sm:$0xff] %v605
        %623 = vst [vmem:[%s617 + $0x28] sm:$0xff] %v606
        %624 = vst [vmem:[%s617 + $0x30] sm:$0xff] %v607
        %625 = vst [vmem:[%s617 + $0x38] sm:$0xff] %v608
        %626 = vst [vmem:[%s617 + $0x40] sm:$0xff] %v609
        %627 = vst [vmem:[%s617 + $0x48] sm:$0xff] %v610
        %628 = vst [vmem:[%s617 + $0x50] sm:$0xff] %v611
        %629 = vst [vmem:[%s617 + $0x58] sm:$0xff] %v612
        %630 = vst [vmem:[%s617 + $0x60] sm:$0xff] %v613
        %631 = vst [vmem:[%s617 + $0x68] sm:$0xff] %v614
        %632 = vst [vmem:[%s617 + $0x70] sm:$0xff] %v615
        %633 = vst [vmem:[%s617 + $0x78] sm:$0xff] %v616
        %v634 = vld [vmem:[%s451 + $0x2] sm:$0xff]
        %v635 = vld [vmem:[%s451 + $0xa] sm:$0xff]
        %v636 = vld [vmem:[%s451 + $0x1a] sm:$0xff]
        %v637 = vld [vmem:[%s451 + $0x22] sm:$0xff]
        %v638 = vld [vmem:[%s451 + $0x32] sm:$0xff]
        %v639 = vld [vmem:[%s451 + $0x3a] sm:$0xff]
        %v640 = vld [vmem:[%s451 + $0x4a] sm:$0xff]
        %v641 = vld [vmem:[%s451 + $0x52] sm:$0xff]
        %v642 = vld [vmem:[%s451 + $0x62] sm:$0xff]
        %v643 = vld [vmem:[%s451 + $0x6a] sm:$0xff]
        %v644 = vld [vmem:[%s451 + $0x7a] sm:$0xff]
        %v645 = vld [vmem:[%s451 + $0x82] sm:$0xff]
        %s646 = scalar_lea.vmem [#allocation2], 960
        %647 = vst [vmem:[%s646] sm:$0xff] %v634
        %648 = vst [vmem:[%s646 + $0x8] sm:$0xff] %v635
        %649 = vst [vmem:[%s646 + $0x10] sm:$0xff] %v636
        %650 = vst [vmem:[%s646 + $0x18] sm:$0xff] %v637
        %651 = vst [vmem:[%s646 + $0x20] sm:$0xff] %v638
        %652 = vst [vmem:[%s646 + $0x28] sm:$0xff] %v639
        %653 = vst [vmem:[%s646 + $0x30] sm:$0xff] %v640
        %654 = vst [vmem:[%s646 + $0x38] sm:$0xff] %v641
        %655 = vst [vmem:[%s646 + $0x40] sm:$0xff] %v642
        %656 = vst [vmem:[%s646 + $0x48] sm:$0xff] %v643
        %657 = vst [vmem:[%s646 + $0x50] sm:$0xff] %v644
        %658 = vst [vmem:[%s646 + $0x58] sm:$0xff] %v645
        %v659 = vld [vmem:[%s384 + $0x3] sm:$0xff]
        %v660 = vld [vmem:[%s384 + $0xb] sm:$0xff]
        %v661 = vld [vmem:[%s384 + $0x1b] sm:$0xff]
        %v662 = vld [vmem:[%s384 + $0x23] sm:$0xff]
        %v663 = vld [vmem:[%s384 + $0x33] sm:$0xff]
        %v664 = vld [vmem:[%s384 + $0x3b] sm:$0xff]
        %v665 = vld [vmem:[%s384 + $0x4b] sm:$0xff]
        %v666 = vld [vmem:[%s384 + $0x53] sm:$0xff]
        %v667 = vld [vmem:[%s384 + $0x63] sm:$0xff]
        %v668 = vld [vmem:[%s384 + $0x6b] sm:$0xff]
        %v669 = vld [vmem:[%s384 + $0x7b] sm:$0xff]
        %v670 = vld [vmem:[%s384 + $0x83] sm:$0xff]
        %v671 = vld [vmem:[%s384 + $0x93] sm:$0xff]
        %v672 = vld [vmem:[%s384 + $0x9b] sm:$0xff]
        %v673 = vld [vmem:[%s384 + $0xab] sm:$0xff]
        %v674 = vld [vmem:[%s384 + $0xb3] sm:$0xff]
        %s675 = scalar_lea.vmem [#allocation2], 1056
        %676 = vst [vmem:[%s675] sm:$0xff] %v659
        %677 = vst [vmem:[%s675 + $0x8] sm:$0xff] %v660
        %678 = vst [vmem:[%s675 + $0x10] sm:$0xff] %v661
        %679 = vst [vmem:[%s675 + $0x18] sm:$0xff] %v662
        %680 = vst [vmem:[%s675 + $0x20] sm:$0xff] %v663
        %681 = vst [vmem:[%s675 + $0x28] sm:$0xff] %v664
        %682 = vst [vmem:[%s675 + $0x30] sm:$0xff] %v665
        %683 = vst [vmem:[%s675 + $0x38] sm:$0xff] %v666
        %684 = vst [vmem:[%s675 + $0x40] sm:$0xff] %v667
        %685 = vst [vmem:[%s675 + $0x48] sm:$0xff] %v668
        %686 = vst [vmem:[%s675 + $0x50] sm:$0xff] %v669
        %687 = vst [vmem:[%s675 + $0x58] sm:$0xff] %v670
        %688 = vst [vmem:[%s675 + $0x60] sm:$0xff] %v671
        %689 = vst [vmem:[%s675 + $0x68] sm:$0xff] %v672
        %690 = vst [vmem:[%s675 + $0x70] sm:$0xff] %v673
        %691 = vst [vmem:[%s675 + $0x78] sm:$0xff] %v674
        %v692 = vld [vmem:[%s417 + $0x3] sm:$0xff]
        %v693 = vld [vmem:[%s417 + $0xb] sm:$0xff]
        %v694 = vld [vmem:[%s417 + $0x1b] sm:$0xff]
        %v695 = vld [vmem:[%s417 + $0x23] sm:$0xff]
        %v696 = vld [vmem:[%s417 + $0x33] sm:$0xff]
        %v697 = vld [vmem:[%s417 + $0x3b] sm:$0xff]
        %v698 = vld [vmem:[%s417 + $0x4b] sm:$0xff]
        %v699 = vld [vmem:[%s417 + $0x53] sm:$0xff]
        %v700 = vld [vmem:[%s417 + $0x63] sm:$0xff]
        %v701 = vld [vmem:[%s417 + $0x6b] sm:$0xff]
        %v702 = vld [vmem:[%s417 + $0x7b] sm:$0xff]
        %v703 = vld [vmem:[%s417 + $0x83] sm:$0xff]
        %v704 = vld [vmem:[%s417 + $0x93] sm:$0xff]
        %v705 = vld [vmem:[%s417 + $0x9b] sm:$0xff]
        %v706 = vld [vmem:[%s417 + $0xab] sm:$0xff]
        %v707 = vld [vmem:[%s417 + $0xb3] sm:$0xff]
        %s708 = scalar_lea.vmem [#allocation2], 1184
        %709 = vst [vmem:[%s708] sm:$0xff] %v692
        %710 = vst [vmem:[%s708 + $0x8] sm:$0xff] %v693
        %711 = vst [vmem:[%s708 + $0x10] sm:$0xff] %v694
        %712 = vst [vmem:[%s708 + $0x18] sm:$0xff] %v695
        %713 = vst [vmem:[%s708 + $0x20] sm:$0xff] %v696
        %714 = vst [vmem:[%s708 + $0x28] sm:$0xff] %v697
        %715 = vst [vmem:[%s708 + $0x30] sm:$0xff] %v698
        %716 = vst [vmem:[%s708 + $0x38] sm:$0xff] %v699
        %717 = vst [vmem:[%s708 + $0x40] sm:$0xff] %v700
        %718 = vst [vmem:[%s708 + $0x48] sm:$0xff] %v701
        %719 = vst [vmem:[%s708 + $0x50] sm:$0xff] %v702
        %720 = vst [vmem:[%s708 + $0x58] sm:$0xff] %v703
        %721 = vst [vmem:[%s708 + $0x60] sm:$0xff] %v704
        %722 = vst [vmem:[%s708 + $0x68] sm:$0xff] %v705
        %723 = vst [vmem:[%s708 + $0x70] sm:$0xff] %v706
        %724 = vst [vmem:[%s708 + $0x78] sm:$0xff] %v707
        %v725 = vld [vmem:[%s451 + $0x3] sm:$0xff]
        %v726 = vld [vmem:[%s451 + $0xb] sm:$0xff]
        %v727 = vld [vmem:[%s451 + $0x1b] sm:$0xff]
        %v728 = vld [vmem:[%s451 + $0x23] sm:$0xff]
        %v729 = vld [vmem:[%s451 + $0x33] sm:$0xff]
        %v730 = vld [vmem:[%s451 + $0x3b] sm:$0xff]
        %v731 = vld [vmem:[%s451 + $0x4b] sm:$0xff]
        %v732 = vld [vmem:[%s451 + $0x53] sm:$0xff]
        %v733 = vld [vmem:[%s451 + $0x63] sm:$0xff]
        %v734 = vld [vmem:[%s451 + $0x6b] sm:$0xff]
        %v735 = vld [vmem:[%s451 + $0x7b] sm:$0xff]
        %v736 = vld [vmem:[%s451 + $0x83] sm:$0xff]
        %s737 = scalar_lea.vmem [#allocation2], 1312
        %738 = vst [vmem:[%s737] sm:$0xff] %v725
        %739 = vst [vmem:[%s737 + $0x8] sm:$0xff] %v726
        %740 = vst [vmem:[%s737 + $0x10] sm:$0xff] %v727
        %741 = vst [vmem:[%s737 + $0x18] sm:$0xff] %v728
        %742 = vst [vmem:[%s737 + $0x20] sm:$0xff] %v729
        %743 = vst [vmem:[%s737 + $0x28] sm:$0xff] %v730
        %744 = vst [vmem:[%s737 + $0x30] sm:$0xff] %v731
        %745 = vst [vmem:[%s737 + $0x38] sm:$0xff] %v732
        %746 = vst [vmem:[%s737 + $0x40] sm:$0xff] %v733
        %747 = vst [vmem:[%s737 + $0x48] sm:$0xff] %v734
        %748 = vst [vmem:[%s737 + $0x50] sm:$0xff] %v735
        %749 = vst [vmem:[%s737 + $0x58] sm:$0xff] %v736
        %v750 = vld [vmem:[%s384 + $0x4] sm:$0xff]
        %v751 = vld [vmem:[%s384 + $0xc] sm:$0xff]
        %v752 = vld [vmem:[%s384 + $0x1c] sm:$0xff]
        %v753 = vld [vmem:[%s384 + $0x24] sm:$0xff]
        %v754 = vld [vmem:[%s384 + $0x34] sm:$0xff]
        %v755 = vld [vmem:[%s384 + $0x3c] sm:$0xff]
        %v756 = vld [vmem:[%s384 + $0x4c] sm:$0xff]
        %v757 = vld [vmem:[%s384 + $0x54] sm:$0xff]
        %v758 = vld [vmem:[%s384 + $0x64] sm:$0xff]
        %v759 = vld [vmem:[%s384 + $0x6c] sm:$0xff]
        %v760 = vld [vmem:[%s384 + $0x7c] sm:$0xff]
        %v761 = vld [vmem:[%s384 + $0x84] sm:$0xff]
        %v762 = vld [vmem:[%s384 + $0x94] sm:$0xff]
        %v763 = vld [vmem:[%s384 + $0x9c] sm:$0xff]
        %v764 = vld [vmem:[%s384 + $0xac] sm:$0xff]
        %v765 = vld [vmem:[%s384 + $0xb4] sm:$0xff]
        %s766 = scalar_lea.vmem [#allocation2], 1408
        %767 = vst [vmem:[%s766] sm:$0xff] %v750
        %768 = vst [vmem:[%s766 + $0x8] sm:$0xff] %v751
        %769 = vst [vmem:[%s766 + $0x10] sm:$0xff] %v752
        %770 = vst [vmem:[%s766 + $0x18] sm:$0xff] %v753
        %771 = vst [vmem:[%s766 + $0x20] sm:$0xff] %v754
        %772 = vst [vmem:[%s766 + $0x28] sm:$0xff] %v755
        %773 = vst [vmem:[%s766 + $0x30] sm:$0xff] %v756
        %774 = vst [vmem:[%s766 + $0x38] sm:$0xff] %v757
        %775 = vst [vmem:[%s766 + $0x40] sm:$0xff] %v758
        %776 = vst [vmem:[%s766 + $0x48] sm:$0xff] %v759
        %777 = vst [vmem:[%s766 + $0x50] sm:$0xff] %v760
        %778 = vst [vmem:[%s766 + $0x58] sm:$0xff] %v761
        %779 = vst [vmem:[%s766 + $0x60] sm:$0xff] %v762
        %780 = vst [vmem:[%s766 + $0x68] sm:$0xff] %v763
        %781 = vst [vmem:[%s766 + $0x70] sm:$0xff] %v764
        %782 = vst [vmem:[%s766 + $0x78] sm:$0xff] %v765
        %v783 = vld [vmem:[%s417 + $0x4] sm:$0xff]
        %v784 = vld [vmem:[%s417 + $0xc] sm:$0xff]
        %v785 = vld [vmem:[%s417 + $0x1c] sm:$0xff]
        %v786 = vld [vmem:[%s417 + $0x24] sm:$0xff]
        %v787 = vld [vmem:[%s417 + $0x34] sm:$0xff]
        %v788 = vld [vmem:[%s417 + $0x3c] sm:$0xff]
        %v789 = vld [vmem:[%s417 + $0x4c] sm:$0xff]
        %v790 = vld [vmem:[%s417 + $0x54] sm:$0xff]
        %v791 = vld [vmem:[%s417 + $0x64] sm:$0xff]
        %v792 = vld [vmem:[%s417 + $0x6c] sm:$0xff]
        %v793 = vld [vmem:[%s417 + $0x7c] sm:$0xff]
        %v794 = vld [vmem:[%s417 + $0x84] sm:$0xff]
        %v795 = vld [vmem:[%s417 + $0x94] sm:$0xff]
        %v796 = vld [vmem:[%s417 + $0x9c] sm:$0xff]
        %v797 = vld [vmem:[%s417 + $0xac] sm:$0xff]
        %v798 = vld [vmem:[%s417 + $0xb4] sm:$0xff]
        %s799 = scalar_lea.vmem [#allocation2], 1536
        %800 = vst [vmem:[%s799] sm:$0xff] %v783
        %801 = vst [vmem:[%s799 + $0x8] sm:$0xff] %v784
        %802 = vst [vmem:[%s799 + $0x10] sm:$0xff] %v785
        %803 = vst [vmem:[%s799 + $0x18] sm:$0xff] %v786
        %804 = vst [vmem:[%s799 + $0x20] sm:$0xff] %v787
        %805 = vst [vmem:[%s799 + $0x28] sm:$0xff] %v788
        %806 = vst [vmem:[%s799 + $0x30] sm:$0xff] %v789
        %807 = vst [vmem:[%s799 + $0x38] sm:$0xff] %v790
        %808 = vst [vmem:[%s799 + $0x40] sm:$0xff] %v791
        %809 = vst [vmem:[%s799 + $0x48] sm:$0xff] %v792
        %810 = vst [vmem:[%s799 + $0x50] sm:$0xff] %v793
        %811 = vst [vmem:[%s799 + $0x58] sm:$0xff] %v794
        %812 = vst [vmem:[%s799 + $0x60] sm:$0xff] %v795
        %813 = vst [vmem:[%s799 + $0x68] sm:$0xff] %v796
        %814 = vst [vmem:[%s799 + $0x70] sm:$0xff] %v797
        %815 = vst [vmem:[%s799 + $0x78] sm:$0xff] %v798
        %v816 = vld [vmem:[%s451 + $0x4] sm:$0xff]
        %v817 = vld [vmem:[%s451 + $0xc] sm:$0xff]
        %v818 = vld [vmem:[%s451 + $0x1c] sm:$0xff]
        %v819 = vld [vmem:[%s451 + $0x24] sm:$0xff]
        %v820 = vld [vmem:[%s451 + $0x34] sm:$0xff]
        %v821 = vld [vmem:[%s451 + $0x3c] sm:$0xff]
        %v822 = vld [vmem:[%s451 + $0x4c] sm:$0xff]
        %v823 = vld [vmem:[%s451 + $0x54] sm:$0xff]
        %v824 = vld [vmem:[%s451 + $0x64] sm:$0xff]
        %v825 = vld [vmem:[%s451 + $0x6c] sm:$0xff]
        %v826 = vld [vmem:[%s451 + $0x7c] sm:$0xff]
        %v827 = vld [vmem:[%s451 + $0x84] sm:$0xff]
        %s828 = scalar_lea.vmem [#allocation2], 1664
        %829 = vst [vmem:[%s828] sm:$0xff] %v816
        %830 = vst [vmem:[%s828 + $0x8] sm:$0xff] %v817
        %831 = vst [vmem:[%s828 + $0x10] sm:$0xff] %v818
        %832 = vst [vmem:[%s828 + $0x18] sm:$0xff] %v819
        %833 = vst [vmem:[%s828 + $0x20] sm:$0xff] %v820
        %834 = vst [vmem:[%s828 + $0x28] sm:$0xff] %v821
        %835 = vst [vmem:[%s828 + $0x30] sm:$0xff] %v822
        %836 = vst [vmem:[%s828 + $0x38] sm:$0xff] %v823
        %837 = vst [vmem:[%s828 + $0x40] sm:$0xff] %v824
        %838 = vst [vmem:[%s828 + $0x48] sm:$0xff] %v825
        %839 = vst [vmem:[%s828 + $0x50] sm:$0xff] %v826
        %840 = vst [vmem:[%s828 + $0x58] sm:$0xff] %v827
        %v841 = vld [vmem:[%s384 + $0x5] sm:$0xff]
        %v842 = vld [vmem:[%s384 + $0xd] sm:$0xff]
        %v843 = vld [vmem:[%s384 + $0x1d] sm:$0xff]
        %v844 = vld [vmem:[%s384 + $0x25] sm:$0xff]
        %v845 = vld [vmem:[%s384 + $0x35] sm:$0xff]
        %v846 = vld [vmem:[%s384 + $0x3d] sm:$0xff]
        %v847 = vld [vmem:[%s384 + $0x4d] sm:$0xff]
        %v848 = vld [vmem:[%s384 + $0x55] sm:$0xff]
        %v849 = vld [vmem:[%s384 + $0x65] sm:$0xff]
        %v850 = vld [vmem:[%s384 + $0x6d] sm:$0xff]
        %v851 = vld [vmem:[%s384 + $0x7d] sm:$0xff]
        %v852 = vld [vmem:[%s384 + $0x85] sm:$0xff]
        %v853 = vld [vmem:[%s384 + $0x95] sm:$0xff]
        %v854 = vld [vmem:[%s384 + $0x9d] sm:$0xff]
        %v855 = vld [vmem:[%s384 + $0xad] sm:$0xff]
        %v856 = vld [vmem:[%s384 + $0xb5] sm:$0xff]
        %s857 = scalar_lea.vmem [#allocation2], 1760
        %858 = vst [vmem:[%s857] sm:$0xff] %v841
        %859 = vst [vmem:[%s857 + $0x8] sm:$0xff] %v842
        %860 = vst [vmem:[%s857 + $0x10] sm:$0xff] %v843
        %861 = vst [vmem:[%s857 + $0x18] sm:$0xff] %v844
        %862 = vst [vmem:[%s857 + $0x20] sm:$0xff] %v845
        %863 = vst [vmem:[%s857 + $0x28] sm:$0xff] %v846
        %864 = vst [vmem:[%s857 + $0x30] sm:$0xff] %v847
        %865 = vst [vmem:[%s857 + $0x38] sm:$0xff] %v848
        %866 = vst [vmem:[%s857 + $0x40] sm:$0xff] %v849
        %867 = vst [vmem:[%s857 + $0x48] sm:$0xff] %v850
        %868 = vst [vmem:[%s857 + $0x50] sm:$0xff] %v851
        %869 = vst [vmem:[%s857 + $0x58] sm:$0xff] %v852
        %870 = vst [vmem:[%s857 + $0x60] sm:$0xff] %v853
        %871 = vst [vmem:[%s857 + $0x68] sm:$0xff] %v854
        %872 = vst [vmem:[%s857 + $0x70] sm:$0xff] %v855
        %873 = vst [vmem:[%s857 + $0x78] sm:$0xff] %v856
        %v874 = vld [vmem:[%s417 + $0x5] sm:$0xff]
        %v875 = vld [vmem:[%s417 + $0xd] sm:$0xff]
        %v876 = vld [vmem:[%s417 + $0x1d] sm:$0xff]
        %v877 = vld [vmem:[%s417 + $0x25] sm:$0xff]
        %v878 = vld [vmem:[%s417 + $0x35] sm:$0xff]
        %v879 = vld [vmem:[%s417 + $0x3d] sm:$0xff]
        %v880 = vld [vmem:[%s417 + $0x4d] sm:$0xff]
        %v881 = vld [vmem:[%s417 + $0x55] sm:$0xff]
        %v882 = vld [vmem:[%s417 + $0x65] sm:$0xff]
        %v883 = vld [vmem:[%s417 + $0x6d] sm:$0xff]
        %v884 = vld [vmem:[%s417 + $0x7d] sm:$0xff]
        %v885 = vld [vmem:[%s417 + $0x85] sm:$0xff]
        %v886 = vld [vmem:[%s417 + $0x95] sm:$0xff]
        %v887 = vld [vmem:[%s417 + $0x9d] sm:$0xff]
        %v888 = vld [vmem:[%s417 + $0xad] sm:$0xff]
        %v889 = vld [vmem:[%s417 + $0xb5] sm:$0xff]
        %s890 = scalar_lea.vmem [#allocation2], 1888
        %891 = vst [vmem:[%s890] sm:$0xff] %v874
        %892 = vst [vmem:[%s890 + $0x8] sm:$0xff] %v875
        %893 = vst [vmem:[%s890 + $0x10] sm:$0xff] %v876
        %894 = vst [vmem:[%s890 + $0x18] sm:$0xff] %v877
        %895 = vst [vmem:[%s890 + $0x20] sm:$0xff] %v878
        %896 = vst [vmem:[%s890 + $0x28] sm:$0xff] %v879
        %897 = vst [vmem:[%s890 + $0x30] sm:$0xff] %v880
        %898 = vst [vmem:[%s890 + $0x38] sm:$0xff] %v881
        %899 = vst [vmem:[%s890 + $0x40] sm:$0xff] %v882
        %900 = vst [vmem:[%s890 + $0x48] sm:$0xff] %v883
        %901 = vst [vmem:[%s890 + $0x50] sm:$0xff] %v884
        %902 = vst [vmem:[%s890 + $0x58] sm:$0xff] %v885
        %903 = vst [vmem:[%s890 + $0x60] sm:$0xff] %v886
        %904 = vst [vmem:[%s890 + $0x68] sm:$0xff] %v887
        %905 = vst [vmem:[%s890 + $0x70] sm:$0xff] %v888
        %906 = vst [vmem:[%s890 + $0x78] sm:$0xff] %v889
        %v907 = vld [vmem:[%s451 + $0x5] sm:$0xff]
        %v908 = vld [vmem:[%s451 + $0xd] sm:$0xff]
        %v909 = vld [vmem:[%s451 + $0x1d] sm:$0xff]
        %v910 = vld [vmem:[%s451 + $0x25] sm:$0xff]
        %v911 = vld [vmem:[%s451 + $0x35] sm:$0xff]
        %v912 = vld [vmem:[%s451 + $0x3d] sm:$0xff]
        %v913 = vld [vmem:[%s451 + $0x4d] sm:$0xff]
        %v914 = vld [vmem:[%s451 + $0x55] sm:$0xff]
        %v915 = vld [vmem:[%s451 + $0x65] sm:$0xff]
        %v916 = vld [vmem:[%s451 + $0x6d] sm:$0xff]
        %v917 = vld [vmem:[%s451 + $0x7d] sm:$0xff]
        %v918 = vld [vmem:[%s451 + $0x85] sm:$0xff]
        %s919 = scalar_lea.vmem [#allocation2], 2016
        %920 = vst [vmem:[%s919] sm:$0xff] %v907
        %921 = vst [vmem:[%s919 + $0x8] sm:$0xff] %v908
        %922 = vst [vmem:[%s919 + $0x10] sm:$0xff] %v909
        %923 = vst [vmem:[%s919 + $0x18] sm:$0xff] %v910
        %924 = vst [vmem:[%s919 + $0x20] sm:$0xff] %v911
        %925 = vst [vmem:[%s919 + $0x28] sm:$0xff] %v912
        %926 = vst [vmem:[%s919 + $0x30] sm:$0xff] %v913
        %927 = vst [vmem:[%s919 + $0x38] sm:$0xff] %v914
        %928 = vst [vmem:[%s919 + $0x40] sm:$0xff] %v915
        %929 = vst [vmem:[%s919 + $0x48] sm:$0xff] %v916
        %930 = vst [vmem:[%s919 + $0x50] sm:$0xff] %v917
        %931 = vst [vmem:[%s919 + $0x58] sm:$0xff] %v918
        %v932 = vld [vmem:[%s384 + $0x6] sm:$0xff]
        %v933 = vld [vmem:[%s384 + $0xe] sm:$0xff]
        %v934 = vld [vmem:[%s384 + $0x1e] sm:$0xff]
        %v935 = vld [vmem:[%s384 + $0x26] sm:$0xff]
        %v936 = vld [vmem:[%s384 + $0x36] sm:$0xff]
        %v937 = vld [vmem:[%s384 + $0x3e] sm:$0xff]
        %v938 = vld [vmem:[%s384 + $0x4e] sm:$0xff]
        %v939 = vld [vmem:[%s384 + $0x56] sm:$0xff]
        %v940 = vld [vmem:[%s384 + $0x66] sm:$0xff]
        %v941 = vld [vmem:[%s384 + $0x6e] sm:$0xff]
        %v942 = vld [vmem:[%s384 + $0x7e] sm:$0xff]
        %v943 = vld [vmem:[%s384 + $0x86] sm:$0xff]
        %v944 = vld [vmem:[%s384 + $0x96] sm:$0xff]
        %v945 = vld [vmem:[%s384 + $0x9e] sm:$0xff]
        %v946 = vld [vmem:[%s384 + $0xae] sm:$0xff]
        %v947 = vld [vmem:[%s384 + $0xb6] sm:$0xff]
        %s948 = scalar_lea.vmem [#allocation2], 2112
        %949 = vst [vmem:[%s948] sm:$0xff] %v932
        %950 = vst [vmem:[%s948 + $0x8] sm:$0xff] %v933
        %951 = vst [vmem:[%s948 + $0x10] sm:$0xff] %v934
        %952 = vst [vmem:[%s948 + $0x18] sm:$0xff] %v935
        %953 = vst [vmem:[%s948 + $0x20] sm:$0xff] %v936
        %954 = vst [vmem:[%s948 + $0x28] sm:$0xff] %v937
        %955 = vst [vmem:[%s948 + $0x30] sm:$0xff] %v938
        %956 = vst [vmem:[%s948 + $0x38] sm:$0xff] %v939
        %957 = vst [vmem:[%s948 + $0x40] sm:$0xff] %v940
        %958 = vst [vmem:[%s948 + $0x48] sm:$0xff] %v941
        %959 = vst [vmem:[%s948 + $0x50] sm:$0xff] %v942
        %960 = vst [vmem:[%s948 + $0x58] sm:$0xff] %v943
        %961 = vst [vmem:[%s948 + $0x60] sm:$0xff] %v944
        %962 = vst [vmem:[%s948 + $0x68] sm:$0xff] %v945
        %963 = vst [vmem:[%s948 + $0x70] sm:$0xff] %v946
        %964 = vst [vmem:[%s948 + $0x78] sm:$0xff] %v947
        %v965 = vld [vmem:[%s417 + $0x6] sm:$0xff]
        %v966 = vld [vmem:[%s417 + $0xe] sm:$0xff]
        %v967 = vld [vmem:[%s417 + $0x1e] sm:$0xff]
        %v968 = vld [vmem:[%s417 + $0x26] sm:$0xff]
        %v969 = vld [vmem:[%s417 + $0x36] sm:$0xff]
        %v970 = vld [vmem:[%s417 + $0x3e] sm:$0xff]
        %v971 = vld [vmem:[%s417 + $0x4e] sm:$0xff]
        %v972 = vld [vmem:[%s417 + $0x56] sm:$0xff]
        %v973 = vld [vmem:[%s417 + $0x66] sm:$0xff]
        %v974 = vld [vmem:[%s417 + $0x6e] sm:$0xff]
        %v975 = vld [vmem:[%s417 + $0x7e] sm:$0xff]
        %v976 = vld [vmem:[%s417 + $0x86] sm:$0xff]
        %v977 = vld [vmem:[%s417 + $0x96] sm:$0xff]
        %v978 = vld [vmem:[%s417 + $0x9e] sm:$0xff]
        %v979 = vld [vmem:[%s417 + $0xae] sm:$0xff]
        %v980 = vld [vmem:[%s417 + $0xb6] sm:$0xff]
        %s981 = scalar_lea.vmem [#allocation2], 2240
        %982 = vst [vmem:[%s981] sm:$0xff] %v965
        %983 = vst [vmem:[%s981 + $0x8] sm:$0xff] %v966
        %984 = vst [vmem:[%s981 + $0x10] sm:$0xff] %v967
        %985 = vst [vmem:[%s981 + $0x18] sm:$0xff] %v968
        %986 = vst [vmem:[%s981 + $0x20] sm:$0xff] %v969
        %987 = vst [vmem:[%s981 + $0x28] sm:$0xff] %v970
        %988 = vst [vmem:[%s981 + $0x30] sm:$0xff] %v971
        %989 = vst [vmem:[%s981 + $0x38] sm:$0xff] %v972
        %990 = vst [vmem:[%s981 + $0x40] sm:$0xff] %v973
        %991 = vst [vmem:[%s981 + $0x48] sm:$0xff] %v974
        %992 = vst [vmem:[%s981 + $0x50] sm:$0xff] %v975
        %993 = vst [vmem:[%s981 + $0x58] sm:$0xff] %v976
        %994 = vst [vmem:[%s981 + $0x60] sm:$0xff] %v977
        %995 = vst [vmem:[%s981 + $0x68] sm:$0xff] %v978
        %996 = vst [vmem:[%s981 + $0x70] sm:$0xff] %v979
        %997 = vst [vmem:[%s981 + $0x78] sm:$0xff] %v980
        %v998 = vld [vmem:[%s451 + $0x6] sm:$0xff]
        %v999 = vld [vmem:[%s451 + $0xe] sm:$0xff]
        %v1000 = vld [vmem:[%s451 + $0x1e] sm:$0xff]
        %v1001 = vld [vmem:[%s451 + $0x26] sm:$0xff]
        %v1002 = vld [vmem:[%s451 + $0x36] sm:$0xff]
        %v1003 = vld [vmem:[%s451 + $0x3e] sm:$0xff]
        %v1004 = vld [vmem:[%s451 + $0x4e] sm:$0xff]
        %v1005 = vld [vmem:[%s451 + $0x56] sm:$0xff]
        %v1006 = vld [vmem:[%s451 + $0x66] sm:$0xff]
        %v1007 = vld [vmem:[%s451 + $0x6e] sm:$0xff]
        %v1008 = vld [vmem:[%s451 + $0x7e] sm:$0xff]
        %v1009 = vld [vmem:[%s451 + $0x86] sm:$0xff]
        %s1010 = scalar_lea.vmem [#allocation2], 2368
        %1011 = vst [vmem:[%s1010] sm:$0xff] %v998
        %1012 = vst [vmem:[%s1010 + $0x8] sm:$0xff] %v999
        %1013 = vst [vmem:[%s1010 + $0x10] sm:$0xff] %v1000
        %1014 = vst [vmem:[%s1010 + $0x18] sm:$0xff] %v1001
        %1015 = vst [vmem:[%s1010 + $0x20] sm:$0xff] %v1002
        %1016 = vst [vmem:[%s1010 + $0x28] sm:$0xff] %v1003
        %1017 = vst [vmem:[%s1010 + $0x30] sm:$0xff] %v1004
        %1018 = vst [vmem:[%s1010 + $0x38] sm:$0xff] %v1005
        %1019 = vst [vmem:[%s1010 + $0x40] sm:$0xff] %v1006
        %1020 = vst [vmem:[%s1010 + $0x48] sm:$0xff] %v1007
        %1021 = vst [vmem:[%s1010 + $0x50] sm:$0xff] %v1008
        %1022 = vst [vmem:[%s1010 + $0x58] sm:$0xff] %v1009
        %1023 = vst [vmem:[#allocation4] sm:$0x1] 0.0
        %v1024 = vld [vmem:[%s5] sm:$0xf]
        %v1025 = vld [vmem:[%s6] sm:$0xf]
        loop: start=0, step=1, limit=4
        $region65: #{tpu_custom_call.1} parent=63 // loop_pre_header
          _
        $region66: #{tpu_custom_call.1} parent=63 // loop_header
          %s1027 = sphi 0, %s1031
          %p1028 = scmp.ge.s32.totalorder %s1027, 4
        $region67: #{tpu_custom_call.1} parent=63 // loop_header_branch
          %1030 = sbr.rel (%p1028) target = $region71
        $region68: #{tpu_custom_call.1} parent=63 // loop_body
          %s1032 = smul.u32 %s1027, 4
          %s1033 = sadd.s32 %s1032, 3
          %s1034 = smul.u32 %s1033, 16
          %s1035 = sadd.s32 %s1034, 1056
          %s1036 = scalar_lea.vmem [#allocation2], %s1035
          %v1037 = vld [vmem:[%s1036] sm:$0xff]
          %v1038 = vld [vmem:[%s1036 + $0x8] sm:$0xff]
          %v1039 = vld [vmem:[%s1036 + $0x10] sm:$0xff]
          %v1040 = vld [vmem:[%s1036 + $0x18] sm:$0xff]
          %v1041 = vld [vmem:[%s1036 + $0x20] sm:$0xff]
          %v1042 = vld [vmem:[%s1036 + $0x28] sm:$0xff]
          %v1043 = vld [vmem:[%s1036 + $0x30] sm:$0xff]
          %v1044 = vld [vmem:[%s1036 + $0x38] sm:$0xff]
          %v1045 = vld [vmem:[%s1] sm:$0xff]
          %v1046 = vld [vmem:[%s1 + $0x8] sm:$0xff]
          %v1047 = vld [vmem:[%s1 + $0x10] sm:$0xff]
          %v1048 = vld [vmem:[%s1 + $0x18] sm:$0xff]
          %v1049 = vld [vmem:[%s1 + $0x20] sm:$0xff]
          %v1050 = vld [vmem:[%s1 + $0x28] sm:$0xff]
          %v1051 = vld [vmem:[%s1 + $0x30] sm:$0xff]
          %v1052 = vld [vmem:[%s1 + $0x38] sm:$0xff]
          %v1053 = vld [vmem:[%s1 + $0x40] sm:$0xff]
          %v1054 = vld [vmem:[%s1 + $0x48] sm:$0xff]
          %v1055 = vld [vmem:[%s1 + $0x50] sm:$0xff]
          %v1056 = vld [vmem:[%s1 + $0x58] sm:$0xff]
          %v1057 = vld [vmem:[%s1 + $0x60] sm:$0xff]
          %v1058 = vld [vmem:[%s1 + $0x68] sm:$0xff]
          %v1059 = vld [vmem:[%s1 + $0x70] sm:$0xff]
          %v1060 = vld [vmem:[%s1 + $0x78] sm:$0xff]
          %v1061 = vld [vmem:[%s2] sm:$0x1]
          %v1063 = vlaneseq
          %v1064 = vshrl.u32 %v1063, 7
          %v1065 = vsub.s32 0, %v1064
          %v1066 = vrot.slane %v1061, %v1065
          %1068 = vmatprep.subr.mxu0 0.0
          %1069 = vmatpush1.msra.mxu0 %v1045
          %1070 = vmatprep.subr.mxu0 0.0
          %1071 = vmatpush1.msra.mxu0 %v1046
          %1072 = vmatprep.subr.mxu0 0.0
          %1073 = vmatpush1.msra.mxu0 %v1047
          %1074 = vmatprep.subr.mxu0 0.0
          %1075 = vmatpush1.msra.mxu0 %v1048
          %1076 = vmatprep.subr.mxu0 0.0
          %1077 = vmatpush1.msra.mxu0 %v1049
          %1078 = vmatprep.subr.mxu0 0.0
          %1079 = vmatpush1.msra.mxu0 %v1050
          %1080 = vmatprep.subr.mxu0 0.0
          %1081 = vmatpush1.msra.mxu0 %v1051
          %1082 = vmatprep.subr.mxu0 0.0
          %1083 = vmatpush1.msra.mxu0 %v1052
          %1084 = vmatprep.subr.mxu0 0.0
          %1085 = vmatpush1.msra.mxu0 %v1053
          %1086 = vmatprep.subr.mxu0 0.0
          %1087 = vmatpush1.msra.mxu0 %v1054
          %1088 = vmatprep.subr.mxu0 0.0
          %1089 = vmatpush1.msra.mxu0 %v1055
          %1090 = vmatprep.subr.mxu0 0.0
          %1091 = vmatpush1.msra.mxu0 %v1056
          %1092 = vmatprep.subr.mxu0 0.0
          %1093 = vmatpush1.msra.mxu0 %v1057
          %1094 = vmatprep.subr.mxu0 0.0
          %1095 = vmatpush1.msra.mxu0 %v1058
          %1096 = vmatprep.subr.mxu0 0.0
          %1097 = vmatpush1.msra.mxu0 %v1059
          %1098 = vmatprep.subr.mxu0 0.0
          %1099 = vmatpush1.msra.mxu0 %v1060
          %1100 = vmatprep.subr.mxu0 0.0
          %1101 = vmatpush1.msra.mxu0 0.0
          %1102 = vmatprep.subr.mxu0 0.0
          %1103 = vmatpush1.msra.mxu0 0.0
          %1104 = vmatprep.subr.mxu0 0.0
          %1105 = vmatpush1.msra.mxu0 0.0
          %1106 = vmatprep.subr.mxu0 0.0
          %1107 = vmatpush1.msra.mxu0 0.0
          %1108 = vmatprep.subr.mxu0 0.0
          %1109 = vmatpush1.msra.mxu0 0.0
          %1110 = vmatprep.subr.mxu0 0.0
          %1111 = vmatpush1.msra.mxu0 0.0
          %1112 = vmatprep.subr.mxu0 0.0
          %1113 = vmatpush1.msra.mxu0 0.0
          %1114 = vmatprep.subr.mxu0 0.0
          %1115 = vmatpush1.msra.mxu0 0.0
          %1116 = vmatprep.subr.mxu0 0.0
          %1117 = vmatpush1.msra.mxu0 0.0
          %1118 = vmatprep.subr.mxu0 0.0
          %1119 = vmatpush1.msra.mxu0 0.0
          %1120 = vmatprep.subr.mxu0 0.0
          %1121 = vmatpush1.msra.mxu0 0.0
          %1122 = vmatprep.subr.mxu0 0.0
          %1123 = vmatpush1.msra.mxu0 0.0
          %1124 = vmatprep.subr.mxu0 0.0
          %1125 = vmatpush1.msra.mxu0 0.0
          %1126 = vmatprep.subr.mxu0 0.0
          %1127 = vmatpush1.msra.mxu0 0.0
          %1128 = vmatprep.subr.mxu0 0.0
          %1129 = vmatpush1.msra.mxu0 0.0
          %1130 = vmatprep.subr.mxu0 0.0
          %1131 = vmatpush1.msra.mxu0 0.0
          %1132 = vmatprep.mubr.f32.mxu0 0.0
          %1133 = vmatmul.mubr.f32.gmra.mrb[0].mxu0 %v1037
          %v1134 = vpop.f32.mrb[0].mxu0
          %v1135 = vadd.f32 %v1066, %v1134
          %v1136 = vpop.f32.mrb[0].mxu0
          %1137 = vmatprep.mubr.f32.mxu0 0.0
          %1138 = vmatmul.mubr.f32.gmra.mrb[0].mxu0 %v1038
          %v1139 = vpop.f32.mrb[0].mxu0
          %v1140 = vadd.f32 %v1066, %v1139
          %v1141 = vpop.f32.mrb[0].mxu0
          %1142 = vmatprep.mubr.f32.mxu0 0.0
          %1143 = vmatmul.mubr.f32.gmra.mrb[0].mxu0 %v1039
          %v1144 = vpop.f32.mrb[0].mxu0
          %v1145 = vadd.f32 %v1066, %v1144
          %v1146 = vpop.f32.mrb[0].mxu0
          %1147 = vmatprep.mubr.f32.mxu0 0.0
          %1148 = vmatmul.mubr.f32.gmra.mrb[0].mxu0 %v1040
          %v1149 = vpop.f32.mrb[0].mxu0
          %v1150 = vadd.f32 %v1066, %v1149
          %v1151 = vpop.f32.mrb[0].mxu0
          %1152 = vmatprep.mubr.f32.mxu0 0.0
          %1153 = vmatmul.mubr.f32.gmra.mrb[0].mxu0 %v1041
          %v1154 = vpop.f32.mrb[0].mxu0
          %v1155 = vadd.f32 %v1066, %v1154
          %v1156 = vpop.f32.mrb[0].mxu0
          %1157 = vmatprep.mubr.f32.mxu0 0.0
          %1158 = vmatmul.mubr.f32.gmra.mrb[0].mxu0 %v1042
          %v1159 = vpop.f32.mrb[0].mxu0
          %v1160 = vadd.f32 %v1066, %v1159
          %v1161 = vpop.f32.mrb[0].mxu0
          %1162 = vmatprep.mubr.f32.mxu0 0.0
          %1163 = vmatmul.mubr.f32.gmra.mrb[0].mxu0 %v1043
          %v1164 = vpop.f32.mrb[0].mxu0
          %v1165 = vadd.f32 %v1066, %v1164
          %v1166 = vpop.f32.mrb[0].mxu0
          %1167 = vmatprep.mubr.f32.mxu0 0.0
          %1168 = vmatmul.mubr.f32.gmra.mrb[0].mxu0 %v1044
          %v1169 = vpop.f32.mrb[0].mxu0
          %v1170 = vadd.f32 %v1066, %v1169
          %v1171 = vpop.f32.mrb[0].mxu0
          %1172 = vdwg.mxu0
          %v1173 = vmax.f32 %v1135, 0.0
          %v1174 = vmax.f32 %v1140, 0.0
          %v1175 = vmax.f32 %v1145, 0.0
          %v1176 = vmax.f32 %v1150, 0.0
          %v1177 = vmax.f32 %v1155, 0.0
          %v1178 = vmax.f32 %v1160, 0.0
          %v1179 = vmax.f32 %v1165, 0.0
          %v1180 = vmax.f32 %v1170, 0.0
          %v1181 = vld [vmem:[%s3] sm:$0xff]
          %v1182 = vld [vmem:[%s3 + $0x8] sm:$0xff]
          %v1183 = vld [vmem:[%s3 + $0x10] sm:$0xff]
          %v1184 = vld [vmem:[%s3 + $0x18] sm:$0xff]
          %v1185 = vld [vmem:[%s3 + $0x20] sm:$0xff]
          %v1186 = vld [vmem:[%s3 + $0x28] sm:$0xff]
          %v1187 = vld [vmem:[%s3 + $0x30] sm:$0xff]
          %v1188 = vld [vmem:[%s3 + $0x38] sm:$0xff]
          %v1189 = vld [vmem:[%s3 + $0x40] sm:$0xff]
          %v1190 = vld [vmem:[%s3 + $0x48] sm:$0xff]
          %v1191 = vld [vmem:[%s3 + $0x50] sm:$0xff]
          %v1192 = vld [vmem:[%s3 + $0x58] sm:$0xff]
          %v1193 = vld [vmem:[%s3 + $0x60] sm:$0xff]
          %v1194 = vld [vmem:[%s3 + $0x68] sm:$0xff]
          %v1195 = vld [vmem:[%s3 + $0x70] sm:$0xff]
          %v1196 = vld [vmem:[%s3 + $0x78] sm:$0xff]
          %v1197 = vld [vmem:[%s4] sm:$0x1]
          %v1199 = vlaneseq
          %v1200 = vshrl.u32 %v1199, 7
          %v1201 = vsub.s32 0, %v1200
          %v1202 = vrot.slane %v1197, %v1201
          %1204 = vmatprep.subr.mxu0 0.0
          %1205 = vmatpush1.msra.mxu0 %v1181
          %1206 = vmatprep.subr.mxu0 0.0
          %1207 = vmatpush1.msra.mxu0 %v1182
          %1208 = vmatprep.subr.mxu0 0.0
          %1209 = vmatpush1.msra.mxu0 %v1183
          %1210 = vmatprep.subr.mxu0 0.0
          %1211 = vmatpush1.msra.mxu0 %v1184
          %1212 = vmatprep.subr.mxu0 0.0
          %1213 = vmatpush1.msra.mxu0 %v1185
          %1214 = vmatprep.subr.mxu0 0.0
          %1215 = vmatpush1.msra.mxu0 %v1186
          %1216 = vmatprep.subr.mxu0 0.0
          %1217 = vmatpush1.msra.mxu0 %v1187
          %1218 = vmatprep.subr.mxu0 0.0
          %1219 = vmatpush1.msra.mxu0 %v1188
          %1220 = vmatprep.subr.mxu0 0.0
          %1221 = vmatpush1.msra.mxu0 %v1189
          %1222 = vmatprep.subr.mxu0 0.0
          %1223 = vmatpush1.msra.mxu0 %v1190
          %1224 = vmatprep.subr.mxu0 0.0
          %1225 = vmatpush1.msra.mxu0 %v1191
          %1226 = vmatprep.subr.mxu0 0.0
          %1227 = vmatpush1.msra.mxu0 %v1192
          %1228 = vmatprep.subr.mxu0 0.0
          %1229 = vmatpush1.msra.mxu0 %v1193
          %1230 = vmatprep.subr.mxu0 0.0
          %1231 = vmatpush1.msra.mxu0 %v1194
          %1232 = vmatprep.subr.mxu0 0.0
          %1233 = vmatpush1.msra.mxu0 %v1195
          %1234 = vmatprep.subr.mxu0 0.0
          %1235 = vmatpush1.msra.mxu0 %v1196
          %1236 = vmatprep.subr.mxu0 0.0
          %1237 = vmatpush1.msra.mxu0 0.0
          %1238 = vmatprep.subr.mxu0 0.0
          %1239 = vmatpush1.msra.mxu0 0.0
          %1240 = vmatprep.subr.mxu0 0.0
          %1241 = vmatpush1.msra.mxu0 0.0
          %1242 = vmatprep.subr.mxu0 0.0
          %1243 = vmatpush1.msra.mxu0 0.0
          %1244 = vmatprep.subr.mxu0 0.0
          %1245 = vmatpush1.msra.mxu0 0.0
          %1246 = vmatprep.subr.mxu0 0.0
          %1247 = vmatpush1.msra.mxu0 0.0
          %1248 = vmatprep.subr.mxu0 0.0
          %1249 = vmatpush1.msra.mxu0 0.0
          %1250 = vmatprep.subr.mxu0 0.0
          %1251 = vmatpush1.msra.mxu0 0.0
          %1252 = vmatprep.subr.mxu0 0.0
          %1253 = vmatpush1.msra.mxu0 0.0
          %1254 = vmatprep.subr.mxu0 0.0
          %1255 = vmatpush1.msra.mxu0 0.0
          %1256 = vmatprep.subr.mxu0 0.0
          %1257 = vmatpush1.msra.mxu0 0.0
          %1258 = vmatprep.subr.mxu0 0.0
          %1259 = vmatpush1.msra.mxu0 0.0
          %1260 = vmatprep.subr.mxu0 0.0
          %1261 = vmatpush1.msra.mxu0 0.0
          %1262 = vmatprep.subr.mxu0 0.0
          %1263 = vmatpush1.msra.mxu0 0.0
          %1264 = vmatprep.subr.mxu0 0.0
          %1265 = vmatpush1.msra.mxu0 0.0
          %1266 = vmatprep.subr.mxu0 0.0
          %1267 = vmatpush1.msra.mxu0 0.0
          %1268 = vmatprep.mubr.f32.mxu0 0.0
          %1269 = vmatmul.mubr.f32.gmra.mrb[0].mxu0 %v1173
          %v1270 = vpop.f32.mrb[0].mxu0
          %v1271 = vadd.f32 %v1202, %v1270
          %v1272 = vpop.f32.mrb[0].mxu0
          %1273 = vmatprep.mubr.f32.mxu0 0.0
          %1274 = vmatmul.mubr.f32.gmra.mrb[0].mxu0 %v1174
          %v1275 = vpop.f32.mrb[0].mxu0
          %v1276 = vadd.f32 %v1202, %v1275
          %v1277 = vpop.f32.mrb[0].mxu0
          %1278 = vmatprep.mubr.f32.mxu0 0.0
          %1279 = vmatmul.mubr.f32.gmra.mrb[0].mxu0 %v1175
          %v1280 = vpop.f32.mrb[0].mxu0
          %v1281 = vadd.f32 %v1202, %v1280
          %v1282 = vpop.f32.mrb[0].mxu0
          %1283 = vmatprep.mubr.f32.mxu0 0.0
          %1284 = vmatmul.mubr.f32.gmra.mrb[0].mxu0 %v1176
          %v1285 = vpop.f32.mrb[0].mxu0
          %v1286 = vadd.f32 %v1202, %v1285
          %v1287 = vpop.f32.mrb[0].mxu0
          %1288 = vmatprep.mubr.f32.mxu0 0.0
          %1289 = vmatmul.mubr.f32.gmra.mrb[0].mxu0 %v1177
          %v1290 = vpop.f32.mrb[0].mxu0
          %v1291 = vadd.f32 %v1202, %v1290
          %v1292 = vpop.f32.mrb[0].mxu0
          %1293 = vmatprep.mubr.f32.mxu0 0.0
          %1294 = vmatmul.mubr.f32.gmra.mrb[0].mxu0 %v1178
          %v1295 = vpop.f32.mrb[0].mxu0
          %v1296 = vadd.f32 %v1202, %v1295
          %v1297 = vpop.f32.mrb[0].mxu0
          %1298 = vmatprep.mubr.f32.mxu0 0.0
          %1299 = vmatmul.mubr.f32.gmra.mrb[0].mxu0 %v1179
          %v1300 = vpop.f32.mrb[0].mxu0
          %v1301 = vadd.f32 %v1202, %v1300
          %v1302 = vpop.f32.mrb[0].mxu0
          %1303 = vmatprep.mubr.f32.mxu0 0.0
          %1304 = vmatmul.mubr.f32.gmra.mrb[0].mxu0 %v1180
          %v1305 = vpop.f32.mrb[0].mxu0
          %v1306 = vadd.f32 %v1202, %v1305
          %v1307 = vpop.f32.mrb[0].mxu0
          %1308 = vdwg.mxu0
          %1310 = vset.pattern.permute.xlu0 0
          %1311 = vperm.xlu0 %1310, %v1271
          %v1312 = vpop.permute.xlu0 %1311
          %1315 = vset.pattern.permute.xlu0 0
          %1316 = vperm.xlu0 %1315, %v1276
          %v1317 = vpop.permute.xlu0 %1316
          %1320 = vset.pattern.permute.xlu0 0
          %1321 = vperm.xlu0 %1320, %v1281
          %v1322 = vpop.permute.xlu0 %1321
          %1325 = vset.pattern.permute.xlu0 0
          %1326 = vperm.xlu0 %1325, %v1286
          %v1327 = vpop.permute.xlu0 %1326
          %1330 = vset.pattern.permute.xlu0 0
          %1331 = vperm.xlu0 %1330, %v1291
          %v1332 = vpop.permute.xlu0 %1331
          %1335 = vset.pattern.permute.xlu0 0
          %1336 = vperm.xlu0 %1335, %v1296
          %v1337 = vpop.permute.xlu0 %1336
          %1340 = vset.pattern.permute.xlu0 0
          %1341 = vperm.xlu0 %1340, %v1301
          %v1342 = vpop.permute.xlu0 %1341
          %1345 = vset.pattern.permute.xlu0 0
          %1346 = vperm.xlu0 %1345, %v1306
          %v1347 = vpop.permute.xlu0 %1346
          %v1349 = vmul.f32 %v1312, %v1037
          %v1350 = vmul.f32 %v1317, %v1038
          %v1351 = vmul.f32 %v1322, %v1039
          %v1352 = vmul.f32 %v1327, %v1040
          %v1353 = vmul.f32 %v1332, %v1041
          %v1354 = vmul.f32 %v1337, %v1042
          %v1355 = vmul.f32 %v1342, %v1043
          %v1356 = vmul.f32 %v1347, %v1044
          %v1357 = vadd.f32 %v1349, 0.0
          %v1358 = vadd.f32 %v1350, 0.0
          %v1359 = vadd.f32 %v1351, 0.0
          %v1360 = vadd.f32 %v1352, 0.0
          %v1361 = vadd.f32 %v1353, 0.0
          %v1362 = vadd.f32 %v1354, 0.0
          %v1363 = vadd.f32 %v1355, 0.0
          %v1364 = vadd.f32 %v1356, 0.0
          %v1365 = vlaneseq
          %v1366 = vshrl.u32 %v1365, 7
          %v1367 = vsub.s32 0, %v1366
          %v1368 = vrot.slane %v1024, %v1367
          %v1369 = vmul.f32 %v1357, %v1368
          %v1370 = vmul.f32 %v1358, %v1368
          %v1371 = vmul.f32 %v1359, %v1368
          %v1372 = vmul.f32 %v1360, %v1368
          %v1373 = vmul.f32 %v1361, %v1368
          %v1374 = vmul.f32 %v1362, %v1368
          %v1375 = vmul.f32 %v1363, %v1368
          %v1376 = vmul.f32 %v1364, %v1368
          %v1377 = vlaneseq
          %v1378 = vshrl.u32 %v1377, 7
          %v1379 = vsub.s32 0, %v1378
          %v1380 = vrot.slane %v1025, %v1379
          %v1381 = vadd.f32 %v1369, %v1380
          %v1382 = vadd.f32 %v1370, %v1380
          %v1383 = vadd.f32 %v1371, %v1380
          %v1384 = vadd.f32 %v1372, %v1380
          %v1385 = vadd.f32 %v1373, %v1380
          %v1386 = vadd.f32 %v1374, %v1380
          %v1387 = vadd.f32 %v1375, %v1380
          %v1388 = vadd.f32 %v1376, %v1380
          %v1389 = vmax.f32 %v1381, 0.0
          %v1390 = vmax.f32 %v1382, 0.0
          %v1391 = vmax.f32 %v1383, 0.0
          %v1392 = vmax.f32 %v1384, 0.0
          %v1393 = vmax.f32 %v1385, 0.0
          %v1394 = vmax.f32 %v1386, 0.0
          %v1395 = vmax.f32 %v1387, 0.0
          %v1396 = vmax.f32 %v1388, 0.0
          %s1397 = smul.u32 %s1032, 16
          %s1398 = scalar_lea.vmem [#allocation3], %s1397
          %1399 = vst [vmem:[%s1398] sm:$0xff] %v1389
          %1400 = vst [vmem:[%s1398 + $0x8] sm:$0xff] %v1390
          %1401 = vst [vmem:[%s1398 + $0x10] sm:$0xff] %v1391
          %1402 = vst [vmem:[%s1398 + $0x18] sm:$0xff] %v1392
          %1403 = vst [vmem:[%s1398 + $0x20] sm:$0xff] %v1393
          %1404 = vst [vmem:[%s1398 + $0x28] sm:$0xff] %v1394
          %1405 = vst [vmem:[%s1398 + $0x30] sm:$0xff] %v1395
          %1406 = vst [vmem:[%s1398 + $0x38] sm:$0xff] %v1396
          %v1407 = vld [vmem:[#allocation4] sm:$0x1]
          %v1408 = vadd.f32 %v1389, %v1390
          %v1409 = vadd.f32 %v1408, %v1391
          %v1410 = vadd.f32 %v1409, %v1392
          %v1411 = vadd.f32 %v1410, %v1393
          %v1412 = vadd.f32 %v1411, %v1394
          %v1413 = vadd.f32 %v1412, %v1395
          %v1414 = vadd.f32 %v1413, %v1396
          %v1415 = vrot.slane %v1414, 4
          %v1416 = vadd.f32 %v1414, %v1415
          %v1417 = vrot.slane %v1416, 2
          %v1418 = vadd.f32 %v1416, %v1417
          %v1419 = vrot.slane %v1418, 1
          %v1420 = vadd.f32 %v1418, %v1419
          %v1421 = vadd.f32 %v1407, %v1420
          %1422 = vst [vmem:[#allocation4] sm:$0x1] %v1421
          %s1423 = sadd.s32 %s1032, 2
          %s1424 = smul.u32 %s1423, 16
          %s1425 = sadd.s32 %s1424, 704
          %s1426 = scalar_lea.vmem [#allocation2], %s1425
          %v1427 = vld [vmem:[%s1426] sm:$0xff]
          %v1428 = vld [vmem:[%s1426 + $0x8] sm:$0xff]
          %v1429 = vld [vmem:[%s1426 + $0x10] sm:$0xff]
          %v1430 = vld [vmem:[%s1426 + $0x18] sm:$0xff]
          %v1431 = vld [vmem:[%s1426 + $0x20] sm:$0xff]
          %v1432 = vld [vmem:[%s1426 + $0x28] sm:$0xff]
          %v1433 = vld [vmem:[%s1426 + $0x30] sm:$0xff]
          %v1434 = vld [vmem:[%s1426 + $0x38] sm:$0xff]
          %1435 = vset.pattern.permute.xlu0 1
          %1436 = vperm.xlu0 %1435, %v1271
          %v1437 = vpop.permute.xlu0 %1436
          %1439 = vset.pattern.permute.xlu0 1
          %1440 = vperm.xlu0 %1439, %v1276
          %v1441 = vpop.permute.xlu0 %1440
          %1443 = vset.pattern.permute.xlu0 1
          %1444 = vperm.xlu0 %1443, %v1281
          %v1445 = vpop.permute.xlu0 %1444
          %1447 = vset.pattern.permute.xlu0 1
          %1448 = vperm.xlu0 %1447, %v1286
          %v1449 = vpop.permute.xlu0 %1448
          %1451 = vset.pattern.permute.xlu0 1
          %1452 = vperm.xlu0 %1451, %v1291
          %v1453 = vpop.permute.xlu0 %1452
          %1455 = vset.pattern.permute.xlu0 1
          %1456 = vperm.xlu0 %1455, %v1296
          %v1457 = vpop.permute.xlu0 %1456
          %1459 = vset.pattern.permute.xlu0 1
          %1460 = vperm.xlu0 %1459, %v1301
          %v1461 = vpop.permute.xlu0 %1460
          %1463 = vset.pattern.permute.xlu0 1
          %1464 = vperm.xlu0 %1463, %v1306
          %v1465 = vpop.permute.xlu0 %1464
          %v1467 = vmul.f32 %v1437, %v1427
          %v1468 = vmul.f32 %v1441, %v1428
          %v1469 = vmul.f32 %v1445, %v1429
          %v1470 = vmul.f32 %v1449, %v1430
          %v1471 = vmul.f32 %v1453, %v1431
          %v1472 = vmul.f32 %v1457, %v1432
          %v1473 = vmul.f32 %v1461, %v1433
          %v1474 = vmul.f32 %v1465, %v1434
          %v1475 = vadd.f32 %v1467, 0.0
          %v1476 = vadd.f32 %v1468, 0.0
          %v1477 = vadd.f32 %v1469, 0.0
          %v1478 = vadd.f32 %v1470, 0.0
          %v1479 = vadd.f32 %v1471, 0.0
          %v1480 = vadd.f32 %v1472, 0.0
          %v1481 = vadd.f32 %v1473, 0.0
          %v1482 = vadd.f32 %v1474, 0.0
          %s1483 = sadd.s32 %s1424, 1056
          %s1484 = scalar_lea.vmem [#allocation2], %s1483
          %v1485 = vld [vmem:[%s1484] sm:$0xff]
          %v1486 = vld [vmem:[%s1484 + $0x8] sm:$0xff]
          %v1487 = vld [vmem:[%s1484 + $0x10] sm:$0xff]
          %v1488 = vld [vmem:[%s1484 + $0x18] sm:$0xff]
          %v1489 = vld [vmem:[%s1484 + $0x20] sm:$0xff]
          %v1490 = vld [vmem:[%s1484 + $0x28] sm:$0xff]
          %v1491 = vld [vmem:[%s1484 + $0x30] sm:$0xff]
          %v1492 = vld [vmem:[%s1484 + $0x38] sm:$0xff]
          %1493 = vset.pattern.permute.xlu0 2
          %1494 = vperm.xlu0 %1493, %v1271
          %v1495 = vpop.permute.xlu0 %1494
          %1497 = vset.pattern.permute.xlu0 2
          %1498 = vperm.xlu0 %1497, %v1276
          %v1499 = vpop.permute.xlu0 %1498
          %1501 = vset.pattern.permute.xlu0 2
          %1502 = vperm.xlu0 %1501, %v1281
          %v1503 = vpop.permute.xlu0 %1502
          %1505 = vset.pattern.permute.xlu0 2
          %1506 = vperm.xlu0 %1505, %v1286
          %v1507 = vpop.permute.xlu0 %1506
          %1509 = vset.pattern.permute.xlu0 2
          %1510 = vperm.xlu0 %1509, %v1291
          %v1511 = vpop.permute.xlu0 %1510
          %1513 = vset.pattern.permute.xlu0 2
          %1514 = vperm.xlu0 %1513, %v1296
          %v1515 = vpop.permute.xlu0 %1514
          %1517 = vset.pattern.permute.xlu0 2
          %1518 = vperm.xlu0 %1517, %v1301
          %v1519 = vpop.permute.xlu0 %1518
          %1521 = vset.pattern.permute.xlu0 2
          %1522 = vperm.xlu0 %1521, %v1306
          %v1523 = vpop.permute.xlu0 %1522
          %v1525 = vmul.f32 %v1495, %v1485
          %v1526 = vmul.f32 %v1499, %v1486
          %v1527 = vmul.f32 %v1503, %v1487
          %v1528 = vmul.f32 %v1507, %v1488
          %v1529 = vmul.f32 %v1511, %v1489
          %v1530 = vmul.f32 %v1515, %v1490
          %v1531 = vmul.f32 %v1519, %v1491
          %v1532 = vmul.f32 %v1523, %v1492
          %v1533 = vadd.f32 %v1475, %v1525
          %v1534 = vadd.f32 %v1476, %v1526
          %v1535 = vadd.f32 %v1477, %v1527
          %v1536 = vadd.f32 %v1478, %v1528
          %v1537 = vadd.f32 %v1479, %v1529
          %v1538 = vadd.f32 %v1480, %v1530
          %v1539 = vadd.f32 %v1481, %v1531
          %v1540 = vadd.f32 %v1482, %v1532
          %s1541 = sadd.s32 %s1424, 1408
          %s1542 = scalar_lea.vmem [#allocation2], %s1541
          %v1543 = vld [vmem:[%s1542] sm:$0xff]
          %v1544 = vld [vmem:[%s1542 + $0x8] sm:$0xff]
          %v1545 = vld [vmem:[%s1542 + $0x10] sm:$0xff]
          %v1546 = vld [vmem:[%s1542 + $0x18] sm:$0xff]
          %v1547 = vld [vmem:[%s1542 + $0x20] sm:$0xff]
          %v1548 = vld [vmem:[%s1542 + $0x28] sm:$0xff]
          %v1549 = vld [vmem:[%s1542 + $0x30] sm:$0xff]
          %v1550 = vld [vmem:[%s1542 + $0x38] sm:$0xff]
          %1551 = vset.pattern.permute.xlu0 3
          %1552 = vperm.xlu0 %1551, %v1271
          %v1553 = vpop.permute.xlu0 %1552
          %1555 = vset.pattern.permute.xlu0 3
          %1556 = vperm.xlu0 %1555, %v1276
          %v1557 = vpop.permute.xlu0 %1556
          %1559 = vset.pattern.permute.xlu0 3
          %1560 = vperm.xlu0 %1559, %v1281
          %v1561 = vpop.permute.xlu0 %1560
          %1563 = vset.pattern.permute.xlu0 3
          %1564 = vperm.xlu0 %1563, %v1286
          %v1565 = vpop.permute.xlu0 %1564
          %1567 = vset.pattern.permute.xlu0 3
          %1568 = vperm.xlu0 %1567, %v1291
          %v1569 = vpop.permute.xlu0 %1568
          %1571 = vset.pattern.permute.xlu0 3
          %1572 = vperm.xlu0 %1571, %v1296
          %v1573 = vpop.permute.xlu0 %1572
          %1575 = vset.pattern.permute.xlu0 3
          %1576 = vperm.xlu0 %1575, %v1301
          %v1577 = vpop.permute.xlu0 %1576
          %1579 = vset.pattern.permute.xlu0 3
          %1580 = vperm.xlu0 %1579, %v1306
          %v1581 = vpop.permute.xlu0 %1580
          %v1583 = vmul.f32 %v1553, %v1543
          %v1584 = vmul.f32 %v1557, %v1544
          %v1585 = vmul.f32 %v1561, %v1545
          %v1586 = vmul.f32 %v1565, %v1546
          %v1587 = vmul.f32 %v1569, %v1547
          %v1588 = vmul.f32 %v1573, %v1548
          %v1589 = vmul.f32 %v1577, %v1549
          %v1590 = vmul.f32 %v1581, %v1550
          %v1591 = vadd.f32 %v1533, %v1583
          %v1592 = vadd.f32 %v1534, %v1584
          %v1593 = vadd.f32 %v1535, %v1585
          %v1594 = vadd.f32 %v1536, %v1586
          %v1595 = vadd.f32 %v1537, %v1587
          %v1596 = vadd.f32 %v1538, %v1588
          %v1597 = vadd.f32 %v1539, %v1589
          %v1598 = vadd.f32 %v1540, %v1590
          %s1599 = sadd.s32 %s1034, 704
          %s1600 = scalar_lea.vmem [#allocation2], %s1599
          %v1601 = vld [vmem:[%s1600] sm:$0xff]
          %v1602 = vld [vmem:[%s1600 + $0x8] sm:$0xff]
          %v1603 = vld [vmem:[%s1600 + $0x10] sm:$0xff]
          %v1604 = vld [vmem:[%s1600 + $0x18] sm:$0xff]
          %v1605 = vld [vmem:[%s1600 + $0x20] sm:$0xff]
          %v1606 = vld [vmem:[%s1600 + $0x28] sm:$0xff]
          %v1607 = vld [vmem:[%s1600 + $0x30] sm:$0xff]
          %v1608 = vld [vmem:[%s1600 + $0x38] sm:$0xff]
          %1609 = vset.pattern.permute.xlu0 4
          %1610 = vperm.xlu0 %1609, %v1271
          %v1611 = vpop.permute.xlu0 %1610
          %1613 = vset.pattern.permute.xlu0 4
          %1614 = vperm.xlu0 %1613, %v1276
          %v1615 = vpop.permute.xlu0 %1614
          %1617 = vset.pattern.permute.xlu0 4
          %1618 = vperm.xlu0 %1617, %v1281
          %v1619 = vpop.permute.xlu0 %1618
          %1621 = vset.pattern.permute.xlu0 4
          %1622 = vperm.xlu0 %1621, %v1286
          %v1623 = vpop.permute.xlu0 %1622
          %1625 = vset.pattern.permute.xlu0 4
          %1626 = vperm.xlu0 %1625, %v1291
          %v1627 = vpop.permute.xlu0 %1626
          %1629 = vset.pattern.permute.xlu0 4
          %1630 = vperm.xlu0 %1629, %v1296
          %v1631 = vpop.permute.xlu0 %1630
          %1633 = vset.pattern.permute.xlu0 4
          %1634 = vperm.xlu0 %1633, %v1301
          %v1635 = vpop.permute.xlu0 %1634
          %1637 = vset.pattern.permute.xlu0 4
          %1638 = vperm.xlu0 %1637, %v1306
          %v1639 = vpop.permute.xlu0 %1638
          %v1641 = vmul.f32 %v1611, %v1601
          %v1642 = vmul.f32 %v1615, %v1602
          %v1643 = vmul.f32 %v1619, %v1603
          %v1644 = vmul.f32 %v1623, %v1604
          %v1645 = vmul.f32 %v1627, %v1605
          %v1646 = vmul.f32 %v1631, %v1606
          %v1647 = vmul.f32 %v1635, %v1607
          %v1648 = vmul.f32 %v1639, %v1608
          %v1649 = vadd.f32 %v1591, %v1641
          %v1650 = vadd.f32 %v1592, %v1642
          %v1651 = vadd.f32 %v1593, %v1643
          %v1652 = vadd.f32 %v1594, %v1644
          %v1653 = vadd.f32 %v1595, %v1645
          %v1654 = vadd.f32 %v1596, %v1646
          %v1655 = vadd.f32 %v1597, %v1647
          %v1656 = vadd.f32 %v1598, %v1648
          %v1657 = vld [vmem:[%s1036] sm:$0xff]
          %v1658 = vld [vmem:[%s1036 + $0x8] sm:$0xff]
          %v1659 = vld [vmem:[%s1036 + $0x10] sm:$0xff]
          %v1660 = vld [vmem:[%s1036 + $0x18] sm:$0xff]
          %v1661 = vld [vmem:[%s1036 + $0x20] sm:$0xff]
          %v1662 = vld [vmem:[%s1036 + $0x28] sm:$0xff]
          %v1663 = vld [vmem:[%s1036 + $0x30] sm:$0xff]
          %v1664 = vld [vmem:[%s1036 + $0x38] sm:$0xff]
          %1665 = vset.pattern.permute.xlu0 5
          %1666 = vperm.xlu0 %1665, %v1271
          %v1667 = vpop.permute.xlu0 %1666
          %1669 = vset.pattern.permute.xlu0 5
          %1670 = vperm.xlu0 %1669, %v1276
          %v1671 = vpop.permute.xlu0 %1670
          %1673 = vset.pattern.permute.xlu0 5
          %1674 = vperm.xlu0 %1673, %v1281
          %v1675 = vpop.permute.xlu0 %1674
          %1677 = vset.pattern.permute.xlu0 5
          %1678 = vperm.xlu0 %1677, %v1286
          %v1679 = vpop.permute.xlu0 %1678
          %1681 = vset.pattern.permute.xlu0 5
          %1682 = vperm.xlu0 %1681, %v1291
          %v1683 = vpop.permute.xlu0 %1682
          %1685 = vset.pattern.permute.xlu0 5
          %1686 = vperm.xlu0 %1685, %v1296
          %v1687 = vpop.permute.xlu0 %1686
          %1689 = vset.pattern.permute.xlu0 5
          %1690 = vperm.xlu0 %1689, %v1301
          %v1691 = vpop.permute.xlu0 %1690
          %1693 = vset.pattern.permute.xlu0 5
          %1694 = vperm.xlu0 %1693, %v1306
          %v1695 = vpop.permute.xlu0 %1694
          %v1697 = vmul.f32 %v1667, %v1657
          %v1698 = vmul.f32 %v1671, %v1658
          %v1699 = vmul.f32 %v1675, %v1659
          %v1700 = vmul.f32 %v1679, %v1660
          %v1701 = vmul.f32 %v1683, %v1661
          %v1702 = vmul.f32 %v1687, %v1662
          %v1703 = vmul.f32 %v1691, %v1663
          %v1704 = vmul.f32 %v1695, %v1664
          %v1705 = vadd.f32 %v1649, %v1697
          %v1706 = vadd.f32 %v1650, %v1698
          %v1707 = vadd.f32 %v1651, %v1699
          %v1708 = vadd.f32 %v1652, %v1700
          %v1709 = vadd.f32 %v1653, %v1701
          %v1710 = vadd.f32 %v1654, %v1702
          %v1711 = vadd.f32 %v1655, %v1703
          %v1712 = vadd.f32 %v1656, %v1704
          %s1713 = sadd.s32 %s1034, 1408
          %s1714 = scalar_lea.vmem [#allocation2], %s1713
          %v1715 = vld [vmem:[%s1714] sm:$0xff]
          %v1716 = vld [vmem:[%s1714 + $0x8] sm:$0xff]
          %v1717 = vld [vmem:[%s1714 + $0x10] sm:$0xff]
          %v1718 = vld [vmem:[%s1714 + $0x18] sm:$0xff]
          %v1719 = vld [vmem:[%s1714 + $0x20] sm:$0xff]
          %v1720 = vld [vmem:[%s1714 + $0x28] sm:$0xff]
          %v1721 = vld [vmem:[%s1714 + $0x30] sm:$0xff]
          %v1722 = vld [vmem:[%s1714 + $0x38] sm:$0xff]
          %1723 = vset.pattern.permute.xlu0 6
          %1724 = vperm.xlu0 %1723, %v1271
          %v1725 = vpop.permute.xlu0 %1724
          %1727 = vset.pattern.permute.xlu0 6
          %1728 = vperm.xlu0 %1727, %v1276
          %v1729 = vpop.permute.xlu0 %1728
          %1731 = vset.pattern.permute.xlu0 6
          %1732 = vperm.xlu0 %1731, %v1281
          %v1733 = vpop.permute.xlu0 %1732
          %1735 = vset.pattern.permute.xlu0 6
          %1736 = vperm.xlu0 %1735, %v1286
          %v1737 = vpop.permute.xlu0 %1736
          %1739 = vset.pattern.permute.xlu0 6
          %1740 = vperm.xlu0 %1739, %v1291
          %v1741 = vpop.permute.xlu0 %1740
          %1743 = vset.pattern.permute.xlu0 6
          %1744 = vperm.xlu0 %1743, %v1296
          %v1745 = vpop.permute.xlu0 %1744
          %1747 = vset.pattern.permute.xlu0 6
          %1748 = vperm.xlu0 %1747, %v1301
          %v1749 = vpop.permute.xlu0 %1748
          %1751 = vset.pattern.permute.xlu0 6
          %1752 = vperm.xlu0 %1751, %v1306
          %v1753 = vpop.permute.xlu0 %1752
          %v1755 = vmul.f32 %v1725, %v1715
          %v1756 = vmul.f32 %v1729, %v1716
          %v1757 = vmul.f32 %v1733, %v1717
          %v1758 = vmul.f32 %v1737, %v1718
          %v1759 = vmul.f32 %v1741, %v1719
          %v1760 = vmul.f32 %v1745, %v1720
          %v1761 = vmul.f32 %v1749, %v1721
          %v1762 = vmul.f32 %v1753, %v1722
          %v1763 = vadd.f32 %v1705, %v1755
          %v1764 = vadd.f32 %v1706, %v1756
          %v1765 = vadd.f32 %v1707, %v1757
          %v1766 = vadd.f32 %v1708, %v1758
          %v1767 = vadd.f32 %v1709, %v1759
          %v1768 = vadd.f32 %v1710, %v1760
          %v1769 = vadd.f32 %v1711, %v1761
          %v1770 = vadd.f32 %v1712, %v1762
          %s1771 = sadd.s32 %s1032, 4
          %s1772 = smul.u32 %s1771, 16
          %s1773 = sadd.s32 %s1772, 704
          %s1774 = scalar_lea.vmem [#allocation2], %s1773
          %v1775 = vld [vmem:[%s1774] sm:$0xff]
          %v1776 = vld [vmem:[%s1774 + $0x8] sm:$0xff]
          %v1777 = vld [vmem:[%s1774 + $0x10] sm:$0xff]
          %v1778 = vld [vmem:[%s1774 + $0x18] sm:$0xff]
          %v1779 = vld [vmem:[%s1774 + $0x20] sm:$0xff]
          %v1780 = vld [vmem:[%s1774 + $0x28] sm:$0xff]
          %v1781 = vld [vmem:[%s1774 + $0x30] sm:$0xff]
          %v1782 = vld [vmem:[%s1774 + $0x38] sm:$0xff]
          %1783 = vset.pattern.permute.xlu0 7
          %1784 = vperm.xlu0 %1783, %v1271
          %v1785 = vpop.permute.xlu0 %1784
          %1787 = vset.pattern.permute.xlu0 7
          %1788 = vperm.xlu0 %1787, %v1276
          %v1789 = vpop.permute.xlu0 %1788
          %1791 = vset.pattern.permute.xlu0 7
          %1792 = vperm.xlu0 %1791, %v1281
          %v1793 = vpop.permute.xlu0 %1792
          %1795 = vset.pattern.permute.xlu0 7
          %1796 = vperm.xlu0 %1795, %v1286
          %v1797 = vpop.permute.xlu0 %1796
          %1799 = vset.pattern.permute.xlu0 7
          %1800 = vperm.xlu0 %1799, %v1291
          %v1801 = vpop.permute.xlu0 %1800
          %1803 = vset.pattern.permute.xlu0 7
          %1804 = vperm.xlu0 %1803, %v1296
          %v1805 = vpop.permute.xlu0 %1804
          %1807 = vset.pattern.permute.xlu0 7
          %1808 = vperm.xlu0 %1807, %v1301
          %v1809 = vpop.permute.xlu0 %1808
          %1811 = vset.pattern.permute.xlu0 7
          %1812 = vperm.xlu0 %1811, %v1306
          %v1813 = vpop.permute.xlu0 %1812
          %v1815 = vmul.f32 %v1785, %v1775
          %v1816 = vmul.f32 %v1789, %v1776
          %v1817 = vmul.f32 %v1793, %v1777
          %v1818 = vmul.f32 %v1797, %v1778
          %v1819 = vmul.f32 %v1801, %v1779
          %v1820 = vmul.f32 %v1805, %v1780
          %v1821 = vmul.f32 %v1809, %v1781
          %v1822 = vmul.f32 %v1813, %v1782
          %v1823 = vadd.f32 %v1763, %v1815
          %v1824 = vadd.f32 %v1764, %v1816
          %v1825 = vadd.f32 %v1765, %v1817
          %v1826 = vadd.f32 %v1766, %v1818
          %v1827 = vadd.f32 %v1767, %v1819
          %v1828 = vadd.f32 %v1768, %v1820
          %v1829 = vadd.f32 %v1769, %v1821
          %v1830 = vadd.f32 %v1770, %v1822
          %s1831 = sadd.s32 %s1772, 1056
          %s1832 = scalar_lea.vmem [#allocation2], %s1831
          %v1833 = vld [vmem:[%s1832] sm:$0xff]
          %v1834 = vld [vmem:[%s1832 + $0x8] sm:$0xff]
          %v1835 = vld [vmem:[%s1832 + $0x10] sm:$0xff]
          %v1836 = vld [vmem:[%s1832 + $0x18] sm:$0xff]
          %v1837 = vld [vmem:[%s1832 + $0x20] sm:$0xff]
          %v1838 = vld [vmem:[%s1832 + $0x28] sm:$0xff]
          %v1839 = vld [vmem:[%s1832 + $0x30] sm:$0xff]
          %v1840 = vld [vmem:[%s1832 + $0x38] sm:$0xff]
          %1841 = vset.pattern.permute.xlu0 8
          %1842 = vperm.xlu0 %1841, %v1271
          %v1843 = vpop.permute.xlu0 %1842
          %1845 = vset.pattern.permute.xlu0 8
          %1846 = vperm.xlu0 %1845, %v1276
          %v1847 = vpop.permute.xlu0 %1846
          %1849 = vset.pattern.permute.xlu0 8
          %1850 = vperm.xlu0 %1849, %v1281
          %v1851 = vpop.permute.xlu0 %1850
          %1853 = vset.pattern.permute.xlu0 8
          %1854 = vperm.xlu0 %1853, %v1286
          %v1855 = vpop.permute.xlu0 %1854
          %1857 = vset.pattern.permute.xlu0 8
          %1858 = vperm.xlu0 %1857, %v1291
          %v1859 = vpop.permute.xlu0 %1858
          %1861 = vset.pattern.permute.xlu0 8
          %1862 = vperm.xlu0 %1861, %v1296
          %v1863 = vpop.permute.xlu0 %1862
          %1865 = vset.pattern.permute.xlu0 8
          %1866 = vperm.xlu0 %1865, %v1301
          %v1867 = vpop.permute.xlu0 %1866
          %1869 = vset.pattern.permute.xlu0 8
          %1870 = vperm.xlu0 %1869, %v1306
          %v1871 = vpop.permute.xlu0 %1870
          %v1873 = vmul.f32 %v1843, %v1833
          %v1874 = vmul.f32 %v1847, %v1834
          %v1875 = vmul.f32 %v1851, %v1835
          %v1876 = vmul.f32 %v1855, %v1836
          %v1877 = vmul.f32 %v1859, %v1837
          %v1878 = vmul.f32 %v1863, %v1838
          %v1879 = vmul.f32 %v1867, %v1839
          %v1880 = vmul.f32 %v1871, %v1840
          %v1881 = vadd.f32 %v1823, %v1873
          %v1882 = vadd.f32 %v1824, %v1874
          %v1883 = vadd.f32 %v1825, %v1875
          %v1884 = vadd.f32 %v1826, %v1876
          %v1885 = vadd.f32 %v1827, %v1877
          %v1886 = vadd.f32 %v1828, %v1878
          %v1887 = vadd.f32 %v1829, %v1879
          %v1888 = vadd.f32 %v1830, %v1880
          %s1889 = sadd.s32 %s1772, 1408
          %s1890 = scalar_lea.vmem [#allocation2], %s1889
          %v1891 = vld [vmem:[%s1890] sm:$0xff]
          %v1892 = vld [vmem:[%s1890 + $0x8] sm:$0xff]
          %v1893 = vld [vmem:[%s1890 + $0x10] sm:$0xff]
          %v1894 = vld [vmem:[%s1890 + $0x18] sm:$0xff]
          %v1895 = vld [vmem:[%s1890 + $0x20] sm:$0xff]
          %v1896 = vld [vmem:[%s1890 + $0x28] sm:$0xff]
          %v1897 = vld [vmem:[%s1890 + $0x30] sm:$0xff]
          %v1898 = vld [vmem:[%s1890 + $0x38] sm:$0xff]
          %1899 = vset.pattern.permute.xlu0 9
          %1900 = vperm.xlu0 %1899, %v1271
          %v1901 = vpop.permute.xlu0 %1900
          %1903 = vset.pattern.permute.xlu0 9
          %1904 = vperm.xlu0 %1903, %v1276
          %v1905 = vpop.permute.xlu0 %1904
          %1907 = vset.pattern.permute.xlu0 9
          %1908 = vperm.xlu0 %1907, %v1281
          %v1909 = vpop.permute.xlu0 %1908
          %1911 = vset.pattern.permute.xlu0 9
          %1912 = vperm.xlu0 %1911, %v1286
          %v1913 = vpop.permute.xlu0 %1912
          %1915 = vset.pattern.permute.xlu0 9
          %1916 = vperm.xlu0 %1915, %v1291
          %v1917 = vpop.permute.xlu0 %1916
          %1919 = vset.pattern.permute.xlu0 9
          %1920 = vperm.xlu0 %1919, %v1296
          %v1921 = vpop.permute.xlu0 %1920
          %1923 = vset.pattern.permute.xlu0 9
          %1924 = vperm.xlu0 %1923, %v1301
          %v1925 = vpop.permute.xlu0 %1924
          %1927 = vset.pattern.permute.xlu0 9
          %1928 = vperm.xlu0 %1927, %v1306
          %v1929 = vpop.permute.xlu0 %1928
          %v1931 = vmul.f32 %v1901, %v1891
          %v1932 = vmul.f32 %v1905, %v1892
          %v1933 = vmul.f32 %v1909, %v1893
          %v1934 = vmul.f32 %v1913, %v1894
          %v1935 = vmul.f32 %v1917, %v1895
          %v1936 = vmul.f32 %v1921, %v1896
          %v1937 = vmul.f32 %v1925, %v1897
          %v1938 = vmul.f32 %v1929, %v1898
          %v1939 = vadd.f32 %v1881, %v1931
          %v1940 = vadd.f32 %v1882, %v1932
          %v1941 = vadd.f32 %v1883, %v1933
          %v1942 = vadd.f32 %v1884, %v1934
          %v1943 = vadd.f32 %v1885, %v1935
          %v1944 = vadd.f32 %v1886, %v1936
          %v1945 = vadd.f32 %v1887, %v1937
          %v1946 = vadd.f32 %v1888, %v1938
          %v1947 = vlaneseq
          %v1948 = vshrl.u32 %v1947, 7
          %v1949 = vsub.s32 1, %v1948
          %v1950 = vrot.slane %v1024, %v1949
          %v1951 = vmul.f32 %v1939, %v1950
          %v1952 = vmul.f32 %v1940, %v1950
          %v1953 = vmul.f32 %v1941, %v1950
          %v1954 = vmul.f32 %v1942, %v1950
          %v1955 = vmul.f32 %v1943, %v1950
          %v1956 = vmul.f32 %v1944, %v1950
          %v1957 = vmul.f32 %v1945, %v1950
          %v1958 = vmul.f32 %v1946, %v1950
          %v1959 = vlaneseq
          %v1960 = vshrl.u32 %v1959, 7
          %v1961 = vsub.s32 1, %v1960
          %v1962 = vrot.slane %v1025, %v1961
          %v1963 = vadd.f32 %v1951, %v1962
          %v1964 = vadd.f32 %v1952, %v1962
          %v1965 = vadd.f32 %v1953, %v1962
          %v1966 = vadd.f32 %v1954, %v1962
          %v1967 = vadd.f32 %v1955, %v1962
          %v1968 = vadd.f32 %v1956, %v1962
          %v1969 = vadd.f32 %v1957, %v1962
          %v1970 = vadd.f32 %v1958, %v1962
          %v1971 = vmax.f32 %v1963, 0.0
          %v1972 = vmax.f32 %v1964, 0.0
          %v1973 = vmax.f32 %v1965, 0.0
          %v1974 = vmax.f32 %v1966, 0.0
          %v1975 = vmax.f32 %v1967, 0.0
          %v1976 = vmax.f32 %v1968, 0.0
          %v1977 = vmax.f32 %v1969, 0.0
          %v1978 = vmax.f32 %v1970, 0.0
          %s1979 = sadd.s32 %s1397, 256
          %s1980 = scalar_lea.vmem [#allocation3], %s1979
          %1981 = vst [vmem:[%s1980] sm:$0xff] %v1971
          %1982 = vst [vmem:[%s1980 + $0x8] sm:$0xff] %v1972
          %1983 = vst [vmem:[%s1980 + $0x10] sm:$0xff] %v1973
          %1984 = vst [vmem:[%s1980 + $0x18] sm:$0xff] %v1974
          %1985 = vst [vmem:[%s1980 + $0x20] sm:$0xff] %v1975
          %1986 = vst [vmem:[%s1980 + $0x28] sm:$0xff] %v1976
          %1987 = vst [vmem:[%s1980 + $0x30] sm:$0xff] %v1977
          %1988 = vst [vmem:[%s1980 + $0x38] sm:$0xff] %v1978
          %v1989 = vld [vmem:[#allocation4] sm:$0x1]
          %v1990 = vadd.f32 %v1971, %v1972
          %v1991 = vadd.f32 %v1990, %v1973
          %v1992 = vadd.f32 %v1991, %v1974
          %v1993 = vadd.f32 %v1992, %v1975
          %v1994 = vadd.f32 %v1993, %v1976
          %v1995 = vadd.f32 %v1994, %v1977
          %v1996 = vadd.f32 %v1995, %v1978
          %v1997 = vrot.slane %v1996, 4
          %v1998 = vadd.f32 %v1996, %v1997
          %v1999 = vrot.slane %v1998, 2
          %v2000 = vadd.f32 %v1998, %v1999
          %v2001 = vrot.slane %v2000, 1
          %v2002 = vadd.f32 %v2000, %v2001
          %v2003 = vadd.f32 %v1989, %v2002
          %2004 = vst [vmem:[#allocation4] sm:$0x1] %v2003
          %s2005 = sadd.s32 %s1032, 1
          %s2006 = smul.u32 %s2005, 16
          %s2007 = sadd.s32 %s2006, 352
          %s2008 = scalar_lea.vmem [#allocation2], %s2007
          %v2009 = vld [vmem:[%s2008] sm:$0xff]
          %v2010 = vld [vmem:[%s2008 + $0x8] sm:$0xff]
          %v2011 = vld [vmem:[%s2008 + $0x10] sm:$0xff]
          %v2012 = vld [vmem:[%s2008 + $0x18] sm:$0xff]
          %v2013 = vld [vmem:[%s2008 + $0x20] sm:$0xff]
          %v2014 = vld [vmem:[%s2008 + $0x28] sm:$0xff]
          %v2015 = vld [vmem:[%s2008 + $0x30] sm:$0xff]
          %v2016 = vld [vmem:[%s2008 + $0x38] sm:$0xff]
          %2017 = vset.pattern.permute.xlu0 10
          %2018 = vperm.xlu0 %2017, %v1271
          %v2019 = vpop.permute.xlu0 %2018
          %2021 = vset.pattern.permute.xlu0 10
          %2022 = vperm.xlu0 %2021, %v1276
          %v2023 = vpop.permute.xlu0 %2022
          %2025 = vset.pattern.permute.xlu0 10
          %2026 = vperm.xlu0 %2025, %v1281
          %v2027 = vpop.permute.xlu0 %2026
          %2029 = vset.pattern.permute.xlu0 10
          %2030 = vperm.xlu0 %2029, %v1286
          %v2031 = vpop.permute.xlu0 %2030
          %2033 = vset.pattern.permute.xlu0 10
          %2034 = vperm.xlu0 %2033, %v1291
          %v2035 = vpop.permute.xlu0 %2034
          %2037 = vset.pattern.permute.xlu0 10
          %2038 = vperm.xlu0 %2037, %v1296
          %v2039 = vpop.permute.xlu0 %2038
          %2041 = vset.pattern.permute.xlu0 10
          %2042 = vperm.xlu0 %2041, %v1301
          %v2043 = vpop.permute.xlu0 %2042
          %2045 = vset.pattern.permute.xlu0 10
          %2046 = vperm.xlu0 %2045, %v1306
          %v2047 = vpop.permute.xlu0 %2046
          %v2049 = vmul.f32 %v2019, %v2009
          %v2050 = vmul.f32 %v2023, %v2010
          %v2051 = vmul.f32 %v2027, %v2011
          %v2052 = vmul.f32 %v2031, %v2012
          %v2053 = vmul.f32 %v2035, %v2013
          %v2054 = vmul.f32 %v2039, %v2014
          %v2055 = vmul.f32 %v2043, %v2015
          %v2056 = vmul.f32 %v2047, %v2016
          %v2057 = vadd.f32 %v2049, 0.0
          %v2058 = vadd.f32 %v2050, 0.0
          %v2059 = vadd.f32 %v2051, 0.0
          %v2060 = vadd.f32 %v2052, 0.0
          %v2061 = vadd.f32 %v2053, 0.0
          %v2062 = vadd.f32 %v2054, 0.0
          %v2063 = vadd.f32 %v2055, 0.0
          %v2064 = vadd.f32 %v2056, 0.0
          %s2065 = sadd.s32 %s2006, 704
          %s2066 = scalar_lea.vmem [#allocation2], %s2065
          %v2067 = vld [vmem:[%s2066] sm:$0xff]
          %v2068 = vld [vmem:[%s2066 + $0x8] sm:$0xff]
          %v2069 = vld [vmem:[%s2066 + $0x10] sm:$0xff]
          %v2070 = vld [vmem:[%s2066 + $0x18] sm:$0xff]
          %v2071 = vld [vmem:[%s2066 + $0x20] sm:$0xff]
          %v2072 = vld [vmem:[%s2066 + $0x28] sm:$0xff]
          %v2073 = vld [vmem:[%s2066 + $0x30] sm:$0xff]
          %v2074 = vld [vmem:[%s2066 + $0x38] sm:$0xff]
          %2075 = vset.pattern.permute.xlu0 11
          %2076 = vperm.xlu0 %2075, %v1271
          %v2077 = vpop.permute.xlu0 %2076
          %2079 = vset.pattern.permute.xlu0 11
          %2080 = vperm.xlu0 %2079, %v1276
          %v2081 = vpop.permute.xlu0 %2080
          %2083 = vset.pattern.permute.xlu0 11
          %2084 = vperm.xlu0 %2083, %v1281
          %v2085 = vpop.permute.xlu0 %2084
          %2087 = vset.pattern.permute.xlu0 11
          %2088 = vperm.xlu0 %2087, %v1286
          %v2089 = vpop.permute.xlu0 %2088
          %2091 = vset.pattern.permute.xlu0 11
          %2092 = vperm.xlu0 %2091, %v1291
          %v2093 = vpop.permute.xlu0 %2092
          %2095 = vset.pattern.permute.xlu0 11
          %2096 = vperm.xlu0 %2095, %v1296
          %v2097 = vpop.permute.xlu0 %2096
          %2099 = vset.pattern.permute.xlu0 11
          %2100 = vperm.xlu0 %2099, %v1301
          %v2101 = vpop.permute.xlu0 %2100
          %2103 = vset.pattern.permute.xlu0 11
          %2104 = vperm.xlu0 %2103, %v1306
          %v2105 = vpop.permute.xlu0 %2104
          %v2107 = vmul.f32 %v2077, %v2067
          %v2108 = vmul.f32 %v2081, %v2068
          %v2109 = vmul.f32 %v2085, %v2069
          %v2110 = vmul.f32 %v2089, %v2070
          %v2111 = vmul.f32 %v2093, %v2071
          %v2112 = vmul.f32 %v2097, %v2072
          %v2113 = vmul.f32 %v2101, %v2073
          %v2114 = vmul.f32 %v2105, %v2074
          %v2115 = vadd.f32 %v2057, %v2107
          %v2116 = vadd.f32 %v2058, %v2108
          %v2117 = vadd.f32 %v2059, %v2109
          %v2118 = vadd.f32 %v2060, %v2110
          %v2119 = vadd.f32 %v2061, %v2111
          %v2120 = vadd.f32 %v2062, %v2112
          %v2121 = vadd.f32 %v2063, %v2113
          %v2122 = vadd.f32 %v2064, %v2114
          %s2123 = sadd.s32 %s2006, 1056
          %s2124 = scalar_lea.vmem [#allocation2], %s2123
          %v2125 = vld [vmem:[%s2124] sm:$0xff]
          %v2126 = vld [vmem:[%s2124 + $0x8] sm:$0xff]
          %v2127 = vld [vmem:[%s2124 + $0x10] sm:$0xff]
          %v2128 = vld [vmem:[%s2124 + $0x18] sm:$0xff]
          %v2129 = vld [vmem:[%s2124 + $0x20] sm:$0xff]
          %v2130 = vld [vmem:[%s2124 + $0x28] sm:$0xff]
          %v2131 = vld [vmem:[%s2124 + $0x30] sm:$0xff]
          %v2132 = vld [vmem:[%s2124 + $0x38] sm:$0xff]
          %2133 = vset.pattern.permute.xlu0 12
          %2134 = vperm.xlu0 %2133, %v1271
          %v2135 = vpop.permute.xlu0 %2134
          %2137 = vset.pattern.permute.xlu0 12
          %2138 = vperm.xlu0 %2137, %v1276
          %v2139 = vpop.permute.xlu0 %2138
          %2141 = vset.pattern.permute.xlu0 12
          %2142 = vperm.xlu0 %2141, %v1281
          %v2143 = vpop.permute.xlu0 %2142
          %2145 = vset.pattern.permute.xlu0 12
          %2146 = vperm.xlu0 %2145, %v1286
          %v2147 = vpop.permute.xlu0 %2146
          %2149 = vset.pattern.permute.xlu0 12
          %2150 = vperm.xlu0 %2149, %v1291
          %v2151 = vpop.permute.xlu0 %2150
          %2153 = vset.pattern.permute.xlu0 12
          %2154 = vperm.xlu0 %2153, %v1296
          %v2155 = vpop.permute.xlu0 %2154
          %2157 = vset.pattern.permute.xlu0 12
          %2158 = vperm.xlu0 %2157, %v1301
          %v2159 = vpop.permute.xlu0 %2158
          %2161 = vset.pattern.permute.xlu0 12
          %2162 = vperm.xlu0 %2161, %v1306
          %v2163 = vpop.permute.xlu0 %2162
          %v2165 = vmul.f32 %v2135, %v2125
          %v2166 = vmul.f32 %v2139, %v2126
          %v2167 = vmul.f32 %v2143, %v2127
          %v2168 = vmul.f32 %v2147, %v2128
          %v2169 = vmul.f32 %v2151, %v2129
          %v2170 = vmul.f32 %v2155, %v2130
          %v2171 = vmul.f32 %v2159, %v2131
          %v2172 = vmul.f32 %v2163, %v2132
          %v2173 = vadd.f32 %v2115, %v2165
          %v2174 = vadd.f32 %v2116, %v2166
          %v2175 = vadd.f32 %v2117, %v2167
          %v2176 = vadd.f32 %v2118, %v2168
          %v2177 = vadd.f32 %v2119, %v2169
          %v2178 = vadd.f32 %v2120, %v2170
          %v2179 = vadd.f32 %v2121, %v2171
          %v2180 = vadd.f32 %v2122, %v2172
          %s2181 = sadd.s32 %s2006, 1408
          %s2182 = scalar_lea.vmem [#allocation2], %s2181
          %v2183 = vld [vmem:[%s2182] sm:$0xff]
          %v2184 = vld [vmem:[%s2182 + $0x8] sm:$0xff]
          %v2185 = vld [vmem:[%s2182 + $0x10] sm:$0xff]
          %v2186 = vld [vmem:[%s2182 + $0x18] sm:$0xff]
          %v2187 = vld [vmem:[%s2182 + $0x20] sm:$0xff]
          %v2188 = vld [vmem:[%s2182 + $0x28] sm:$0xff]
          %v2189 = vld [vmem:[%s2182 + $0x30] sm:$0xff]
          %v2190 = vld [vmem:[%s2182 + $0x38] sm:$0xff]
          %2191 = vset.pattern.permute.xlu0 13
          %2192 = vperm.xlu0 %2191, %v1271
          %v2193 = vpop.permute.xlu0 %2192
          %2195 = vset.pattern.permute.xlu0 13
          %2196 = vperm.xlu0 %2195, %v1276
          %v2197 = vpop.permute.xlu0 %2196
          %2199 = vset.pattern.permute.xlu0 13
          %2200 = vperm.xlu0 %2199, %v1281
          %v2201 = vpop.permute.xlu0 %2200
          %2203 = vset.pattern.permute.xlu0 13
          %2204 = vperm.xlu0 %2203, %v1286
          %v2205 = vpop.permute.xlu0 %2204
          %2207 = vset.pattern.permute.xlu0 13
          %2208 = vperm.xlu0 %2207, %v1291
          %v2209 = vpop.permute.xlu0 %2208
          %2211 = vset.pattern.permute.xlu0 13
          %2212 = vperm.xlu0 %2211, %v1296
          %v2213 = vpop.permute.xlu0 %2212
          %2215 = vset.pattern.permute.xlu0 13
          %2216 = vperm.xlu0 %2215, %v1301
          %v2217 = vpop.permute.xlu0 %2216
          %2219 = vset.pattern.permute.xlu0 13
          %2220 = vperm.xlu0 %2219, %v1306
          %v2221 = vpop.permute.xlu0 %2220
          %v2223 = vmul.f32 %v2193, %v2183
          %v2224 = vmul.f32 %v2197, %v2184
          %v2225 = vmul.f32 %v2201, %v2185
          %v2226 = vmul.f32 %v2205, %v2186
          %v2227 = vmul.f32 %v2209, %v2187
          %v2228 = vmul.f32 %v2213, %v2188
          %v2229 = vmul.f32 %v2217, %v2189
          %v2230 = vmul.f32 %v2221, %v2190
          %v2231 = vadd.f32 %v2173, %v2223
          %v2232 = vadd.f32 %v2174, %v2224
          %v2233 = vadd.f32 %v2175, %v2225
          %v2234 = vadd.f32 %v2176, %v2226
          %v2235 = vadd.f32 %v2177, %v2227
          %v2236 = vadd.f32 %v2178, %v2228
          %v2237 = vadd.f32 %v2179, %v2229
          %v2238 = vadd.f32 %v2180, %v2230
          %s2239 = sadd.s32 %s2006, 1760
          %s2240 = scalar_lea.vmem [#allocation2], %s2239
          %v2241 = vld [vmem:[%s2240] sm:$0xff]
          %v2242 = vld [vmem:[%s2240 + $0x8] sm:$0xff]
          %v2243 = vld [vmem:[%s2240 + $0x10] sm:$0xff]
          %v2244 = vld [vmem:[%s2240 + $0x18] sm:$0xff]
          %v2245 = vld [vmem:[%s2240 + $0x20] sm:$0xff]
          %v2246 = vld [vmem:[%s2240 + $0x28] sm:$0xff]
          %v2247 = vld [vmem:[%s2240 + $0x30] sm:$0xff]
          %v2248 = vld [vmem:[%s2240 + $0x38] sm:$0xff]
          %2249 = vset.pattern.permute.xlu0 14
          %2250 = vperm.xlu0 %2249, %v1271
          %v2251 = vpop.permute.xlu0 %2250
          %2253 = vset.pattern.permute.xlu0 14
          %2254 = vperm.xlu0 %2253, %v1276
          %v2255 = vpop.permute.xlu0 %2254
          %2257 = vset.pattern.permute.xlu0 14
          %2258 = vperm.xlu0 %2257, %v1281
          %v2259 = vpop.permute.xlu0 %2258
          %2261 = vset.pattern.permute.xlu0 14
          %2262 = vperm.xlu0 %2261, %v1286
          %v2263 = vpop.permute.xlu0 %2262
          %2265 = vset.pattern.permute.xlu0 14
          %2266 = vperm.xlu0 %2265, %v1291
          %v2267 = vpop.permute.xlu0 %2266
          %2269 = vset.pattern.permute.xlu0 14
          %2270 = vperm.xlu0 %2269, %v1296
          %v2271 = vpop.permute.xlu0 %2270
          %2273 = vset.pattern.permute.xlu0 14
          %2274 = vperm.xlu0 %2273, %v1301
          %v2275 = vpop.permute.xlu0 %2274
          %2277 = vset.pattern.permute.xlu0 14
          %2278 = vperm.xlu0 %2277, %v1306
          %v2279 = vpop.permute.xlu0 %2278
          %v2281 = vmul.f32 %v2251, %v2241
          %v2282 = vmul.f32 %v2255, %v2242
          %v2283 = vmul.f32 %v2259, %v2243
          %v2284 = vmul.f32 %v2263, %v2244
          %v2285 = vmul.f32 %v2267, %v2245
          %v2286 = vmul.f32 %v2271, %v2246
          %v2287 = vmul.f32 %v2275, %v2247
          %v2288 = vmul.f32 %v2279, %v2248
          %v2289 = vadd.f32 %v2231, %v2281
          %v2290 = vadd.f32 %v2232, %v2282
          %v2291 = vadd.f32 %v2233, %v2283
          %v2292 = vadd.f32 %v2234, %v2284
          %v2293 = vadd.f32 %v2235, %v2285
          %v2294 = vadd.f32 %v2236, %v2286
          %v2295 = vadd.f32 %v2237, %v2287
          %v2296 = vadd.f32 %v2238, %v2288
          %s2297 = sadd.s32 %s1424, 352
          %s2298 = scalar_lea.vmem [#allocation2], %s2297
          %v2299 = vld [vmem:[%s2298] sm:$0xff]
          %v2300 = vld [vmem:[%s2298 + $0x8] sm:$0xff]
          %v2301 = vld [vmem:[%s2298 + $0x10] sm:$0xff]
          %v2302 = vld [vmem:[%s2298 + $0x18] sm:$0xff]
          %v2303 = vld [vmem:[%s2298 + $0x20] sm:$0xff]
          %v2304 = vld [vmem:[%s2298 + $0x28] sm:$0xff]
          %v2305 = vld [vmem:[%s2298 + $0x30] sm:$0xff]
          %v2306 = vld [vmem:[%s2298 + $0x38] sm:$0xff]
          %2307 = vset.pattern.permute.xlu0 15
          %2308 = vperm.xlu0 %2307, %v1271
          %v2309 = vpop.permute.xlu0 %2308
          %2311 = vset.pattern.permute.xlu0 15
          %2312 = vperm.xlu0 %2311, %v1276
          %v2313 = vpop.permute.xlu0 %2312
          %2315 = vset.pattern.permute.xlu0 15
          %2316 = vperm.xlu0 %2315, %v1281
          %v2317 = vpop.permute.xlu0 %2316
          %2319 = vset.pattern.permute.xlu0 15
          %2320 = vperm.xlu0 %2319, %v1286
          %v2321 = vpop.permute.xlu0 %2320
          %2323 = vset.pattern.permute.xlu0 15
          %2324 = vperm.xlu0 %2323, %v1291
          %v2325 = vpop.permute.xlu0 %2324
          %2327 = vset.pattern.permute.xlu0 15
          %2328 = vperm.xlu0 %2327, %v1296
          %v2329 = vpop.permute.xlu0 %2328
          %2331 = vset.pattern.permute.xlu0 15
          %2332 = vperm.xlu0 %2331, %v1301
          %v2333 = vpop.permute.xlu0 %2332
          %2335 = vset.pattern.permute.xlu0 15
          %2336 = vperm.xlu0 %2335, %v1306
          %v2337 = vpop.permute.xlu0 %2336
          %v2339 = vmul.f32 %v2309, %v2299
          %v2340 = vmul.f32 %v2313, %v2300
          %v2341 = vmul.f32 %v2317, %v2301
          %v2342 = vmul.f32 %v2321, %v2302
          %v2343 = vmul.f32 %v2325, %v2303
          %v2344 = vmul.f32 %v2329, %v2304
          %v2345 = vmul.f32 %v2333, %v2305
          %v2346 = vmul.f32 %v2337, %v2306
          %v2347 = vadd.f32 %v2289, %v2339
          %v2348 = vadd.f32 %v2290, %v2340
          %v2349 = vadd.f32 %v2291, %v2341
          %v2350 = vadd.f32 %v2292, %v2342
          %v2351 = vadd.f32 %v2293, %v2343
          %v2352 = vadd.f32 %v2294, %v2344
          %v2353 = vadd.f32 %v2295, %v2345
          %v2354 = vadd.f32 %v2296, %v2346
          %v2355 = vld [vmem:[%s1426] sm:$0xff]
          %v2356 = vld [vmem:[%s1426 + $0x8] sm:$0xff]
          %v2357 = vld [vmem:[%s1426 + $0x10] sm:$0xff]
          %v2358 = vld [vmem:[%s1426 + $0x18] sm:$0xff]
          %v2359 = vld [vmem:[%s1426 + $0x20] sm:$0xff]
          %v2360 = vld [vmem:[%s1426 + $0x28] sm:$0xff]
          %v2361 = vld [vmem:[%s1426 + $0x30] sm:$0xff]
          %v2362 = vld [vmem:[%s1426 + $0x38] sm:$0xff]
          %2363 = vset.pattern.permute.xlu0 16
          %2364 = vperm.xlu0 %2363, %v1271
          %v2365 = vpop.permute.xlu0 %2364
          %2367 = vset.pattern.permute.xlu0 16
          %2368 = vperm.xlu0 %2367, %v1276
          %v2369 = vpop.permute.xlu0 %2368
          %2371 = vset.pattern.permute.xlu0 16
          %2372 = vperm.xlu0 %2371, %v1281
          %v2373 = vpop.permute.xlu0 %2372
          %2375 = vset.pattern.permute.xlu0 16
          %2376 = vperm.xlu0 %2375, %v1286
          %v2377 = vpop.permute.xlu0 %2376
          %2379 = vset.pattern.permute.xlu0 16
          %2380 = vperm.xlu0 %2379, %v1291
          %v2381 = vpop.permute.xlu0 %2380
          %2383 = vset.pattern.permute.xlu0 16
          %2384 = vperm.xlu0 %2383, %v1296
          %v2385 = vpop.permute.xlu0 %2384
          %2387 = vset.pattern.permute.xlu0 16
          %2388 = vperm.xlu0 %2387, %v1301
          %v2389 = vpop.permute.xlu0 %2388
          %2391 = vset.pattern.permute.xlu0 16
          %2392 = vperm.xlu0 %2391, %v1306
          %v2393 = vpop.permute.xlu0 %2392
          %v2395 = vmul.f32 %v2365, %v2355
          %v2396 = vmul.f32 %v2369, %v2356
          %v2397 = vmul.f32 %v2373, %v2357
          %v2398 = vmul.f32 %v2377, %v2358
          %v2399 = vmul.f32 %v2381, %v2359
          %v2400 = vmul.f32 %v2385, %v2360
          %v2401 = vmul.f32 %v2389, %v2361
          %v2402 = vmul.f32 %v2393, %v2362
          %v2403 = vadd.f32 %v2347, %v2395
          %v2404 = vadd.f32 %v2348, %v2396
          %v2405 = vadd.f32 %v2349, %v2397
          %v2406 = vadd.f32 %v2350, %v2398
          %v2407 = vadd.f32 %v2351, %v2399
          %v2408 = vadd.f32 %v2352, %v2400
          %v2409 = vadd.f32 %v2353, %v2401
          %v2410 = vadd.f32 %v2354, %v2402
          %v2411 = vld [vmem:[%s1484] sm:$0xff]
          %v2412 = vld [vmem:[%s1484 + $0x8] sm:$0xff]
          %v2413 = vld [vmem:[%s1484 + $0x10] sm:$0xff]
          %v2414 = vld [vmem:[%s1484 + $0x18] sm:$0xff]
          %v2415 = vld [vmem:[%s1484 + $0x20] sm:$0xff]
          %v2416 = vld [vmem:[%s1484 + $0x28] sm:$0xff]
          %v2417 = vld [vmem:[%s1484 + $0x30] sm:$0xff]
          %v2418 = vld [vmem:[%s1484 + $0x38] sm:$0xff]
          %2419 = vset.pattern.permute.xlu0 17
          %2420 = vperm.xlu0 %2419, %v1271
          %v2421 = vpop.permute.xlu0 %2420
          %2423 = vset.pattern.permute.xlu0 17
          %2424 = vperm.xlu0 %2423, %v1276
          %v2425 = vpop.permute.xlu0 %2424
          %2427 = vset.pattern.permute.xlu0 17
          %2428 = vperm.xlu0 %2427, %v1281
          %v2429 = vpop.permute.xlu0 %2428
          %2431 = vset.pattern.permute.xlu0 17
          %2432 = vperm.xlu0 %2431, %v1286
          %v2433 = vpop.permute.xlu0 %2432
          %2435 = vset.pattern.permute.xlu0 17
          %2436 = vperm.xlu0 %2435, %v1291
          %v2437 = vpop.permute.xlu0 %2436
          %2439 = vset.pattern.permute.xlu0 17
          %2440 = vperm.xlu0 %2439, %v1296
          %v2441 = vpop.permute.xlu0 %2440
          %2443 = vset.pattern.permute.xlu0 17
          %2444 = vperm.xlu0 %2443, %v1301
          %v2445 = vpop.permute.xlu0 %2444
          %2447 = vset.pattern.permute.xlu0 17
          %2448 = vperm.xlu0 %2447, %v1306
          %v2449 = vpop.permute.xlu0 %2448
          %v2451 = vmul.f32 %v2421, %v2411
          %v2452 = vmul.f32 %v2425, %v2412
          %v2453 = vmul.f32 %v2429, %v2413
          %v2454 = vmul.f32 %v2433, %v2414
          %v2455 = vmul.f32 %v2437, %v2415
          %v2456 = vmul.f32 %v2441, %v2416
          %v2457 = vmul.f32 %v2445, %v2417
          %v2458 = vmul.f32 %v2449, %v2418
          %v2459 = vadd.f32 %v2403, %v2451
          %v2460 = vadd.f32 %v2404, %v2452
          %v2461 = vadd.f32 %v2405, %v2453
          %v2462 = vadd.f32 %v2406, %v2454
          %v2463 = vadd.f32 %v2407, %v2455
          %v2464 = vadd.f32 %v2408, %v2456
          %v2465 = vadd.f32 %v2409, %v2457
          %v2466 = vadd.f32 %v2410, %v2458
          %v2467 = vld [vmem:[%s1542] sm:$0xff]
          %v2468 = vld [vmem:[%s1542 + $0x8] sm:$0xff]
          %v2469 = vld [vmem:[%s1542 + $0x10] sm:$0xff]
          %v2470 = vld [vmem:[%s1542 + $0x18] sm:$0xff]
          %v2471 = vld [vmem:[%s1542 + $0x20] sm:$0xff]
          %v2472 = vld [vmem:[%s1542 + $0x28] sm:$0xff]
          %v2473 = vld [vmem:[%s1542 + $0x30] sm:$0xff]
          %v2474 = vld [vmem:[%s1542 + $0x38] sm:$0xff]
          %2475 = vset.pattern.permute.xlu0 18
          %2476 = vperm.xlu0 %2475, %v1271
          %v2477 = vpop.permute.xlu0 %2476
          %2479 = vset.pattern.permute.xlu0 18
          %2480 = vperm.xlu0 %2479, %v1276
          %v2481 = vpop.permute.xlu0 %2480
          %2483 = vset.pattern.permute.xlu0 18
          %2484 = vperm.xlu0 %2483, %v1281
          %v2485 = vpop.permute.xlu0 %2484
          %2487 = vset.pattern.permute.xlu0 18
          %2488 = vperm.xlu0 %2487, %v1286
          %v2489 = vpop.permute.xlu0 %2488
          %2491 = vset.pattern.permute.xlu0 18
          %2492 = vperm.xlu0 %2491, %v1291
          %v2493 = vpop.permute.xlu0 %2492
          %2495 = vset.pattern.permute.xlu0 18
          %2496 = vperm.xlu0 %2495, %v1296
          %v2497 = vpop.permute.xlu0 %2496
          %2499 = vset.pattern.permute.xlu0 18
          %2500 = vperm.xlu0 %2499, %v1301
          %v2501 = vpop.permute.xlu0 %2500
          %2503 = vset.pattern.permute.xlu0 18
          %2504 = vperm.xlu0 %2503, %v1306
          %v2505 = vpop.permute.xlu0 %2504
          %v2507 = vmul.f32 %v2477, %v2467
          %v2508 = vmul.f32 %v2481, %v2468
          %v2509 = vmul.f32 %v2485, %v2469
          %v2510 = vmul.f32 %v2489, %v2470
          %v2511 = vmul.f32 %v2493, %v2471
          %v2512 = vmul.f32 %v2497, %v2472
          %v2513 = vmul.f32 %v2501, %v2473
          %v2514 = vmul.f32 %v2505, %v2474
          %v2515 = vadd.f32 %v2459, %v2507
          %v2516 = vadd.f32 %v2460, %v2508
          %v2517 = vadd.f32 %v2461, %v2509
          %v2518 = vadd.f32 %v2462, %v2510
          %v2519 = vadd.f32 %v2463, %v2511
          %v2520 = vadd.f32 %v2464, %v2512
          %v2521 = vadd.f32 %v2465, %v2513
          %v2522 = vadd.f32 %v2466, %v2514
          %s2523 = sadd.s32 %s1424, 1760
          %s2524 = scalar_lea.vmem [#allocation2], %s2523
          %v2525 = vld [vmem:[%s2524] sm:$0xff]
          %v2526 = vld [vmem:[%s2524 + $0x8] sm:$0xff]
          %v2527 = vld [vmem:[%s2524 + $0x10] sm:$0xff]
          %v2528 = vld [vmem:[%s2524 + $0x18] sm:$0xff]
          %v2529 = vld [vmem:[%s2524 + $0x20] sm:$0xff]
          %v2530 = vld [vmem:[%s2524 + $0x28] sm:$0xff]
          %v2531 = vld [vmem:[%s2524 + $0x30] sm:$0xff]
          %v2532 = vld [vmem:[%s2524 + $0x38] sm:$0xff]
          %2533 = vset.pattern.permute.xlu0 19
          %2534 = vperm.xlu0 %2533, %v1271
          %v2535 = vpop.permute.xlu0 %2534
          %2537 = vset.pattern.permute.xlu0 19
          %2538 = vperm.xlu0 %2537, %v1276
          %v2539 = vpop.permute.xlu0 %2538
          %2541 = vset.pattern.permute.xlu0 19
          %2542 = vperm.xlu0 %2541, %v1281
          %v2543 = vpop.permute.xlu0 %2542
          %2545 = vset.pattern.permute.xlu0 19
          %2546 = vperm.xlu0 %2545, %v1286
          %v2547 = vpop.permute.xlu0 %2546
          %2549 = vset.pattern.permute.xlu0 19
          %2550 = vperm.xlu0 %2549, %v1291
          %v2551 = vpop.permute.xlu0 %2550
          %2553 = vset.pattern.permute.xlu0 19
          %2554 = vperm.xlu0 %2553, %v1296
          %v2555 = vpop.permute.xlu0 %2554
          %2557 = vset.pattern.permute.xlu0 19
          %2558 = vperm.xlu0 %2557, %v1301
          %v2559 = vpop.permute.xlu0 %2558
          %2561 = vset.pattern.permute.xlu0 19
          %2562 = vperm.xlu0 %2561, %v1306
          %v2563 = vpop.permute.xlu0 %2562
          %v2565 = vmul.f32 %v2535, %v2525
          %v2566 = vmul.f32 %v2539, %v2526
          %v2567 = vmul.f32 %v2543, %v2527
          %v2568 = vmul.f32 %v2547, %v2528
          %v2569 = vmul.f32 %v2551, %v2529
          %v2570 = vmul.f32 %v2555, %v2530
          %v2571 = vmul.f32 %v2559, %v2531
          %v2572 = vmul.f32 %v2563, %v2532
          %v2573 = vadd.f32 %v2515, %v2565
          %v2574 = vadd.f32 %v2516, %v2566
          %v2575 = vadd.f32 %v2517, %v2567
          %v2576 = vadd.f32 %v2518, %v2568
          %v2577 = vadd.f32 %v2519, %v2569
          %v2578 = vadd.f32 %v2520, %v2570
          %v2579 = vadd.f32 %v2521, %v2571
          %v2580 = vadd.f32 %v2522, %v2572
          %s2581 = sadd.s32 %s1034, 352
          %s2582 = scalar_lea.vmem [#allocation2], %s2581
          %v2583 = vld [vmem:[%s2582] sm:$0xff]
          %v2584 = vld [vmem:[%s2582 + $0x8] sm:$0xff]
          %v2585 = vld [vmem:[%s2582 + $0x10] sm:$0xff]
          %v2586 = vld [vmem:[%s2582 + $0x18] sm:$0xff]
          %v2587 = vld [vmem:[%s2582 + $0x20] sm:$0xff]
          %v2588 = vld [vmem:[%s2582 + $0x28] sm:$0xff]
          %v2589 = vld [vmem:[%s2582 + $0x30] sm:$0xff]
          %v2590 = vld [vmem:[%s2582 + $0x38] sm:$0xff]
          %2591 = vset.pattern.permute.xlu0 20
          %2592 = vperm.xlu0 %2591, %v1271
          %v2593 = vpop.permute.xlu0 %2592
          %2595 = vset.pattern.permute.xlu0 20
          %2596 = vperm.xlu0 %2595, %v1276
          %v2597 = vpop.permute.xlu0 %2596
          %2599 = vset.pattern.permute.xlu0 20
          %2600 = vperm.xlu0 %2599, %v1281
          %v2601 = vpop.permute.xlu0 %2600
          %2603 = vset.pattern.permute.xlu0 20
          %2604 = vperm.xlu0 %2603, %v1286
          %v2605 = vpop.permute.xlu0 %2604
          %2607 = vset.pattern.permute.xlu0 20
          %2608 = vperm.xlu0 %2607, %v1291
          %v2609 = vpop.permute.xlu0 %2608
          %2611 = vset.pattern.permute.xlu0 20
          %2612 = vperm.xlu0 %2611, %v1296
          %v2613 = vpop.permute.xlu0 %2612
          %2615 = vset.pattern.permute.xlu0 20
          %2616 = vperm.xlu0 %2615, %v1301
          %v2617 = vpop.permute.xlu0 %2616
          %2619 = vset.pattern.permute.xlu0 20
          %2620 = vperm.xlu0 %2619, %v1306
          %v2621 = vpop.permute.xlu0 %2620
          %v2623 = vmul.f32 %v2593, %v2583
          %v2624 = vmul.f32 %v2597, %v2584
          %v2625 = vmul.f32 %v2601, %v2585
          %v2626 = vmul.f32 %v2605, %v2586
          %v2627 = vmul.f32 %v2609, %v2587
          %v2628 = vmul.f32 %v2613, %v2588
          %v2629 = vmul.f32 %v2617, %v2589
          %v2630 = vmul.f32 %v2621, %v2590
          %v2631 = vadd.f32 %v2573, %v2623
          %v2632 = vadd.f32 %v2574, %v2624
          %v2633 = vadd.f32 %v2575, %v2625
          %v2634 = vadd.f32 %v2576, %v2626
          %v2635 = vadd.f32 %v2577, %v2627
          %v2636 = vadd.f32 %v2578, %v2628
          %v2637 = vadd.f32 %v2579, %v2629
          %v2638 = vadd.f32 %v2580, %v2630
          %v2639 = vld [vmem:[%s1600] sm:$0xff]
          %v2640 = vld [vmem:[%s1600 + $0x8] sm:$0xff]
          %v2641 = vld [vmem:[%s1600 + $0x10] sm:$0xff]
          %v2642 = vld [vmem:[%s1600 + $0x18] sm:$0xff]
          %v2643 = vld [vmem:[%s1600 + $0x20] sm:$0xff]
          %v2644 = vld [vmem:[%s1600 + $0x28] sm:$0xff]
          %v2645 = vld [vmem:[%s1600 + $0x30] sm:$0xff]
          %v2646 = vld [vmem:[%s1600 + $0x38] sm:$0xff]
          %2647 = vset.pattern.permute.xlu0 21
          %2648 = vperm.xlu0 %2647, %v1271
          %v2649 = vpop.permute.xlu0 %2648
          %2651 = vset.pattern.permute.xlu0 21
          %2652 = vperm.xlu0 %2651, %v1276
          %v2653 = vpop.permute.xlu0 %2652
          %2655 = vset.pattern.permute.xlu0 21
          %2656 = vperm.xlu0 %2655, %v1281
          %v2657 = vpop.permute.xlu0 %2656
          %2659 = vset.pattern.permute.xlu0 21
          %2660 = vperm.xlu0 %2659, %v1286
          %v2661 = vpop.permute.xlu0 %2660
          %2663 = vset.pattern.permute.xlu0 21
          %2664 = vperm.xlu0 %2663, %v1291
          %v2665 = vpop.permute.xlu0 %2664
          %2667 = vset.pattern.permute.xlu0 21
          %2668 = vperm.xlu0 %2667, %v1296
          %v2669 = vpop.permute.xlu0 %2668
          %2671 = vset.pattern.permute.xlu0 21
          %2672 = vperm.xlu0 %2671, %v1301
          %v2673 = vpop.permute.xlu0 %2672
          %2675 = vset.pattern.permute.xlu0 21
          %2676 = vperm.xlu0 %2675, %v1306
          %v2677 = vpop.permute.xlu0 %2676
          %v2679 = vmul.f32 %v2649, %v2639
          %v2680 = vmul.f32 %v2653, %v2640
          %v2681 = vmul.f32 %v2657, %v2641
          %v2682 = vmul.f32 %v2661, %v2642
          %v2683 = vmul.f32 %v2665, %v2643
          %v2684 = vmul.f32 %v2669, %v2644
          %v2685 = vmul.f32 %v2673, %v2645
          %v2686 = vmul.f32 %v2677, %v2646
          %v2687 = vadd.f32 %v2631, %v2679
          %v2688 = vadd.f32 %v2632, %v2680
          %v2689 = vadd.f32 %v2633, %v2681
          %v2690 = vadd.f32 %v2634, %v2682
          %v2691 = vadd.f32 %v2635, %v2683
          %v2692 = vadd.f32 %v2636, %v2684
          %v2693 = vadd.f32 %v2637, %v2685
          %v2694 = vadd.f32 %v2638, %v2686
          %v2695 = vld [vmem:[%s1036] sm:$0xff]
          %v2696 = vld [vmem:[%s1036 + $0x8] sm:$0xff]
          %v2697 = vld [vmem:[%s1036 + $0x10] sm:$0xff]
          %v2698 = vld [vmem:[%s1036 + $0x18] sm:$0xff]
          %v2699 = vld [vmem:[%s1036 + $0x20] sm:$0xff]
          %v2700 = vld [vmem:[%s1036 + $0x28] sm:$0xff]
          %v2701 = vld [vmem:[%s1036 + $0x30] sm:$0xff]
          %v2702 = vld [vmem:[%s1036 + $0x38] sm:$0xff]
          %2703 = vset.pattern.permute.xlu0 22
          %2704 = vperm.xlu0 %2703, %v1271
          %v2705 = vpop.permute.xlu0 %2704
          %2707 = vset.pattern.permute.xlu0 22
          %2708 = vperm.xlu0 %2707, %v1276
          %v2709 = vpop.permute.xlu0 %2708
          %2711 = vset.pattern.permute.xlu0 22
          %2712 = vperm.xlu0 %2711, %v1281
          %v2713 = vpop.permute.xlu0 %2712
          %2715 = vset.pattern.permute.xlu0 22
          %2716 = vperm.xlu0 %2715, %v1286
          %v2717 = vpop.permute.xlu0 %2716
          %2719 = vset.pattern.permute.xlu0 22
          %2720 = vperm.xlu0 %2719, %v1291
          %v2721 = vpop.permute.xlu0 %2720
          %2723 = vset.pattern.permute.xlu0 22
          %2724 = vperm.xlu0 %2723, %v1296
          %v2725 = vpop.permute.xlu0 %2724
          %2727 = vset.pattern.permute.xlu0 22
          %2728 = vperm.xlu0 %2727, %v1301
          %v2729 = vpop.permute.xlu0 %2728
          %2731 = vset.pattern.permute.xlu0 22
          %2732 = vperm.xlu0 %2731, %v1306
          %v2733 = vpop.permute.xlu0 %2732
          %v2735 = vmul.f32 %v2705, %v2695
          %v2736 = vmul.f32 %v2709, %v2696
          %v2737 = vmul.f32 %v2713, %v2697
          %v2738 = vmul.f32 %v2717, %v2698
          %v2739 = vmul.f32 %v2721, %v2699
          %v2740 = vmul.f32 %v2725, %v2700
          %v2741 = vmul.f32 %v2729, %v2701
          %v2742 = vmul.f32 %v2733, %v2702
          %v2743 = vadd.f32 %v2687, %v2735
          %v2744 = vadd.f32 %v2688, %v2736
          %v2745 = vadd.f32 %v2689, %v2737
          %v2746 = vadd.f32 %v2690, %v2738
          %v2747 = vadd.f32 %v2691, %v2739
          %v2748 = vadd.f32 %v2692, %v2740
          %v2749 = vadd.f32 %v2693, %v2741
          %v2750 = vadd.f32 %v2694, %v2742
          %v2751 = vld [vmem:[%s1714] sm:$0xff]
          %v2752 = vld [vmem:[%s1714 + $0x8] sm:$0xff]
          %v2753 = vld [vmem:[%s1714 + $0x10] sm:$0xff]
          %v2754 = vld [vmem:[%s1714 + $0x18] sm:$0xff]
          %v2755 = vld [vmem:[%s1714 + $0x20] sm:$0xff]
          %v2756 = vld [vmem:[%s1714 + $0x28] sm:$0xff]
          %v2757 = vld [vmem:[%s1714 + $0x30] sm:$0xff]
          %v2758 = vld [vmem:[%s1714 + $0x38] sm:$0xff]
          %2759 = vset.pattern.permute.xlu0 23
          %2760 = vperm.xlu0 %2759, %v1271
          %v2761 = vpop.permute.xlu0 %2760
          %2763 = vset.pattern.permute.xlu0 23
          %2764 = vperm.xlu0 %2763, %v1276
          %v2765 = vpop.permute.xlu0 %2764
          %2767 = vset.pattern.permute.xlu0 23
          %2768 = vperm.xlu0 %2767, %v1281
          %v2769 = vpop.permute.xlu0 %2768
          %2771 = vset.pattern.permute.xlu0 23
          %2772 = vperm.xlu0 %2771, %v1286
          %v2773 = vpop.permute.xlu0 %2772
          %2775 = vset.pattern.permute.xlu0 23
          %2776 = vperm.xlu0 %2775, %v1291
          %v2777 = vpop.permute.xlu0 %2776
          %2779 = vset.pattern.permute.xlu0 23
          %2780 = vperm.xlu0 %2779, %v1296
          %v2781 = vpop.permute.xlu0 %2780
          %2783 = vset.pattern.permute.xlu0 23
          %2784 = vperm.xlu0 %2783, %v1301
          %v2785 = vpop.permute.xlu0 %2784
          %2787 = vset.pattern.permute.xlu0 23
          %2788 = vperm.xlu0 %2787, %v1306
          %v2789 = vpop.permute.xlu0 %2788
          %v2791 = vmul.f32 %v2761, %v2751
          %v2792 = vmul.f32 %v2765, %v2752
          %v2793 = vmul.f32 %v2769, %v2753
          %v2794 = vmul.f32 %v2773, %v2754
          %v2795 = vmul.f32 %v2777, %v2755
          %v2796 = vmul.f32 %v2781, %v2756
          %v2797 = vmul.f32 %v2785, %v2757
          %v2798 = vmul.f32 %v2789, %v2758
          %v2799 = vadd.f32 %v2743, %v2791
          %v2800 = vadd.f32 %v2744, %v2792
          %v2801 = vadd.f32 %v2745, %v2793
          %v2802 = vadd.f32 %v2746, %v2794
          %v2803 = vadd.f32 %v2747, %v2795
          %v2804 = vadd.f32 %v2748, %v2796
          %v2805 = vadd.f32 %v2749, %v2797
          %v2806 = vadd.f32 %v2750, %v2798
          %s2807 = sadd.s32 %s1034, 1760
          %s2808 = scalar_lea.vmem [#allocation2], %s2807
          %v2809 = vld [vmem:[%s2808] sm:$0xff]
          %v2810 = vld [vmem:[%s2808 + $0x8] sm:$0xff]
          %v2811 = vld [vmem:[%s2808 + $0x10] sm:$0xff]
          %v2812 = vld [vmem:[%s2808 + $0x18] sm:$0xff]
          %v2813 = vld [vmem:[%s2808 + $0x20] sm:$0xff]
          %v2814 = vld [vmem:[%s2808 + $0x28] sm:$0xff]
          %v2815 = vld [vmem:[%s2808 + $0x30] sm:$0xff]
          %v2816 = vld [vmem:[%s2808 + $0x38] sm:$0xff]
          %2817 = vset.pattern.permute.xlu0 24
          %2818 = vperm.xlu0 %2817, %v1271
          %v2819 = vpop.permute.xlu0 %2818
          %2821 = vset.pattern.permute.xlu0 24
          %2822 = vperm.xlu0 %2821, %v1276
          %v2823 = vpop.permute.xlu0 %2822
          %2825 = vset.pattern.permute.xlu0 24
          %2826 = vperm.xlu0 %2825, %v1281
          %v2827 = vpop.permute.xlu0 %2826
          %2829 = vset.pattern.permute.xlu0 24
          %2830 = vperm.xlu0 %2829, %v1286
          %v2831 = vpop.permute.xlu0 %2830
          %2833 = vset.pattern.permute.xlu0 24
          %2834 = vperm.xlu0 %2833, %v1291
          %v2835 = vpop.permute.xlu0 %2834
          %2837 = vset.pattern.permute.xlu0 24
          %2838 = vperm.xlu0 %2837, %v1296
          %v2839 = vpop.permute.xlu0 %2838
          %2841 = vset.pattern.permute.xlu0 24
          %2842 = vperm.xlu0 %2841, %v1301
          %v2843 = vpop.permute.xlu0 %2842
          %2845 = vset.pattern.permute.xlu0 24
          %2846 = vperm.xlu0 %2845, %v1306
          %v2847 = vpop.permute.xlu0 %2846
          %v2849 = vmul.f32 %v2819, %v2809
          %v2850 = vmul.f32 %v2823, %v2810
          %v2851 = vmul.f32 %v2827, %v2811
          %v2852 = vmul.f32 %v2831, %v2812
          %v2853 = vmul.f32 %v2835, %v2813
          %v2854 = vmul.f32 %v2839, %v2814
          %v2855 = vmul.f32 %v2843, %v2815
          %v2856 = vmul.f32 %v2847, %v2816
          %v2857 = vadd.f32 %v2799, %v2849
          %v2858 = vadd.f32 %v2800, %v2850
          %v2859 = vadd.f32 %v2801, %v2851
          %v2860 = vadd.f32 %v2802, %v2852
          %v2861 = vadd.f32 %v2803, %v2853
          %v2862 = vadd.f32 %v2804, %v2854
          %v2863 = vadd.f32 %v2805, %v2855
          %v2864 = vadd.f32 %v2806, %v2856
          %s2865 = sadd.s32 %s1772, 352
          %s2866 = scalar_lea.vmem [#allocation2], %s2865
          %v2867 = vld [vmem:[%s2866] sm:$0xff]
          %v2868 = vld [vmem:[%s2866 + $0x8] sm:$0xff]
          %v2869 = vld [vmem:[%s2866 + $0x10] sm:$0xff]
          %v2870 = vld [vmem:[%s2866 + $0x18] sm:$0xff]
          %v2871 = vld [vmem:[%s2866 + $0x20] sm:$0xff]
          %v2872 = vld [vmem:[%s2866 + $0x28] sm:$0xff]
          %v2873 = vld [vmem:[%s2866 + $0x30] sm:$0xff]
          %v2874 = vld [vmem:[%s2866 + $0x38] sm:$0xff]
          %2875 = vset.pattern.permute.xlu0 25
          %2876 = vperm.xlu0 %2875, %v1271
          %v2877 = vpop.permute.xlu0 %2876
          %2879 = vset.pattern.permute.xlu0 25
          %2880 = vperm.xlu0 %2879, %v1276
          %v2881 = vpop.permute.xlu0 %2880
          %2883 = vset.pattern.permute.xlu0 25
          %2884 = vperm.xlu0 %2883, %v1281
          %v2885 = vpop.permute.xlu0 %2884
          %2887 = vset.pattern.permute.xlu0 25
          %2888 = vperm.xlu0 %2887, %v1286
          %v2889 = vpop.permute.xlu0 %2888
          %2891 = vset.pattern.permute.xlu0 25
          %2892 = vperm.xlu0 %2891, %v1291
          %v2893 = vpop.permute.xlu0 %2892
          %2895 = vset.pattern.permute.xlu0 25
          %2896 = vperm.xlu0 %2895, %v1296
          %v2897 = vpop.permute.xlu0 %2896
          %2899 = vset.pattern.permute.xlu0 25
          %2900 = vperm.xlu0 %2899, %v1301
          %v2901 = vpop.permute.xlu0 %2900
          %2903 = vset.pattern.permute.xlu0 25
          %2904 = vperm.xlu0 %2903, %v1306
          %v2905 = vpop.permute.xlu0 %2904
          %v2907 = vmul.f32 %v2877, %v2867
          %v2908 = vmul.f32 %v2881, %v2868
          %v2909 = vmul.f32 %v2885, %v2869
          %v2910 = vmul.f32 %v2889, %v2870
          %v2911 = vmul.f32 %v2893, %v2871
          %v2912 = vmul.f32 %v2897, %v2872
          %v2913 = vmul.f32 %v2901, %v2873
          %v2914 = vmul.f32 %v2905, %v2874
          %v2915 = vadd.f32 %v2857, %v2907
          %v2916 = vadd.f32 %v2858, %v2908
          %v2917 = vadd.f32 %v2859, %v2909
          %v2918 = vadd.f32 %v2860, %v2910
          %v2919 = vadd.f32 %v2861, %v2911
          %v2920 = vadd.f32 %v2862, %v2912
          %v2921 = vadd.f32 %v2863, %v2913
          %v2922 = vadd.f32 %v2864, %v2914
          %v2923 = vld [vmem:[%s1774] sm:$0xff]
          %v2924 = vld [vmem:[%s1774 + $0x8] sm:$0xff]
          %v2925 = vld [vmem:[%s1774 + $0x10] sm:$0xff]
          %v2926 = vld [vmem:[%s1774 + $0x18] sm:$0xff]
          %v2927 = vld [vmem:[%s1774 + $0x20] sm:$0xff]
          %v2928 = vld [vmem:[%s1774 + $0x28] sm:$0xff]
          %v2929 = vld [vmem:[%s1774 + $0x30] sm:$0xff]
          %v2930 = vld [vmem:[%s1774 + $0x38] sm:$0xff]
          %2931 = vset.pattern.permute.xlu0 26
          %2932 = vperm.xlu0 %2931, %v1271
          %v2933 = vpop.permute.xlu0 %2932
          %2935 = vset.pattern.permute.xlu0 26
          %2936 = vperm.xlu0 %2935, %v1276
          %v2937 = vpop.permute.xlu0 %2936
          %2939 = vset.pattern.permute.xlu0 26
          %2940 = vperm.xlu0 %2939, %v1281
          %v2941 = vpop.permute.xlu0 %2940
          %2943 = vset.pattern.permute.xlu0 26
          %2944 = vperm.xlu0 %2943, %v1286
          %v2945 = vpop.permute.xlu0 %2944
          %2947 = vset.pattern.permute.xlu0 26
          %2948 = vperm.xlu0 %2947, %v1291
          %v2949 = vpop.permute.xlu0 %2948
          %2951 = vset.pattern.permute.xlu0 26
          %2952 = vperm.xlu0 %2951, %v1296
          %v2953 = vpop.permute.xlu0 %2952
          %2955 = vset.pattern.permute.xlu0 26
          %2956 = vperm.xlu0 %2955, %v1301
          %v2957 = vpop.permute.xlu0 %2956
          %2959 = vset.pattern.permute.xlu0 26
          %2960 = vperm.xlu0 %2959, %v1306
          %v2961 = vpop.permute.xlu0 %2960
          %v2963 = vmul.f32 %v2933, %v2923
          %v2964 = vmul.f32 %v2937, %v2924
          %v2965 = vmul.f32 %v2941, %v2925
          %v2966 = vmul.f32 %v2945, %v2926
          %v2967 = vmul.f32 %v2949, %v2927
          %v2968 = vmul.f32 %v2953, %v2928
          %v2969 = vmul.f32 %v2957, %v2929
          %v2970 = vmul.f32 %v2961, %v2930
          %v2971 = vadd.f32 %v2915, %v2963
          %v2972 = vadd.f32 %v2916, %v2964
          %v2973 = vadd.f32 %v2917, %v2965
          %v2974 = vadd.f32 %v2918, %v2966
          %v2975 = vadd.f32 %v2919, %v2967
          %v2976 = vadd.f32 %v2920, %v2968
          %v2977 = vadd.f32 %v2921, %v2969
          %v2978 = vadd.f32 %v2922, %v2970
          %v2979 = vld [vmem:[%s1832] sm:$0xff]
          %v2980 = vld [vmem:[%s1832 + $0x8] sm:$0xff]
          %v2981 = vld [vmem:[%s1832 + $0x10] sm:$0xff]
          %v2982 = vld [vmem:[%s1832 + $0x18] sm:$0xff]
          %v2983 = vld [vmem:[%s1832 + $0x20] sm:$0xff]
          %v2984 = vld [vmem:[%s1832 + $0x28] sm:$0xff]
          %v2985 = vld [vmem:[%s1832 + $0x30] sm:$0xff]
          %v2986 = vld [vmem:[%s1832 + $0x38] sm:$0xff]
          %2987 = vset.pattern.permute.xlu0 27
          %2988 = vperm.xlu0 %2987, %v1271
          %v2989 = vpop.permute.xlu0 %2988
          %2991 = vset.pattern.permute.xlu0 27
          %2992 = vperm.xlu0 %2991, %v1276
          %v2993 = vpop.permute.xlu0 %2992
          %2995 = vset.pattern.permute.xlu0 27
          %2996 = vperm.xlu0 %2995, %v1281
          %v2997 = vpop.permute.xlu0 %2996
          %2999 = vset.pattern.permute.xlu0 27
          %3000 = vperm.xlu0 %2999, %v1286
          %v3001 = vpop.permute.xlu0 %3000
          %3003 = vset.pattern.permute.xlu0 27
          %3004 = vperm.xlu0 %3003, %v1291
          %v3005 = vpop.permute.xlu0 %3004
          %3007 = vset.pattern.permute.xlu0 27
          %3008 = vperm.xlu0 %3007, %v1296
          %v3009 = vpop.permute.xlu0 %3008
          %3011 = vset.pattern.permute.xlu0 27
          %3012 = vperm.xlu0 %3011, %v1301
          %v3013 = vpop.permute.xlu0 %3012
          %3015 = vset.pattern.permute.xlu0 27
          %3016 = vperm.xlu0 %3015, %v1306
          %v3017 = vpop.permute.xlu0 %3016
          %v3019 = vmul.f32 %v2989, %v2979
          %v3020 = vmul.f32 %v2993, %v2980
          %v3021 = vmul.f32 %v2997, %v2981
          %v3022 = vmul.f32 %v3001, %v2982
          %v3023 = vmul.f32 %v3005, %v2983
          %v3024 = vmul.f32 %v3009, %v2984
          %v3025 = vmul.f32 %v3013, %v2985
          %v3026 = vmul.f32 %v3017, %v2986
          %v3027 = vadd.f32 %v2971, %v3019
          %v3028 = vadd.f32 %v2972, %v3020
          %v3029 = vadd.f32 %v2973, %v3021
          %v3030 = vadd.f32 %v2974, %v3022
          %v3031 = vadd.f32 %v2975, %v3023
          %v3032 = vadd.f32 %v2976, %v3024
          %v3033 = vadd.f32 %v2977, %v3025
          %v3034 = vadd.f32 %v2978, %v3026
          %v3035 = vld [vmem:[%s1890] sm:$0xff]
          %v3036 = vld [vmem:[%s1890 + $0x8] sm:$0xff]
          %v3037 = vld [vmem:[%s1890 + $0x10] sm:$0xff]
          %v3038 = vld [vmem:[%s1890 + $0x18] sm:$0xff]
          %v3039 = vld [vmem:[%s1890 + $0x20] sm:$0xff]
          %v3040 = vld [vmem:[%s1890 + $0x28] sm:$0xff]
          %v3041 = vld [vmem:[%s1890 + $0x30] sm:$0xff]
          %v3042 = vld [vmem:[%s1890 + $0x38] sm:$0xff]
          %3043 = vset.pattern.permute.xlu0 28
          %3044 = vperm.xlu0 %3043, %v1271
          %v3045 = vpop.permute.xlu0 %3044
          %3047 = vset.pattern.permute.xlu0 28
          %3048 = vperm.xlu0 %3047, %v1276
          %v3049 = vpop.permute.xlu0 %3048
          %3051 = vset.pattern.permute.xlu0 28
          %3052 = vperm.xlu0 %3051, %v1281
          %v3053 = vpop.permute.xlu0 %3052
          %3055 = vset.pattern.permute.xlu0 28
          %3056 = vperm.xlu0 %3055, %v1286
          %v3057 = vpop.permute.xlu0 %3056
          %3059 = vset.pattern.permute.xlu0 28
          %3060 = vperm.xlu0 %3059, %v1291
          %v3061 = vpop.permute.xlu0 %3060
          %3063 = vset.pattern.permute.xlu0 28
          %3064 = vperm.xlu0 %3063, %v1296
          %v3065 = vpop.permute.xlu0 %3064
          %3067 = vset.pattern.permute.xlu0 28
          %3068 = vperm.xlu0 %3067, %v1301
          %v3069 = vpop.permute.xlu0 %3068
          %3071 = vset.pattern.permute.xlu0 28
          %3072 = vperm.xlu0 %3071, %v1306
          %v3073 = vpop.permute.xlu0 %3072
          %v3075 = vmul.f32 %v3045, %v3035
          %v3076 = vmul.f32 %v3049, %v3036
          %v3077 = vmul.f32 %v3053, %v3037
          %v3078 = vmul.f32 %v3057, %v3038
          %v3079 = vmul.f32 %v3061, %v3039
          %v3080 = vmul.f32 %v3065, %v3040
          %v3081 = vmul.f32 %v3069, %v3041
          %v3082 = vmul.f32 %v3073, %v3042
          %v3083 = vadd.f32 %v3027, %v3075
          %v3084 = vadd.f32 %v3028, %v3076
          %v3085 = vadd.f32 %v3029, %v3077
          %v3086 = vadd.f32 %v3030, %v3078
          %v3087 = vadd.f32 %v3031, %v3079
          %v3088 = vadd.f32 %v3032, %v3080
          %v3089 = vadd.f32 %v3033, %v3081
          %v3090 = vadd.f32 %v3034, %v3082
          %s3091 = sadd.s32 %s1772, 1760
          %s3092 = scalar_lea.vmem [#allocation2], %s3091
          %v3093 = vld [vmem:[%s3092] sm:$0xff]
          %v3094 = vld [vmem:[%s3092 + $0x8] sm:$0xff]
          %v3095 = vld [vmem:[%s3092 + $0x10] sm:$0xff]
          %v3096 = vld [vmem:[%s3092 + $0x18] sm:$0xff]
          %v3097 = vld [vmem:[%s3092 + $0x20] sm:$0xff]
          %v3098 = vld [vmem:[%s3092 + $0x28] sm:$0xff]
          %v3099 = vld [vmem:[%s3092 + $0x30] sm:$0xff]
          %v3100 = vld [vmem:[%s3092 + $0x38] sm:$0xff]
          %3101 = vset.pattern.permute.xlu0 29
          %3102 = vperm.xlu0 %3101, %v1271
          %v3103 = vpop.permute.xlu0 %3102
          %3105 = vset.pattern.permute.xlu0 29
          %3106 = vperm.xlu0 %3105, %v1276
          %v3107 = vpop.permute.xlu0 %3106
          %3109 = vset.pattern.permute.xlu0 29
          %3110 = vperm.xlu0 %3109, %v1281
          %v3111 = vpop.permute.xlu0 %3110
          %3113 = vset.pattern.permute.xlu0 29
          %3114 = vperm.xlu0 %3113, %v1286
          %v3115 = vpop.permute.xlu0 %3114
          %3117 = vset.pattern.permute.xlu0 29
          %3118 = vperm.xlu0 %3117, %v1291
          %v3119 = vpop.permute.xlu0 %3118
          %3121 = vset.pattern.permute.xlu0 29
          %3122 = vperm.xlu0 %3121, %v1296
          %v3123 = vpop.permute.xlu0 %3122
          %3125 = vset.pattern.permute.xlu0 29
          %3126 = vperm.xlu0 %3125, %v1301
          %v3127 = vpop.permute.xlu0 %3126
          %3129 = vset.pattern.permute.xlu0 29
          %3130 = vperm.xlu0 %3129, %v1306
          %v3131 = vpop.permute.xlu0 %3130
          %v3133 = vmul.f32 %v3103, %v3093
          %v3134 = vmul.f32 %v3107, %v3094
          %v3135 = vmul.f32 %v3111, %v3095
          %v3136 = vmul.f32 %v3115, %v3096
          %v3137 = vmul.f32 %v3119, %v3097
          %v3138 = vmul.f32 %v3123, %v3098
          %v3139 = vmul.f32 %v3127, %v3099
          %v3140 = vmul.f32 %v3131, %v3100
          %v3141 = vadd.f32 %v3083, %v3133
          %v3142 = vadd.f32 %v3084, %v3134
          %v3143 = vadd.f32 %v3085, %v3135
          %v3144 = vadd.f32 %v3086, %v3136
          %v3145 = vadd.f32 %v3087, %v3137
          %v3146 = vadd.f32 %v3088, %v3138
          %v3147 = vadd.f32 %v3089, %v3139
          %v3148 = vadd.f32 %v3090, %v3140
          %s3149 = sadd.s32 %s1032, 5
          %s3150 = smul.u32 %s3149, 16
          %s3151 = sadd.s32 %s3150, 352
          %s3152 = scalar_lea.vmem [#allocation2], %s3151
          %v3153 = vld [vmem:[%s3152] sm:$0xff]
          %v3154 = vld [vmem:[%s3152 + $0x8] sm:$0xff]
          %v3155 = vld [vmem:[%s3152 + $0x10] sm:$0xff]
          %v3156 = vld [vmem:[%s3152 + $0x18] sm:$0xff]
          %v3157 = vld [vmem:[%s3152 + $0x20] sm:$0xff]
          %v3158 = vld [vmem:[%s3152 + $0x28] sm:$0xff]
          %v3159 = vld [vmem:[%s3152 + $0x30] sm:$0xff]
          %v3160 = vld [vmem:[%s3152 + $0x38] sm:$0xff]
          %3161 = vset.pattern.permute.xlu0 30
          %3162 = vperm.xlu0 %3161, %v1271
          %v3163 = vpop.permute.xlu0 %3162
          %3165 = vset.pattern.permute.xlu0 30
          %3166 = vperm.xlu0 %3165, %v1276
          %v3167 = vpop.permute.xlu0 %3166
          %3169 = vset.pattern.permute.xlu0 30
          %3170 = vperm.xlu0 %3169, %v1281
          %v3171 = vpop.permute.xlu0 %3170
          %3173 = vset.pattern.permute.xlu0 30
          %3174 = vperm.xlu0 %3173, %v1286
          %v3175 = vpop.permute.xlu0 %3174
          %3177 = vset.pattern.permute.xlu0 30
          %3178 = vperm.xlu0 %3177, %v1291
          %v3179 = vpop.permute.xlu0 %3178
          %3181 = vset.pattern.permute.xlu0 30
          %3182 = vperm.xlu0 %3181, %v1296
          %v3183 = vpop.permute.xlu0 %3182
          %3185 = vset.pattern.permute.xlu0 30
          %3186 = vperm.xlu0 %3185, %v1301
          %v3187 = vpop.permute.xlu0 %3186
          %3189 = vset.pattern.permute.xlu0 30
          %3190 = vperm.xlu0 %3189, %v1306
          %v3191 = vpop.permute.xlu0 %3190
          %v3193 = vmul.f32 %v3163, %v3153
          %v3194 = vmul.f32 %v3167, %v3154
          %v3195 = vmul.f32 %v3171, %v3155
          %v3196 = vmul.f32 %v3175, %v3156
          %v3197 = vmul.f32 %v3179, %v3157
          %v3198 = vmul.f32 %v3183, %v3158
          %v3199 = vmul.f32 %v3187, %v3159
          %v3200 = vmul.f32 %v3191, %v3160
          %v3201 = vadd.f32 %v3141, %v3193
          %v3202 = vadd.f32 %v3142, %v3194
          %v3203 = vadd.f32 %v3143, %v3195
          %v3204 = vadd.f32 %v3144, %v3196
          %v3205 = vadd.f32 %v3145, %v3197
          %v3206 = vadd.f32 %v3146, %v3198
          %v3207 = vadd.f32 %v3147, %v3199
          %v3208 = vadd.f32 %v3148, %v3200
          %s3209 = sadd.s32 %s3150, 704
          %s3210 = scalar_lea.vmem [#allocation2], %s3209
          %v3211 = vld [vmem:[%s3210] sm:$0xff]
          %v3212 = vld [vmem:[%s3210 + $0x8] sm:$0xff]
          %v3213 = vld [vmem:[%s3210 + $0x10] sm:$0xff]
          %v3214 = vld [vmem:[%s3210 + $0x18] sm:$0xff]
          %v3215 = vld [vmem:[%s3210 + $0x20] sm:$0xff]
          %v3216 = vld [vmem:[%s3210 + $0x28] sm:$0xff]
          %v3217 = vld [vmem:[%s3210 + $0x30] sm:$0xff]
          %v3218 = vld [vmem:[%s3210 + $0x38] sm:$0xff]
          %3219 = vset.pattern.permute.xlu0 31
          %3220 = vperm.xlu0 %3219, %v1271
          %v3221 = vpop.permute.xlu0 %3220
          %3223 = vset.pattern.permute.xlu0 31
          %3224 = vperm.xlu0 %3223, %v1276
          %v3225 = vpop.permute.xlu0 %3224
          %3227 = vset.pattern.permute.xlu0 31
          %3228 = vperm.xlu0 %3227, %v1281
          %v3229 = vpop.permute.xlu0 %3228
          %3231 = vset.pattern.permute.xlu0 31
          %3232 = vperm.xlu0 %3231, %v1286
          %v3233 = vpop.permute.xlu0 %3232
          %3235 = vset.pattern.permute.xlu0 31
          %3236 = vperm.xlu0 %3235, %v1291
          %v3237 = vpop.permute.xlu0 %3236
          %3239 = vset.pattern.permute.xlu0 31
          %3240 = vperm.xlu0 %3239, %v1296
          %v3241 = vpop.permute.xlu0 %3240
          %3243 = vset.pattern.permute.xlu0 31
          %3244 = vperm.xlu0 %3243, %v1301
          %v3245 = vpop.permute.xlu0 %3244
          %3247 = vset.pattern.permute.xlu0 31
          %3248 = vperm.xlu0 %3247, %v1306
          %v3249 = vpop.permute.xlu0 %3248
          %v3251 = vmul.f32 %v3221, %v3211
          %v3252 = vmul.f32 %v3225, %v3212
          %v3253 = vmul.f32 %v3229, %v3213
          %v3254 = vmul.f32 %v3233, %v3214
          %v3255 = vmul.f32 %v3237, %v3215
          %v3256 = vmul.f32 %v3241, %v3216
          %v3257 = vmul.f32 %v3245, %v3217
          %v3258 = vmul.f32 %v3249, %v3218
          %v3259 = vadd.f32 %v3201, %v3251
          %v3260 = vadd.f32 %v3202, %v3252
          %v3261 = vadd.f32 %v3203, %v3253
          %v3262 = vadd.f32 %v3204, %v3254
          %v3263 = vadd.f32 %v3205, %v3255
          %v3264 = vadd.f32 %v3206, %v3256
          %v3265 = vadd.f32 %v3207, %v3257
          %v3266 = vadd.f32 %v3208, %v3258
          %s3267 = sadd.s32 %s3150, 1056
          %s3268 = scalar_lea.vmem [#allocation2], %s3267
          %v3269 = vld [vmem:[%s3268] sm:$0xff]
          %v3270 = vld [vmem:[%s3268 + $0x8] sm:$0xff]
          %v3271 = vld [vmem:[%s3268 + $0x10] sm:$0xff]
          %v3272 = vld [vmem:[%s3268 + $0x18] sm:$0xff]
          %v3273 = vld [vmem:[%s3268 + $0x20] sm:$0xff]
          %v3274 = vld [vmem:[%s3268 + $0x28] sm:$0xff]
          %v3275 = vld [vmem:[%s3268 + $0x30] sm:$0xff]
          %v3276 = vld [vmem:[%s3268 + $0x38] sm:$0xff]
          %3277 = vset.pattern.permute.xlu0 32
          %3278 = vperm.xlu0 %3277, %v1271
          %v3279 = vpop.permute.xlu0 %3278
          %3281 = vset.pattern.permute.xlu0 32
          %3282 = vperm.xlu0 %3281, %v1276
          %v3283 = vpop.permute.xlu0 %3282
          %3285 = vset.pattern.permute.xlu0 32
          %3286 = vperm.xlu0 %3285, %v1281
          %v3287 = vpop.permute.xlu0 %3286
          %3289 = vset.pattern.permute.xlu0 32
          %3290 = vperm.xlu0 %3289, %v1286
          %v3291 = vpop.permute.xlu0 %3290
          %3293 = vset.pattern.permute.xlu0 32
          %3294 = vperm.xlu0 %3293, %v1291
          %v3295 = vpop.permute.xlu0 %3294
          %3297 = vset.pattern.permute.xlu0 32
          %3298 = vperm.xlu0 %3297, %v1296
          %v3299 = vpop.permute.xlu0 %3298
          %3301 = vset.pattern.permute.xlu0 32
          %3302 = vperm.xlu0 %3301, %v1301
          %v3303 = vpop.permute.xlu0 %3302
          %3305 = vset.pattern.permute.xlu0 32
          %3306 = vperm.xlu0 %3305, %v1306
          %v3307 = vpop.permute.xlu0 %3306
          %v3309 = vmul.f32 %v3279, %v3269
          %v3310 = vmul.f32 %v3283, %v3270
          %v3311 = vmul.f32 %v3287, %v3271
          %v3312 = vmul.f32 %v3291, %v3272
          %v3313 = vmul.f32 %v3295, %v3273
          %v3314 = vmul.f32 %v3299, %v3274
          %v3315 = vmul.f32 %v3303, %v3275
          %v3316 = vmul.f32 %v3307, %v3276
          %v3317 = vadd.f32 %v3259, %v3309
          %v3318 = vadd.f32 %v3260, %v3310
          %v3319 = vadd.f32 %v3261, %v3311
          %v3320 = vadd.f32 %v3262, %v3312
          %v3321 = vadd.f32 %v3263, %v3313
          %v3322 = vadd.f32 %v3264, %v3314
          %v3323 = vadd.f32 %v3265, %v3315
          %v3324 = vadd.f32 %v3266, %v3316
          %s3325 = sadd.s32 %s3150, 1408
          %s3326 = scalar_lea.vmem [#allocation2], %s3325
          %v3327 = vld [vmem:[%s3326] sm:$0xff]
          %v3328 = vld [vmem:[%s3326 + $0x8] sm:$0xff]
          %v3329 = vld [vmem:[%s3326 + $0x10] sm:$0xff]
          %v3330 = vld [vmem:[%s3326 + $0x18] sm:$0xff]
          %v3331 = vld [vmem:[%s3326 + $0x20] sm:$0xff]
          %v3332 = vld [vmem:[%s3326 + $0x28] sm:$0xff]
          %v3333 = vld [vmem:[%s3326 + $0x30] sm:$0xff]
          %v3334 = vld [vmem:[%s3326 + $0x38] sm:$0xff]
          %3335 = vset.pattern.permute.xlu0 33
          %3336 = vperm.xlu0 %3335, %v1271
          %v3337 = vpop.permute.xlu0 %3336
          %3339 = vset.pattern.permute.xlu0 33
          %3340 = vperm.xlu0 %3339, %v1276
          %v3341 = vpop.permute.xlu0 %3340
          %3343 = vset.pattern.permute.xlu0 33
          %3344 = vperm.xlu0 %3343, %v1281
          %v3345 = vpop.permute.xlu0 %3344
          %3347 = vset.pattern.permute.xlu0 33
          %3348 = vperm.xlu0 %3347, %v1286
          %v3349 = vpop.permute.xlu0 %3348
          %3351 = vset.pattern.permute.xlu0 33
          %3352 = vperm.xlu0 %3351, %v1291
          %v3353 = vpop.permute.xlu0 %3352
          %3355 = vset.pattern.permute.xlu0 33
          %3356 = vperm.xlu0 %3355, %v1296
          %v3357 = vpop.permute.xlu0 %3356
          %3359 = vset.pattern.permute.xlu0 33
          %3360 = vperm.xlu0 %3359, %v1301
          %v3361 = vpop.permute.xlu0 %3360
          %3363 = vset.pattern.permute.xlu0 33
          %3364 = vperm.xlu0 %3363, %v1306
          %v3365 = vpop.permute.xlu0 %3364
          %v3367 = vmul.f32 %v3337, %v3327
          %v3368 = vmul.f32 %v3341, %v3328
          %v3369 = vmul.f32 %v3345, %v3329
          %v3370 = vmul.f32 %v3349, %v3330
          %v3371 = vmul.f32 %v3353, %v3331
          %v3372 = vmul.f32 %v3357, %v3332
          %v3373 = vmul.f32 %v3361, %v3333
          %v3374 = vmul.f32 %v3365, %v3334
          %v3375 = vadd.f32 %v3317, %v3367
          %v3376 = vadd.f32 %v3318, %v3368
          %v3377 = vadd.f32 %v3319, %v3369
          %v3378 = vadd.f32 %v3320, %v3370
          %v3379 = vadd.f32 %v3321, %v3371
          %v3380 = vadd.f32 %v3322, %v3372
          %v3381 = vadd.f32 %v3323, %v3373
          %v3382 = vadd.f32 %v3324, %v3374
          %s3383 = sadd.s32 %s3150, 1760
          %s3384 = scalar_lea.vmem [#allocation2], %s3383
          %v3385 = vld [vmem:[%s3384] sm:$0xff]
          %v3386 = vld [vmem:[%s3384 + $0x8] sm:$0xff]
          %v3387 = vld [vmem:[%s3384 + $0x10] sm:$0xff]
          %v3388 = vld [vmem:[%s3384 + $0x18] sm:$0xff]
          %v3389 = vld [vmem:[%s3384 + $0x20] sm:$0xff]
          %v3390 = vld [vmem:[%s3384 + $0x28] sm:$0xff]
          %v3391 = vld [vmem:[%s3384 + $0x30] sm:$0xff]
          %v3392 = vld [vmem:[%s3384 + $0x38] sm:$0xff]
          %3393 = vset.pattern.permute.xlu0 34
          %3394 = vperm.xlu0 %3393, %v1271
          %v3395 = vpop.permute.xlu0 %3394
          %3397 = vset.pattern.permute.xlu0 34
          %3398 = vperm.xlu0 %3397, %v1276
          %v3399 = vpop.permute.xlu0 %3398
          %3401 = vset.pattern.permute.xlu0 34
          %3402 = vperm.xlu0 %3401, %v1281
          %v3403 = vpop.permute.xlu0 %3402
          %3405 = vset.pattern.permute.xlu0 34
          %3406 = vperm.xlu0 %3405, %v1286
          %v3407 = vpop.permute.xlu0 %3406
          %3409 = vset.pattern.permute.xlu0 34
          %3410 = vperm.xlu0 %3409, %v1291
          %v3411 = vpop.permute.xlu0 %3410
          %3413 = vset.pattern.permute.xlu0 34
          %3414 = vperm.xlu0 %3413, %v1296
          %v3415 = vpop.permute.xlu0 %3414
          %3417 = vset.pattern.permute.xlu0 34
          %3418 = vperm.xlu0 %3417, %v1301
          %v3419 = vpop.permute.xlu0 %3418
          %3421 = vset.pattern.permute.xlu0 34
          %3422 = vperm.xlu0 %3421, %v1306
          %v3423 = vpop.permute.xlu0 %3422
          %v3425 = vmul.f32 %v3395, %v3385
          %v3426 = vmul.f32 %v3399, %v3386
          %v3427 = vmul.f32 %v3403, %v3387
          %v3428 = vmul.f32 %v3407, %v3388
          %v3429 = vmul.f32 %v3411, %v3389
          %v3430 = vmul.f32 %v3415, %v3390
          %v3431 = vmul.f32 %v3419, %v3391
          %v3432 = vmul.f32 %v3423, %v3392
          %v3433 = vadd.f32 %v3375, %v3425
          %v3434 = vadd.f32 %v3376, %v3426
          %v3435 = vadd.f32 %v3377, %v3427
          %v3436 = vadd.f32 %v3378, %v3428
          %v3437 = vadd.f32 %v3379, %v3429
          %v3438 = vadd.f32 %v3380, %v3430
          %v3439 = vadd.f32 %v3381, %v3431
          %v3440 = vadd.f32 %v3382, %v3432
          %v3441 = vlaneseq
          %v3442 = vshrl.u32 %v3441, 7
          %v3443 = vsub.s32 2, %v3442
          %v3444 = vrot.slane %v1024, %v3443
          %v3445 = vmul.f32 %v3433, %v3444
          %v3446 = vmul.f32 %v3434, %v3444
          %v3447 = vmul.f32 %v3435, %v3444
          %v3448 = vmul.f32 %v3436, %v3444
          %v3449 = vmul.f32 %v3437, %v3444
          %v3450 = vmul.f32 %v3438, %v3444
          %v3451 = vmul.f32 %v3439, %v3444
          %v3452 = vmul.f32 %v3440, %v3444
          %v3453 = vlaneseq
          %v3454 = vshrl.u32 %v3453, 7
          %v3455 = vsub.s32 2, %v3454
          %v3456 = vrot.slane %v1025, %v3455
          %v3457 = vadd.f32 %v3445, %v3456
          %v3458 = vadd.f32 %v3446, %v3456
          %v3459 = vadd.f32 %v3447, %v3456
          %v3460 = vadd.f32 %v3448, %v3456
          %v3461 = vadd.f32 %v3449, %v3456
          %v3462 = vadd.f32 %v3450, %v3456
          %v3463 = vadd.f32 %v3451, %v3456
          %v3464 = vadd.f32 %v3452, %v3456
          %v3465 = vmax.f32 %v3457, 0.0
          %v3466 = vmax.f32 %v3458, 0.0
          %v3467 = vmax.f32 %v3459, 0.0
          %v3468 = vmax.f32 %v3460, 0.0
          %v3469 = vmax.f32 %v3461, 0.0
          %v3470 = vmax.f32 %v3462, 0.0
          %v3471 = vmax.f32 %v3463, 0.0
          %v3472 = vmax.f32 %v3464, 0.0
          %s3473 = sadd.s32 %s1397, 512
          %s3474 = scalar_lea.vmem [#allocation3], %s3473
          %3475 = vst [vmem:[%s3474] sm:$0xff] %v3465
          %3476 = vst [vmem:[%s3474 + $0x8] sm:$0xff] %v3466
          %3477 = vst [vmem:[%s3474 + $0x10] sm:$0xff] %v3467
          %3478 = vst [vmem:[%s3474 + $0x18] sm:$0xff] %v3468
          %3479 = vst [vmem:[%s3474 + $0x20] sm:$0xff] %v3469
          %3480 = vst [vmem:[%s3474 + $0x28] sm:$0xff] %v3470
          %3481 = vst [vmem:[%s3474 + $0x30] sm:$0xff] %v3471
          %3482 = vst [vmem:[%s3474 + $0x38] sm:$0xff] %v3472
          %v3483 = vld [vmem:[#allocation4] sm:$0x1]
          %v3484 = vadd.f32 %v3465, %v3466
          %v3485 = vadd.f32 %v3484, %v3467
          %v3486 = vadd.f32 %v3485, %v3468
          %v3487 = vadd.f32 %v3486, %v3469
          %v3488 = vadd.f32 %v3487, %v3470
          %v3489 = vadd.f32 %v3488, %v3471
          %v3490 = vadd.f32 %v3489, %v3472
          %v3491 = vrot.slane %v3490, 4
          %v3492 = vadd.f32 %v3490, %v3491
          %v3493 = vrot.slane %v3492, 2
          %v3494 = vadd.f32 %v3492, %v3493
          %v3495 = vrot.slane %v3494, 1
          %v3496 = vadd.f32 %v3494, %v3495
          %v3497 = vadd.f32 %v3483, %v3496
          %3498 = vst [vmem:[#allocation4] sm:$0x1] %v3497
          %s3499 = scalar_lea.vmem [#allocation2], %s1397
          %v3500 = vld [vmem:[%s3499] sm:$0xff]
          %v3501 = vld [vmem:[%s3499 + $0x8] sm:$0xff]
          %v3502 = vld [vmem:[%s3499 + $0x10] sm:$0xff]
          %v3503 = vld [vmem:[%s3499 + $0x18] sm:$0xff]
          %v3504 = vld [vmem:[%s3499 + $0x20] sm:$0xff]
          %v3505 = vld [vmem:[%s3499 + $0x28] sm:$0xff]
          %v3506 = vld [vmem:[%s3499 + $0x30] sm:$0xff]
          %v3507 = vld [vmem:[%s3499 + $0x38] sm:$0xff]
          %3508 = vset.pattern.permute.xlu0 35
          %3509 = vperm.xlu0 %3508, %v1271
          %v3510 = vpop.permute.xlu0 %3509
          %3512 = vset.pattern.permute.xlu0 35
          %3513 = vperm.xlu0 %3512, %v1276
          %v3514 = vpop.permute.xlu0 %3513
          %3516 = vset.pattern.permute.xlu0 35
          %3517 = vperm.xlu0 %3516, %v1281
          %v3518 = vpop.permute.xlu0 %3517
          %3520 = vset.pattern.permute.xlu0 35
          %3521 = vperm.xlu0 %3520, %v1286
          %v3522 = vpop.permute.xlu0 %3521
          %3524 = vset.pattern.permute.xlu0 35
          %3525 = vperm.xlu0 %3524, %v1291
          %v3526 = vpop.permute.xlu0 %3525
          %3528 = vset.pattern.permute.xlu0 35
          %3529 = vperm.xlu0 %3528, %v1296
          %v3530 = vpop.permute.xlu0 %3529
          %3532 = vset.pattern.permute.xlu0 35
          %3533 = vperm.xlu0 %3532, %v1301
          %v3534 = vpop.permute.xlu0 %3533
          %3536 = vset.pattern.permute.xlu0 35
          %3537 = vperm.xlu0 %3536, %v1306
          %v3538 = vpop.permute.xlu0 %3537
          %v3540 = vmul.f32 %v3510, %v3500
          %v3541 = vmul.f32 %v3514, %v3501
          %v3542 = vmul.f32 %v3518, %v3502
          %v3543 = vmul.f32 %v3522, %v3503
          %v3544 = vmul.f32 %v3526, %v3504
          %v3545 = vmul.f32 %v3530, %v3505
          %v3546 = vmul.f32 %v3534, %v3506
          %v3547 = vmul.f32 %v3538, %v3507
          %v3548 = vadd.f32 %v3540, 0.0
          %v3549 = vadd.f32 %v3541, 0.0
          %v3550 = vadd.f32 %v3542, 0.0
          %v3551 = vadd.f32 %v3543, 0.0
          %v3552 = vadd.f32 %v3544, 0.0
          %v3553 = vadd.f32 %v3545, 0.0
          %v3554 = vadd.f32 %v3546, 0.0
          %v3555 = vadd.f32 %v3547, 0.0
          %s3556 = sadd.s32 %s1397, 352
          %s3557 = scalar_lea.vmem [#allocation2], %s3556
          %v3558 = vld [vmem:[%s3557] sm:$0xff]
          %v3559 = vld [vmem:[%s3557 + $0x8] sm:$0xff]
          %v3560 = vld [vmem:[%s3557 + $0x10] sm:$0xff]
          %v3561 = vld [vmem:[%s3557 + $0x18] sm:$0xff]
          %v3562 = vld [vmem:[%s3557 + $0x20] sm:$0xff]
          %v3563 = vld [vmem:[%s3557 + $0x28] sm:$0xff]
          %v3564 = vld [vmem:[%s3557 + $0x30] sm:$0xff]
          %v3565 = vld [vmem:[%s3557 + $0x38] sm:$0xff]
          %3566 = vset.pattern.permute.xlu0 36
          %3567 = vperm.xlu0 %3566, %v1271
          %v3568 = vpop.permute.xlu0 %3567
          %3570 = vset.pattern.permute.xlu0 36
          %3571 = vperm.xlu0 %3570, %v1276
          %v3572 = vpop.permute.xlu0 %3571
          %3574 = vset.pattern.permute.xlu0 36
          %3575 = vperm.xlu0 %3574, %v1281
          %v3576 = vpop.permute.xlu0 %3575
          %3578 = vset.pattern.permute.xlu0 36
          %3579 = vperm.xlu0 %3578, %v1286
          %v3580 = vpop.permute.xlu0 %3579
          %3582 = vset.pattern.permute.xlu0 36
          %3583 = vperm.xlu0 %3582, %v1291
          %v3584 = vpop.permute.xlu0 %3583
          %3586 = vset.pattern.permute.xlu0 36
          %3587 = vperm.xlu0 %3586, %v1296
          %v3588 = vpop.permute.xlu0 %3587
          %3590 = vset.pattern.permute.xlu0 36
          %3591 = vperm.xlu0 %3590, %v1301
          %v3592 = vpop.permute.xlu0 %3591
          %3594 = vset.pattern.permute.xlu0 36
          %3595 = vperm.xlu0 %3594, %v1306
          %v3596 = vpop.permute.xlu0 %3595
          %v3598 = vmul.f32 %v3568, %v3558
          %v3599 = vmul.f32 %v3572, %v3559
          %v3600 = vmul.f32 %v3576, %v3560
          %v3601 = vmul.f32 %v3580, %v3561
          %v3602 = vmul.f32 %v3584, %v3562
          %v3603 = vmul.f32 %v3588, %v3563
          %v3604 = vmul.f32 %v3592, %v3564
          %v3605 = vmul.f32 %v3596, %v3565
          %v3606 = vadd.f32 %v3548, %v3598
          %v3607 = vadd.f32 %v3549, %v3599
          %v3608 = vadd.f32 %v3550, %v3600
          %v3609 = vadd.f32 %v3551, %v3601
          %v3610 = vadd.f32 %v3552, %v3602
          %v3611 = vadd.f32 %v3553, %v3603
          %v3612 = vadd.f32 %v3554, %v3604
          %v3613 = vadd.f32 %v3555, %v3605
          %s3614 = sadd.s32 %s1397, 704
          %s3615 = scalar_lea.vmem [#allocation2], %s3614
          %v3616 = vld [vmem:[%s3615] sm:$0xff]
          %v3617 = vld [vmem:[%s3615 + $0x8] sm:$0xff]
          %v3618 = vld [vmem:[%s3615 + $0x10] sm:$0xff]
          %v3619 = vld [vmem:[%s3615 + $0x18] sm:$0xff]
          %v3620 = vld [vmem:[%s3615 + $0x20] sm:$0xff]
          %v3621 = vld [vmem:[%s3615 + $0x28] sm:$0xff]
          %v3622 = vld [vmem:[%s3615 + $0x30] sm:$0xff]
          %v3623 = vld [vmem:[%s3615 + $0x38] sm:$0xff]
          %3624 = vset.pattern.permute.xlu0 37
          %3625 = vperm.xlu0 %3624, %v1271
          %v3626 = vpop.permute.xlu0 %3625
          %3628 = vset.pattern.permute.xlu0 37
          %3629 = vperm.xlu0 %3628, %v1276
          %v3630 = vpop.permute.xlu0 %3629
          %3632 = vset.pattern.permute.xlu0 37
          %3633 = vperm.xlu0 %3632, %v1281
          %v3634 = vpop.permute.xlu0 %3633
          %3636 = vset.pattern.permute.xlu0 37
          %3637 = vperm.xlu0 %3636, %v1286
          %v3638 = vpop.permute.xlu0 %3637
          %3640 = vset.pattern.permute.xlu0 37
          %3641 = vperm.xlu0 %3640, %v1291
          %v3642 = vpop.permute.xlu0 %3641
          %3644 = vset.pattern.permute.xlu0 37
          %3645 = vperm.xlu0 %3644, %v1296
          %v3646 = vpop.permute.xlu0 %3645
          %3648 = vset.pattern.permute.xlu0 37
          %3649 = vperm.xlu0 %3648, %v1301
          %v3650 = vpop.permute.xlu0 %3649
          %3652 = vset.pattern.permute.xlu0 37
          %3653 = vperm.xlu0 %3652, %v1306
          %v3654 = vpop.permute.xlu0 %3653
          %v3656 = vmul.f32 %v3626, %v3616
          %v3657 = vmul.f32 %v3630, %v3617
          %v3658 = vmul.f32 %v3634, %v3618
          %v3659 = vmul.f32 %v3638, %v3619
          %v3660 = vmul.f32 %v3642, %v3620
          %v3661 = vmul.f32 %v3646, %v3621
          %v3662 = vmul.f32 %v3650, %v3622
          %v3663 = vmul.f32 %v3654, %v3623
          %v3664 = vadd.f32 %v3606, %v3656
          %v3665 = vadd.f32 %v3607, %v3657
          %v3666 = vadd.f32 %v3608, %v3658
          %v3667 = vadd.f32 %v3609, %v3659
          %v3668 = vadd.f32 %v3610, %v3660
          %v3669 = vadd.f32 %v3611, %v3661
          %v3670 = vadd.f32 %v3612, %v3662
          %v3671 = vadd.f32 %v3613, %v3663
          %s3672 = sadd.s32 %s1397, 1056
          %s3673 = scalar_lea.vmem [#allocation2], %s3672
          %v3674 = vld [vmem:[%s3673] sm:$0xff]
          %v3675 = vld [vmem:[%s3673 + $0x8] sm:$0xff]
          %v3676 = vld [vmem:[%s3673 + $0x10] sm:$0xff]
          %v3677 = vld [vmem:[%s3673 + $0x18] sm:$0xff]
          %v3678 = vld [vmem:[%s3673 + $0x20] sm:$0xff]
          %v3679 = vld [vmem:[%s3673 + $0x28] sm:$0xff]
          %v3680 = vld [vmem:[%s3673 + $0x30] sm:$0xff]
          %v3681 = vld [vmem:[%s3673 + $0x38] sm:$0xff]
          %3682 = vset.pattern.permute.xlu0 38
          %3683 = vperm.xlu0 %3682, %v1271
          %v3684 = vpop.permute.xlu0 %3683
          %3686 = vset.pattern.permute.xlu0 38
          %3687 = vperm.xlu0 %3686, %v1276
          %v3688 = vpop.permute.xlu0 %3687
          %3690 = vset.pattern.permute.xlu0 38
          %3691 = vperm.xlu0 %3690, %v1281
          %v3692 = vpop.permute.xlu0 %3691
          %3694 = vset.pattern.permute.xlu0 38
          %3695 = vperm.xlu0 %3694, %v1286
          %v3696 = vpop.permute.xlu0 %3695
          %3698 = vset.pattern.permute.xlu0 38
          %3699 = vperm.xlu0 %3698, %v1291
          %v3700 = vpop.permute.xlu0 %3699
          %3702 = vset.pattern.permute.xlu0 38
          %3703 = vperm.xlu0 %3702, %v1296
          %v3704 = vpop.permute.xlu0 %3703
          %3706 = vset.pattern.permute.xlu0 38
          %3707 = vperm.xlu0 %3706, %v1301
          %v3708 = vpop.permute.xlu0 %3707
          %3710 = vset.pattern.permute.xlu0 38
          %3711 = vperm.xlu0 %3710, %v1306
          %v3712 = vpop.permute.xlu0 %3711
          %v3714 = vmul.f32 %v3684, %v3674
          %v3715 = vmul.f32 %v3688, %v3675
          %v3716 = vmul.f32 %v3692, %v3676
          %v3717 = vmul.f32 %v3696, %v3677
          %v3718 = vmul.f32 %v3700, %v3678
          %v3719 = vmul.f32 %v3704, %v3679
          %v3720 = vmul.f32 %v3708, %v3680
          %v3721 = vmul.f32 %v3712, %v3681
          %v3722 = vadd.f32 %v3664, %v3714
          %v3723 = vadd.f32 %v3665, %v3715
          %v3724 = vadd.f32 %v3666, %v3716
          %v3725 = vadd.f32 %v3667, %v3717
          %v3726 = vadd.f32 %v3668, %v3718
          %v3727 = vadd.f32 %v3669, %v3719
          %v3728 = vadd.f32 %v3670, %v3720
          %v3729 = vadd.f32 %v3671, %v3721
          %s3730 = sadd.s32 %s1397, 1408
          %s3731 = scalar_lea.vmem [#allocation2], %s3730
          %v3732 = vld [vmem:[%s3731] sm:$0xff]
          %v3733 = vld [vmem:[%s3731 + $0x8] sm:$0xff]
          %v3734 = vld [vmem:[%s3731 + $0x10] sm:$0xff]
          %v3735 = vld [vmem:[%s3731 + $0x18] sm:$0xff]
          %v3736 = vld [vmem:[%s3731 + $0x20] sm:$0xff]
          %v3737 = vld [vmem:[%s3731 + $0x28] sm:$0xff]
          %v3738 = vld [vmem:[%s3731 + $0x30] sm:$0xff]
          %v3739 = vld [vmem:[%s3731 + $0x38] sm:$0xff]
          %3740 = vset.pattern.permute.xlu0 39
          %3741 = vperm.xlu0 %3740, %v1271
          %v3742 = vpop.permute.xlu0 %3741
          %3744 = vset.pattern.permute.xlu0 39
          %3745 = vperm.xlu0 %3744, %v1276
          %v3746 = vpop.permute.xlu0 %3745
          %3748 = vset.pattern.permute.xlu0 39
          %3749 = vperm.xlu0 %3748, %v1281
          %v3750 = vpop.permute.xlu0 %3749
          %3752 = vset.pattern.permute.xlu0 39
          %3753 = vperm.xlu0 %3752, %v1286
          %v3754 = vpop.permute.xlu0 %3753
          %3756 = vset.pattern.permute.xlu0 39
          %3757 = vperm.xlu0 %3756, %v1291
          %v3758 = vpop.permute.xlu0 %3757
          %3760 = vset.pattern.permute.xlu0 39
          %3761 = vperm.xlu0 %3760, %v1296
          %v3762 = vpop.permute.xlu0 %3761
          %3764 = vset.pattern.permute.xlu0 39
          %3765 = vperm.xlu0 %3764, %v1301
          %v3766 = vpop.permute.xlu0 %3765
          %3768 = vset.pattern.permute.xlu0 39
          %3769 = vperm.xlu0 %3768, %v1306
          %v3770 = vpop.permute.xlu0 %3769
          %v3772 = vmul.f32 %v3742, %v3732
          %v3773 = vmul.f32 %v3746, %v3733
          %v3774 = vmul.f32 %v3750, %v3734
          %v3775 = vmul.f32 %v3754, %v3735
          %v3776 = vmul.f32 %v3758, %v3736
          %v3777 = vmul.f32 %v3762, %v3737
          %v3778 = vmul.f32 %v3766, %v3738
          %v3779 = vmul.f32 %v3770, %v3739
          %v3780 = vadd.f32 %v3722, %v3772
          %v3781 = vadd.f32 %v3723, %v3773
          %v3782 = vadd.f32 %v3724, %v3774
          %v3783 = vadd.f32 %v3725, %v3775
          %v3784 = vadd.f32 %v3726, %v3776
          %v3785 = vadd.f32 %v3727, %v3777
          %v3786 = vadd.f32 %v3728, %v3778
          %v3787 = vadd.f32 %v3729, %v3779
          %s3788 = sadd.s32 %s1397, 1760
          %s3789 = scalar_lea.vmem [#allocation2], %s3788
          %v3790 = vld [vmem:[%s3789] sm:$0xff]
          %v3791 = vld [vmem:[%s3789 + $0x8] sm:$0xff]
          %v3792 = vld [vmem:[%s3789 + $0x10] sm:$0xff]
          %v3793 = vld [vmem:[%s3789 + $0x18] sm:$0xff]
          %v3794 = vld [vmem:[%s3789 + $0x20] sm:$0xff]
          %v3795 = vld [vmem:[%s3789 + $0x28] sm:$0xff]
          %v3796 = vld [vmem:[%s3789 + $0x30] sm:$0xff]
          %v3797 = vld [vmem:[%s3789 + $0x38] sm:$0xff]
          %3798 = vset.pattern.permute.xlu0 40
          %3799 = vperm.xlu0 %3798, %v1271
          %v3800 = vpop.permute.xlu0 %3799
          %3802 = vset.pattern.permute.xlu0 40
          %3803 = vperm.xlu0 %3802, %v1276
          %v3804 = vpop.permute.xlu0 %3803
          %3806 = vset.pattern.permute.xlu0 40
          %3807 = vperm.xlu0 %3806, %v1281
          %v3808 = vpop.permute.xlu0 %3807
          %3810 = vset.pattern.permute.xlu0 40
          %3811 = vperm.xlu0 %3810, %v1286
          %v3812 = vpop.permute.xlu0 %3811
          %3814 = vset.pattern.permute.xlu0 40
          %3815 = vperm.xlu0 %3814, %v1291
          %v3816 = vpop.permute.xlu0 %3815
          %3818 = vset.pattern.permute.xlu0 40
          %3819 = vperm.xlu0 %3818, %v1296
          %v3820 = vpop.permute.xlu0 %3819
          %3822 = vset.pattern.permute.xlu0 40
          %3823 = vperm.xlu0 %3822, %v1301
          %v3824 = vpop.permute.xlu0 %3823
          %3826 = vset.pattern.permute.xlu0 40
          %3827 = vperm.xlu0 %3826, %v1306
          %v3828 = vpop.permute.xlu0 %3827
          %v3830 = vmul.f32 %v3800, %v3790
          %v3831 = vmul.f32 %v3804, %v3791
          %v3832 = vmul.f32 %v3808, %v3792
          %v3833 = vmul.f32 %v3812, %v3793
          %v3834 = vmul.f32 %v3816, %v3794
          %v3835 = vmul.f32 %v3820, %v3795
          %v3836 = vmul.f32 %v3824, %v3796
          %v3837 = vmul.f32 %v3828, %v3797
          %v3838 = vadd.f32 %v3780, %v3830
          %v3839 = vadd.f32 %v3781, %v3831
          %v3840 = vadd.f32 %v3782, %v3832
          %v3841 = vadd.f32 %v3783, %v3833
          %v3842 = vadd.f32 %v3784, %v3834
          %v3843 = vadd.f32 %v3785, %v3835
          %v3844 = vadd.f32 %v3786, %v3836
          %v3845 = vadd.f32 %v3787, %v3837
          %s3846 = sadd.s32 %s1397, 2112
          %s3847 = scalar_lea.vmem [#allocation2], %s3846
          %v3848 = vld [vmem:[%s3847] sm:$0xff]
          %v3849 = vld [vmem:[%s3847 + $0x8] sm:$0xff]
          %v3850 = vld [vmem:[%s3847 + $0x10] sm:$0xff]
          %v3851 = vld [vmem:[%s3847 + $0x18] sm:$0xff]
          %v3852 = vld [vmem:[%s3847 + $0x20] sm:$0xff]
          %v3853 = vld [vmem:[%s3847 + $0x28] sm:$0xff]
          %v3854 = vld [vmem:[%s3847 + $0x30] sm:$0xff]
          %v3855 = vld [vmem:[%s3847 + $0x38] sm:$0xff]
          %3856 = vset.pattern.permute.xlu0 41
          %3857 = vperm.xlu0 %3856, %v1271
          %v3858 = vpop.permute.xlu0 %3857
          %3860 = vset.pattern.permute.xlu0 41
          %3861 = vperm.xlu0 %3860, %v1276
          %v3862 = vpop.permute.xlu0 %3861
          %3864 = vset.pattern.permute.xlu0 41
          %3865 = vperm.xlu0 %3864, %v1281
          %v3866 = vpop.permute.xlu0 %3865
          %3868 = vset.pattern.permute.xlu0 41
          %3869 = vperm.xlu0 %3868, %v1286
          %v3870 = vpop.permute.xlu0 %3869
          %3872 = vset.pattern.permute.xlu0 41
          %3873 = vperm.xlu0 %3872, %v1291
          %v3874 = vpop.permute.xlu0 %3873
          %3876 = vset.pattern.permute.xlu0 41
          %3877 = vperm.xlu0 %3876, %v1296
          %v3878 = vpop.permute.xlu0 %3877
          %3880 = vset.pattern.permute.xlu0 41
          %3881 = vperm.xlu0 %3880, %v1301
          %v3882 = vpop.permute.xlu0 %3881
          %3884 = vset.pattern.permute.xlu0 41
          %3885 = vperm.xlu0 %3884, %v1306
          %v3886 = vpop.permute.xlu0 %3885
          %v3888 = vmul.f32 %v3858, %v3848
          %v3889 = vmul.f32 %v3862, %v3849
          %v3890 = vmul.f32 %v3866, %v3850
          %v3891 = vmul.f32 %v3870, %v3851
          %v3892 = vmul.f32 %v3874, %v3852
          %v3893 = vmul.f32 %v3878, %v3853
          %v3894 = vmul.f32 %v3882, %v3854
          %v3895 = vmul.f32 %v3886, %v3855
          %v3896 = vadd.f32 %v3838, %v3888
          %v3897 = vadd.f32 %v3839, %v3889
          %v3898 = vadd.f32 %v3840, %v3890
          %v3899 = vadd.f32 %v3841, %v3891
          %v3900 = vadd.f32 %v3842, %v3892
          %v3901 = vadd.f32 %v3843, %v3893
          %v3902 = vadd.f32 %v3844, %v3894
          %v3903 = vadd.f32 %v3845, %v3895
          %s3904 = scalar_lea.vmem [#allocation2], %s2006
          %v3905 = vld [vmem:[%s3904] sm:$0xff]
          %v3906 = vld [vmem:[%s3904 + $0x8] sm:$0xff]
          %v3907 = vld [vmem:[%s3904 + $0x10] sm:$0xff]
          %v3908 = vld [vmem:[%s3904 + $0x18] sm:$0xff]
          %v3909 = vld [vmem:[%s3904 + $0x20] sm:$0xff]
          %v3910 = vld [vmem:[%s3904 + $0x28] sm:$0xff]
          %v3911 = vld [vmem:[%s3904 + $0x30] sm:$0xff]
          %v3912 = vld [vmem:[%s3904 + $0x38] sm:$0xff]
          %3913 = vset.pattern.permute.xlu0 42
          %3914 = vperm.xlu0 %3913, %v1271
          %v3915 = vpop.permute.xlu0 %3914
          %3917 = vset.pattern.permute.xlu0 42
          %3918 = vperm.xlu0 %3917, %v1276
          %v3919 = vpop.permute.xlu0 %3918
          %3921 = vset.pattern.permute.xlu0 42
          %3922 = vperm.xlu0 %3921, %v1281
          %v3923 = vpop.permute.xlu0 %3922
          %3925 = vset.pattern.permute.xlu0 42
          %3926 = vperm.xlu0 %3925, %v1286
          %v3927 = vpop.permute.xlu0 %3926
          %3929 = vset.pattern.permute.xlu0 42
          %3930 = vperm.xlu0 %3929, %v1291
          %v3931 = vpop.permute.xlu0 %3930
          %3933 = vset.pattern.permute.xlu0 42
          %3934 = vperm.xlu0 %3933, %v1296
          %v3935 = vpop.permute.xlu0 %3934
          %3937 = vset.pattern.permute.xlu0 42
          %3938 = vperm.xlu0 %3937, %v1301
          %v3939 = vpop.permute.xlu0 %3938
          %3941 = vset.pattern.permute.xlu0 42
          %3942 = vperm.xlu0 %3941, %v1306
          %v3943 = vpop.permute.xlu0 %3942
          %v3945 = vmul.f32 %v3915, %v3905
          %v3946 = vmul.f32 %v3919, %v3906
          %v3947 = vmul.f32 %v3923, %v3907
          %v3948 = vmul.f32 %v3927, %v3908
          %v3949 = vmul.f32 %v3931, %v3909
          %v3950 = vmul.f32 %v3935, %v3910
          %v3951 = vmul.f32 %v3939, %v3911
          %v3952 = vmul.f32 %v3943, %v3912
          %v3953 = vadd.f32 %v3896, %v3945
          %v3954 = vadd.f32 %v3897, %v3946
          %v3955 = vadd.f32 %v3898, %v3947
          %v3956 = vadd.f32 %v3899, %v3948
          %v3957 = vadd.f32 %v3900, %v3949
          %v3958 = vadd.f32 %v3901, %v3950
          %v3959 = vadd.f32 %v3902, %v3951
          %v3960 = vadd.f32 %v3903, %v3952
          %v3961 = vld [vmem:[%s2008] sm:$0xff]
          %v3962 = vld [vmem:[%s2008 + $0x8] sm:$0xff]
          %v3963 = vld [vmem:[%s2008 + $0x10] sm:$0xff]
          %v3964 = vld [vmem:[%s2008 + $0x18] sm:$0xff]
          %v3965 = vld [vmem:[%s2008 + $0x20] sm:$0xff]
          %v3966 = vld [vmem:[%s2008 + $0x28] sm:$0xff]
          %v3967 = vld [vmem:[%s2008 + $0x30] sm:$0xff]
          %v3968 = vld [vmem:[%s2008 + $0x38] sm:$0xff]
          %3969 = vset.pattern.permute.xlu0 43
          %3970 = vperm.xlu0 %3969, %v1271
          %v3971 = vpop.permute.xlu0 %3970
          %3973 = vset.pattern.permute.xlu0 43
          %3974 = vperm.xlu0 %3973, %v1276
          %v3975 = vpop.permute.xlu0 %3974
          %3977 = vset.pattern.permute.xlu0 43
          %3978 = vperm.xlu0 %3977, %v1281
          %v3979 = vpop.permute.xlu0 %3978
          %3981 = vset.pattern.permute.xlu0 43
          %3982 = vperm.xlu0 %3981, %v1286
          %v3983 = vpop.permute.xlu0 %3982
          %3985 = vset.pattern.permute.xlu0 43
          %3986 = vperm.xlu0 %3985, %v1291
          %v3987 = vpop.permute.xlu0 %3986
          %3989 = vset.pattern.permute.xlu0 43
          %3990 = vperm.xlu0 %3989, %v1296
          %v3991 = vpop.permute.xlu0 %3990
          %3993 = vset.pattern.permute.xlu0 43
          %3994 = vperm.xlu0 %3993, %v1301
          %v3995 = vpop.permute.xlu0 %3994
          %3997 = vset.pattern.permute.xlu0 43
          %3998 = vperm.xlu0 %3997, %v1306
          %v3999 = vpop.permute.xlu0 %3998
          %v4001 = vmul.f32 %v3971, %v3961
          %v4002 = vmul.f32 %v3975, %v3962
          %v4003 = vmul.f32 %v3979, %v3963
          %v4004 = vmul.f32 %v3983, %v3964
          %v4005 = vmul.f32 %v3987, %v3965
          %v4006 = vmul.f32 %v3991, %v3966
          %v4007 = vmul.f32 %v3995, %v3967
          %v4008 = vmul.f32 %v3999, %v3968
          %v4009 = vadd.f32 %v3953, %v4001
          %v4010 = vadd.f32 %v3954, %v4002
          %v4011 = vadd.f32 %v3955, %v4003
          %v4012 = vadd.f32 %v3956, %v4004
          %v4013 = vadd.f32 %v3957, %v4005
          %v4014 = vadd.f32 %v3958, %v4006
          %v4015 = vadd.f32 %v3959, %v4007
          %v4016 = vadd.f32 %v3960, %v4008
          %v4017 = vld [vmem:[%s2066] sm:$0xff]
          %v4018 = vld [vmem:[%s2066 + $0x8] sm:$0xff]
          %v4019 = vld [vmem:[%s2066 + $0x10] sm:$0xff]
          %v4020 = vld [vmem:[%s2066 + $0x18] sm:$0xff]
          %v4021 = vld [vmem:[%s2066 + $0x20] sm:$0xff]
          %v4022 = vld [vmem:[%s2066 + $0x28] sm:$0xff]
          %v4023 = vld [vmem:[%s2066 + $0x30] sm:$0xff]
          %v4024 = vld [vmem:[%s2066 + $0x38] sm:$0xff]
          %4025 = vset.pattern.permute.xlu0 44
          %4026 = vperm.xlu0 %4025, %v1271
          %v4027 = vpop.permute.xlu0 %4026
          %4029 = vset.pattern.permute.xlu0 44
          %4030 = vperm.xlu0 %4029, %v1276
          %v4031 = vpop.permute.xlu0 %4030
          %4033 = vset.pattern.permute.xlu0 44
          %4034 = vperm.xlu0 %4033, %v1281
          %v4035 = vpop.permute.xlu0 %4034
          %4037 = vset.pattern.permute.xlu0 44
          %4038 = vperm.xlu0 %4037, %v1286
          %v4039 = vpop.permute.xlu0 %4038
          %4041 = vset.pattern.permute.xlu0 44
          %4042 = vperm.xlu0 %4041, %v1291
          %v4043 = vpop.permute.xlu0 %4042
          %4045 = vset.pattern.permute.xlu0 44
          %4046 = vperm.xlu0 %4045, %v1296
          %v4047 = vpop.permute.xlu0 %4046
          %4049 = vset.pattern.permute.xlu0 44
          %4050 = vperm.xlu0 %4049, %v1301
          %v4051 = vpop.permute.xlu0 %4050
          %4053 = vset.pattern.permute.xlu0 44
          %4054 = vperm.xlu0 %4053, %v1306
          %v4055 = vpop.permute.xlu0 %4054
          %v4057 = vmul.f32 %v4027, %v4017
          %v4058 = vmul.f32 %v4031, %v4018
          %v4059 = vmul.f32 %v4035, %v4019
          %v4060 = vmul.f32 %v4039, %v4020
          %v4061 = vmul.f32 %v4043, %v4021
          %v4062 = vmul.f32 %v4047, %v4022
          %v4063 = vmul.f32 %v4051, %v4023
          %v4064 = vmul.f32 %v4055, %v4024
          %v4065 = vadd.f32 %v4009, %v4057
          %v4066 = vadd.f32 %v4010, %v4058
          %v4067 = vadd.f32 %v4011, %v4059
          %v4068 = vadd.f32 %v4012, %v4060
          %v4069 = vadd.f32 %v4013, %v4061
          %v4070 = vadd.f32 %v4014, %v4062
          %v4071 = vadd.f32 %v4015, %v4063
          %v4072 = vadd.f32 %v4016, %v4064
          %v4073 = vld [vmem:[%s2124] sm:$0xff]
          %v4074 = vld [vmem:[%s2124 + $0x8] sm:$0xff]
          %v4075 = vld [vmem:[%s2124 + $0x10] sm:$0xff]
          %v4076 = vld [vmem:[%s2124 + $0x18] sm:$0xff]
          %v4077 = vld [vmem:[%s2124 + $0x20] sm:$0xff]
          %v4078 = vld [vmem:[%s2124 + $0x28] sm:$0xff]
          %v4079 = vld [vmem:[%s2124 + $0x30] sm:$0xff]
          %v4080 = vld [vmem:[%s2124 + $0x38] sm:$0xff]
          %4081 = vset.pattern.permute.xlu0 45
          %4082 = vperm.xlu0 %4081, %v1271
          %v4083 = vpop.permute.xlu0 %4082
          %4085 = vset.pattern.permute.xlu0 45
          %4086 = vperm.xlu0 %4085, %v1276
          %v4087 = vpop.permute.xlu0 %4086
          %4089 = vset.pattern.permute.xlu0 45
          %4090 = vperm.xlu0 %4089, %v1281
          %v4091 = vpop.permute.xlu0 %4090
          %4093 = vset.pattern.permute.xlu0 45
          %4094 = vperm.xlu0 %4093, %v1286
          %v4095 = vpop.permute.xlu0 %4094
          %4097 = vset.pattern.permute.xlu0 45
          %4098 = vperm.xlu0 %4097, %v1291
          %v4099 = vpop.permute.xlu0 %4098
          %4101 = vset.pattern.permute.xlu0 45
          %4102 = vperm.xlu0 %4101, %v1296
          %v4103 = vpop.permute.xlu0 %4102
          %4105 = vset.pattern.permute.xlu0 45
          %4106 = vperm.xlu0 %4105, %v1301
          %v4107 = vpop.permute.xlu0 %4106
          %4109 = vset.pattern.permute.xlu0 45
          %4110 = vperm.xlu0 %4109, %v1306
          %v4111 = vpop.permute.xlu0 %4110
          %v4113 = vmul.f32 %v4083, %v4073
          %v4114 = vmul.f32 %v4087, %v4074
          %v4115 = vmul.f32 %v4091, %v4075
          %v4116 = vmul.f32 %v4095, %v4076
          %v4117 = vmul.f32 %v4099, %v4077
          %v4118 = vmul.f32 %v4103, %v4078
          %v4119 = vmul.f32 %v4107, %v4079
          %v4120 = vmul.f32 %v4111, %v4080
          %v4121 = vadd.f32 %v4065, %v4113
          %v4122 = vadd.f32 %v4066, %v4114
          %v4123 = vadd.f32 %v4067, %v4115
          %v4124 = vadd.f32 %v4068, %v4116
          %v4125 = vadd.f32 %v4069, %v4117
          %v4126 = vadd.f32 %v4070, %v4118
          %v4127 = vadd.f32 %v4071, %v4119
          %v4128 = vadd.f32 %v4072, %v4120
          %v4129 = vld [vmem:[%s2182] sm:$0xff]
          %v4130 = vld [vmem:[%s2182 + $0x8] sm:$0xff]
          %v4131 = vld [vmem:[%s2182 + $0x10] sm:$0xff]
          %v4132 = vld [vmem:[%s2182 + $0x18] sm:$0xff]
          %v4133 = vld [vmem:[%s2182 + $0x20] sm:$0xff]
          %v4134 = vld [vmem:[%s2182 + $0x28] sm:$0xff]
          %v4135 = vld [vmem:[%s2182 + $0x30] sm:$0xff]
          %v4136 = vld [vmem:[%s2182 + $0x38] sm:$0xff]
          %4137 = vset.pattern.permute.xlu0 46
          %4138 = vperm.xlu0 %4137, %v1271
          %v4139 = vpop.permute.xlu0 %4138
          %4141 = vset.pattern.permute.xlu0 46
          %4142 = vperm.xlu0 %4141, %v1276
          %v4143 = vpop.permute.xlu0 %4142
          %4145 = vset.pattern.permute.xlu0 46
          %4146 = vperm.xlu0 %4145, %v1281
          %v4147 = vpop.permute.xlu0 %4146
          %4149 = vset.pattern.permute.xlu0 46
          %4150 = vperm.xlu0 %4149, %v1286
          %v4151 = vpop.permute.xlu0 %4150
          %4153 = vset.pattern.permute.xlu0 46
          %4154 = vperm.xlu0 %4153, %v1291
          %v4155 = vpop.permute.xlu0 %4154
          %4157 = vset.pattern.permute.xlu0 46
          %4158 = vperm.xlu0 %4157, %v1296
          %v4159 = vpop.permute.xlu0 %4158
          %4161 = vset.pattern.permute.xlu0 46
          %4162 = vperm.xlu0 %4161, %v1301
          %v4163 = vpop.permute.xlu0 %4162
          %4165 = vset.pattern.permute.xlu0 46
          %4166 = vperm.xlu0 %4165, %v1306
          %v4167 = vpop.permute.xlu0 %4166
          %v4169 = vmul.f32 %v4139, %v4129
          %v4170 = vmul.f32 %v4143, %v4130
          %v4171 = vmul.f32 %v4147, %v4131
          %v4172 = vmul.f32 %v4151, %v4132
          %v4173 = vmul.f32 %v4155, %v4133
          %v4174 = vmul.f32 %v4159, %v4134
          %v4175 = vmul.f32 %v4163, %v4135
          %v4176 = vmul.f32 %v4167, %v4136
          %v4177 = vadd.f32 %v4121, %v4169
          %v4178 = vadd.f32 %v4122, %v4170
          %v4179 = vadd.f32 %v4123, %v4171
          %v4180 = vadd.f32 %v4124, %v4172
          %v4181 = vadd.f32 %v4125, %v4173
          %v4182 = vadd.f32 %v4126, %v4174
          %v4183 = vadd.f32 %v4127, %v4175
          %v4184 = vadd.f32 %v4128, %v4176
          %v4185 = vld [vmem:[%s2240] sm:$0xff]
          %v4186 = vld [vmem:[%s2240 + $0x8] sm:$0xff]
          %v4187 = vld [vmem:[%s2240 + $0x10] sm:$0xff]
          %v4188 = vld [vmem:[%s2240 + $0x18] sm:$0xff]
          %v4189 = vld [vmem:[%s2240 + $0x20] sm:$0xff]
          %v4190 = vld [vmem:[%s2240 + $0x28] sm:$0xff]
          %v4191 = vld [vmem:[%s2240 + $0x30] sm:$0xff]
          %v4192 = vld [vmem:[%s2240 + $0x38] sm:$0xff]
          %4193 = vset.pattern.permute.xlu0 47
          %4194 = vperm.xlu0 %4193, %v1271
          %v4195 = vpop.permute.xlu0 %4194
          %4197 = vset.pattern.permute.xlu0 47
          %4198 = vperm.xlu0 %4197, %v1276
          %v4199 = vpop.permute.xlu0 %4198
          %4201 = vset.pattern.permute.xlu0 47
          %4202 = vperm.xlu0 %4201, %v1281
          %v4203 = vpop.permute.xlu0 %4202
          %4205 = vset.pattern.permute.xlu0 47
          %4206 = vperm.xlu0 %4205, %v1286
          %v4207 = vpop.permute.xlu0 %4206
          %4209 = vset.pattern.permute.xlu0 47
          %4210 = vperm.xlu0 %4209, %v1291
          %v4211 = vpop.permute.xlu0 %4210
          %4213 = vset.pattern.permute.xlu0 47
          %4214 = vperm.xlu0 %4213, %v1296
          %v4215 = vpop.permute.xlu0 %4214
          %4217 = vset.pattern.permute.xlu0 47
          %4218 = vperm.xlu0 %4217, %v1301
          %v4219 = vpop.permute.xlu0 %4218
          %4221 = vset.pattern.permute.xlu0 47
          %4222 = vperm.xlu0 %4221, %v1306
          %v4223 = vpop.permute.xlu0 %4222
          %v4225 = vmul.f32 %v4195, %v4185
          %v4226 = vmul.f32 %v4199, %v4186
          %v4227 = vmul.f32 %v4203, %v4187
          %v4228 = vmul.f32 %v4207, %v4188
          %v4229 = vmul.f32 %v4211, %v4189
          %v4230 = vmul.f32 %v4215, %v4190
          %v4231 = vmul.f32 %v4219, %v4191
          %v4232 = vmul.f32 %v4223, %v4192
          %v4233 = vadd.f32 %v4177, %v4225
          %v4234 = vadd.f32 %v4178, %v4226
          %v4235 = vadd.f32 %v4179, %v4227
          %v4236 = vadd.f32 %v4180, %v4228
          %v4237 = vadd.f32 %v4181, %v4229
          %v4238 = vadd.f32 %v4182, %v4230
          %v4239 = vadd.f32 %v4183, %v4231
          %v4240 = vadd.f32 %v4184, %v4232
          %s4241 = sadd.s32 %s2006, 2112
          %s4242 = scalar_lea.vmem [#allocation2], %s4241
          %v4243 = vld [vmem:[%s4242] sm:$0xff]
          %v4244 = vld [vmem:[%s4242 + $0x8] sm:$0xff]
          %v4245 = vld [vmem:[%s4242 + $0x10] sm:$0xff]
          %v4246 = vld [vmem:[%s4242 + $0x18] sm:$0xff]
          %v4247 = vld [vmem:[%s4242 + $0x20] sm:$0xff]
          %v4248 = vld [vmem:[%s4242 + $0x28] sm:$0xff]
          %v4249 = vld [vmem:[%s4242 + $0x30] sm:$0xff]
          %v4250 = vld [vmem:[%s4242 + $0x38] sm:$0xff]
          %4251 = vset.pattern.permute.xlu0 48
          %4252 = vperm.xlu0 %4251, %v1271
          %v4253 = vpop.permute.xlu0 %4252
          %4255 = vset.pattern.permute.xlu0 48
          %4256 = vperm.xlu0 %4255, %v1276
          %v4257 = vpop.permute.xlu0 %4256
          %4259 = vset.pattern.permute.xlu0 48
          %4260 = vperm.xlu0 %4259, %v1281
          %v4261 = vpop.permute.xlu0 %4260
          %4263 = vset.pattern.permute.xlu0 48
          %4264 = vperm.xlu0 %4263, %v1286
          %v4265 = vpop.permute.xlu0 %4264
          %4267 = vset.pattern.permute.xlu0 48
          %4268 = vperm.xlu0 %4267, %v1291
          %v4269 = vpop.permute.xlu0 %4268
          %4271 = vset.pattern.permute.xlu0 48
          %4272 = vperm.xlu0 %4271, %v1296
          %v4273 = vpop.permute.xlu0 %4272
          %4275 = vset.pattern.permute.xlu0 48
          %4276 = vperm.xlu0 %4275, %v1301
          %v4277 = vpop.permute.xlu0 %4276
          %4279 = vset.pattern.permute.xlu0 48
          %4280 = vperm.xlu0 %4279, %v1306
          %v4281 = vpop.permute.xlu0 %4280
          %v4283 = vmul.f32 %v4253, %v4243
          %v4284 = vmul.f32 %v4257, %v4244
          %v4285 = vmul.f32 %v4261, %v4245
          %v4286 = vmul.f32 %v4265, %v4246
          %v4287 = vmul.f32 %v4269, %v4247
          %v4288 = vmul.f32 %v4273, %v4248
          %v4289 = vmul.f32 %v4277, %v4249
          %v4290 = vmul.f32 %v4281, %v4250
          %v4291 = vadd.f32 %v4233, %v4283
          %v4292 = vadd.f32 %v4234, %v4284
          %v4293 = vadd.f32 %v4235, %v4285
          %v4294 = vadd.f32 %v4236, %v4286
          %v4295 = vadd.f32 %v4237, %v4287
          %v4296 = vadd.f32 %v4238, %v4288
          %v4297 = vadd.f32 %v4239, %v4289
          %v4298 = vadd.f32 %v4240, %v4290
          %s4299 = scalar_lea.vmem [#allocation2], %s1424
          %v4300 = vld [vmem:[%s4299] sm:$0xff]
          %v4301 = vld [vmem:[%s4299 + $0x8] sm:$0xff]
          %v4302 = vld [vmem:[%s4299 + $0x10] sm:$0xff]
          %v4303 = vld [vmem:[%s4299 + $0x18] sm:$0xff]
          %v4304 = vld [vmem:[%s4299 + $0x20] sm:$0xff]
          %v4305 = vld [vmem:[%s4299 + $0x28] sm:$0xff]
          %v4306 = vld [vmem:[%s4299 + $0x30] sm:$0xff]
          %v4307 = vld [vmem:[%s4299 + $0x38] sm:$0xff]
          %4308 = vset.pattern.permute.xlu0 49
          %4309 = vperm.xlu0 %4308, %v1271
          %v4310 = vpop.permute.xlu0 %4309
          %4312 = vset.pattern.permute.xlu0 49
          %4313 = vperm.xlu0 %4312, %v1276
          %v4314 = vpop.permute.xlu0 %4313
          %4316 = vset.pattern.permute.xlu0 49
          %4317 = vperm.xlu0 %4316, %v1281
          %v4318 = vpop.permute.xlu0 %4317
          %4320 = vset.pattern.permute.xlu0 49
          %4321 = vperm.xlu0 %4320, %v1286
          %v4322 = vpop.permute.xlu0 %4321
          %4324 = vset.pattern.permute.xlu0 49
          %4325 = vperm.xlu0 %4324, %v1291
          %v4326 = vpop.permute.xlu0 %4325
          %4328 = vset.pattern.permute.xlu0 49
          %4329 = vperm.xlu0 %4328, %v1296
          %v4330 = vpop.permute.xlu0 %4329
          %4332 = vset.pattern.permute.xlu0 49
          %4333 = vperm.xlu0 %4332, %v1301
          %v4334 = vpop.permute.xlu0 %4333
          %4336 = vset.pattern.permute.xlu0 49
          %4337 = vperm.xlu0 %4336, %v1306
          %v4338 = vpop.permute.xlu0 %4337
          %v4340 = vmul.f32 %v4310, %v4300
          %v4341 = vmul.f32 %v4314, %v4301
          %v4342 = vmul.f32 %v4318, %v4302
          %v4343 = vmul.f32 %v4322, %v4303
          %v4344 = vmul.f32 %v4326, %v4304
          %v4345 = vmul.f32 %v4330, %v4305
          %v4346 = vmul.f32 %v4334, %v4306
          %v4347 = vmul.f32 %v4338, %v4307
          %v4348 = vadd.f32 %v4291, %v4340
          %v4349 = vadd.f32 %v4292, %v4341
          %v4350 = vadd.f32 %v4293, %v4342
          %v4351 = vadd.f32 %v4294, %v4343
          %v4352 = vadd.f32 %v4295, %v4344
          %v4353 = vadd.f32 %v4296, %v4345
          %v4354 = vadd.f32 %v4297, %v4346
          %v4355 = vadd.f32 %v4298, %v4347
          %v4356 = vld [vmem:[%s2298] sm:$0xff]
          %v4357 = vld [vmem:[%s2298 + $0x8] sm:$0xff]
          %v4358 = vld [vmem:[%s2298 + $0x10] sm:$0xff]
          %v4359 = vld [vmem:[%s2298 + $0x18] sm:$0xff]
          %v4360 = vld [vmem:[%s2298 + $0x20] sm:$0xff]
          %v4361 = vld [vmem:[%s2298 + $0x28] sm:$0xff]
          %v4362 = vld [vmem:[%s2298 + $0x30] sm:$0xff]
          %v4363 = vld [vmem:[%s2298 + $0x38] sm:$0xff]
          %4364 = vset.pattern.permute.xlu0 50
          %4365 = vperm.xlu0 %4364, %v1271
          %v4366 = vpop.permute.xlu0 %4365
          %4368 = vset.pattern.permute.xlu0 50
          %4369 = vperm.xlu0 %4368, %v1276
          %v4370 = vpop.permute.xlu0 %4369
          %4372 = vset.pattern.permute.xlu0 50
          %4373 = vperm.xlu0 %4372, %v1281
          %v4374 = vpop.permute.xlu0 %4373
          %4376 = vset.pattern.permute.xlu0 50
          %4377 = vperm.xlu0 %4376, %v1286
          %v4378 = vpop.permute.xlu0 %4377
          %4380 = vset.pattern.permute.xlu0 50
          %4381 = vperm.xlu0 %4380, %v1291
          %v4382 = vpop.permute.xlu0 %4381
          %4384 = vset.pattern.permute.xlu0 50
          %4385 = vperm.xlu0 %4384, %v1296
          %v4386 = vpop.permute.xlu0 %4385
          %4388 = vset.pattern.permute.xlu0 50
          %4389 = vperm.xlu0 %4388, %v1301
          %v4390 = vpop.permute.xlu0 %4389
          %4392 = vset.pattern.permute.xlu0 50
          %4393 = vperm.xlu0 %4392, %v1306
          %v4394 = vpop.permute.xlu0 %4393
          %v4396 = vmul.f32 %v4366, %v4356
          %v4397 = vmul.f32 %v4370, %v4357
          %v4398 = vmul.f32 %v4374, %v4358
          %v4399 = vmul.f32 %v4378, %v4359
          %v4400 = vmul.f32 %v4382, %v4360
          %v4401 = vmul.f32 %v4386, %v4361
          %v4402 = vmul.f32 %v4390, %v4362
          %v4403 = vmul.f32 %v4394, %v4363
          %v4404 = vadd.f32 %v4348, %v4396
          %v4405 = vadd.f32 %v4349, %v4397
          %v4406 = vadd.f32 %v4350, %v4398
          %v4407 = vadd.f32 %v4351, %v4399
          %v4408 = vadd.f32 %v4352, %v4400
          %v4409 = vadd.f32 %v4353, %v4401
          %v4410 = vadd.f32 %v4354, %v4402
          %v4411 = vadd.f32 %v4355, %v4403
          %v4412 = vld [vmem:[%s1426] sm:$0xff]
          %v4413 = vld [vmem:[%s1426 + $0x8] sm:$0xff]
          %v4414 = vld [vmem:[%s1426 + $0x10] sm:$0xff]
          %v4415 = vld [vmem:[%s1426 + $0x18] sm:$0xff]
          %v4416 = vld [vmem:[%s1426 + $0x20] sm:$0xff]
          %v4417 = vld [vmem:[%s1426 + $0x28] sm:$0xff]
          %v4418 = vld [vmem:[%s1426 + $0x30] sm:$0xff]
          %v4419 = vld [vmem:[%s1426 + $0x38] sm:$0xff]
          %4420 = vset.pattern.permute.xlu0 51
          %4421 = vperm.xlu0 %4420, %v1271
          %v4422 = vpop.permute.xlu0 %4421
          %4424 = vset.pattern.permute.xlu0 51
          %4425 = vperm.xlu0 %4424, %v1276
          %v4426 = vpop.permute.xlu0 %4425
          %4428 = vset.pattern.permute.xlu0 51
          %4429 = vperm.xlu0 %4428, %v1281
          %v4430 = vpop.permute.xlu0 %4429
          %4432 = vset.pattern.permute.xlu0 51
          %4433 = vperm.xlu0 %4432, %v1286
          %v4434 = vpop.permute.xlu0 %4433
          %4436 = vset.pattern.permute.xlu0 51
          %4437 = vperm.xlu0 %4436, %v1291
          %v4438 = vpop.permute.xlu0 %4437
          %4440 = vset.pattern.permute.xlu0 51
          %4441 = vperm.xlu0 %4440, %v1296
          %v4442 = vpop.permute.xlu0 %4441
          %4444 = vset.pattern.permute.xlu0 51
          %4445 = vperm.xlu0 %4444, %v1301
          %v4446 = vpop.permute.xlu0 %4445
          %4448 = vset.pattern.permute.xlu0 51
          %4449 = vperm.xlu0 %4448, %v1306
          %v4450 = vpop.permute.xlu0 %4449
          %v4452 = vmul.f32 %v4422, %v4412
          %v4453 = vmul.f32 %v4426, %v4413
          %v4454 = vmul.f32 %v4430, %v4414
          %v4455 = vmul.f32 %v4434, %v4415
          %v4456 = vmul.f32 %v4438, %v4416
          %v4457 = vmul.f32 %v4442, %v4417
          %v4458 = vmul.f32 %v4446, %v4418
          %v4459 = vmul.f32 %v4450, %v4419
          %v4460 = vadd.f32 %v4404, %v4452
          %v4461 = vadd.f32 %v4405, %v4453
          %v4462 = vadd.f32 %v4406, %v4454
          %v4463 = vadd.f32 %v4407, %v4455
          %v4464 = vadd.f32 %v4408, %v4456
          %v4465 = vadd.f32 %v4409, %v4457
          %v4466 = vadd.f32 %v4410, %v4458
          %v4467 = vadd.f32 %v4411, %v4459
          %v4468 = vld [vmem:[%s1484] sm:$0xff]
          %v4469 = vld [vmem:[%s1484 + $0x8] sm:$0xff]
          %v4470 = vld [vmem:[%s1484 + $0x10] sm:$0xff]
          %v4471 = vld [vmem:[%s1484 + $0x18] sm:$0xff]
          %v4472 = vld [vmem:[%s1484 + $0x20] sm:$0xff]
          %v4473 = vld [vmem:[%s1484 + $0x28] sm:$0xff]
          %v4474 = vld [vmem:[%s1484 + $0x30] sm:$0xff]
          %v4475 = vld [vmem:[%s1484 + $0x38] sm:$0xff]
          %4476 = vset.pattern.permute.xlu0 52
          %4477 = vperm.xlu0 %4476, %v1271
          %v4478 = vpop.permute.xlu0 %4477
          %4480 = vset.pattern.permute.xlu0 52
          %4481 = vperm.xlu0 %4480, %v1276
          %v4482 = vpop.permute.xlu0 %4481
          %4484 = vset.pattern.permute.xlu0 52
          %4485 = vperm.xlu0 %4484, %v1281
          %v4486 = vpop.permute.xlu0 %4485
          %4488 = vset.pattern.permute.xlu0 52
          %4489 = vperm.xlu0 %4488, %v1286
          %v4490 = vpop.permute.xlu0 %4489
          %4492 = vset.pattern.permute.xlu0 52
          %4493 = vperm.xlu0 %4492, %v1291
          %v4494 = vpop.permute.xlu0 %4493
          %4496 = vset.pattern.permute.xlu0 52
          %4497 = vperm.xlu0 %4496, %v1296
          %v4498 = vpop.permute.xlu0 %4497
          %4500 = vset.pattern.permute.xlu0 52
          %4501 = vperm.xlu0 %4500, %v1301
          %v4502 = vpop.permute.xlu0 %4501
          %4504 = vset.pattern.permute.xlu0 52
          %4505 = vperm.xlu0 %4504, %v1306
          %v4506 = vpop.permute.xlu0 %4505
          %v4508 = vmul.f32 %v4478, %v4468
          %v4509 = vmul.f32 %v4482, %v4469
          %v4510 = vmul.f32 %v4486, %v4470
          %v4511 = vmul.f32 %v4490, %v4471
          %v4512 = vmul.f32 %v4494, %v4472
          %v4513 = vmul.f32 %v4498, %v4473
          %v4514 = vmul.f32 %v4502, %v4474
          %v4515 = vmul.f32 %v4506, %v4475
          %v4516 = vadd.f32 %v4460, %v4508
          %v4517 = vadd.f32 %v4461, %v4509
          %v4518 = vadd.f32 %v4462, %v4510
          %v4519 = vadd.f32 %v4463, %v4511
          %v4520 = vadd.f32 %v4464, %v4512
          %v4521 = vadd.f32 %v4465, %v4513
          %v4522 = vadd.f32 %v4466, %v4514
          %v4523 = vadd.f32 %v4467, %v4515
          %v4524 = vld [vmem:[%s1542] sm:$0xff]
          %v4525 = vld [vmem:[%s1542 + $0x8] sm:$0xff]
          %v4526 = vld [vmem:[%s1542 + $0x10] sm:$0xff]
          %v4527 = vld [vmem:[%s1542 + $0x18] sm:$0xff]
          %v4528 = vld [vmem:[%s1542 + $0x20] sm:$0xff]
          %v4529 = vld [vmem:[%s1542 + $0x28] sm:$0xff]
          %v4530 = vld [vmem:[%s1542 + $0x30] sm:$0xff]
          %v4531 = vld [vmem:[%s1542 + $0x38] sm:$0xff]
          %4532 = vset.pattern.permute.xlu0 53
          %4533 = vperm.xlu0 %4532, %v1271
          %v4534 = vpop.permute.xlu0 %4533
          %4536 = vset.pattern.permute.xlu0 53
          %4537 = vperm.xlu0 %4536, %v1276
          %v4538 = vpop.permute.xlu0 %4537
          %4540 = vset.pattern.permute.xlu0 53
          %4541 = vperm.xlu0 %4540, %v1281
          %v4542 = vpop.permute.xlu0 %4541
          %4544 = vset.pattern.permute.xlu0 53
          %4545 = vperm.xlu0 %4544, %v1286
          %v4546 = vpop.permute.xlu0 %4545
          %4548 = vset.pattern.permute.xlu0 53
          %4549 = vperm.xlu0 %4548, %v1291
          %v4550 = vpop.permute.xlu0 %4549
          %4552 = vset.pattern.permute.xlu0 53
          %4553 = vperm.xlu0 %4552, %v1296
          %v4554 = vpop.permute.xlu0 %4553
          %4556 = vset.pattern.permute.xlu0 53
          %4557 = vperm.xlu0 %4556, %v1301
          %v4558 = vpop.permute.xlu0 %4557
          %4560 = vset.pattern.permute.xlu0 53
          %4561 = vperm.xlu0 %4560, %v1306
          %v4562 = vpop.permute.xlu0 %4561
          %v4564 = vmul.f32 %v4534, %v4524
          %v4565 = vmul.f32 %v4538, %v4525
          %v4566 = vmul.f32 %v4542, %v4526
          %v4567 = vmul.f32 %v4546, %v4527
          %v4568 = vmul.f32 %v4550, %v4528
          %v4569 = vmul.f32 %v4554, %v4529
          %v4570 = vmul.f32 %v4558, %v4530
          %v4571 = vmul.f32 %v4562, %v4531
          %v4572 = vadd.f32 %v4516, %v4564
          %v4573 = vadd.f32 %v4517, %v4565
          %v4574 = vadd.f32 %v4518, %v4566
          %v4575 = vadd.f32 %v4519, %v4567
          %v4576 = vadd.f32 %v4520, %v4568
          %v4577 = vadd.f32 %v4521, %v4569
          %v4578 = vadd.f32 %v4522, %v4570
          %v4579 = vadd.f32 %v4523, %v4571
          %v4580 = vld [vmem:[%s2524] sm:$0xff]
          %v4581 = vld [vmem:[%s2524 + $0x8] sm:$0xff]
          %v4582 = vld [vmem:[%s2524 + $0x10] sm:$0xff]
          %v4583 = vld [vmem:[%s2524 + $0x18] sm:$0xff]
          %v4584 = vld [vmem:[%s2524 + $0x20] sm:$0xff]
          %v4585 = vld [vmem:[%s2524 + $0x28] sm:$0xff]
          %v4586 = vld [vmem:[%s2524 + $0x30] sm:$0xff]
          %v4587 = vld [vmem:[%s2524 + $0x38] sm:$0xff]
          %4588 = vset.pattern.permute.xlu0 54
          %4589 = vperm.xlu0 %4588, %v1271
          %v4590 = vpop.permute.xlu0 %4589
          %4592 = vset.pattern.permute.xlu0 54
          %4593 = vperm.xlu0 %4592, %v1276
          %v4594 = vpop.permute.xlu0 %4593
          %4596 = vset.pattern.permute.xlu0 54
          %4597 = vperm.xlu0 %4596, %v1281
          %v4598 = vpop.permute.xlu0 %4597
          %4600 = vset.pattern.permute.xlu0 54
          %4601 = vperm.xlu0 %4600, %v1286
          %v4602 = vpop.permute.xlu0 %4601
          %4604 = vset.pattern.permute.xlu0 54
          %4605 = vperm.xlu0 %4604, %v1291
          %v4606 = vpop.permute.xlu0 %4605
          %4608 = vset.pattern.permute.xlu0 54
          %4609 = vperm.xlu0 %4608, %v1296
          %v4610 = vpop.permute.xlu0 %4609
          %4612 = vset.pattern.permute.xlu0 54
          %4613 = vperm.xlu0 %4612, %v1301
          %v4614 = vpop.permute.xlu0 %4613
          %4616 = vset.pattern.permute.xlu0 54
          %4617 = vperm.xlu0 %4616, %v1306
          %v4618 = vpop.permute.xlu0 %4617
          %v4620 = vmul.f32 %v4590, %v4580
          %v4621 = vmul.f32 %v4594, %v4581
          %v4622 = vmul.f32 %v4598, %v4582
          %v4623 = vmul.f32 %v4602, %v4583
          %v4624 = vmul.f32 %v4606, %v4584
          %v4625 = vmul.f32 %v4610, %v4585
          %v4626 = vmul.f32 %v4614, %v4586
          %v4627 = vmul.f32 %v4618, %v4587
          %v4628 = vadd.f32 %v4572, %v4620
          %v4629 = vadd.f32 %v4573, %v4621
          %v4630 = vadd.f32 %v4574, %v4622
          %v4631 = vadd.f32 %v4575, %v4623
          %v4632 = vadd.f32 %v4576, %v4624
          %v4633 = vadd.f32 %v4577, %v4625
          %v4634 = vadd.f32 %v4578, %v4626
          %v4635 = vadd.f32 %v4579, %v4627
          %s4636 = sadd.s32 %s1424, 2112
          %s4637 = scalar_lea.vmem [#allocation2], %s4636
          %v4638 = vld [vmem:[%s4637] sm:$0xff]
          %v4639 = vld [vmem:[%s4637 + $0x8] sm:$0xff]
          %v4640 = vld [vmem:[%s4637 + $0x10] sm:$0xff]
          %v4641 = vld [vmem:[%s4637 + $0x18] sm:$0xff]
          %v4642 = vld [vmem:[%s4637 + $0x20] sm:$0xff]
          %v4643 = vld [vmem:[%s4637 + $0x28] sm:$0xff]
          %v4644 = vld [vmem:[%s4637 + $0x30] sm:$0xff]
          %v4645 = vld [vmem:[%s4637 + $0x38] sm:$0xff]
          %4646 = vset.pattern.permute.xlu0 55
          %4647 = vperm.xlu0 %4646, %v1271
          %v4648 = vpop.permute.xlu0 %4647
          %4650 = vset.pattern.permute.xlu0 55
          %4651 = vperm.xlu0 %4650, %v1276
          %v4652 = vpop.permute.xlu0 %4651
          %4654 = vset.pattern.permute.xlu0 55
          %4655 = vperm.xlu0 %4654, %v1281
          %v4656 = vpop.permute.xlu0 %4655
          %4658 = vset.pattern.permute.xlu0 55
          %4659 = vperm.xlu0 %4658, %v1286
          %v4660 = vpop.permute.xlu0 %4659
          %4662 = vset.pattern.permute.xlu0 55
          %4663 = vperm.xlu0 %4662, %v1291
          %v4664 = vpop.permute.xlu0 %4663
          %4666 = vset.pattern.permute.xlu0 55
          %4667 = vperm.xlu0 %4666, %v1296
          %v4668 = vpop.permute.xlu0 %4667
          %4670 = vset.pattern.permute.xlu0 55
          %4671 = vperm.xlu0 %4670, %v1301
          %v4672 = vpop.permute.xlu0 %4671
          %4674 = vset.pattern.permute.xlu0 55
          %4675 = vperm.xlu0 %4674, %v1306
          %v4676 = vpop.permute.xlu0 %4675
          %v4678 = vmul.f32 %v4648, %v4638
          %v4679 = vmul.f32 %v4652, %v4639
          %v4680 = vmul.f32 %v4656, %v4640
          %v4681 = vmul.f32 %v4660, %v4641
          %v4682 = vmul.f32 %v4664, %v4642
          %v4683 = vmul.f32 %v4668, %v4643
          %v4684 = vmul.f32 %v4672, %v4644
          %v4685 = vmul.f32 %v4676, %v4645
          %v4686 = vadd.f32 %v4628, %v4678
          %v4687 = vadd.f32 %v4629, %v4679
          %v4688 = vadd.f32 %v4630, %v4680
          %v4689 = vadd.f32 %v4631, %v4681
          %v4690 = vadd.f32 %v4632, %v4682
          %v4691 = vadd.f32 %v4633, %v4683
          %v4692 = vadd.f32 %v4634, %v4684
          %v4693 = vadd.f32 %v4635, %v4685
          %s4694 = scalar_lea.vmem [#allocation2], %s1034
          %v4695 = vld [vmem:[%s4694] sm:$0xff]
          %v4696 = vld [vmem:[%s4694 + $0x8] sm:$0xff]
          %v4697 = vld [vmem:[%s4694 + $0x10] sm:$0xff]
          %v4698 = vld [vmem:[%s4694 + $0x18] sm:$0xff]
          %v4699 = vld [vmem:[%s4694 + $0x20] sm:$0xff]
          %v4700 = vld [vmem:[%s4694 + $0x28] sm:$0xff]
          %v4701 = vld [vmem:[%s4694 + $0x30] sm:$0xff]
          %v4702 = vld [vmem:[%s4694 + $0x38] sm:$0xff]
          %4703 = vset.pattern.permute.xlu0 56
          %4704 = vperm.xlu0 %4703, %v1271
          %v4705 = vpop.permute.xlu0 %4704
          %4707 = vset.pattern.permute.xlu0 56
          %4708 = vperm.xlu0 %4707, %v1276
          %v4709 = vpop.permute.xlu0 %4708
          %4711 = vset.pattern.permute.xlu0 56
          %4712 = vperm.xlu0 %4711, %v1281
          %v4713 = vpop.permute.xlu0 %4712
          %4715 = vset.pattern.permute.xlu0 56
          %4716 = vperm.xlu0 %4715, %v1286
          %v4717 = vpop.permute.xlu0 %4716
          %4719 = vset.pattern.permute.xlu0 56
          %4720 = vperm.xlu0 %4719, %v1291
          %v4721 = vpop.permute.xlu0 %4720
          %4723 = vset.pattern.permute.xlu0 56
          %4724 = vperm.xlu0 %4723, %v1296
          %v4725 = vpop.permute.xlu0 %4724
          %4727 = vset.pattern.permute.xlu0 56
          %4728 = vperm.xlu0 %4727, %v1301
          %v4729 = vpop.permute.xlu0 %4728
          %4731 = vset.pattern.permute.xlu0 56
          %4732 = vperm.xlu0 %4731, %v1306
          %v4733 = vpop.permute.xlu0 %4732
          %v4735 = vmul.f32 %v4705, %v4695
          %v4736 = vmul.f32 %v4709, %v4696
          %v4737 = vmul.f32 %v4713, %v4697
          %v4738 = vmul.f32 %v4717, %v4698
          %v4739 = vmul.f32 %v4721, %v4699
          %v4740 = vmul.f32 %v4725, %v4700
          %v4741 = vmul.f32 %v4729, %v4701
          %v4742 = vmul.f32 %v4733, %v4702
          %v4743 = vadd.f32 %v4686, %v4735
          %v4744 = vadd.f32 %v4687, %v4736
          %v4745 = vadd.f32 %v4688, %v4737
          %v4746 = vadd.f32 %v4689, %v4738
          %v4747 = vadd.f32 %v4690, %v4739
          %v4748 = vadd.f32 %v4691, %v4740
          %v4749 = vadd.f32 %v4692, %v4741
          %v4750 = vadd.f32 %v4693, %v4742
          %v4751 = vld [vmem:[%s2582] sm:$0xff]
          %v4752 = vld [vmem:[%s2582 + $0x8] sm:$0xff]
          %v4753 = vld [vmem:[%s2582 + $0x10] sm:$0xff]
          %v4754 = vld [vmem:[%s2582 + $0x18] sm:$0xff]
          %v4755 = vld [vmem:[%s2582 + $0x20] sm:$0xff]
          %v4756 = vld [vmem:[%s2582 + $0x28] sm:$0xff]
          %v4757 = vld [vmem:[%s2582 + $0x30] sm:$0xff]
          %v4758 = vld [vmem:[%s2582 + $0x38] sm:$0xff]
          %4759 = vset.pattern.permute.xlu0 57
          %4760 = vperm.xlu0 %4759, %v1271
          %v4761 = vpop.permute.xlu0 %4760
          %4763 = vset.pattern.permute.xlu0 57
          %4764 = vperm.xlu0 %4763, %v1276
          %v4765 = vpop.permute.xlu0 %4764
          %4767 = vset.pattern.permute.xlu0 57
          %4768 = vperm.xlu0 %4767, %v1281
          %v4769 = vpop.permute.xlu0 %4768
          %4771 = vset.pattern.permute.xlu0 57
          %4772 = vperm.xlu0 %4771, %v1286
          %v4773 = vpop.permute.xlu0 %4772
          %4775 = vset.pattern.permute.xlu0 57
          %4776 = vperm.xlu0 %4775, %v1291
          %v4777 = vpop.permute.xlu0 %4776
          %4779 = vset.pattern.permute.xlu0 57
          %4780 = vperm.xlu0 %4779, %v1296
          %v4781 = vpop.permute.xlu0 %4780
          %4783 = vset.pattern.permute.xlu0 57
          %4784 = vperm.xlu0 %4783, %v1301
          %v4785 = vpop.permute.xlu0 %4784
          %4787 = vset.pattern.permute.xlu0 57
          %4788 = vperm.xlu0 %4787, %v1306
          %v4789 = vpop.permute.xlu0 %4788
          %v4791 = vmul.f32 %v4761, %v4751
          %v4792 = vmul.f32 %v4765, %v4752
          %v4793 = vmul.f32 %v4769, %v4753
          %v4794 = vmul.f32 %v4773, %v4754
          %v4795 = vmul.f32 %v4777, %v4755
          %v4796 = vmul.f32 %v4781, %v4756
          %v4797 = vmul.f32 %v4785, %v4757
          %v4798 = vmul.f32 %v4789, %v4758
          %v4799 = vadd.f32 %v4743, %v4791
          %v4800 = vadd.f32 %v4744, %v4792
          %v4801 = vadd.f32 %v4745, %v4793
          %v4802 = vadd.f32 %v4746, %v4794
          %v4803 = vadd.f32 %v4747, %v4795
          %v4804 = vadd.f32 %v4748, %v4796
          %v4805 = vadd.f32 %v4749, %v4797
          %v4806 = vadd.f32 %v4750, %v4798
          %v4807 = vld [vmem:[%s1600] sm:$0xff]
          %v4808 = vld [vmem:[%s1600 + $0x8] sm:$0xff]
          %v4809 = vld [vmem:[%s1600 + $0x10] sm:$0xff]
          %v4810 = vld [vmem:[%s1600 + $0x18] sm:$0xff]
          %v4811 = vld [vmem:[%s1600 + $0x20] sm:$0xff]
          %v4812 = vld [vmem:[%s1600 + $0x28] sm:$0xff]
          %v4813 = vld [vmem:[%s1600 + $0x30] sm:$0xff]
          %v4814 = vld [vmem:[%s1600 + $0x38] sm:$0xff]
          %4815 = vset.pattern.permute.xlu0 58
          %4816 = vperm.xlu0 %4815, %v1271
          %v4817 = vpop.permute.xlu0 %4816
          %4819 = vset.pattern.permute.xlu0 58
          %4820 = vperm.xlu0 %4819, %v1276
          %v4821 = vpop.permute.xlu0 %4820
          %4823 = vset.pattern.permute.xlu0 58
          %4824 = vperm.xlu0 %4823, %v1281
          %v4825 = vpop.permute.xlu0 %4824
          %4827 = vset.pattern.permute.xlu0 58
          %4828 = vperm.xlu0 %4827, %v1286
          %v4829 = vpop.permute.xlu0 %4828
          %4831 = vset.pattern.permute.xlu0 58
          %4832 = vperm.xlu0 %4831, %v1291
          %v4833 = vpop.permute.xlu0 %4832
          %4835 = vset.pattern.permute.xlu0 58
          %4836 = vperm.xlu0 %4835, %v1296
          %v4837 = vpop.permute.xlu0 %4836
          %4839 = vset.pattern.permute.xlu0 58
          %4840 = vperm.xlu0 %4839, %v1301
          %v4841 = vpop.permute.xlu0 %4840
          %4843 = vset.pattern.permute.xlu0 58
          %4844 = vperm.xlu0 %4843, %v1306
          %v4845 = vpop.permute.xlu0 %4844
          %v4847 = vmul.f32 %v4817, %v4807
          %v4848 = vmul.f32 %v4821, %v4808
          %v4849 = vmul.f32 %v4825, %v4809
          %v4850 = vmul.f32 %v4829, %v4810
          %v4851 = vmul.f32 %v4833, %v4811
          %v4852 = vmul.f32 %v4837, %v4812
          %v4853 = vmul.f32 %v4841, %v4813
          %v4854 = vmul.f32 %v4845, %v4814
          %v4855 = vadd.f32 %v4799, %v4847
          %v4856 = vadd.f32 %v4800, %v4848
          %v4857 = vadd.f32 %v4801, %v4849
          %v4858 = vadd.f32 %v4802, %v4850
          %v4859 = vadd.f32 %v4803, %v4851
          %v4860 = vadd.f32 %v4804, %v4852
          %v4861 = vadd.f32 %v4805, %v4853
          %v4862 = vadd.f32 %v4806, %v4854
          %v4863 = vld [vmem:[%s1036] sm:$0xff]
          %v4864 = vld [vmem:[%s1036 + $0x8] sm:$0xff]
          %v4865 = vld [vmem:[%s1036 + $0x10] sm:$0xff]
          %v4866 = vld [vmem:[%s1036 + $0x18] sm:$0xff]
          %v4867 = vld [vmem:[%s1036 + $0x20] sm:$0xff]
          %v4868 = vld [vmem:[%s1036 + $0x28] sm:$0xff]
          %v4869 = vld [vmem:[%s1036 + $0x30] sm:$0xff]
          %v4870 = vld [vmem:[%s1036 + $0x38] sm:$0xff]
          %4871 = vset.pattern.permute.xlu0 59
          %4872 = vperm.xlu0 %4871, %v1271
          %v4873 = vpop.permute.xlu0 %4872
          %4875 = vset.pattern.permute.xlu0 59
          %4876 = vperm.xlu0 %4875, %v1276
          %v4877 = vpop.permute.xlu0 %4876
          %4879 = vset.pattern.permute.xlu0 59
          %4880 = vperm.xlu0 %4879, %v1281
          %v4881 = vpop.permute.xlu0 %4880
          %4883 = vset.pattern.permute.xlu0 59
          %4884 = vperm.xlu0 %4883, %v1286
          %v4885 = vpop.permute.xlu0 %4884
          %4887 = vset.pattern.permute.xlu0 59
          %4888 = vperm.xlu0 %4887, %v1291
          %v4889 = vpop.permute.xlu0 %4888
          %4891 = vset.pattern.permute.xlu0 59
          %4892 = vperm.xlu0 %4891, %v1296
          %v4893 = vpop.permute.xlu0 %4892
          %4895 = vset.pattern.permute.xlu0 59
          %4896 = vperm.xlu0 %4895, %v1301
          %v4897 = vpop.permute.xlu0 %4896
          %4899 = vset.pattern.permute.xlu0 59
          %4900 = vperm.xlu0 %4899, %v1306
          %v4901 = vpop.permute.xlu0 %4900
          %v4903 = vmul.f32 %v4873, %v4863
          %v4904 = vmul.f32 %v4877, %v4864
          %v4905 = vmul.f32 %v4881, %v4865
          %v4906 = vmul.f32 %v4885, %v4866
          %v4907 = vmul.f32 %v4889, %v4867
          %v4908 = vmul.f32 %v4893, %v4868
          %v4909 = vmul.f32 %v4897, %v4869
          %v4910 = vmul.f32 %v4901, %v4870
          %v4911 = vadd.f32 %v4855, %v4903
          %v4912 = vadd.f32 %v4856, %v4904
          %v4913 = vadd.f32 %v4857, %v4905
          %v4914 = vadd.f32 %v4858, %v4906
          %v4915 = vadd.f32 %v4859, %v4907
          %v4916 = vadd.f32 %v4860, %v4908
          %v4917 = vadd.f32 %v4861, %v4909
          %v4918 = vadd.f32 %v4862, %v4910
          %v4919 = vld [vmem:[%s1714] sm:$0xff]
          %v4920 = vld [vmem:[%s1714 + $0x8] sm:$0xff]
          %v4921 = vld [vmem:[%s1714 + $0x10] sm:$0xff]
          %v4922 = vld [vmem:[%s1714 + $0x18] sm:$0xff]
          %v4923 = vld [vmem:[%s1714 + $0x20] sm:$0xff]
          %v4924 = vld [vmem:[%s1714 + $0x28] sm:$0xff]
          %v4925 = vld [vmem:[%s1714 + $0x30] sm:$0xff]
          %v4926 = vld [vmem:[%s1714 + $0x38] sm:$0xff]
          %4927 = vset.pattern.permute.xlu0 60
          %4928 = vperm.xlu0 %4927, %v1271
          %v4929 = vpop.permute.xlu0 %4928
          %4931 = vset.pattern.permute.xlu0 60
          %4932 = vperm.xlu0 %4931, %v1276
          %v4933 = vpop.permute.xlu0 %4932
          %4935 = vset.pattern.permute.xlu0 60
          %4936 = vperm.xlu0 %4935, %v1281
          %v4937 = vpop.permute.xlu0 %4936
          %4939 = vset.pattern.permute.xlu0 60
          %4940 = vperm.xlu0 %4939, %v1286
          %v4941 = vpop.permute.xlu0 %4940
          %4943 = vset.pattern.permute.xlu0 60
          %4944 = vperm.xlu0 %4943, %v1291
          %v4945 = vpop.permute.xlu0 %4944
          %4947 = vset.pattern.permute.xlu0 60
          %4948 = vperm.xlu0 %4947, %v1296
          %v4949 = vpop.permute.xlu0 %4948
          %4951 = vset.pattern.permute.xlu0 60
          %4952 = vperm.xlu0 %4951, %v1301
          %v4953 = vpop.permute.xlu0 %4952
          %4955 = vset.pattern.permute.xlu0 60
          %4956 = vperm.xlu0 %4955, %v1306
          %v4957 = vpop.permute.xlu0 %4956
          %v4959 = vmul.f32 %v4929, %v4919
          %v4960 = vmul.f32 %v4933, %v4920
          %v4961 = vmul.f32 %v4937, %v4921
          %v4962 = vmul.f32 %v4941, %v4922
          %v4963 = vmul.f32 %v4945, %v4923
          %v4964 = vmul.f32 %v4949, %v4924
          %v4965 = vmul.f32 %v4953, %v4925
          %v4966 = vmul.f32 %v4957, %v4926
          %v4967 = vadd.f32 %v4911, %v4959
          %v4968 = vadd.f32 %v4912, %v4960
          %v4969 = vadd.f32 %v4913, %v4961
          %v4970 = vadd.f32 %v4914, %v4962
          %v4971 = vadd.f32 %v4915, %v4963
          %v4972 = vadd.f32 %v4916, %v4964
          %v4973 = vadd.f32 %v4917, %v4965
          %v4974 = vadd.f32 %v4918, %v4966
          %v4975 = vld [vmem:[%s2808] sm:$0xff]
          %v4976 = vld [vmem:[%s2808 + $0x8] sm:$0xff]
          %v4977 = vld [vmem:[%s2808 + $0x10] sm:$0xff]
          %v4978 = vld [vmem:[%s2808 + $0x18] sm:$0xff]
          %v4979 = vld [vmem:[%s2808 + $0x20] sm:$0xff]
          %v4980 = vld [vmem:[%s2808 + $0x28] sm:$0xff]
          %v4981 = vld [vmem:[%s2808 + $0x30] sm:$0xff]
          %v4982 = vld [vmem:[%s2808 + $0x38] sm:$0xff]
          %4983 = vset.pattern.permute.xlu0 61
          %4984 = vperm.xlu0 %4983, %v1271
          %v4985 = vpop.permute.xlu0 %4984
          %4987 = vset.pattern.permute.xlu0 61
          %4988 = vperm.xlu0 %4987, %v1276
          %v4989 = vpop.permute.xlu0 %4988
          %4991 = vset.pattern.permute.xlu0 61
          %4992 = vperm.xlu0 %4991, %v1281
          %v4993 = vpop.permute.xlu0 %4992
          %4995 = vset.pattern.permute.xlu0 61
          %4996 = vperm.xlu0 %4995, %v1286
          %v4997 = vpop.permute.xlu0 %4996
          %4999 = vset.pattern.permute.xlu0 61
          %5000 = vperm.xlu0 %4999, %v1291
          %v5001 = vpop.permute.xlu0 %5000
          %5003 = vset.pattern.permute.xlu0 61
          %5004 = vperm.xlu0 %5003, %v1296
          %v5005 = vpop.permute.xlu0 %5004
          %5007 = vset.pattern.permute.xlu0 61
          %5008 = vperm.xlu0 %5007, %v1301
          %v5009 = vpop.permute.xlu0 %5008
          %5011 = vset.pattern.permute.xlu0 61
          %5012 = vperm.xlu0 %5011, %v1306
          %v5013 = vpop.permute.xlu0 %5012
          %v5015 = vmul.f32 %v4985, %v4975
          %v5016 = vmul.f32 %v4989, %v4976
          %v5017 = vmul.f32 %v4993, %v4977
          %v5018 = vmul.f32 %v4997, %v4978
          %v5019 = vmul.f32 %v5001, %v4979
          %v5020 = vmul.f32 %v5005, %v4980
          %v5021 = vmul.f32 %v5009, %v4981
          %v5022 = vmul.f32 %v5013, %v4982
          %v5023 = vadd.f32 %v4967, %v5015
          %v5024 = vadd.f32 %v4968, %v5016
          %v5025 = vadd.f32 %v4969, %v5017
          %v5026 = vadd.f32 %v4970, %v5018
          %v5027 = vadd.f32 %v4971, %v5019
          %v5028 = vadd.f32 %v4972, %v5020
          %v5029 = vadd.f32 %v4973, %v5021
          %v5030 = vadd.f32 %v4974, %v5022
          %s5031 = sadd.s32 %s1034, 2112
          %s5032 = scalar_lea.vmem [#allocation2], %s5031
          %v5033 = vld [vmem:[%s5032] sm:$0xff]
          %v5034 = vld [vmem:[%s5032 + $0x8] sm:$0xff]
          %v5035 = vld [vmem:[%s5032 + $0x10] sm:$0xff]
          %v5036 = vld [vmem:[%s5032 + $0x18] sm:$0xff]
          %v5037 = vld [vmem:[%s5032 + $0x20] sm:$0xff]
          %v5038 = vld [vmem:[%s5032 + $0x28] sm:$0xff]
          %v5039 = vld [vmem:[%s5032 + $0x30] sm:$0xff]
          %v5040 = vld [vmem:[%s5032 + $0x38] sm:$0xff]
          %5041 = vset.pattern.permute.xlu0 62
          %5042 = vperm.xlu0 %5041, %v1271
          %v5043 = vpop.permute.xlu0 %5042
          %5045 = vset.pattern.permute.xlu0 62
          %5046 = vperm.xlu0 %5045, %v1276
          %v5047 = vpop.permute.xlu0 %5046
          %5049 = vset.pattern.permute.xlu0 62
          %5050 = vperm.xlu0 %5049, %v1281
          %v5051 = vpop.permute.xlu0 %5050
          %5053 = vset.pattern.permute.xlu0 62
          %5054 = vperm.xlu0 %5053, %v1286
          %v5055 = vpop.permute.xlu0 %5054
          %5057 = vset.pattern.permute.xlu0 62
          %5058 = vperm.xlu0 %5057, %v1291
          %v5059 = vpop.permute.xlu0 %5058
          %5061 = vset.pattern.permute.xlu0 62
          %5062 = vperm.xlu0 %5061, %v1296
          %v5063 = vpop.permute.xlu0 %5062
          %5065 = vset.pattern.permute.xlu0 62
          %5066 = vperm.xlu0 %5065, %v1301
          %v5067 = vpop.permute.xlu0 %5066
          %5069 = vset.pattern.permute.xlu0 62
          %5070 = vperm.xlu0 %5069, %v1306
          %v5071 = vpop.permute.xlu0 %5070
          %v5073 = vmul.f32 %v5043, %v5033
          %v5074 = vmul.f32 %v5047, %v5034
          %v5075 = vmul.f32 %v5051, %v5035
          %v5076 = vmul.f32 %v5055, %v5036
          %v5077 = vmul.f32 %v5059, %v5037
          %v5078 = vmul.f32 %v5063, %v5038
          %v5079 = vmul.f32 %v5067, %v5039
          %v5080 = vmul.f32 %v5071, %v5040
          %v5081 = vadd.f32 %v5023, %v5073
          %v5082 = vadd.f32 %v5024, %v5074
          %v5083 = vadd.f32 %v5025, %v5075
          %v5084 = vadd.f32 %v5026, %v5076
          %v5085 = vadd.f32 %v5027, %v5077
          %v5086 = vadd.f32 %v5028, %v5078
          %v5087 = vadd.f32 %v5029, %v5079
          %v5088 = vadd.f32 %v5030, %v5080
          %s5089 = scalar_lea.vmem [#allocation2], %s1772
          %v5090 = vld [vmem:[%s5089] sm:$0xff]
          %v5091 = vld [vmem:[%s5089 + $0x8] sm:$0xff]
          %v5092 = vld [vmem:[%s5089 + $0x10] sm:$0xff]
          %v5093 = vld [vmem:[%s5089 + $0x18] sm:$0xff]
          %v5094 = vld [vmem:[%s5089 + $0x20] sm:$0xff]
          %v5095 = vld [vmem:[%s5089 + $0x28] sm:$0xff]
          %v5096 = vld [vmem:[%s5089 + $0x30] sm:$0xff]
          %v5097 = vld [vmem:[%s5089 + $0x38] sm:$0xff]
          %5098 = vset.pattern.permute.xlu0 63
          %5099 = vperm.xlu0 %5098, %v1271
          %v5100 = vpop.permute.xlu0 %5099
          %5102 = vset.pattern.permute.xlu0 63
          %5103 = vperm.xlu0 %5102, %v1276
          %v5104 = vpop.permute.xlu0 %5103
          %5106 = vset.pattern.permute.xlu0 63
          %5107 = vperm.xlu0 %5106, %v1281
          %v5108 = vpop.permute.xlu0 %5107
          %5110 = vset.pattern.permute.xlu0 63
          %5111 = vperm.xlu0 %5110, %v1286
          %v5112 = vpop.permute.xlu0 %5111
          %5114 = vset.pattern.permute.xlu0 63
          %5115 = vperm.xlu0 %5114, %v1291
          %v5116 = vpop.permute.xlu0 %5115
          %5118 = vset.pattern.permute.xlu0 63
          %5119 = vperm.xlu0 %5118, %v1296
          %v5120 = vpop.permute.xlu0 %5119
          %5122 = vset.pattern.permute.xlu0 63
          %5123 = vperm.xlu0 %5122, %v1301
          %v5124 = vpop.permute.xlu0 %5123
          %5126 = vset.pattern.permute.xlu0 63
          %5127 = vperm.xlu0 %5126, %v1306
          %v5128 = vpop.permute.xlu0 %5127
          %v5130 = vmul.f32 %v5100, %v5090
          %v5131 = vmul.f32 %v5104, %v5091
          %v5132 = vmul.f32 %v5108, %v5092
          %v5133 = vmul.f32 %v5112, %v5093
          %v5134 = vmul.f32 %v5116, %v5094
          %v5135 = vmul.f32 %v5120, %v5095
          %v5136 = vmul.f32 %v5124, %v5096
          %v5137 = vmul.f32 %v5128, %v5097
          %v5138 = vadd.f32 %v5081, %v5130
          %v5139 = vadd.f32 %v5082, %v5131
          %v5140 = vadd.f32 %v5083, %v5132
          %v5141 = vadd.f32 %v5084, %v5133
          %v5142 = vadd.f32 %v5085, %v5134
          %v5143 = vadd.f32 %v5086, %v5135
          %v5144 = vadd.f32 %v5087, %v5136
          %v5145 = vadd.f32 %v5088, %v5137
          %v5146 = vld [vmem:[%s2866] sm:$0xff]
          %v5147 = vld [vmem:[%s2866 + $0x8] sm:$0xff]
          %v5148 = vld [vmem:[%s2866 + $0x10] sm:$0xff]
          %v5149 = vld [vmem:[%s2866 + $0x18] sm:$0xff]
          %v5150 = vld [vmem:[%s2866 + $0x20] sm:$0xff]
          %v5151 = vld [vmem:[%s2866 + $0x28] sm:$0xff]
          %v5152 = vld [vmem:[%s2866 + $0x30] sm:$0xff]
          %v5153 = vld [vmem:[%s2866 + $0x38] sm:$0xff]
          %5154 = vset.pattern.permute.xlu0 64
          %5155 = vperm.xlu0 %5154, %v1271
          %v5156 = vpop.permute.xlu0 %5155
          %5158 = vset.pattern.permute.xlu0 64
          %5159 = vperm.xlu0 %5158, %v1276
          %v5160 = vpop.permute.xlu0 %5159
          %5162 = vset.pattern.permute.xlu0 64
          %5163 = vperm.xlu0 %5162, %v1281
          %v5164 = vpop.permute.xlu0 %5163
          %5166 = vset.pattern.permute.xlu0 64
          %5167 = vperm.xlu0 %5166, %v1286
          %v5168 = vpop.permute.xlu0 %5167
          %5170 = vset.pattern.permute.xlu0 64
          %5171 = vperm.xlu0 %5170, %v1291
          %v5172 = vpop.permute.xlu0 %5171
          %5174 = vset.pattern.permute.xlu0 64
          %5175 = vperm.xlu0 %5174, %v1296
          %v5176 = vpop.permute.xlu0 %5175
          %5178 = vset.pattern.permute.xlu0 64
          %5179 = vperm.xlu0 %5178, %v1301
          %v5180 = vpop.permute.xlu0 %5179
          %5182 = vset.pattern.permute.xlu0 64
          %5183 = vperm.xlu0 %5182, %v1306
          %v5184 = vpop.permute.xlu0 %5183
          %v5186 = vmul.f32 %v5156, %v5146
          %v5187 = vmul.f32 %v5160, %v5147
          %v5188 = vmul.f32 %v5164, %v5148
          %v5189 = vmul.f32 %v5168, %v5149
          %v5190 = vmul.f32 %v5172, %v5150
          %v5191 = vmul.f32 %v5176, %v5151
          %v5192 = vmul.f32 %v5180, %v5152
          %v5193 = vmul.f32 %v5184, %v5153
          %v5194 = vadd.f32 %v5138, %v5186
          %v5195 = vadd.f32 %v5139, %v5187
          %v5196 = vadd.f32 %v5140, %v5188
          %v5197 = vadd.f32 %v5141, %v5189
          %v5198 = vadd.f32 %v5142, %v5190
          %v5199 = vadd.f32 %v5143, %v5191
          %v5200 = vadd.f32 %v5144, %v5192
          %v5201 = vadd.f32 %v5145, %v5193
          %v5202 = vld [vmem:[%s1774] sm:$0xff]
          %v5203 = vld [vmem:[%s1774 + $0x8] sm:$0xff]
          %v5204 = vld [vmem:[%s1774 + $0x10] sm:$0xff]
          %v5205 = vld [vmem:[%s1774 + $0x18] sm:$0xff]
          %v5206 = vld [vmem:[%s1774 + $0x20] sm:$0xff]
          %v5207 = vld [vmem:[%s1774 + $0x28] sm:$0xff]
          %v5208 = vld [vmem:[%s1774 + $0x30] sm:$0xff]
          %v5209 = vld [vmem:[%s1774 + $0x38] sm:$0xff]
          %5210 = vset.pattern.permute.xlu0 65
          %5211 = vperm.xlu0 %5210, %v1271
          %v5212 = vpop.permute.xlu0 %5211
          %5214 = vset.pattern.permute.xlu0 65
          %5215 = vperm.xlu0 %5214, %v1276
          %v5216 = vpop.permute.xlu0 %5215
          %5218 = vset.pattern.permute.xlu0 65
          %5219 = vperm.xlu0 %5218, %v1281
          %v5220 = vpop.permute.xlu0 %5219
          %5222 = vset.pattern.permute.xlu0 65
          %5223 = vperm.xlu0 %5222, %v1286
          %v5224 = vpop.permute.xlu0 %5223
          %5226 = vset.pattern.permute.xlu0 65
          %5227 = vperm.xlu0 %5226, %v1291
          %v5228 = vpop.permute.xlu0 %5227
          %5230 = vset.pattern.permute.xlu0 65
          %5231 = vperm.xlu0 %5230, %v1296
          %v5232 = vpop.permute.xlu0 %5231
          %5234 = vset.pattern.permute.xlu0 65
          %5235 = vperm.xlu0 %5234, %v1301
          %v5236 = vpop.permute.xlu0 %5235
          %5238 = vset.pattern.permute.xlu0 65
          %5239 = vperm.xlu0 %5238, %v1306
          %v5240 = vpop.permute.xlu0 %5239
          %v5242 = vmul.f32 %v5212, %v5202
          %v5243 = vmul.f32 %v5216, %v5203
          %v5244 = vmul.f32 %v5220, %v5204
          %v5245 = vmul.f32 %v5224, %v5205
          %v5246 = vmul.f32 %v5228, %v5206
          %v5247 = vmul.f32 %v5232, %v5207
          %v5248 = vmul.f32 %v5236, %v5208
          %v5249 = vmul.f32 %v5240, %v5209
          %v5250 = vadd.f32 %v5194, %v5242
          %v5251 = vadd.f32 %v5195, %v5243
          %v5252 = vadd.f32 %v5196, %v5244
          %v5253 = vadd.f32 %v5197, %v5245
          %v5254 = vadd.f32 %v5198, %v5246
          %v5255 = vadd.f32 %v5199, %v5247
          %v5256 = vadd.f32 %v5200, %v5248
          %v5257 = vadd.f32 %v5201, %v5249
          %v5258 = vld [vmem:[%s1832] sm:$0xff]
          %v5259 = vld [vmem:[%s1832 + $0x8] sm:$0xff]
          %v5260 = vld [vmem:[%s1832 + $0x10] sm:$0xff]
          %v5261 = vld [vmem:[%s1832 + $0x18] sm:$0xff]
          %v5262 = vld [vmem:[%s1832 + $0x20] sm:$0xff]
          %v5263 = vld [vmem:[%s1832 + $0x28] sm:$0xff]
          %v5264 = vld [vmem:[%s1832 + $0x30] sm:$0xff]
          %v5265 = vld [vmem:[%s1832 + $0x38] sm:$0xff]
          %5266 = vset.pattern.permute.xlu0 66
          %5267 = vperm.xlu0 %5266, %v1271
          %v5268 = vpop.permute.xlu0 %5267
          %5270 = vset.pattern.permute.xlu0 66
          %5271 = vperm.xlu0 %5270, %v1276
          %v5272 = vpop.permute.xlu0 %5271
          %5274 = vset.pattern.permute.xlu0 66
          %5275 = vperm.xlu0 %5274, %v1281
          %v5276 = vpop.permute.xlu0 %5275
          %5278 = vset.pattern.permute.xlu0 66
          %5279 = vperm.xlu0 %5278, %v1286
          %v5280 = vpop.permute.xlu0 %5279
          %5282 = vset.pattern.permute.xlu0 66
          %5283 = vperm.xlu0 %5282, %v1291
          %v5284 = vpop.permute.xlu0 %5283
          %5286 = vset.pattern.permute.xlu0 66
          %5287 = vperm.xlu0 %5286, %v1296
          %v5288 = vpop.permute.xlu0 %5287
          %5290 = vset.pattern.permute.xlu0 66
          %5291 = vperm.xlu0 %5290, %v1301
          %v5292 = vpop.permute.xlu0 %5291
          %5294 = vset.pattern.permute.xlu0 66
          %5295 = vperm.xlu0 %5294, %v1306
          %v5296 = vpop.permute.xlu0 %5295
          %v5298 = vmul.f32 %v5268, %v5258
          %v5299 = vmul.f32 %v5272, %v5259
          %v5300 = vmul.f32 %v5276, %v5260
          %v5301 = vmul.f32 %v5280, %v5261
          %v5302 = vmul.f32 %v5284, %v5262
          %v5303 = vmul.f32 %v5288, %v5263
          %v5304 = vmul.f32 %v5292, %v5264
          %v5305 = vmul.f32 %v5296, %v5265
          %v5306 = vadd.f32 %v5250, %v5298
          %v5307 = vadd.f32 %v5251, %v5299
          %v5308 = vadd.f32 %v5252, %v5300
          %v5309 = vadd.f32 %v5253, %v5301
          %v5310 = vadd.f32 %v5254, %v5302
          %v5311 = vadd.f32 %v5255, %v5303
          %v5312 = vadd.f32 %v5256, %v5304
          %v5313 = vadd.f32 %v5257, %v5305
          %v5314 = vld [vmem:[%s1890] sm:$0xff]
          %v5315 = vld [vmem:[%s1890 + $0x8] sm:$0xff]
          %v5316 = vld [vmem:[%s1890 + $0x10] sm:$0xff]
          %v5317 = vld [vmem:[%s1890 + $0x18] sm:$0xff]
          %v5318 = vld [vmem:[%s1890 + $0x20] sm:$0xff]
          %v5319 = vld [vmem:[%s1890 + $0x28] sm:$0xff]
          %v5320 = vld [vmem:[%s1890 + $0x30] sm:$0xff]
          %v5321 = vld [vmem:[%s1890 + $0x38] sm:$0xff]
          %5322 = vset.pattern.permute.xlu0 67
          %5323 = vperm.xlu0 %5322, %v1271
          %v5324 = vpop.permute.xlu0 %5323
          %5326 = vset.pattern.permute.xlu0 67
          %5327 = vperm.xlu0 %5326, %v1276
          %v5328 = vpop.permute.xlu0 %5327
          %5330 = vset.pattern.permute.xlu0 67
          %5331 = vperm.xlu0 %5330, %v1281
          %v5332 = vpop.permute.xlu0 %5331
          %5334 = vset.pattern.permute.xlu0 67
          %5335 = vperm.xlu0 %5334, %v1286
          %v5336 = vpop.permute.xlu0 %5335
          %5338 = vset.pattern.permute.xlu0 67
          %5339 = vperm.xlu0 %5338, %v1291
          %v5340 = vpop.permute.xlu0 %5339
          %5342 = vset.pattern.permute.xlu0 67
          %5343 = vperm.xlu0 %5342, %v1296
          %v5344 = vpop.permute.xlu0 %5343
          %5346 = vset.pattern.permute.xlu0 67
          %5347 = vperm.xlu0 %5346, %v1301
          %v5348 = vpop.permute.xlu0 %5347
          %5350 = vset.pattern.permute.xlu0 67
          %5351 = vperm.xlu0 %5350, %v1306
          %v5352 = vpop.permute.xlu0 %5351
          %v5354 = vmul.f32 %v5324, %v5314
          %v5355 = vmul.f32 %v5328, %v5315
          %v5356 = vmul.f32 %v5332, %v5316
          %v5357 = vmul.f32 %v5336, %v5317
          %v5358 = vmul.f32 %v5340, %v5318
          %v5359 = vmul.f32 %v5344, %v5319
          %v5360 = vmul.f32 %v5348, %v5320
          %v5361 = vmul.f32 %v5352, %v5321
          %v5362 = vadd.f32 %v5306, %v5354
          %v5363 = vadd.f32 %v5307, %v5355
          %v5364 = vadd.f32 %v5308, %v5356
          %v5365 = vadd.f32 %v5309, %v5357
          %v5366 = vadd.f32 %v5310, %v5358
          %v5367 = vadd.f32 %v5311, %v5359
          %v5368 = vadd.f32 %v5312, %v5360
          %v5369 = vadd.f32 %v5313, %v5361
          %v5370 = vld [vmem:[%s3092] sm:$0xff]
          %v5371 = vld [vmem:[%s3092 + $0x8] sm:$0xff]
          %v5372 = vld [vmem:[%s3092 + $0x10] sm:$0xff]
          %v5373 = vld [vmem:[%s3092 + $0x18] sm:$0xff]
          %v5374 = vld [vmem:[%s3092 + $0x20] sm:$0xff]
          %v5375 = vld [vmem:[%s3092 + $0x28] sm:$0xff]
          %v5376 = vld [vmem:[%s3092 + $0x30] sm:$0xff]
          %v5377 = vld [vmem:[%s3092 + $0x38] sm:$0xff]
          %5378 = vset.pattern.permute.xlu0 68
          %5379 = vperm.xlu0 %5378, %v1271
          %v5380 = vpop.permute.xlu0 %5379
          %5382 = vset.pattern.permute.xlu0 68
          %5383 = vperm.xlu0 %5382, %v1276
          %v5384 = vpop.permute.xlu0 %5383
          %5386 = vset.pattern.permute.xlu0 68
          %5387 = vperm.xlu0 %5386, %v1281
          %v5388 = vpop.permute.xlu0 %5387
          %5390 = vset.pattern.permute.xlu0 68
          %5391 = vperm.xlu0 %5390, %v1286
          %v5392 = vpop.permute.xlu0 %5391
          %5394 = vset.pattern.permute.xlu0 68
          %5395 = vperm.xlu0 %5394, %v1291
          %v5396 = vpop.permute.xlu0 %5395
          %5398 = vset.pattern.permute.xlu0 68
          %5399 = vperm.xlu0 %5398, %v1296
          %v5400 = vpop.permute.xlu0 %5399
          %5402 = vset.pattern.permute.xlu0 68
          %5403 = vperm.xlu0 %5402, %v1301
          %v5404 = vpop.permute.xlu0 %5403
          %5406 = vset.pattern.permute.xlu0 68
          %5407 = vperm.xlu0 %5406, %v1306
          %v5408 = vpop.permute.xlu0 %5407
          %v5410 = vmul.f32 %v5380, %v5370
          %v5411 = vmul.f32 %v5384, %v5371
          %v5412 = vmul.f32 %v5388, %v5372
          %v5413 = vmul.f32 %v5392, %v5373
          %v5414 = vmul.f32 %v5396, %v5374
          %v5415 = vmul.f32 %v5400, %v5375
          %v5416 = vmul.f32 %v5404, %v5376
          %v5417 = vmul.f32 %v5408, %v5377
          %v5418 = vadd.f32 %v5362, %v5410
          %v5419 = vadd.f32 %v5363, %v5411
          %v5420 = vadd.f32 %v5364, %v5412
          %v5421 = vadd.f32 %v5365, %v5413
          %v5422 = vadd.f32 %v5366, %v5414
          %v5423 = vadd.f32 %v5367, %v5415
          %v5424 = vadd.f32 %v5368, %v5416
          %v5425 = vadd.f32 %v5369, %v5417
          %s5426 = sadd.s32 %s1772, 2112
          %s5427 = scalar_lea.vmem [#allocation2], %s5426
          %v5428 = vld [vmem:[%s5427] sm:$0xff]
          %v5429 = vld [vmem:[%s5427 + $0x8] sm:$0xff]
          %v5430 = vld [vmem:[%s5427 + $0x10] sm:$0xff]
          %v5431 = vld [vmem:[%s5427 + $0x18] sm:$0xff]
          %v5432 = vld [vmem:[%s5427 + $0x20] sm:$0xff]
          %v5433 = vld [vmem:[%s5427 + $0x28] sm:$0xff]
          %v5434 = vld [vmem:[%s5427 + $0x30] sm:$0xff]
          %v5435 = vld [vmem:[%s5427 + $0x38] sm:$0xff]
          %5436 = vset.pattern.permute.xlu0 69
          %5437 = vperm.xlu0 %5436, %v1271
          %v5438 = vpop.permute.xlu0 %5437
          %5440 = vset.pattern.permute.xlu0 69
          %5441 = vperm.xlu0 %5440, %v1276
          %v5442 = vpop.permute.xlu0 %5441
          %5444 = vset.pattern.permute.xlu0 69
          %5445 = vperm.xlu0 %5444, %v1281
          %v5446 = vpop.permute.xlu0 %5445
          %5448 = vset.pattern.permute.xlu0 69
          %5449 = vperm.xlu0 %5448, %v1286
          %v5450 = vpop.permute.xlu0 %5449
          %5452 = vset.pattern.permute.xlu0 69
          %5453 = vperm.xlu0 %5452, %v1291
          %v5454 = vpop.permute.xlu0 %5453
          %5456 = vset.pattern.permute.xlu0 69
          %5457 = vperm.xlu0 %5456, %v1296
          %v5458 = vpop.permute.xlu0 %5457
          %5460 = vset.pattern.permute.xlu0 69
          %5461 = vperm.xlu0 %5460, %v1301
          %v5462 = vpop.permute.xlu0 %5461
          %5464 = vset.pattern.permute.xlu0 69
          %5465 = vperm.xlu0 %5464, %v1306
          %v5466 = vpop.permute.xlu0 %5465
          %v5468 = vmul.f32 %v5438, %v5428
          %v5469 = vmul.f32 %v5442, %v5429
          %v5470 = vmul.f32 %v5446, %v5430
          %v5471 = vmul.f32 %v5450, %v5431
          %v5472 = vmul.f32 %v5454, %v5432
          %v5473 = vmul.f32 %v5458, %v5433
          %v5474 = vmul.f32 %v5462, %v5434
          %v5475 = vmul.f32 %v5466, %v5435
          %v5476 = vadd.f32 %v5418, %v5468
          %v5477 = vadd.f32 %v5419, %v5469
          %v5478 = vadd.f32 %v5420, %v5470
          %v5479 = vadd.f32 %v5421, %v5471
          %v5480 = vadd.f32 %v5422, %v5472
          %v5481 = vadd.f32 %v5423, %v5473
          %v5482 = vadd.f32 %v5424, %v5474
          %v5483 = vadd.f32 %v5425, %v5475
          %s5484 = scalar_lea.vmem [#allocation2], %s3150
          %v5485 = vld [vmem:[%s5484] sm:$0xff]
          %v5486 = vld [vmem:[%s5484 + $0x8] sm:$0xff]
          %v5487 = vld [vmem:[%s5484 + $0x10] sm:$0xff]
          %v5488 = vld [vmem:[%s5484 + $0x18] sm:$0xff]
          %v5489 = vld [vmem:[%s5484 + $0x20] sm:$0xff]
          %v5490 = vld [vmem:[%s5484 + $0x28] sm:$0xff]
          %v5491 = vld [vmem:[%s5484 + $0x30] sm:$0xff]
          %v5492 = vld [vmem:[%s5484 + $0x38] sm:$0xff]
          %5493 = vset.pattern.permute.xlu0 70
          %5494 = vperm.xlu0 %5493, %v1271
          %v5495 = vpop.permute.xlu0 %5494
          %5497 = vset.pattern.permute.xlu0 70
          %5498 = vperm.xlu0 %5497, %v1276
          %v5499 = vpop.permute.xlu0 %5498
          %5501 = vset.pattern.permute.xlu0 70
          %5502 = vperm.xlu0 %5501, %v1281
          %v5503 = vpop.permute.xlu0 %5502
          %5505 = vset.pattern.permute.xlu0 70
          %5506 = vperm.xlu0 %5505, %v1286
          %v5507 = vpop.permute.xlu0 %5506
          %5509 = vset.pattern.permute.xlu0 70
          %5510 = vperm.xlu0 %5509, %v1291
          %v5511 = vpop.permute.xlu0 %5510
          %5513 = vset.pattern.permute.xlu0 70
          %5514 = vperm.xlu0 %5513, %v1296
          %v5515 = vpop.permute.xlu0 %5514
          %5517 = vset.pattern.permute.xlu0 70
          %5518 = vperm.xlu0 %5517, %v1301
          %v5519 = vpop.permute.xlu0 %5518
          %5521 = vset.pattern.permute.xlu0 70
          %5522 = vperm.xlu0 %5521, %v1306
          %v5523 = vpop.permute.xlu0 %5522
          %v5525 = vmul.f32 %v5495, %v5485
          %v5526 = vmul.f32 %v5499, %v5486
          %v5527 = vmul.f32 %v5503, %v5487
          %v5528 = vmul.f32 %v5507, %v5488
          %v5529 = vmul.f32 %v5511, %v5489
          %v5530 = vmul.f32 %v5515, %v5490
          %v5531 = vmul.f32 %v5519, %v5491
          %v5532 = vmul.f32 %v5523, %v5492
          %v5533 = vadd.f32 %v5476, %v5525
          %v5534 = vadd.f32 %v5477, %v5526
          %v5535 = vadd.f32 %v5478, %v5527
          %v5536 = vadd.f32 %v5479, %v5528
          %v5537 = vadd.f32 %v5480, %v5529
          %v5538 = vadd.f32 %v5481, %v5530
          %v5539 = vadd.f32 %v5482, %v5531
          %v5540 = vadd.f32 %v5483, %v5532
          %v5541 = vld [vmem:[%s3152] sm:$0xff]
          %v5542 = vld [vmem:[%s3152 + $0x8] sm:$0xff]
          %v5543 = vld [vmem:[%s3152 + $0x10] sm:$0xff]
          %v5544 = vld [vmem:[%s3152 + $0x18] sm:$0xff]
          %v5545 = vld [vmem:[%s3152 + $0x20] sm:$0xff]
          %v5546 = vld [vmem:[%s3152 + $0x28] sm:$0xff]
          %v5547 = vld [vmem:[%s3152 + $0x30] sm:$0xff]
          %v5548 = vld [vmem:[%s3152 + $0x38] sm:$0xff]
          %5549 = vset.pattern.permute.xlu0 71
          %5550 = vperm.xlu0 %5549, %v1271
          %v5551 = vpop.permute.xlu0 %5550
          %5553 = vset.pattern.permute.xlu0 71
          %5554 = vperm.xlu0 %5553, %v1276
          %v5555 = vpop.permute.xlu0 %5554
          %5557 = vset.pattern.permute.xlu0 71
          %5558 = vperm.xlu0 %5557, %v1281
          %v5559 = vpop.permute.xlu0 %5558
          %5561 = vset.pattern.permute.xlu0 71
          %5562 = vperm.xlu0 %5561, %v1286
          %v5563 = vpop.permute.xlu0 %5562
          %5565 = vset.pattern.permute.xlu0 71
          %5566 = vperm.xlu0 %5565, %v1291
          %v5567 = vpop.permute.xlu0 %5566
          %5569 = vset.pattern.permute.xlu0 71
          %5570 = vperm.xlu0 %5569, %v1296
          %v5571 = vpop.permute.xlu0 %5570
          %5573 = vset.pattern.permute.xlu0 71
          %5574 = vperm.xlu0 %5573, %v1301
          %v5575 = vpop.permute.xlu0 %5574
          %5577 = vset.pattern.permute.xlu0 71
          %5578 = vperm.xlu0 %5577, %v1306
          %v5579 = vpop.permute.xlu0 %5578
          %v5581 = vmul.f32 %v5551, %v5541
          %v5582 = vmul.f32 %v5555, %v5542
          %v5583 = vmul.f32 %v5559, %v5543
          %v5584 = vmul.f32 %v5563, %v5544
          %v5585 = vmul.f32 %v5567, %v5545
          %v5586 = vmul.f32 %v5571, %v5546
          %v5587 = vmul.f32 %v5575, %v5547
          %v5588 = vmul.f32 %v5579, %v5548
          %v5589 = vadd.f32 %v5533, %v5581
          %v5590 = vadd.f32 %v5534, %v5582
          %v5591 = vadd.f32 %v5535, %v5583
          %v5592 = vadd.f32 %v5536, %v5584
          %v5593 = vadd.f32 %v5537, %v5585
          %v5594 = vadd.f32 %v5538, %v5586
          %v5595 = vadd.f32 %v5539, %v5587
          %v5596 = vadd.f32 %v5540, %v5588
          %v5597 = vld [vmem:[%s3210] sm:$0xff]
          %v5598 = vld [vmem:[%s3210 + $0x8] sm:$0xff]
          %v5599 = vld [vmem:[%s3210 + $0x10] sm:$0xff]
          %v5600 = vld [vmem:[%s3210 + $0x18] sm:$0xff]
          %v5601 = vld [vmem:[%s3210 + $0x20] sm:$0xff]
          %v5602 = vld [vmem:[%s3210 + $0x28] sm:$0xff]
          %v5603 = vld [vmem:[%s3210 + $0x30] sm:$0xff]
          %v5604 = vld [vmem:[%s3210 + $0x38] sm:$0xff]
          %5605 = vset.pattern.permute.xlu0 72
          %5606 = vperm.xlu0 %5605, %v1271
          %v5607 = vpop.permute.xlu0 %5606
          %5609 = vset.pattern.permute.xlu0 72
          %5610 = vperm.xlu0 %5609, %v1276
          %v5611 = vpop.permute.xlu0 %5610
          %5613 = vset.pattern.permute.xlu0 72
          %5614 = vperm.xlu0 %5613, %v1281
          %v5615 = vpop.permute.xlu0 %5614
          %5617 = vset.pattern.permute.xlu0 72
          %5618 = vperm.xlu0 %5617, %v1286
          %v5619 = vpop.permute.xlu0 %5618
          %5621 = vset.pattern.permute.xlu0 72
          %5622 = vperm.xlu0 %5621, %v1291
          %v5623 = vpop.permute.xlu0 %5622
          %5625 = vset.pattern.permute.xlu0 72
          %5626 = vperm.xlu0 %5625, %v1296
          %v5627 = vpop.permute.xlu0 %5626
          %5629 = vset.pattern.permute.xlu0 72
          %5630 = vperm.xlu0 %5629, %v1301
          %v5631 = vpop.permute.xlu0 %5630
          %5633 = vset.pattern.permute.xlu0 72
          %5634 = vperm.xlu0 %5633, %v1306
          %v5635 = vpop.permute.xlu0 %5634
          %v5637 = vmul.f32 %v5607, %v5597
          %v5638 = vmul.f32 %v5611, %v5598
          %v5639 = vmul.f32 %v5615, %v5599
          %v5640 = vmul.f32 %v5619, %v5600
          %v5641 = vmul.f32 %v5623, %v5601
          %v5642 = vmul.f32 %v5627, %v5602
          %v5643 = vmul.f32 %v5631, %v5603
          %v5644 = vmul.f32 %v5635, %v5604
          %v5645 = vadd.f32 %v5589, %v5637
          %v5646 = vadd.f32 %v5590, %v5638
          %v5647 = vadd.f32 %v5591, %v5639
          %v5648 = vadd.f32 %v5592, %v5640
          %v5649 = vadd.f32 %v5593, %v5641
          %v5650 = vadd.f32 %v5594, %v5642
          %v5651 = vadd.f32 %v5595, %v5643
          %v5652 = vadd.f32 %v5596, %v5644
          %v5653 = vld [vmem:[%s3268] sm:$0xff]
          %v5654 = vld [vmem:[%s3268 + $0x8] sm:$0xff]
          %v5655 = vld [vmem:[%s3268 + $0x10] sm:$0xff]
          %v5656 = vld [vmem:[%s3268 + $0x18] sm:$0xff]
          %v5657 = vld [vmem:[%s3268 + $0x20] sm:$0xff]
          %v5658 = vld [vmem:[%s3268 + $0x28] sm:$0xff]
          %v5659 = vld [vmem:[%s3268 + $0x30] sm:$0xff]
          %v5660 = vld [vmem:[%s3268 + $0x38] sm:$0xff]
          %5661 = vset.pattern.permute.xlu0 73
          %5662 = vperm.xlu0 %5661, %v1271
          %v5663 = vpop.permute.xlu0 %5662
          %5665 = vset.pattern.permute.xlu0 73
          %5666 = vperm.xlu0 %5665, %v1276
          %v5667 = vpop.permute.xlu0 %5666
          %5669 = vset.pattern.permute.xlu0 73
          %5670 = vperm.xlu0 %5669, %v1281
          %v5671 = vpop.permute.xlu0 %5670
          %5673 = vset.pattern.permute.xlu0 73
          %5674 = vperm.xlu0 %5673, %v1286
          %v5675 = vpop.permute.xlu0 %5674
          %5677 = vset.pattern.permute.xlu0 73
          %5678 = vperm.xlu0 %5677, %v1291
          %v5679 = vpop.permute.xlu0 %5678
          %5681 = vset.pattern.permute.xlu0 73
          %5682 = vperm.xlu0 %5681, %v1296
          %v5683 = vpop.permute.xlu0 %5682
          %5685 = vset.pattern.permute.xlu0 73
          %5686 = vperm.xlu0 %5685, %v1301
          %v5687 = vpop.permute.xlu0 %5686
          %5689 = vset.pattern.permute.xlu0 73
          %5690 = vperm.xlu0 %5689, %v1306
          %v5691 = vpop.permute.xlu0 %5690
          %v5693 = vmul.f32 %v5663, %v5653
          %v5694 = vmul.f32 %v5667, %v5654
          %v5695 = vmul.f32 %v5671, %v5655
          %v5696 = vmul.f32 %v5675, %v5656
          %v5697 = vmul.f32 %v5679, %v5657
          %v5698 = vmul.f32 %v5683, %v5658
          %v5699 = vmul.f32 %v5687, %v5659
          %v5700 = vmul.f32 %v5691, %v5660
          %v5701 = vadd.f32 %v5645, %v5693
          %v5702 = vadd.f32 %v5646, %v5694
          %v5703 = vadd.f32 %v5647, %v5695
          %v5704 = vadd.f32 %v5648, %v5696
          %v5705 = vadd.f32 %v5649, %v5697
          %v5706 = vadd.f32 %v5650, %v5698
          %v5707 = vadd.f32 %v5651, %v5699
          %v5708 = vadd.f32 %v5652, %v5700
          %v5709 = vld [vmem:[%s3326] sm:$0xff]
          %v5710 = vld [vmem:[%s3326 + $0x8] sm:$0xff]
          %v5711 = vld [vmem:[%s3326 + $0x10] sm:$0xff]
          %v5712 = vld [vmem:[%s3326 + $0x18] sm:$0xff]
          %v5713 = vld [vmem:[%s3326 + $0x20] sm:$0xff]
          %v5714 = vld [vmem:[%s3326 + $0x28] sm:$0xff]
          %v5715 = vld [vmem:[%s3326 + $0x30] sm:$0xff]
          %v5716 = vld [vmem:[%s3326 + $0x38] sm:$0xff]
          %5717 = vset.pattern.permute.xlu0 74
          %5718 = vperm.xlu0 %5717, %v1271
          %v5719 = vpop.permute.xlu0 %5718
          %5721 = vset.pattern.permute.xlu0 74
          %5722 = vperm.xlu0 %5721, %v1276
          %v5723 = vpop.permute.xlu0 %5722
          %5725 = vset.pattern.permute.xlu0 74
          %5726 = vperm.xlu0 %5725, %v1281
          %v5727 = vpop.permute.xlu0 %5726
          %5729 = vset.pattern.permute.xlu0 74
          %5730 = vperm.xlu0 %5729, %v1286
          %v5731 = vpop.permute.xlu0 %5730
          %5733 = vset.pattern.permute.xlu0 74
          %5734 = vperm.xlu0 %5733, %v1291
          %v5735 = vpop.permute.xlu0 %5734
          %5737 = vset.pattern.permute.xlu0 74
          %5738 = vperm.xlu0 %5737, %v1296
          %v5739 = vpop.permute.xlu0 %5738
          %5741 = vset.pattern.permute.xlu0 74
          %5742 = vperm.xlu0 %5741, %v1301
          %v5743 = vpop.permute.xlu0 %5742
          %5745 = vset.pattern.permute.xlu0 74
          %5746 = vperm.xlu0 %5745, %v1306
          %v5747 = vpop.permute.xlu0 %5746
          %v5749 = vmul.f32 %v5719, %v5709
          %v5750 = vmul.f32 %v5723, %v5710
          %v5751 = vmul.f32 %v5727, %v5711
          %v5752 = vmul.f32 %v5731, %v5712
          %v5753 = vmul.f32 %v5735, %v5713
          %v5754 = vmul.f32 %v5739, %v5714
          %v5755 = vmul.f32 %v5743, %v5715
          %v5756 = vmul.f32 %v5747, %v5716
          %v5757 = vadd.f32 %v5701, %v5749
          %v5758 = vadd.f32 %v5702, %v5750
          %v5759 = vadd.f32 %v5703, %v5751
          %v5760 = vadd.f32 %v5704, %v5752
          %v5761 = vadd.f32 %v5705, %v5753
          %v5762 = vadd.f32 %v5706, %v5754
          %v5763 = vadd.f32 %v5707, %v5755
          %v5764 = vadd.f32 %v5708, %v5756
          %v5765 = vld [vmem:[%s3384] sm:$0xff]
          %v5766 = vld [vmem:[%s3384 + $0x8] sm:$0xff]
          %v5767 = vld [vmem:[%s3384 + $0x10] sm:$0xff]
          %v5768 = vld [vmem:[%s3384 + $0x18] sm:$0xff]
          %v5769 = vld [vmem:[%s3384 + $0x20] sm:$0xff]
          %v5770 = vld [vmem:[%s3384 + $0x28] sm:$0xff]
          %v5771 = vld [vmem:[%s3384 + $0x30] sm:$0xff]
          %v5772 = vld [vmem:[%s3384 + $0x38] sm:$0xff]
          %5773 = vset.pattern.permute.xlu0 75
          %5774 = vperm.xlu0 %5773, %v1271
          %v5775 = vpop.permute.xlu0 %5774
          %5777 = vset.pattern.permute.xlu0 75
          %5778 = vperm.xlu0 %5777, %v1276
          %v5779 = vpop.permute.xlu0 %5778
          %5781 = vset.pattern.permute.xlu0 75
          %5782 = vperm.xlu0 %5781, %v1281
          %v5783 = vpop.permute.xlu0 %5782
          %5785 = vset.pattern.permute.xlu0 75
          %5786 = vperm.xlu0 %5785, %v1286
          %v5787 = vpop.permute.xlu0 %5786
          %5789 = vset.pattern.permute.xlu0 75
          %5790 = vperm.xlu0 %5789, %v1291
          %v5791 = vpop.permute.xlu0 %5790
          %5793 = vset.pattern.permute.xlu0 75
          %5794 = vperm.xlu0 %5793, %v1296
          %v5795 = vpop.permute.xlu0 %5794
          %5797 = vset.pattern.permute.xlu0 75
          %5798 = vperm.xlu0 %5797, %v1301
          %v5799 = vpop.permute.xlu0 %5798
          %5801 = vset.pattern.permute.xlu0 75
          %5802 = vperm.xlu0 %5801, %v1306
          %v5803 = vpop.permute.xlu0 %5802
          %v5805 = vmul.f32 %v5775, %v5765
          %v5806 = vmul.f32 %v5779, %v5766
          %v5807 = vmul.f32 %v5783, %v5767
          %v5808 = vmul.f32 %v5787, %v5768
          %v5809 = vmul.f32 %v5791, %v5769
          %v5810 = vmul.f32 %v5795, %v5770
          %v5811 = vmul.f32 %v5799, %v5771
          %v5812 = vmul.f32 %v5803, %v5772
          %v5813 = vadd.f32 %v5757, %v5805
          %v5814 = vadd.f32 %v5758, %v5806
          %v5815 = vadd.f32 %v5759, %v5807
          %v5816 = vadd.f32 %v5760, %v5808
          %v5817 = vadd.f32 %v5761, %v5809
          %v5818 = vadd.f32 %v5762, %v5810
          %v5819 = vadd.f32 %v5763, %v5811
          %v5820 = vadd.f32 %v5764, %v5812
          %s5821 = sadd.s32 %s3150, 2112
          %s5822 = scalar_lea.vmem [#allocation2], %s5821
          %v5823 = vld [vmem:[%s5822] sm:$0xff]
          %v5824 = vld [vmem:[%s5822 + $0x8] sm:$0xff]
          %v5825 = vld [vmem:[%s5822 + $0x10] sm:$0xff]
          %v5826 = vld [vmem:[%s5822 + $0x18] sm:$0xff]
          %v5827 = vld [vmem:[%s5822 + $0x20] sm:$0xff]
          %v5828 = vld [vmem:[%s5822 + $0x28] sm:$0xff]
          %v5829 = vld [vmem:[%s5822 + $0x30] sm:$0xff]
          %v5830 = vld [vmem:[%s5822 + $0x38] sm:$0xff]
          %5831 = vset.pattern.permute.xlu0 76
          %5832 = vperm.xlu0 %5831, %v1271
          %v5833 = vpop.permute.xlu0 %5832
          %5835 = vset.pattern.permute.xlu0 76
          %5836 = vperm.xlu0 %5835, %v1276
          %v5837 = vpop.permute.xlu0 %5836
          %5839 = vset.pattern.permute.xlu0 76
          %5840 = vperm.xlu0 %5839, %v1281
          %v5841 = vpop.permute.xlu0 %5840
          %5843 = vset.pattern.permute.xlu0 76
          %5844 = vperm.xlu0 %5843, %v1286
          %v5845 = vpop.permute.xlu0 %5844
          %5847 = vset.pattern.permute.xlu0 76
          %5848 = vperm.xlu0 %5847, %v1291
          %v5849 = vpop.permute.xlu0 %5848
          %5851 = vset.pattern.permute.xlu0 76
          %5852 = vperm.xlu0 %5851, %v1296
          %v5853 = vpop.permute.xlu0 %5852
          %5855 = vset.pattern.permute.xlu0 76
          %5856 = vperm.xlu0 %5855, %v1301
          %v5857 = vpop.permute.xlu0 %5856
          %5859 = vset.pattern.permute.xlu0 76
          %5860 = vperm.xlu0 %5859, %v1306
          %v5861 = vpop.permute.xlu0 %5860
          %v5863 = vmul.f32 %v5833, %v5823
          %v5864 = vmul.f32 %v5837, %v5824
          %v5865 = vmul.f32 %v5841, %v5825
          %v5866 = vmul.f32 %v5845, %v5826
          %v5867 = vmul.f32 %v5849, %v5827
          %v5868 = vmul.f32 %v5853, %v5828
          %v5869 = vmul.f32 %v5857, %v5829
          %v5870 = vmul.f32 %v5861, %v5830
          %v5871 = vadd.f32 %v5813, %v5863
          %v5872 = vadd.f32 %v5814, %v5864
          %v5873 = vadd.f32 %v5815, %v5865
          %v5874 = vadd.f32 %v5816, %v5866
          %v5875 = vadd.f32 %v5817, %v5867
          %v5876 = vadd.f32 %v5818, %v5868
          %v5877 = vadd.f32 %v5819, %v5869
          %v5878 = vadd.f32 %v5820, %v5870
          %s5879 = sadd.s32 %s1032, 6
          %s5880 = smul.u32 %s5879, 16
          %s5881 = scalar_lea.vmem [#allocation2], %s5880
          %v5882 = vld [vmem:[%s5881] sm:$0xff]
          %v5883 = vld [vmem:[%s5881 + $0x8] sm:$0xff]
          %v5884 = vld [vmem:[%s5881 + $0x10] sm:$0xff]
          %v5885 = vld [vmem:[%s5881 + $0x18] sm:$0xff]
          %v5886 = vld [vmem:[%s5881 + $0x20] sm:$0xff]
          %v5887 = vld [vmem:[%s5881 + $0x28] sm:$0xff]
          %v5888 = vld [vmem:[%s5881 + $0x30] sm:$0xff]
          %v5889 = vld [vmem:[%s5881 + $0x38] sm:$0xff]
          %5890 = vset.pattern.permute.xlu0 77
          %5891 = vperm.xlu0 %5890, %v1271
          %v5892 = vpop.permute.xlu0 %5891
          %5894 = vset.pattern.permute.xlu0 77
          %5895 = vperm.xlu0 %5894, %v1276
          %v5896 = vpop.permute.xlu0 %5895
          %5898 = vset.pattern.permute.xlu0 77
          %5899 = vperm.xlu0 %5898, %v1281
          %v5900 = vpop.permute.xlu0 %5899
          %5902 = vset.pattern.permute.xlu0 77
          %5903 = vperm.xlu0 %5902, %v1286
          %v5904 = vpop.permute.xlu0 %5903
          %5906 = vset.pattern.permute.xlu0 77
          %5907 = vperm.xlu0 %5906, %v1291
          %v5908 = vpop.permute.xlu0 %5907
          %5910 = vset.pattern.permute.xlu0 77
          %5911 = vperm.xlu0 %5910, %v1296
          %v5912 = vpop.permute.xlu0 %5911
          %5914 = vset.pattern.permute.xlu0 77
          %5915 = vperm.xlu0 %5914, %v1301
          %v5916 = vpop.permute.xlu0 %5915
          %5918 = vset.pattern.permute.xlu0 77
          %5919 = vperm.xlu0 %5918, %v1306
          %v5920 = vpop.permute.xlu0 %5919
          %v5922 = vmul.f32 %v5892, %v5882
          %v5923 = vmul.f32 %v5896, %v5883
          %v5924 = vmul.f32 %v5900, %v5884
          %v5925 = vmul.f32 %v5904, %v5885
          %v5926 = vmul.f32 %v5908, %v5886
          %v5927 = vmul.f32 %v5912, %v5887
          %v5928 = vmul.f32 %v5916, %v5888
          %v5929 = vmul.f32 %v5920, %v5889
          %v5930 = vadd.f32 %v5871, %v5922
          %v5931 = vadd.f32 %v5872, %v5923
          %v5932 = vadd.f32 %v5873, %v5924
          %v5933 = vadd.f32 %v5874, %v5925
          %v5934 = vadd.f32 %v5875, %v5926
          %v5935 = vadd.f32 %v5876, %v5927
          %v5936 = vadd.f32 %v5877, %v5928
          %v5937 = vadd.f32 %v5878, %v5929
          %s5938 = sadd.s32 %s5880, 352
          %s5939 = scalar_lea.vmem [#allocation2], %s5938
          %v5940 = vld [vmem:[%s5939] sm:$0xff]
          %v5941 = vld [vmem:[%s5939 + $0x8] sm:$0xff]
          %v5942 = vld [vmem:[%s5939 + $0x10] sm:$0xff]
          %v5943 = vld [vmem:[%s5939 + $0x18] sm:$0xff]
          %v5944 = vld [vmem:[%s5939 + $0x20] sm:$0xff]
          %v5945 = vld [vmem:[%s5939 + $0x28] sm:$0xff]
          %v5946 = vld [vmem:[%s5939 + $0x30] sm:$0xff]
          %v5947 = vld [vmem:[%s5939 + $0x38] sm:$0xff]
          %5948 = vset.pattern.permute.xlu0 78
          %5949 = vperm.xlu0 %5948, %v1271
          %v5950 = vpop.permute.xlu0 %5949
          %5952 = vset.pattern.permute.xlu0 78
          %5953 = vperm.xlu0 %5952, %v1276
          %v5954 = vpop.permute.xlu0 %5953
          %5956 = vset.pattern.permute.xlu0 78
          %5957 = vperm.xlu0 %5956, %v1281
          %v5958 = vpop.permute.xlu0 %5957
          %5960 = vset.pattern.permute.xlu0 78
          %5961 = vperm.xlu0 %5960, %v1286
          %v5962 = vpop.permute.xlu0 %5961
          %5964 = vset.pattern.permute.xlu0 78
          %5965 = vperm.xlu0 %5964, %v1291
          %v5966 = vpop.permute.xlu0 %5965
          %5968 = vset.pattern.permute.xlu0 78
          %5969 = vperm.xlu0 %5968, %v1296
          %v5970 = vpop.permute.xlu0 %5969
          %5972 = vset.pattern.permute.xlu0 78
          %5973 = vperm.xlu0 %5972, %v1301
          %v5974 = vpop.permute.xlu0 %5973
          %5976 = vset.pattern.permute.xlu0 78
          %5977 = vperm.xlu0 %5976, %v1306
          %v5978 = vpop.permute.xlu0 %5977
          %v5980 = vmul.f32 %v5950, %v5940
          %v5981 = vmul.f32 %v5954, %v5941
          %v5982 = vmul.f32 %v5958, %v5942
          %v5983 = vmul.f32 %v5962, %v5943
          %v5984 = vmul.f32 %v5966, %v5944
          %v5985 = vmul.f32 %v5970, %v5945
          %v5986 = vmul.f32 %v5974, %v5946
          %v5987 = vmul.f32 %v5978, %v5947
          %v5988 = vadd.f32 %v5930, %v5980
          %v5989 = vadd.f32 %v5931, %v5981
          %v5990 = vadd.f32 %v5932, %v5982
          %v5991 = vadd.f32 %v5933, %v5983
          %v5992 = vadd.f32 %v5934, %v5984
          %v5993 = vadd.f32 %v5935, %v5985
          %v5994 = vadd.f32 %v5936, %v5986
          %v5995 = vadd.f32 %v5937, %v5987
          %s5996 = sadd.s32 %s5880, 704
          %s5997 = scalar_lea.vmem [#allocation2], %s5996
          %v5998 = vld [vmem:[%s5997] sm:$0xff]
          %v5999 = vld [vmem:[%s5997 + $0x8] sm:$0xff]
          %v6000 = vld [vmem:[%s5997 + $0x10] sm:$0xff]
          %v6001 = vld [vmem:[%s5997 + $0x18] sm:$0xff]
          %v6002 = vld [vmem:[%s5997 + $0x20] sm:$0xff]
          %v6003 = vld [vmem:[%s5997 + $0x28] sm:$0xff]
          %v6004 = vld [vmem:[%s5997 + $0x30] sm:$0xff]
          %v6005 = vld [vmem:[%s5997 + $0x38] sm:$0xff]
          %6006 = vset.pattern.permute.xlu0 79
          %6007 = vperm.xlu0 %6006, %v1271
          %v6008 = vpop.permute.xlu0 %6007
          %6010 = vset.pattern.permute.xlu0 79
          %6011 = vperm.xlu0 %6010, %v1276
          %v6012 = vpop.permute.xlu0 %6011
          %6014 = vset.pattern.permute.xlu0 79
          %6015 = vperm.xlu0 %6014, %v1281
          %v6016 = vpop.permute.xlu0 %6015
          %6018 = vset.pattern.permute.xlu0 79
          %6019 = vperm.xlu0 %6018, %v1286
          %v6020 = vpop.permute.xlu0 %6019
          %6022 = vset.pattern.permute.xlu0 79
          %6023 = vperm.xlu0 %6022, %v1291
          %v6024 = vpop.permute.xlu0 %6023
          %6026 = vset.pattern.permute.xlu0 79
          %6027 = vperm.xlu0 %6026, %v1296
          %v6028 = vpop.permute.xlu0 %6027
          %6030 = vset.pattern.permute.xlu0 79
          %6031 = vperm.xlu0 %6030, %v1301
          %v6032 = vpop.permute.xlu0 %6031
          %6034 = vset.pattern.permute.xlu0 79
          %6035 = vperm.xlu0 %6034, %v1306
          %v6036 = vpop.permute.xlu0 %6035
          %v6038 = vmul.f32 %v6008, %v5998
          %v6039 = vmul.f32 %v6012, %v5999
          %v6040 = vmul.f32 %v6016, %v6000
          %v6041 = vmul.f32 %v6020, %v6001
          %v6042 = vmul.f32 %v6024, %v6002
          %v6043 = vmul.f32 %v6028, %v6003
          %v6044 = vmul.f32 %v6032, %v6004
          %v6045 = vmul.f32 %v6036, %v6005
          %v6046 = vadd.f32 %v5988, %v6038
          %v6047 = vadd.f32 %v5989, %v6039
          %v6048 = vadd.f32 %v5990, %v6040
          %v6049 = vadd.f32 %v5991, %v6041
          %v6050 = vadd.f32 %v5992, %v6042
          %v6051 = vadd.f32 %v5993, %v6043
          %v6052 = vadd.f32 %v5994, %v6044
          %v6053 = vadd.f32 %v5995, %v6045
          %s6054 = sadd.s32 %s5880, 1056
          %s6055 = scalar_lea.vmem [#allocation2], %s6054
          %v6056 = vld [vmem:[%s6055] sm:$0xff]
          %v6057 = vld [vmem:[%s6055 + $0x8] sm:$0xff]
          %v6058 = vld [vmem:[%s6055 + $0x10] sm:$0xff]
          %v6059 = vld [vmem:[%s6055 + $0x18] sm:$0xff]
          %v6060 = vld [vmem:[%s6055 + $0x20] sm:$0xff]
          %v6061 = vld [vmem:[%s6055 + $0x28] sm:$0xff]
          %v6062 = vld [vmem:[%s6055 + $0x30] sm:$0xff]
          %v6063 = vld [vmem:[%s6055 + $0x38] sm:$0xff]
          %6064 = vset.pattern.permute.xlu0 80
          %6065 = vperm.xlu0 %6064, %v1271
          %v6066 = vpop.permute.xlu0 %6065
          %6068 = vset.pattern.permute.xlu0 80
          %6069 = vperm.xlu0 %6068, %v1276
          %v6070 = vpop.permute.xlu0 %6069
          %6072 = vset.pattern.permute.xlu0 80
          %6073 = vperm.xlu0 %6072, %v1281
          %v6074 = vpop.permute.xlu0 %6073
          %6076 = vset.pattern.permute.xlu0 80
          %6077 = vperm.xlu0 %6076, %v1286
          %v6078 = vpop.permute.xlu0 %6077
          %6080 = vset.pattern.permute.xlu0 80
          %6081 = vperm.xlu0 %6080, %v1291
          %v6082 = vpop.permute.xlu0 %6081
          %6084 = vset.pattern.permute.xlu0 80
          %6085 = vperm.xlu0 %6084, %v1296
          %v6086 = vpop.permute.xlu0 %6085
          %6088 = vset.pattern.permute.xlu0 80
          %6089 = vperm.xlu0 %6088, %v1301
          %v6090 = vpop.permute.xlu0 %6089
          %6092 = vset.pattern.permute.xlu0 80
          %6093 = vperm.xlu0 %6092, %v1306
          %v6094 = vpop.permute.xlu0 %6093
          %v6096 = vmul.f32 %v6066, %v6056
          %v6097 = vmul.f32 %v6070, %v6057
          %v6098 = vmul.f32 %v6074, %v6058
          %v6099 = vmul.f32 %v6078, %v6059
          %v6100 = vmul.f32 %v6082, %v6060
          %v6101 = vmul.f32 %v6086, %v6061
          %v6102 = vmul.f32 %v6090, %v6062
          %v6103 = vmul.f32 %v6094, %v6063
          %v6104 = vadd.f32 %v6046, %v6096
          %v6105 = vadd.f32 %v6047, %v6097
          %v6106 = vadd.f32 %v6048, %v6098
          %v6107 = vadd.f32 %v6049, %v6099
          %v6108 = vadd.f32 %v6050, %v6100
          %v6109 = vadd.f32 %v6051, %v6101
          %v6110 = vadd.f32 %v6052, %v6102
          %v6111 = vadd.f32 %v6053, %v6103
          %s6112 = sadd.s32 %s5880, 1408
          %s6113 = scalar_lea.vmem [#allocation2], %s6112
          %v6114 = vld [vmem:[%s6113] sm:$0xff]
          %v6115 = vld [vmem:[%s6113 + $0x8] sm:$0xff]
          %v6116 = vld [vmem:[%s6113 + $0x10] sm:$0xff]
          %v6117 = vld [vmem:[%s6113 + $0x18] sm:$0xff]
          %v6118 = vld [vmem:[%s6113 + $0x20] sm:$0xff]
          %v6119 = vld [vmem:[%s6113 + $0x28] sm:$0xff]
          %v6120 = vld [vmem:[%s6113 + $0x30] sm:$0xff]
          %v6121 = vld [vmem:[%s6113 + $0x38] sm:$0xff]
          %6122 = vset.pattern.permute.xlu0 81
          %6123 = vperm.xlu0 %6122, %v1271
          %v6124 = vpop.permute.xlu0 %6123
          %6126 = vset.pattern.permute.xlu0 81
          %6127 = vperm.xlu0 %6126, %v1276
          %v6128 = vpop.permute.xlu0 %6127
          %6130 = vset.pattern.permute.xlu0 81
          %6131 = vperm.xlu0 %6130, %v1281
          %v6132 = vpop.permute.xlu0 %6131
          %6134 = vset.pattern.permute.xlu0 81
          %6135 = vperm.xlu0 %6134, %v1286
          %v6136 = vpop.permute.xlu0 %6135
          %6138 = vset.pattern.permute.xlu0 81
          %6139 = vperm.xlu0 %6138, %v1291
          %v6140 = vpop.permute.xlu0 %6139
          %6142 = vset.pattern.permute.xlu0 81
          %6143 = vperm.xlu0 %6142, %v1296
          %v6144 = vpop.permute.xlu0 %6143
          %6146 = vset.pattern.permute.xlu0 81
          %6147 = vperm.xlu0 %6146, %v1301
          %v6148 = vpop.permute.xlu0 %6147
          %6150 = vset.pattern.permute.xlu0 81
          %6151 = vperm.xlu0 %6150, %v1306
          %v6152 = vpop.permute.xlu0 %6151
          %v6154 = vmul.f32 %v6124, %v6114
          %v6155 = vmul.f32 %v6128, %v6115
          %v6156 = vmul.f32 %v6132, %v6116
          %v6157 = vmul.f32 %v6136, %v6117
          %v6158 = vmul.f32 %v6140, %v6118
          %v6159 = vmul.f32 %v6144, %v6119
          %v6160 = vmul.f32 %v6148, %v6120
          %v6161 = vmul.f32 %v6152, %v6121
          %v6162 = vadd.f32 %v6104, %v6154
          %v6163 = vadd.f32 %v6105, %v6155
          %v6164 = vadd.f32 %v6106, %v6156
          %v6165 = vadd.f32 %v6107, %v6157
          %v6166 = vadd.f32 %v6108, %v6158
          %v6167 = vadd.f32 %v6109, %v6159
          %v6168 = vadd.f32 %v6110, %v6160
          %v6169 = vadd.f32 %v6111, %v6161
          %s6170 = sadd.s32 %s5880, 1760
          %s6171 = scalar_lea.vmem [#allocation2], %s6170
          %v6172 = vld [vmem:[%s6171] sm:$0xff]
          %v6173 = vld [vmem:[%s6171 + $0x8] sm:$0xff]
          %v6174 = vld [vmem:[%s6171 + $0x10] sm:$0xff]
          %v6175 = vld [vmem:[%s6171 + $0x18] sm:$0xff]
          %v6176 = vld [vmem:[%s6171 + $0x20] sm:$0xff]
          %v6177 = vld [vmem:[%s6171 + $0x28] sm:$0xff]
          %v6178 = vld [vmem:[%s6171 + $0x30] sm:$0xff]
          %v6179 = vld [vmem:[%s6171 + $0x38] sm:$0xff]
          %6180 = vset.pattern.permute.xlu0 82
          %6181 = vperm.xlu0 %6180, %v1271
          %v6182 = vpop.permute.xlu0 %6181
          %6184 = vset.pattern.permute.xlu0 82
          %6185 = vperm.xlu0 %6184, %v1276
          %v6186 = vpop.permute.xlu0 %6185
          %6188 = vset.pattern.permute.xlu0 82
          %6189 = vperm.xlu0 %6188, %v1281
          %v6190 = vpop.permute.xlu0 %6189
          %6192 = vset.pattern.permute.xlu0 82
          %6193 = vperm.xlu0 %6192, %v1286
          %v6194 = vpop.permute.xlu0 %6193
          %6196 = vset.pattern.permute.xlu0 82
          %6197 = vperm.xlu0 %6196, %v1291
          %v6198 = vpop.permute.xlu0 %6197
          %6200 = vset.pattern.permute.xlu0 82
          %6201 = vperm.xlu0 %6200, %v1296
          %v6202 = vpop.permute.xlu0 %6201
          %6204 = vset.pattern.permute.xlu0 82
          %6205 = vperm.xlu0 %6204, %v1301
          %v6206 = vpop.permute.xlu0 %6205
          %6208 = vset.pattern.permute.xlu0 82
          %6209 = vperm.xlu0 %6208, %v1306
          %v6210 = vpop.permute.xlu0 %6209
          %v6212 = vmul.f32 %v6182, %v6172
          %v6213 = vmul.f32 %v6186, %v6173
          %v6214 = vmul.f32 %v6190, %v6174
          %v6215 = vmul.f32 %v6194, %v6175
          %v6216 = vmul.f32 %v6198, %v6176
          %v6217 = vmul.f32 %v6202, %v6177
          %v6218 = vmul.f32 %v6206, %v6178
          %v6219 = vmul.f32 %v6210, %v6179
          %v6220 = vadd.f32 %v6162, %v6212
          %v6221 = vadd.f32 %v6163, %v6213
          %v6222 = vadd.f32 %v6164, %v6214
          %v6223 = vadd.f32 %v6165, %v6215
          %v6224 = vadd.f32 %v6166, %v6216
          %v6225 = vadd.f32 %v6167, %v6217
          %v6226 = vadd.f32 %v6168, %v6218
          %v6227 = vadd.f32 %v6169, %v6219
          %s6228 = sadd.s32 %s5880, 2112
          %s6229 = scalar_lea.vmem [#allocation2], %s6228
          %v6230 = vld [vmem:[%s6229] sm:$0xff]
          %v6231 = vld [vmem:[%s6229 + $0x8] sm:$0xff]
          %v6232 = vld [vmem:[%s6229 + $0x10] sm:$0xff]
          %v6233 = vld [vmem:[%s6229 + $0x18] sm:$0xff]
          %v6234 = vld [vmem:[%s6229 + $0x20] sm:$0xff]
          %v6235 = vld [vmem:[%s6229 + $0x28] sm:$0xff]
          %v6236 = vld [vmem:[%s6229 + $0x30] sm:$0xff]
          %v6237 = vld [vmem:[%s6229 + $0x38] sm:$0xff]
          %6238 = vset.pattern.permute.xlu0 83
          %6239 = vperm.xlu0 %6238, %v1271
          %v6240 = vpop.permute.xlu0 %6239
          %6242 = vset.pattern.permute.xlu0 83
          %6243 = vperm.xlu0 %6242, %v1276
          %v6244 = vpop.permute.xlu0 %6243
          %6246 = vset.pattern.permute.xlu0 83
          %6247 = vperm.xlu0 %6246, %v1281
          %v6248 = vpop.permute.xlu0 %6247
          %6250 = vset.pattern.permute.xlu0 83
          %6251 = vperm.xlu0 %6250, %v1286
          %v6252 = vpop.permute.xlu0 %6251
          %6254 = vset.pattern.permute.xlu0 83
          %6255 = vperm.xlu0 %6254, %v1291
          %v6256 = vpop.permute.xlu0 %6255
          %6258 = vset.pattern.permute.xlu0 83
          %6259 = vperm.xlu0 %6258, %v1296
          %v6260 = vpop.permute.xlu0 %6259
          %6262 = vset.pattern.permute.xlu0 83
          %6263 = vperm.xlu0 %6262, %v1301
          %v6264 = vpop.permute.xlu0 %6263
          %6266 = vset.pattern.permute.xlu0 83
          %6267 = vperm.xlu0 %6266, %v1306
          %v6268 = vpop.permute.xlu0 %6267
          %v6270 = vmul.f32 %v6240, %v6230
          %v6271 = vmul.f32 %v6244, %v6231
          %v6272 = vmul.f32 %v6248, %v6232
          %v6273 = vmul.f32 %v6252, %v6233
          %v6274 = vmul.f32 %v6256, %v6234
          %v6275 = vmul.f32 %v6260, %v6235
          %v6276 = vmul.f32 %v6264, %v6236
          %v6277 = vmul.f32 %v6268, %v6237
          %v6278 = vadd.f32 %v6220, %v6270
          %v6279 = vadd.f32 %v6221, %v6271
          %v6280 = vadd.f32 %v6222, %v6272
          %v6281 = vadd.f32 %v6223, %v6273
          %v6282 = vadd.f32 %v6224, %v6274
          %v6283 = vadd.f32 %v6225, %v6275
          %v6284 = vadd.f32 %v6226, %v6276
          %v6285 = vadd.f32 %v6227, %v6277
          %v6286 = vlaneseq
          %v6287 = vshrl.u32 %v6286, 7
          %v6288 = vsub.s32 3, %v6287
          %v6289 = vrot.slane %v1024, %v6288
          %v6290 = vmul.f32 %v6278, %v6289
          %v6291 = vmul.f32 %v6279, %v6289
          %v6292 = vmul.f32 %v6280, %v6289
          %v6293 = vmul.f32 %v6281, %v6289
          %v6294 = vmul.f32 %v6282, %v6289
          %v6295 = vmul.f32 %v6283, %v6289
          %v6296 = vmul.f32 %v6284, %v6289
          %v6297 = vmul.f32 %v6285, %v6289
          %v6298 = vlaneseq
          %v6299 = vshrl.u32 %v6298, 7
          %v6300 = vsub.s32 3, %v6299
          %v6301 = vrot.slane %v1025, %v6300
          %v6302 = vadd.f32 %v6290, %v6301
          %v6303 = vadd.f32 %v6291, %v6301
          %v6304 = vadd.f32 %v6292, %v6301
          %v6305 = vadd.f32 %v6293, %v6301
          %v6306 = vadd.f32 %v6294, %v6301
          %v6307 = vadd.f32 %v6295, %v6301
          %v6308 = vadd.f32 %v6296, %v6301
          %v6309 = vadd.f32 %v6297, %v6301
          %v6310 = vmax.f32 %v6302, 0.0
          %v6311 = vmax.f32 %v6303, 0.0
          %v6312 = vmax.f32 %v6304, 0.0
          %v6313 = vmax.f32 %v6305, 0.0
          %v6314 = vmax.f32 %v6306, 0.0
          %v6315 = vmax.f32 %v6307, 0.0
          %v6316 = vmax.f32 %v6308, 0.0
          %v6317 = vmax.f32 %v6309, 0.0
          %s6318 = sadd.s32 %s1397, 768
          %s6319 = scalar_lea.vmem [#allocation3], %s6318
          %6320 = vst [vmem:[%s6319] sm:$0xff] %v6310
          %6321 = vst [vmem:[%s6319 + $0x8] sm:$0xff] %v6311
          %6322 = vst [vmem:[%s6319 + $0x10] sm:$0xff] %v6312
          %6323 = vst [vmem:[%s6319 + $0x18] sm:$0xff] %v6313
          %6324 = vst [vmem:[%s6319 + $0x20] sm:$0xff] %v6314
          %6325 = vst [vmem:[%s6319 + $0x28] sm:$0xff] %v6315
          %6326 = vst [vmem:[%s6319 + $0x30] sm:$0xff] %v6316
          %6327 = vst [vmem:[%s6319 + $0x38] sm:$0xff] %v6317
          %v6328 = vld [vmem:[#allocation4] sm:$0x1]
          %v6329 = vadd.f32 %v6310, %v6311
          %v6330 = vadd.f32 %v6329, %v6312
          %v6331 = vadd.f32 %v6330, %v6313
          %v6332 = vadd.f32 %v6331, %v6314
          %v6333 = vadd.f32 %v6332, %v6315
          %v6334 = vadd.f32 %v6333, %v6316
          %v6335 = vadd.f32 %v6334, %v6317
          %v6336 = vrot.slane %v6335, 4
          %v6337 = vadd.f32 %v6335, %v6336
          %v6338 = vrot.slane %v6337, 2
          %v6339 = vadd.f32 %v6337, %v6338
          %v6340 = vrot.slane %v6339, 1
          %v6341 = vadd.f32 %v6339, %v6340
          %v6342 = vadd.f32 %v6328, %v6341
          %6343 = vst [vmem:[#allocation4] sm:$0x1] %v6342
        $region69: #{tpu_custom_call.1} parent=63 // loop_footer
          %s1031 = sadd.s32 1, %s1027
        $region70: #{tpu_custom_call.1} parent=63 // loop_footer_branch
          %1026 = sbr.rel target = $region66
        $region71: #{tpu_custom_call.1} parent=63 // loop_exit
          _
        %v6344 = vld [vmem:[#allocation4] sm:$0x1]
        %v6345 = vmul.f32 %v6344, 0.00390625
        %v6346 = vld [vmem:[%s7] sm:$0xff]
        %v6347 = vld [vmem:[%s7 + $0x8] sm:$0xff]
        %v6348 = vld [vmem:[%s7 + $0x10] sm:$0xff]
        %v6349 = vld [vmem:[%s7 + $0x18] sm:$0xff]
        %v6350 = vld [vmem:[%s7 + $0x20] sm:$0xff]
        %v6351 = vld [vmem:[%s7 + $0x28] sm:$0xff]
        %v6352 = vld [vmem:[%s7 + $0x30] sm:$0xff]
        %v6353 = vld [vmem:[%s7 + $0x38] sm:$0xff]
        %v6354 = vld [vmem:[%s7 + $0x40] sm:$0xff]
        %v6355 = vld [vmem:[%s7 + $0x48] sm:$0xff]
        %v6356 = vld [vmem:[%s7 + $0x50] sm:$0xff]
        %v6357 = vld [vmem:[%s7 + $0x58] sm:$0xff]
        %v6358 = vld [vmem:[%s7 + $0x60] sm:$0xff]
        %v6359 = vld [vmem:[%s7 + $0x68] sm:$0xff]
        %v6360 = vld [vmem:[%s7 + $0x70] sm:$0xff]
        %v6361 = vld [vmem:[%s7 + $0x78] sm:$0xff]
        %v6362 = vld [vmem:[%s8] sm:$0x1]
        %6363 = vmatprep.subr.mxu0 0.0
        %6364 = vmatpush1.msra.mxu0 %v6346
        %6365 = vmatprep.subr.mxu0 0.0
        %6366 = vmatpush1.msra.mxu0 %v6347
        %6367 = vmatprep.subr.mxu0 0.0
        %6368 = vmatpush1.msra.mxu0 %v6348
        %6369 = vmatprep.subr.mxu0 0.0
        %6370 = vmatpush1.msra.mxu0 %v6349
        %6371 = vmatprep.subr.mxu0 0.0
        %6372 = vmatpush1.msra.mxu0 %v6350
        %6373 = vmatprep.subr.mxu0 0.0
        %6374 = vmatpush1.msra.mxu0 %v6351
        %6375 = vmatprep.subr.mxu0 0.0
        %6376 = vmatpush1.msra.mxu0 %v6352
        %6377 = vmatprep.subr.mxu0 0.0
        %6378 = vmatpush1.msra.mxu0 %v6353
        %6379 = vmatprep.subr.mxu0 0.0
        %6380 = vmatpush1.msra.mxu0 %v6354
        %6381 = vmatprep.subr.mxu0 0.0
        %6382 = vmatpush1.msra.mxu0 %v6355
        %6383 = vmatprep.subr.mxu0 0.0
        %6384 = vmatpush1.msra.mxu0 %v6356
        %6385 = vmatprep.subr.mxu0 0.0
        %6386 = vmatpush1.msra.mxu0 %v6357
        %6387 = vmatprep.subr.mxu0 0.0
        %6388 = vmatpush1.msra.mxu0 %v6358
        %6389 = vmatprep.subr.mxu0 0.0
        %6390 = vmatpush1.msra.mxu0 %v6359
        %6391 = vmatprep.subr.mxu0 0.0
        %6392 = vmatpush1.msra.mxu0 %v6360
        %6393 = vmatprep.subr.mxu0 0.0
        %6394 = vmatpush1.msra.mxu0 %v6361
        %6395 = vmatprep.subr.mxu0 0.0
        %6396 = vmatpush1.msra.mxu0 0.0
        %6397 = vmatprep.subr.mxu0 0.0
        %6398 = vmatpush1.msra.mxu0 0.0
        %6399 = vmatprep.subr.mxu0 0.0
        %6400 = vmatpush1.msra.mxu0 0.0
        %6401 = vmatprep.subr.mxu0 0.0
        %6402 = vmatpush1.msra.mxu0 0.0
        %6403 = vmatprep.subr.mxu0 0.0
        %6404 = vmatpush1.msra.mxu0 0.0
        %6405 = vmatprep.subr.mxu0 0.0
        %6406 = vmatpush1.msra.mxu0 0.0
        %6407 = vmatprep.subr.mxu0 0.0
        %6408 = vmatpush1.msra.mxu0 0.0
        %6409 = vmatprep.subr.mxu0 0.0
        %6410 = vmatpush1.msra.mxu0 0.0
        %6411 = vmatprep.subr.mxu0 0.0
        %6412 = vmatpush1.msra.mxu0 0.0
        %6413 = vmatprep.subr.mxu0 0.0
        %6414 = vmatpush1.msra.mxu0 0.0
        %6415 = vmatprep.subr.mxu0 0.0
        %6416 = vmatpush1.msra.mxu0 0.0
        %6417 = vmatprep.subr.mxu0 0.0
        %6418 = vmatpush1.msra.mxu0 0.0
        %6419 = vmatprep.subr.mxu0 0.0
        %6420 = vmatpush1.msra.mxu0 0.0
        %6421 = vmatprep.subr.mxu0 0.0
        %6422 = vmatpush1.msra.mxu0 0.0
        %6423 = vmatprep.subr.mxu0 0.0
        %6424 = vmatpush1.msra.mxu0 0.0
        %6425 = vmatprep.subr.mxu0 0.0
        %6426 = vmatpush1.msra.mxu0 0.0
        %6427 = vmatprep.mubr.f32.mxu0 0.0
        %6428 = vmatmul.mubr.f32.gmra.mrb[0].mxu0 %v6345
        %v6429 = vpop.f32.mrb[0].mxu0
        %v6430 = vadd.f32 %v6362, %v6429
        %v6431 = vpop.f32.mrb[0].mxu0
        %6432 = vdwg.mxu0
        %v6433 = vld [vmem:[%s9] sm:$0xff]
        %v6434 = vld [vmem:[%s9 + $0x8] sm:$0xff]
        %v6435 = vld [vmem:[%s9 + $0x10] sm:$0xff]
        %v6436 = vld [vmem:[%s9 + $0x18] sm:$0xff]
        %v6437 = vld [vmem:[%s10] sm:$0x1]
        %vm6438 = vcmask 261120
        %v6440 = vsel %vm6438, %v6430, 0
        %6442 = vmatprep.subr.mxu0 0.0
        %6443 = vmatpush1.msra.mxu0 %v6433
        %6444 = vmatprep.subr.mxu0 0.0
        %6445 = vmatpush1.msra.mxu0 %v6434
        %6446 = vmatprep.subr.mxu0 0.0
        %6447 = vmatpush1.msra.mxu0 %v6435
        %6448 = vmatprep.subr.mxu0 0.0
        %6449 = vmatpush1.msra.mxu0 %v6436
        %6450 = vmatprep.subr.mxu0 0.0
        %6451 = vmatpush1.msra.mxu0 0.0
        %6452 = vmatprep.subr.mxu0 0.0
        %6453 = vmatpush1.msra.mxu0 0.0
        %6454 = vmatprep.subr.mxu0 0.0
        %6455 = vmatpush1.msra.mxu0 0.0
        %6456 = vmatprep.subr.mxu0 0.0
        %6457 = vmatpush1.msra.mxu0 0.0
        %6458 = vmatprep.subr.mxu0 0.0
        %6459 = vmatpush1.msra.mxu0 0.0
        %6460 = vmatprep.subr.mxu0 0.0
        %6461 = vmatpush1.msra.mxu0 0.0
        %6462 = vmatprep.subr.mxu0 0.0
        %6463 = vmatpush1.msra.mxu0 0.0
        %6464 = vmatprep.subr.mxu0 0.0
        %6465 = vmatpush1.msra.mxu0 0.0
        %6466 = vmatprep.subr.mxu0 0.0
        %6467 = vmatpush1.msra.mxu0 0.0
        %6468 = vmatprep.subr.mxu0 0.0
        %6469 = vmatpush1.msra.mxu0 0.0
        %6470 = vmatprep.subr.mxu0 0.0
        %6471 = vmatpush1.msra.mxu0 0.0
        %6472 = vmatprep.subr.mxu0 0.0
        %6473 = vmatpush1.msra.mxu0 0.0
        %6474 = vmatprep.subr.mxu0 0.0
        %6475 = vmatpush1.msra.mxu0 0.0
        %6476 = vmatprep.subr.mxu0 0.0
        %6477 = vmatpush1.msra.mxu0 0.0
        %6478 = vmatprep.subr.mxu0 0.0
        %6479 = vmatpush1.msra.mxu0 0.0
        %6480 = vmatprep.subr.mxu0 0.0
        %6481 = vmatpush1.msra.mxu0 0.0
        %6482 = vmatprep.subr.mxu0 0.0
        %6483 = vmatpush1.msra.mxu0 0.0
        %6484 = vmatprep.subr.mxu0 0.0
        %6485 = vmatpush1.msra.mxu0 0.0
        %6486 = vmatprep.subr.mxu0 0.0
        %6487 = vmatpush1.msra.mxu0 0.0
        %6488 = vmatprep.subr.mxu0 0.0
        %6489 = vmatpush1.msra.mxu0 0.0
        %6490 = vmatprep.subr.mxu0 0.0
        %6491 = vmatpush1.msra.mxu0 0.0
        %6492 = vmatprep.subr.mxu0 0.0
        %6493 = vmatpush1.msra.mxu0 0.0
        %6494 = vmatprep.subr.mxu0 0.0
        %6495 = vmatpush1.msra.mxu0 0.0
        %6496 = vmatprep.subr.mxu0 0.0
        %6497 = vmatpush1.msra.mxu0 0.0
        %6498 = vmatprep.subr.mxu0 0.0
        %6499 = vmatpush1.msra.mxu0 0.0
        %6500 = vmatprep.subr.mxu0 0.0
        %6501 = vmatpush1.msra.mxu0 0.0
        %6502 = vmatprep.subr.mxu0 0.0
        %6503 = vmatpush1.msra.mxu0 0.0
        %6504 = vmatprep.subr.mxu0 0.0
        %6505 = vmatpush1.msra.mxu0 0.0
        %6506 = vmatprep.mubr.f32.mxu0 0.0
        %6507 = vmatmul.mubr.f32.gmra.mrb[0].mxu0 %v6440
        %v6508 = vpop.f32.mrb[0].mxu0
        %v6509 = vadd.f32 %v6437, %v6508
        %v6510 = vpop.f32.mrb[0].mxu0
        %6511 = vdwg.mxu0
        %s6512 = scalar_lea.vmem %s9, 32
        %v6513 = vld [vmem:[%s6512] sm:$0xff]
        %v6514 = vld [vmem:[%s6512 + $0x8] sm:$0xff]
        %v6515 = vld [vmem:[%s6512 + $0x10] sm:$0xff]
        %v6516 = vld [vmem:[%s6512 + $0x18] sm:$0xff]
        %v6517 = vld [vmem:[%s10 + $0x1] sm:$0x1]
        %6518 = vmatprep.subr.mxu0 0.0
        %6519 = vmatpush1.msra.mxu0 %v6513
        %6520 = vmatprep.subr.mxu0 0.0
        %6521 = vmatpush1.msra.mxu0 %v6514
        %6522 = vmatprep.subr.mxu0 0.0
        %6523 = vmatpush1.msra.mxu0 %v6515
        %6524 = vmatprep.subr.mxu0 0.0
        %6525 = vmatpush1.msra.mxu0 %v6516
        %6526 = vmatprep.subr.mxu0 0.0
        %6527 = vmatpush1.msra.mxu0 0.0
        %6528 = vmatprep.subr.mxu0 0.0
        %6529 = vmatpush1.msra.mxu0 0.0
        %6530 = vmatprep.subr.mxu0 0.0
        %6531 = vmatpush1.msra.mxu0 0.0
        %6532 = vmatprep.subr.mxu0 0.0
        %6533 = vmatpush1.msra.mxu0 0.0
        %6534 = vmatprep.subr.mxu0 0.0
        %6535 = vmatpush1.msra.mxu0 0.0
        %6536 = vmatprep.subr.mxu0 0.0
        %6537 = vmatpush1.msra.mxu0 0.0
        %6538 = vmatprep.subr.mxu0 0.0
        %6539 = vmatpush1.msra.mxu0 0.0
        %6540 = vmatprep.subr.mxu0 0.0
        %6541 = vmatpush1.msra.mxu0 0.0
        %6542 = vmatprep.subr.mxu0 0.0
        %6543 = vmatpush1.msra.mxu0 0.0
        %6544 = vmatprep.subr.mxu0 0.0
        %6545 = vmatpush1.msra.mxu0 0.0
        %6546 = vmatprep.subr.mxu0 0.0
        %6547 = vmatpush1.msra.mxu0 0.0
        %6548 = vmatprep.subr.mxu0 0.0
        %6549 = vmatpush1.msra.mxu0 0.0
        %6550 = vmatprep.subr.mxu0 0.0
        %6551 = vmatpush1.msra.mxu0 0.0
        %6552 = vmatprep.subr.mxu0 0.0
        %6553 = vmatpush1.msra.mxu0 0.0
        %6554 = vmatprep.subr.mxu0 0.0
        %6555 = vmatpush1.msra.mxu0 0.0
        %6556 = vmatprep.subr.mxu0 0.0
        %6557 = vmatpush1.msra.mxu0 0.0
        %6558 = vmatprep.subr.mxu0 0.0
        %6559 = vmatpush1.msra.mxu0 0.0
        %6560 = vmatprep.subr.mxu0 0.0
        %6561 = vmatpush1.msra.mxu0 0.0
        %6562 = vmatprep.subr.mxu0 0.0
        %6563 = vmatpush1.msra.mxu0 0.0
        %6564 = vmatprep.subr.mxu0 0.0
        %6565 = vmatpush1.msra.mxu0 0.0
        %6566 = vmatprep.subr.mxu0 0.0
        %6567 = vmatpush1.msra.mxu0 0.0
        %6568 = vmatprep.subr.mxu0 0.0
        %6569 = vmatpush1.msra.mxu0 0.0
        %6570 = vmatprep.subr.mxu0 0.0
        %6571 = vmatpush1.msra.mxu0 0.0
        %6572 = vmatprep.subr.mxu0 0.0
        %6573 = vmatpush1.msra.mxu0 0.0
        %6574 = vmatprep.subr.mxu0 0.0
        %6575 = vmatpush1.msra.mxu0 0.0
        %6576 = vmatprep.subr.mxu0 0.0
        %6577 = vmatpush1.msra.mxu0 0.0
        %6578 = vmatprep.subr.mxu0 0.0
        %6579 = vmatpush1.msra.mxu0 0.0
        %6580 = vmatprep.subr.mxu0 0.0
        %6581 = vmatpush1.msra.mxu0 0.0
        %6582 = vmatprep.mubr.f32.mxu0 0.0
        %6583 = vmatmul.mubr.f32.gmra.mrb[0].mxu0 %v6440
        %v6584 = vpop.f32.mrb[0].mxu0
        %v6585 = vadd.f32 %v6517, %v6584
        %v6586 = vpop.f32.mrb[0].mxu0
        %6587 = vdwg.mxu0
        %s6588 = scalar_lea.vmem %s9, 64
        %v6589 = vld [vmem:[%s6588] sm:$0xff]
        %v6590 = vld [vmem:[%s6588 + $0x8] sm:$0xff]
        %v6591 = vld [vmem:[%s6588 + $0x10] sm:$0xff]
        %v6592 = vld [vmem:[%s6588 + $0x18] sm:$0xff]
        %v6593 = vld [vmem:[%s10 + $0x2] sm:$0x1]
        %6594 = vmatprep.subr.mxu0 0.0
        %6595 = vmatpush1.msra.mxu0 %v6589
        %6596 = vmatprep.subr.mxu0 0.0
        %6597 = vmatpush1.msra.mxu0 %v6590
        %6598 = vmatprep.subr.mxu0 0.0
        %6599 = vmatpush1.msra.mxu0 %v6591
        %6600 = vmatprep.subr.mxu0 0.0
        %6601 = vmatpush1.msra.mxu0 %v6592
        %6602 = vmatprep.subr.mxu0 0.0
        %6603 = vmatpush1.msra.mxu0 0.0
        %6604 = vmatprep.subr.mxu0 0.0
        %6605 = vmatpush1.msra.mxu0 0.0
        %6606 = vmatprep.subr.mxu0 0.0
        %6607 = vmatpush1.msra.mxu0 0.0
        %6608 = vmatprep.subr.mxu0 0.0
        %6609 = vmatpush1.msra.mxu0 0.0
        %6610 = vmatprep.subr.mxu0 0.0
        %6611 = vmatpush1.msra.mxu0 0.0
        %6612 = vmatprep.subr.mxu0 0.0
        %6613 = vmatpush1.msra.mxu0 0.0
        %6614 = vmatprep.subr.mxu0 0.0
        %6615 = vmatpush1.msra.mxu0 0.0
        %6616 = vmatprep.subr.mxu0 0.0
        %6617 = vmatpush1.msra.mxu0 0.0
        %6618 = vmatprep.subr.mxu0 0.0
        %6619 = vmatpush1.msra.mxu0 0.0
        %6620 = vmatprep.subr.mxu0 0.0
        %6621 = vmatpush1.msra.mxu0 0.0
        %6622 = vmatprep.subr.mxu0 0.0
        %6623 = vmatpush1.msra.mxu0 0.0
        %6624 = vmatprep.subr.mxu0 0.0
        %6625 = vmatpush1.msra.mxu0 0.0
        %6626 = vmatprep.subr.mxu0 0.0
        %6627 = vmatpush1.msra.mxu0 0.0
        %6628 = vmatprep.subr.mxu0 0.0
        %6629 = vmatpush1.msra.mxu0 0.0
        %6630 = vmatprep.subr.mxu0 0.0
        %6631 = vmatpush1.msra.mxu0 0.0
        %6632 = vmatprep.subr.mxu0 0.0
        %6633 = vmatpush1.msra.mxu0 0.0
        %6634 = vmatprep.subr.mxu0 0.0
        %6635 = vmatpush1.msra.mxu0 0.0
        %6636 = vmatprep.subr.mxu0 0.0
        %6637 = vmatpush1.msra.mxu0 0.0
        %6638 = vmatprep.subr.mxu0 0.0
        %6639 = vmatpush1.msra.mxu0 0.0
        %6640 = vmatprep.subr.mxu0 0.0
        %6641 = vmatpush1.msra.mxu0 0.0
        %6642 = vmatprep.subr.mxu0 0.0
        %6643 = vmatpush1.msra.mxu0 0.0
        %6644 = vmatprep.subr.mxu0 0.0
        %6645 = vmatpush1.msra.mxu0 0.0
        %6646 = vmatprep.subr.mxu0 0.0
        %6647 = vmatpush1.msra.mxu0 0.0
        %6648 = vmatprep.subr.mxu0 0.0
        %6649 = vmatpush1.msra.mxu0 0.0
        %6650 = vmatprep.subr.mxu0 0.0
        %6651 = vmatpush1.msra.mxu0 0.0
        %6652 = vmatprep.subr.mxu0 0.0
        %6653 = vmatpush1.msra.mxu0 0.0
        %6654 = vmatprep.subr.mxu0 0.0
        %6655 = vmatpush1.msra.mxu0 0.0
        %6656 = vmatprep.subr.mxu0 0.0
        %6657 = vmatpush1.msra.mxu0 0.0
        %6658 = vmatprep.mubr.f32.mxu0 0.0
        %6659 = vmatmul.mubr.f32.gmra.mrb[0].mxu0 %v6440
        %v6660 = vpop.f32.mrb[0].mxu0
        %v6661 = vadd.f32 %v6593, %v6660
        %v6662 = vpop.f32.mrb[0].mxu0
        %6663 = vdwg.mxu0
        %s6664 = scalar_lea.vmem %s9, 96
        %v6665 = vld [vmem:[%s6664] sm:$0xff]
        %v6666 = vld [vmem:[%s6664 + $0x8] sm:$0xff]
        %v6667 = vld [vmem:[%s6664 + $0x10] sm:$0xff]
        %v6668 = vld [vmem:[%s6664 + $0x18] sm:$0xff]
        %v6669 = vld [vmem:[%s10 + $0x3] sm:$0x1]
        %6670 = vmatprep.subr.mxu0 0.0
        %6671 = vmatpush1.msra.mxu0 %v6665
        %6672 = vmatprep.subr.mxu0 0.0
        %6673 = vmatpush1.msra.mxu0 %v6666
        %6674 = vmatprep.subr.mxu0 0.0
        %6675 = vmatpush1.msra.mxu0 %v6667
        %6676 = vmatprep.subr.mxu0 0.0
        %6677 = vmatpush1.msra.mxu0 %v6668
        %6678 = vmatprep.subr.mxu0 0.0
        %6679 = vmatpush1.msra.mxu0 0.0
        %6680 = vmatprep.subr.mxu0 0.0
        %6681 = vmatpush1.msra.mxu0 0.0
        %6682 = vmatprep.subr.mxu0 0.0
        %6683 = vmatpush1.msra.mxu0 0.0
        %6684 = vmatprep.subr.mxu0 0.0
        %6685 = vmatpush1.msra.mxu0 0.0
        %6686 = vmatprep.subr.mxu0 0.0
        %6687 = vmatpush1.msra.mxu0 0.0
        %6688 = vmatprep.subr.mxu0 0.0
        %6689 = vmatpush1.msra.mxu0 0.0
        %6690 = vmatprep.subr.mxu0 0.0
        %6691 = vmatpush1.msra.mxu0 0.0
        %6692 = vmatprep.subr.mxu0 0.0
        %6693 = vmatpush1.msra.mxu0 0.0
        %6694 = vmatprep.subr.mxu0 0.0
        %6695 = vmatpush1.msra.mxu0 0.0
        %6696 = vmatprep.subr.mxu0 0.0
        %6697 = vmatpush1.msra.mxu0 0.0
        %6698 = vmatprep.subr.mxu0 0.0
        %6699 = vmatpush1.msra.mxu0 0.0
        %6700 = vmatprep.subr.mxu0 0.0
        %6701 = vmatpush1.msra.mxu0 0.0
        %6702 = vmatprep.subr.mxu0 0.0
        %6703 = vmatpush1.msra.mxu0 0.0
        %6704 = vmatprep.subr.mxu0 0.0
        %6705 = vmatpush1.msra.mxu0 0.0
        %6706 = vmatprep.subr.mxu0 0.0
        %6707 = vmatpush1.msra.mxu0 0.0
        %6708 = vmatprep.subr.mxu0 0.0
        %6709 = vmatpush1.msra.mxu0 0.0
        %6710 = vmatprep.subr.mxu0 0.0
        %6711 = vmatpush1.msra.mxu0 0.0
        %6712 = vmatprep.subr.mxu0 0.0
        %6713 = vmatpush1.msra.mxu0 0.0
        %6714 = vmatprep.subr.mxu0 0.0
        %6715 = vmatpush1.msra.mxu0 0.0
        %6716 = vmatprep.subr.mxu0 0.0
        %6717 = vmatpush1.msra.mxu0 0.0
        %6718 = vmatprep.subr.mxu0 0.0
        %6719 = vmatpush1.msra.mxu0 0.0
        %6720 = vmatprep.subr.mxu0 0.0
        %6721 = vmatpush1.msra.mxu0 0.0
        %6722 = vmatprep.subr.mxu0 0.0
        %6723 = vmatpush1.msra.mxu0 0.0
        %6724 = vmatprep.subr.mxu0 0.0
        %6725 = vmatpush1.msra.mxu0 0.0
        %6726 = vmatprep.subr.mxu0 0.0
        %6727 = vmatpush1.msra.mxu0 0.0
        %6728 = vmatprep.subr.mxu0 0.0
        %6729 = vmatpush1.msra.mxu0 0.0
        %6730 = vmatprep.subr.mxu0 0.0
        %6731 = vmatpush1.msra.mxu0 0.0
        %6732 = vmatprep.subr.mxu0 0.0
        %6733 = vmatpush1.msra.mxu0 0.0
        %6734 = vmatprep.mubr.f32.mxu0 0.0
        %6735 = vmatmul.mubr.f32.gmra.mrb[0].mxu0 %v6440
        %v6736 = vpop.f32.mrb[0].mxu0
        %v6737 = vadd.f32 %v6669, %v6736
        %v6738 = vpop.f32.mrb[0].mxu0
        %6739 = vdwg.mxu0
        %v6740 = vmax.f32 %v6509, %v6585
        %v6741 = vmax.f32 %v6740, %v6661
        %v6742 = vmax.f32 %v6741, %v6737
        %v6743 = vsub.f32 %v6509, %v6742
        %v6744 = vmul.f32 %v6743, 1.442695
        %v6745 = vpow.pop %v6744
        %v6746 = vsub.f32 %v6585, %v6742
        %v6747 = vmul.f32 %v6746, 1.442695
        %v6748 = vpow.pop %v6747
        %v6749 = vsub.f32 %v6661, %v6742
        %v6750 = vmul.f32 %v6749, 1.442695
        %v6751 = vpow.pop %v6750
        %v6752 = vsub.f32 %v6737, %v6742
        %v6753 = vmul.f32 %v6752, 1.442695
        %v6754 = vpow.pop %v6753
        %v6755 = vadd.f32 %v6745, %v6748
        %v6756 = vadd.f32 %v6755, %v6751
        %v6757 = vadd.f32 %v6756, %v6754
        %v6758 = vrcp.pop %v6757
        %v6759 = vmul.f32 %v6745, %v6758
        %v6760 = vmul.f32 %v6748, %v6758
        %v6761 = vmul.f32 %v6751, %v6758
        %v6762 = vmul.f32 %v6754, %v6758
        loop: start=0, step=1, limit=4
        $region72: #{tpu_custom_call.1} parent=63 // loop_pre_header
          _
        $region73: #{tpu_custom_call.1} parent=63 // loop_header
          %s6764 = sphi 0, %s6768
          %p6765 = scmp.ge.s32.totalorder %s6764, 4
        $region74: #{tpu_custom_call.1} parent=63 // loop_header_branch
          %6767 = sbr.rel (%p6765) target = $region78
        $region75: #{tpu_custom_call.1} parent=63 // loop_body
          %s6769 = smul.u32 %s6764, 4
          %s6770 = smul.u32 %s6769, 16
          %s6771 = scalar_lea.vmem [#allocation3], %s6770
          %v6772 = vld [vmem:[%s6771] sm:$0xff]
          %v6773 = vld [vmem:[%s6771 + $0x8] sm:$0xff]
          %v6774 = vld [vmem:[%s6771 + $0x10] sm:$0xff]
          %v6775 = vld [vmem:[%s6771 + $0x18] sm:$0xff]
          %v6776 = vld [vmem:[%s6771 + $0x20] sm:$0xff]
          %v6777 = vld [vmem:[%s6771 + $0x28] sm:$0xff]
          %v6778 = vld [vmem:[%s6771 + $0x30] sm:$0xff]
          %v6779 = vld [vmem:[%s6771 + $0x38] sm:$0xff]
          %v6780 = vlaneseq
          %v6781 = vshrl.u32 %v6780, 7
          %v6782 = vsub.s32 0, %v6781
          %v6783 = vrot.slane %v6759, %v6782
          %v6784 = vmul.f32 %v6783, %v6772
          %v6785 = vmul.f32 %v6783, %v6773
          %v6786 = vmul.f32 %v6783, %v6774
          %v6787 = vmul.f32 %v6783, %v6775
          %v6788 = vmul.f32 %v6783, %v6776
          %v6789 = vmul.f32 %v6783, %v6777
          %v6790 = vmul.f32 %v6783, %v6778
          %v6791 = vmul.f32 %v6783, %v6779
          %s6792 = sadd.s32 %s6770, 256
          %s6793 = scalar_lea.vmem [#allocation3], %s6792
          %v6794 = vld [vmem:[%s6793] sm:$0xff]
          %v6795 = vld [vmem:[%s6793 + $0x8] sm:$0xff]
          %v6796 = vld [vmem:[%s6793 + $0x10] sm:$0xff]
          %v6797 = vld [vmem:[%s6793 + $0x18] sm:$0xff]
          %v6798 = vld [vmem:[%s6793 + $0x20] sm:$0xff]
          %v6799 = vld [vmem:[%s6793 + $0x28] sm:$0xff]
          %v6800 = vld [vmem:[%s6793 + $0x30] sm:$0xff]
          %v6801 = vld [vmem:[%s6793 + $0x38] sm:$0xff]
          %v6802 = vlaneseq
          %v6803 = vshrl.u32 %v6802, 7
          %v6804 = vsub.s32 0, %v6803
          %v6805 = vrot.slane %v6760, %v6804
          %v6806 = vmul.f32 %v6805, %v6794
          %v6807 = vmul.f32 %v6805, %v6795
          %v6808 = vmul.f32 %v6805, %v6796
          %v6809 = vmul.f32 %v6805, %v6797
          %v6810 = vmul.f32 %v6805, %v6798
          %v6811 = vmul.f32 %v6805, %v6799
          %v6812 = vmul.f32 %v6805, %v6800
          %v6813 = vmul.f32 %v6805, %v6801
          %v6814 = vadd.f32 %v6784, %v6806
          %v6815 = vadd.f32 %v6785, %v6807
          %v6816 = vadd.f32 %v6786, %v6808
          %v6817 = vadd.f32 %v6787, %v6809
          %v6818 = vadd.f32 %v6788, %v6810
          %v6819 = vadd.f32 %v6789, %v6811
          %v6820 = vadd.f32 %v6790, %v6812
          %v6821 = vadd.f32 %v6791, %v6813
          %s6822 = sadd.s32 %s6770, 512
          %s6823 = scalar_lea.vmem [#allocation3], %s6822
          %v6824 = vld [vmem:[%s6823] sm:$0xff]
          %v6825 = vld [vmem:[%s6823 + $0x8] sm:$0xff]
          %v6826 = vld [vmem:[%s6823 + $0x10] sm:$0xff]
          %v6827 = vld [vmem:[%s6823 + $0x18] sm:$0xff]
          %v6828 = vld [vmem:[%s6823 + $0x20] sm:$0xff]
          %v6829 = vld [vmem:[%s6823 + $0x28] sm:$0xff]
          %v6830 = vld [vmem:[%s6823 + $0x30] sm:$0xff]
          %v6831 = vld [vmem:[%s6823 + $0x38] sm:$0xff]
          %v6832 = vlaneseq
          %v6833 = vshrl.u32 %v6832, 7
          %v6834 = vsub.s32 0, %v6833
          %v6835 = vrot.slane %v6761, %v6834
          %v6836 = vmul.f32 %v6835, %v6824
          %v6837 = vmul.f32 %v6835, %v6825
          %v6838 = vmul.f32 %v6835, %v6826
          %v6839 = vmul.f32 %v6835, %v6827
          %v6840 = vmul.f32 %v6835, %v6828
          %v6841 = vmul.f32 %v6835, %v6829
          %v6842 = vmul.f32 %v6835, %v6830
          %v6843 = vmul.f32 %v6835, %v6831
          %v6844 = vadd.f32 %v6814, %v6836
          %v6845 = vadd.f32 %v6815, %v6837
          %v6846 = vadd.f32 %v6816, %v6838
          %v6847 = vadd.f32 %v6817, %v6839
          %v6848 = vadd.f32 %v6818, %v6840
          %v6849 = vadd.f32 %v6819, %v6841
          %v6850 = vadd.f32 %v6820, %v6842
          %v6851 = vadd.f32 %v6821, %v6843
          %s6852 = sadd.s32 %s6770, 768
          %s6853 = scalar_lea.vmem [#allocation3], %s6852
          %v6854 = vld [vmem:[%s6853] sm:$0xff]
          %v6855 = vld [vmem:[%s6853 + $0x8] sm:$0xff]
          %v6856 = vld [vmem:[%s6853 + $0x10] sm:$0xff]
          %v6857 = vld [vmem:[%s6853 + $0x18] sm:$0xff]
          %v6858 = vld [vmem:[%s6853 + $0x20] sm:$0xff]
          %v6859 = vld [vmem:[%s6853 + $0x28] sm:$0xff]
          %v6860 = vld [vmem:[%s6853 + $0x30] sm:$0xff]
          %v6861 = vld [vmem:[%s6853 + $0x38] sm:$0xff]
          %v6862 = vlaneseq
          %v6863 = vshrl.u32 %v6862, 7
          %v6864 = vsub.s32 0, %v6863
          %v6865 = vrot.slane %v6762, %v6864
          %v6866 = vmul.f32 %v6865, %v6854
          %v6867 = vmul.f32 %v6865, %v6855
          %v6868 = vmul.f32 %v6865, %v6856
          %v6869 = vmul.f32 %v6865, %v6857
          %v6870 = vmul.f32 %v6865, %v6858
          %v6871 = vmul.f32 %v6865, %v6859
          %v6872 = vmul.f32 %v6865, %v6860
          %v6873 = vmul.f32 %v6865, %v6861
          %v6874 = vadd.f32 %v6844, %v6866
          %v6875 = vadd.f32 %v6845, %v6867
          %v6876 = vadd.f32 %v6846, %v6868
          %v6877 = vadd.f32 %v6847, %v6869
          %v6878 = vadd.f32 %v6848, %v6870
          %v6879 = vadd.f32 %v6849, %v6871
          %v6880 = vadd.f32 %v6850, %v6872
          %v6881 = vadd.f32 %v6851, %v6873
          %s6882 = scalar_lea.vmem %s379, %s6770 [#allocation5]
          %6883 = vst [vmem:[%s6882] sm:$0xff] %v6874
          %6884 = vst [vmem:[%s6882 + $0x8] sm:$0xff] %v6875
          %6885 = vst [vmem:[%s6882 + $0x10] sm:$0xff] %v6876
          %6886 = vst [vmem:[%s6882 + $0x18] sm:$0xff] %v6877
          %6887 = vst [vmem:[%s6882 + $0x20] sm:$0xff] %v6878
          %6888 = vst [vmem:[%s6882 + $0x28] sm:$0xff] %v6879
          %6889 = vst [vmem:[%s6882 + $0x30] sm:$0xff] %v6880
          %6890 = vst [vmem:[%s6882 + $0x38] sm:$0xff] %v6881
        $region76: #{tpu_custom_call.1} parent=63 // loop_footer
          %s6768 = sadd.s32 1, %s6764
        $region77: #{tpu_custom_call.1} parent=63 // loop_footer_branch
          %6763 = sbr.rel target = $region73
        $region78: #{tpu_custom_call.1} parent=63 // loop_exit
          _
        %s6891 = sand.u32 %s269, 1
        %s6892 = scalar_lea.sflag [#allocation6], %s6891
        %s6893 = sand.u32 %s269, 1
        %s6894 = smul.addr %s6893, 256
        %s6895 = scalar_lea.vmem [#allocation5], %s6894
        // Predicated region
        $region79: #{tpu_custom_call.1} parent=63 // pred_check
          %p6896 = pneg %p279
        $region80: #{tpu_custom_call.1} parent=63 // pred_check_branch
          %6898 = sbr.rel (%p6896) target = $region82
        $region81: #{tpu_custom_call.1} parent=63 // pred_region
          %s6900 = ssub.s32 4096, 4096
          %6901 = vsyncadd %s6892, %s6900
          %s6902 = smul.addr %s25, 32
          %s6903 = smul.addr %s6902, 128
          %s6904 = scalar_lea.hbm %s11, %s6903
          %s6905 = sshll.u32 %s6895, 4
          %s6906 = int_to_ptr.vmem [resolvable:$true] %s6905
          %6911 = dma.vmem_to_hbm [thread:$0]  %s6906, 4096, %s6904, %s6892, 128, 128, 8
        $region82: #{tpu_custom_call.1} parent=63 // pred_fallthru
          _
      $region64: #{tpu_custom_call.1} parent=5 // pred_fallthru
        _
      %p6912 = scmp.le.s32.totalorder 2, %s20
      // Predicated region
      $region83: #{tpu_custom_call.1} parent=5 // pred_check
        %p6913 = pneg %p6912
      $region84: #{tpu_custom_call.1} parent=5 // pred_check_branch
        %6915 = sbr.rel (%p6913) target = $region86
      $region85: #{tpu_custom_call.1} parent=5 // pred_region
        %s6916 = ssub.s32 %s20, 2
        // Predicated region
        $region87: #{tpu_custom_call.1} parent=85 // pred_check
          %p6917 = pneg %p285
        $region88: #{tpu_custom_call.1} parent=85 // pred_check_branch
          %6919 = sbr.rel (%p6917) target = $region90
        $region89: #{tpu_custom_call.1} parent=85 // pred_region
          %s6920 = sand.u32 %s270, 1
          %s6921 = scalar_lea.sflag [#allocation6], %s6920
          %s6922 = sand.u32 %s270, 1
          %s6923 = smul.addr %s6922, 256
          %s6924 = scalar_lea.vmem [#allocation5], %s6923
          %6925 = dma.done %s6921, 4096
        $region90: #{tpu_custom_call.1} parent=85 // pred_fallthru
          _
      $region86: #{tpu_custom_call.1} parent=5 // pred_fallthru
        _
    $region6: #{tpu_custom_call.1} parent=1 // loop_footer
      %s24 = sadd.s32 1, %s20
    $region7: #{tpu_custom_call.1} parent=1 // loop_footer_branch
      %19 = sbr.rel target = $region3
    $region8: #{tpu_custom_call.1} parent=1 // loop_exit
      _
    %6926 = vsyncpa [#allocation6], 1
    %s6927 = scalar_lea.sflag [#allocation6], 1
    %6928 = vsyncpa %s6927, 1

</llo_original>
